<compile_context>
chip_gen: v7x
topology: tpu7x:2x2x1
jax: 0.10.0
libtpu: 0.0.40
codegen_flags: <defaults>
</compile_context>

<pallas_src>
import functools
import math

import jax
import jax.numpy as jnp
from jax import lax
from jax.experimental import pallas as pl
from jax.experimental.pallas import tpu as pltpu


_ENC_KEYS = ("wqkv", "bqkv", "wo", "bo", "ln1g", "ln1b",
             "w1", "b1", "w2", "b2", "ln2g", "ln2b")
_RES_KEYS = ("w", "b", "cosph", "g", "beta")


# ----------------------------------------------------------------------------
# in-kernel helpers
# ----------------------------------------------------------------------------
def _layernorm(x, gamma, beta, eps=1e-5):
    m = jnp.mean(x, axis=-1, keepdims=True)
    v = jnp.mean((x - m) ** 2, axis=-1, keepdims=True)
    return (x - m) * lax.rsqrt(v + eps) * gamma + beta


def _bf16_dot(a, w_ref, b_ref=None):
    """a (f32) @ w (bf16 weight ref) with f32 accumulation, optional (1,N) bias ref."""
    y = jnp.dot(a.astype(jnp.bfloat16), w_ref[...],
                preferred_element_type=jnp.float32)
    if b_ref is not None:
        y = y + b_ref[...]
    return y


def _lstm_cell(g, c_prev, H):
    """PyTorch gate order (i, f, g, o); g is the (Bp, 4H) pre-activation."""
    i_g = jax.nn.sigmoid(g[:, 0 * H:1 * H])
    f_g = jax.nn.sigmoid(g[:, 1 * H:2 * H])
    g_g = jnp.tanh(g[:, 2 * H:3 * H])
    o_g = jax.nn.sigmoid(g[:, 3 * H:4 * H])
    c_new = f_g * c_prev + i_g * g_g
    h_new = o_g * jnp.tanh(c_new)
    return h_new, c_new


# ----------------------------------------------------------------------------
# fused forward kernel (no grid: everything resident in VMEM)
# ----------------------------------------------------------------------------
def _fused_forward_kernel(*refs, T, Bp, H, nhead, n_lstm, n_enc, n_res):
    gin_ref = refs[-1]                  # VMEM scratch (T*Bp, 4H) f32
    o_ref = refs[-2]                    # output (Bp, 128) f32
    it = iter(refs[:-2])
    x_ref = next(it)                    # (T*Bp, Din) f32, row = t*Bp + b (time-major)
    bias_ref = next(it)                 # (nhead*R, R) f32: 0 / -1e30 (block + pad mask)
    hmask_ref = next(it)                # (nhead, H) f32: per-head lane mask
    emb_w = next(it)                    # (Din, H/2) bf16
    emb_b = next(it)                    # (1, H/2)   f32
    wih0 = next(it)                     # (H/2, 4H)  bf16  (LSTM layer 0)
    whh0 = next(it)                     # (H, 4H)    bf16
    b0 = next(it)                       # (1, 4H)    f32   (b_ih + b_hh)
    lstm_rest = [(next(it), next(it)) for _ in range(n_lstm - 1)]  # ([wih;whh], b)
    enc_p = [{k: next(it) for k in _ENC_KEYS} for _ in range(n_enc)]
    res_p = [{k: next(it) for k in _RES_KEYS} for _ in range(n_res)]
    head_w = next(it)                   # (H, 128) bf16 (lane-padded)
    head_b = next(it)                   # (1, 128) f32  (lane-padded)

    # ---- embedding: Linear(input_dim, hidden//2) for all (t, b) rows at once ----
    xe = _bf16_dot(x_ref[...], emb_w, emb_b)                  # (T*Bp, H/2)

    # ---- layer-0 input projection, batched over all T steps, parked in VMEM -----
    gin_ref[...] = _bf16_dot(xe, wih0, b0)                    # (T*Bp, 4H)

    # ---- 4-layer LSTM, wavefront schedule: (l, t) runs once (l, t-1) and (l-1, t)
    #      are done, so up to n_lstm independent steps are in flight concurrently.
    h = [jnp.zeros((Bp, H), jnp.float32) for _ in range(n_lstm)]
    c = [jnp.zeros((Bp, H), jnp.float32) for _ in range(n_lstm)]
    for wave in range(T + n_lstm - 1):
        for l in range(n_lstm - 1, -1, -1):   # high->low so h[l-1] is still from wave-1
            t = wave - l
            if t < 0 or t >= T:
                continue
            if l == 0:
                g = gin_ref[t * Bp:(t + 1) * Bp, :] + _bf16_dot(h[0], whh0)
            else:
                wcat, bl = lstm_rest[l - 1]
                xin = jnp.concatenate([h[l - 1], h[l]], axis=1)     # (Bp, 2H)
                g = _bf16_dot(xin, wcat, bl)                        # one fused matmul
            h[l], c[l] = _lstm_cell(g, c[l], H)

    # h_lstm (num_layers, Bp, H) packed into one (n_lstm*Bp, H) aligned slab
    xp = jnp.concatenate(h, axis=0)                           # (32, 128)
    R = n_lstm * Bp
    scale = 1.0 / math.sqrt(H // nhead)
    bias = bias_ref[...]                                      # (nhead*R, R)
    hmask = hmask_ref[...]                                    # (nhead, H)

    # ---- TransformerEncoder (post-norm, ReLU FFN), all heads fused per layer -----
    for ep in enc_p:
        qkv = _bf16_dot(xp, ep["wqkv"], ep["bqkv"])           # (R, 3H)
        q = qkv[:, 0 * H:1 * H] * scale
        k = qkv[:, 1 * H:2 * H].astype(jnp.bfloat16)
        v = qkv[:, 2 * H:3 * H]
        # one QK^T for all heads: stack lane-masked Q copies along rows
        q_stack = jnp.concatenate(
            [q * hmask[hh:hh + 1, :] for hh in range(nhead)],
            axis=0).astype(jnp.bfloat16)                      # (nhead*R, H)
        s = lax.dot_general(q_stack, k, (((1,), (1,)), ((), ())),
                            preferred_element_type=jnp.float32)   # (nhead*R, R) f32
        s = s + bias                                          # f32 additive mask
        s = s - jnp.max(s, axis=-1, keepdims=True)            # one batched softmax
        p = jnp.exp(s)
        p = (p * pl.reciprocal(jnp.sum(p, axis=-1, keepdims=True),
                               approx=True)).astype(jnp.bfloat16)
        ctx = jnp.zeros((R, H), jnp.float32)
        for hh in range(nhead):                               # disjoint lane groups
            v_h = (v * hmask[hh:hh + 1, :]).astype(jnp.bfloat16)
            ctx = ctx + jnp.dot(p[hh * R:(hh + 1) * R, :], v_h,
                                preferred_element_type=jnp.float32)
        attn = _bf16_dot(ctx, ep["wo"], ep["bo"])
        xp = _layernorm(xp + attn, ep["ln1g"][...], ep["ln1b"][...])
        ff = jnp.maximum(_bf16_dot(xp, ep["w1"], ep["b1"]), 0.0)
        ff = _bf16_dot(ff, ep["w2"], ep["b2"])
        xp = _layernorm(xp + ff, ep["ln2g"][...], ep["ln2b"][...])

    # ---- PoliticalResonanceLayer x2: linear -> phase modulation -> GELU -> LN ----
    for rp in res_p:
        y = _bf16_dot(xp, rp["w"], rp["b"])
        y = y + rp["cosph"][...] * y * 0.5
        # TODO(synk): PyTorch nn.GELU() is the exact erf form; tanh approximation used.
        y = jax.nn.gelu(y, approximate=True)
        xp = _layernorm(y, rp["g"][...], rp["beta"][...])

    # ---- heads on x[-1] (last "batch" item block), lane-dense aligned store ------
    x_last = xp[(n_lstm - 1) * Bp:n_lstm * Bp, :]             # (Bp, H), aligned
    logits = _bf16_dot(x_last, head_w, head_b)                # (Bp, 128)
    o_ref[...] = jax.nn.sigmoid(logits)                       # cols 0..6 are real


# ----------------------------------------------------------------------------
# wrapper: one pallas_call for the whole model
# ----------------------------------------------------------------------------
def political_predictor_forward(params, x, *, nhead):
    B, T, Din = x.shape
    H = params["lstm"][0]["whh"].shape[0]
    n_lstm = len(params["lstm"])
    n_enc = len(params["enc"])
    n_res = len(params["res"])
    Bp = max(8, ((B + 7) // 8) * 8)     # pad batch to the 8-sublane tile
    R = n_lstm * Bp
    OUT_PAD = 128

    # time-major padded 2-D input rows: row index = t*Bp + b (pad rows are zero)
    x_pad = jnp.zeros((Bp, T, Din), jnp.float32).at[:B].set(x.astype(jnp.float32))
    x_tb = jnp.transpose(x_pad, (1, 0, 2)).reshape(T * Bp, Din)

    # attention mask (f32, folded by XLA under jit): query r may attend key c iff
    # same lstm-layer block AND key is a real (non-padded) batch row; stacked over
    # heads along rows to match the stacked-Q score matrix.
    rows = jnp.arange(R)
    same_block = (rows[:, None] // Bp) == (rows[None, :] // Bp)
    key_real = (rows % Bp) < B
    bias = jnp.where(same_block & key_real[None, :], 0.0, -1e30).astype(jnp.float32)
    bias_stacked = jnp.tile(bias, (nhead, 1))                 # (nhead*R, R)

    hd = H // nhead
    lanes = jnp.arange(H) // hd
    head_mask = (lanes[None, :] == jnp.arange(nhead)[:, None]).astype(jnp.float32)

    # lane-dense head: pad the 7 output columns to 128 (bf16 weight), slice after.
    head_w = (jnp.zeros((H, OUT_PAD), jnp.float32)
              .at[:, :7].set(params["head_w"])).astype(jnp.bfloat16)
    head_b = jnp.zeros((1, OUT_PAD), jnp.float32).at[0, :7].set(params["head_b"])

    args = [x_tb, bias_stacked, head_mask,
            params["emb_w"], params["emb_b"].reshape(1, -1)]
    l0 = params["lstm"][0]
    args += [l0["wih"], l0["whh"], l0["b"].reshape(1, -1)]
    for lp in params["lstm"][1:]:
        # fused per-step weight: [W_ih ; W_hh] so xin = [x_t ; h_{t-1}] needs one matmul
        args += [jnp.concatenate([lp["wih"], lp["whh"]], axis=0),
                 lp["b"].reshape(1, -1)]
    for lp in params["enc"]:
        args += [lp["wqkv"], lp["bqkv"].reshape(1, -1),
                 lp["wo"], lp["bo"].reshape(1, -1),
                 lp["ln1g"].reshape(1, -1), lp["ln1b"].reshape(1, -1),
                 lp["w1"], lp["b1"].reshape(1, -1),
                 lp["w2"], lp["b2"].reshape(1, -1),
                 lp["ln2g"].reshape(1, -1), lp["ln2b"].reshape(1, -1)]
    for lp in params["res"]:
        args += [lp["w"], lp["b"].reshape(1, -1),
                 jnp.cos(lp["phase"]).reshape(1, -1),
                 lp["g"].reshape(1, -1), lp["beta"].reshape(1, -1)]
    args += [head_w, head_b]

    out = pl.pallas_call(
        functools.partial(_fused_forward_kernel, T=T, Bp=Bp, H=H, nhead=nhead,
                          n_lstm=n_lstm, n_enc=n_enc, n_res=n_res),
        out_shape=jax.ShapeDtypeStruct((Bp, OUT_PAD), jnp.float32),
        scratch_shapes=[pltpu.VMEM((T * Bp, 4 * H), jnp.float32)],
    )(*args)

    heads = out[:B, :7]
    return [heads[:, i:i + 1] for i in range(7)]


# ----------------------------------------------------------------------------
# parameter init (deterministic, synthetic). Matmul weights stored in bf16;
# biases / LayerNorm / phase / head-bias stay f32.
# NOTE: real PyTorch checkpoints store (out,in) weights and split b_ih/b_hh —
# they must be transposed / summed before use here.
# ----------------------------------------------------------------------------
def init_params(key, *, input_dim, hidden, dff, lstm_layers, enc_layers):
    H, H2 = hidden, hidden // 2
    keys = iter(jax.random.split(key, 256))
    bf = jnp.bfloat16

    def rnd(shape, scale=0.05, dtype=jnp.float32):
        return (scale * jax.random.normal(next(keys), shape, dtype=jnp.float32)).astype(dtype)

    p = {"emb_w": rnd((input_dim, H2), dtype=bf), "emb_b": rnd((H2,)),
         "lstm": [], "enc": [], "res": []}
    for l in range(lstm_layers):
        din = H2 if l == 0 else H
        p["lstm"].append(dict(wih=rnd((din, 4 * H), dtype=bf),
                              whh=rnd((H, 4 * H), dtype=bf),
                              b=rnd((4 * H,))))
    for _ in range(enc_layers):
        p["enc"].append(dict(
            wqkv=rnd((H, 3 * H), dtype=bf), bqkv=rnd((3 * H,)),
            wo=rnd((H, H), dtype=bf), bo=rnd((H,)),
            ln1g=jnp.ones((H,), jnp.float32), ln1b=jnp.zeros((H,), jnp.float32),
            w1=rnd((H, dff), dtype=bf), b1=rnd((dff,)),
            w2=rnd((dff, H), dtype=bf), b2=rnd((H,)),
            ln2g=jnp.ones((H,), jnp.float32), ln2b=jnp.zeros((H,), jnp.float32)))
    for _ in range(2):
        p["res"].append(dict(
            w=rnd((H, H), dtype=bf), b=rnd((H,)),
            phase=0.1 * jax.random.normal(next(keys), (H,), dtype=jnp.float32),
            g=jnp.ones((H,), jnp.float32), beta=jnp.zeros((H,), jnp.float32)))
    p["head_w"] = rnd((H, 7))
    p["head_b"] = rnd((7,))
    return p


# ----------------------------------------------------------------------------
if __name__ == "__main__":
    B, T, INPUT_DIM = 2, 8, 16
    HIDDEN, NHEAD, DFF = 128, 4, 256
    LSTM_LAYERS, ENC_LAYERS = 4, 2      # module defaults (4096/64/16384/16) scaled down

    key = jax.random.PRNGKey(0)
    kp, kx = jax.random.split(key)
    params = init_params(kp, input_dim=INPUT_DIM, hidden=HIDDEN, dff=DFF,
                         lstm_layers=LSTM_LAYERS, enc_layers=ENC_LAYERS)
    x = jax.random.normal(kx, (B, T, INPUT_DIM), dtype=jnp.float32)

    fwd = jax.jit(functools.partial(political_predictor_forward, nhead=NHEAD))
    outs = jax.block_until_ready(fwd(params, x))

    assert len(outs) == 7
    for o in outs:
        assert o.shape == (B, 1)
        assert bool(jnp.all(jnp.isfinite(o)))
        assert bool(jnp.all((o >= 0.0) & (o <= 1.0)))
    print("KERNEL_OK")
</pallas_src>

<mosaic_0001>
module attributes {stable_mosaic.version = 11 : i64} {
  func.func @_fused_forward_kernel(%arg0: memref<64x16xf32, #tpu.memory_space<vmem>>, %arg1: memref<128x32xf32, #tpu.memory_space<vmem>>, %arg2: memref<4x128xf32, #tpu.memory_space<vmem>>, %arg3: memref<16x64xbf16, #tpu.memory_space<vmem>>, %arg4: memref<1x64xf32, #tpu.memory_space<vmem>>, %arg5: memref<64x512xbf16, #tpu.memory_space<vmem>>, %arg6: memref<128x512xbf16, #tpu.memory_space<vmem>>, %arg7: memref<1x512xf32, #tpu.memory_space<vmem>>, %arg8: memref<256x512xbf16, #tpu.memory_space<vmem>>, %arg9: memref<1x512xf32, #tpu.memory_space<vmem>>, %arg10: memref<256x512xbf16, #tpu.memory_space<vmem>>, %arg11: memref<1x512xf32, #tpu.memory_space<vmem>>, %arg12: memref<256x512xbf16, #tpu.memory_space<vmem>>, %arg13: memref<1x512xf32, #tpu.memory_space<vmem>>, %arg14: memref<128x384xbf16, #tpu.memory_space<vmem>>, %arg15: memref<1x384xf32, #tpu.memory_space<vmem>>, %arg16: memref<128x128xbf16, #tpu.memory_space<vmem>>, %arg17: memref<1x128xf32, #tpu.memory_space<vmem>>, %arg18: memref<1x128xf32, #tpu.memory_space<vmem>>, %arg19: memref<1x128xf32, #tpu.memory_space<vmem>>, %arg20: memref<128x256xbf16, #tpu.memory_space<vmem>>, %arg21: memref<1x256xf32, #tpu.memory_space<vmem>>, %arg22: memref<256x128xbf16, #tpu.memory_space<vmem>>, %arg23: memref<1x128xf32, #tpu.memory_space<vmem>>, %arg24: memref<1x128xf32, #tpu.memory_space<vmem>>, %arg25: memref<1x128xf32, #tpu.memory_space<vmem>>, %arg26: memref<128x384xbf16, #tpu.memory_space<vmem>>, %arg27: memref<1x384xf32, #tpu.memory_space<vmem>>, %arg28: memref<128x128xbf16, #tpu.memory_space<vmem>>, %arg29: memref<1x128xf32, #tpu.memory_space<vmem>>, %arg30: memref<1x128xf32, #tpu.memory_space<vmem>>, %arg31: memref<1x128xf32, #tpu.memory_space<vmem>>, %arg32: memref<128x256xbf16, #tpu.memory_space<vmem>>, %arg33: memref<1x256xf32, #tpu.memory_space<vmem>>, %arg34: memref<256x128xbf16, #tpu.memory_space<vmem>>, %arg35: memref<1x128xf32, #tpu.memory_space<vmem>>, %arg36: memref<1x128xf32, #tpu.memory_space<vmem>>, %arg37: memref<1x128xf32, #tpu.memory_space<vmem>>, %arg38: memref<128x128xbf16, #tpu.memory_space<vmem>>, %arg39: memref<1x128xf32, #tpu.memory_space<vmem>>, %arg40: memref<1x128xf32, #tpu.memory_space<vmem>>, %arg41: memref<1x128xf32, #tpu.memory_space<vmem>>, %arg42: memref<1x128xf32, #tpu.memory_space<vmem>>, %arg43: memref<128x128xbf16, #tpu.memory_space<vmem>>, %arg44: memref<1x128xf32, #tpu.memory_space<vmem>>, %arg45: memref<1x128xf32, #tpu.memory_space<vmem>>, %arg46: memref<1x128xf32, #tpu.memory_space<vmem>>, %arg47: memref<1x128xf32, #tpu.memory_space<vmem>>, %arg48: memref<128x128xbf16, #tpu.memory_space<vmem>>, %arg49: memref<1x128xf32, #tpu.memory_space<vmem>>, %arg50: memref<8x128xf32, #tpu.memory_space<vmem>>, %arg51: memref<64x512xf32, #tpu.memory_space<vmem>>) attributes {dimension_semantics = [], scalar_prefetch = 0 : i64, scratch_operands = 1 : i64, tpu.core_type = #tpu.core_type<tc>} {
    %c0 = arith.constant 0 : index
    %c0_0 = arith.constant 0 : index
    %0 = vector.load %arg0[%c0, %c0_0] : memref<64x16xf32, #tpu.memory_space<vmem>>, vector<64x16xf32>
    %1 = arith.truncf %0 : vector<64x16xf32> to vector<64x16xbf16>
    %c0_1 = arith.constant 0 : index
    %c0_2 = arith.constant 0 : index
    %2 = vector.load %arg3[%c0_1, %c0_2] : memref<16x64xbf16, #tpu.memory_space<vmem>>, vector<16x64xbf16>
    %cst = arith.constant dense<0.000000e+00> : vector<64x64xf32>
    %3 = tpu.matmul %1, %2, %cst {dimension_numbers = #tpu.dot_dimension_numbers<[1], [0], [0], [1], [0, 0, 1, 1], [], []>} : vector<64x16xbf16>, vector<16x64xbf16>, vector<64x64xf32> -> vector<64x64xf32>
    %c0_3 = arith.constant 0 : index
    %c0_4 = arith.constant 0 : index
    %4 = vector.load %arg4[%c0_3, %c0_4] : memref<1x64xf32, #tpu.memory_space<vmem>>, vector<1x64xf32>
    %5 = vector.broadcast %4 : vector<1x64xf32> to vector<64x64xf32>
    %6 = arith.addf %3, %5 : vector<64x64xf32>
    %7 = arith.truncf %6 : vector<64x64xf32> to vector<64x64xbf16>
    %c0_5 = arith.constant 0 : index
    %c0_6 = arith.constant 0 : index
    %8 = vector.load %arg5[%c0_5, %c0_6] : memref<64x512xbf16, #tpu.memory_space<vmem>>, vector<64x512xbf16>
    %cst_7 = arith.constant dense<0.000000e+00> : vector<64x512xf32>
    %9 = tpu.matmul %7, %8, %cst_7 {dimension_numbers = #tpu.dot_dimension_numbers<[1], [0], [0], [1], [0, 0, 1, 1], [], []>} : vector<64x64xbf16>, vector<64x512xbf16>, vector<64x512xf32> -> vector<64x512xf32>
    %c0_8 = arith.constant 0 : index
    %c0_9 = arith.constant 0 : index
    %10 = vector.load %arg7[%c0_8, %c0_9] : memref<1x512xf32, #tpu.memory_space<vmem>>, vector<1x512xf32>
    %11 = vector.broadcast %10 : vector<1x512xf32> to vector<64x512xf32>
    %12 = arith.addf %9, %11 : vector<64x512xf32>
    %c0_10 = arith.constant 0 : index
    %c0_11 = arith.constant 0 : index
    %13 = vector.load %arg51[%c0_10, %c0_11] : memref<64x512xf32, #tpu.memory_space<vmem>>, vector<64x512xf32>
    tpu.vector_store %arg51[%c0_10, %c0_11], %12 {strides = array<i32>} : memref<64x512xf32, #tpu.memory_space<vmem>>, vector<64x512xf32>,
    %cst_12 = arith.constant 0.000000e+00 : f32
    %14 = vector.broadcast %cst_12 : f32 to vector<8x128xf32>
    %cst_13 = arith.constant 0.000000e+00 : f32
    %15 = vector.broadcast %cst_13 : f32 to vector<8x128xf32>
    %cst_14 = arith.constant 0.000000e+00 : f32
    %16 = vector.broadcast %cst_14 : f32 to vector<8x128xf32>
    %cst_15 = arith.constant 0.000000e+00 : f32
    %17 = vector.broadcast %cst_15 : f32 to vector<8x128xf32>
    %cst_16 = arith.constant 0.000000e+00 : f32
    %18 = vector.broadcast %cst_16 : f32 to vector<8x128xf32>
    %cst_17 = arith.constant 0.000000e+00 : f32
    %19 = vector.broadcast %cst_17 : f32 to vector<8x128xf32>
    %cst_18 = arith.constant 0.000000e+00 : f32
    %20 = vector.broadcast %cst_18 : f32 to vector<8x128xf32>
    %cst_19 = arith.constant 0.000000e+00 : f32
    %21 = vector.broadcast %cst_19 : f32 to vector<8x128xf32>
    %c0_20 = arith.constant 0 : index
    %c0_21 = arith.constant 0 : index
    %22 = vector.load %arg51[%c0_20, %c0_21] : memref<64x512xf32, #tpu.memory_space<vmem>>, vector<8x512xf32>
    %23 = arith.truncf %14 : vector<8x128xf32> to vector<8x128xbf16>
    %c0_22 = arith.constant 0 : index
    %c0_23 = arith.constant 0 : index
    %24 = vector.load %arg6[%c0_22, %c0_23] : memref<128x512xbf16, #tpu.memory_space<vmem>>, vector<128x512xbf16>
    %cst_24 = arith.constant dense<0.000000e+00> : vector<8x512xf32>
    %25 = tpu.matmul %23, %24, %cst_24 {dimension_numbers = #tpu.dot_dimension_numbers<[1], [0], [0], [1], [0, 0, 1, 1], [], []>} : vector<8x128xbf16>, vector<128x512xbf16>, vector<8x512xf32> -> vector<8x512xf32>
    %26 = arith.addf %22, %25 : vector<8x512xf32>
    %27 = vector.extract_strided_slice %26 {offsets = [0, 0], sizes = [8, 128], strides = [1, 1]} : vector<8x512xf32> to vector<8x128xf32>
    %28 = arith.negf %27 : vector<8x128xf32>
    %29 = math.exp %28 : vector<8x128xf32>
    %cst_25 = arith.constant 1.000000e+00 : f32
    %30 = vector.broadcast %cst_25 : f32 to vector<8x128xf32>
    %31 = arith.addf %30, %29 : vector<8x128xf32>
    %32 = arith.divf %30, %31 : vector<8x128xf32>
    %33 = vector.extract_strided_slice %26 {offsets = [0, 128], sizes = [8, 128], strides = [1, 1]} : vector<8x512xf32> to vector<8x128xf32>
    %34 = arith.negf %33 : vector<8x128xf32>
    %35 = math.exp %34 : vector<8x128xf32>
    %cst_26 = arith.constant 1.000000e+00 : f32
    %36 = vector.broadcast %cst_26 : f32 to vector<8x128xf32>
    %37 = arith.addf %36, %35 : vector<8x128xf32>
    %38 = arith.divf %36, %37 : vector<8x128xf32>
    %39 = vector.extract_strided_slice %26 {offsets = [0, 256], sizes = [8, 128], strides = [1, 1]} : vector<8x512xf32> to vector<8x128xf32>
    %40 = math.tanh %39 : vector<8x128xf32>
    %41 = vector.extract_strided_slice %26 {offsets = [0, 384], sizes = [8, 128], strides = [1, 1]} : vector<8x512xf32> to vector<8x128xf32>
    %42 = arith.negf %41 : vector<8x128xf32>
    %43 = math.exp %42 : vector<8x128xf32>
    %cst_27 = arith.constant 1.000000e+00 : f32
    %44 = vector.broadcast %cst_27 : f32 to vector<8x128xf32>
    %45 = arith.addf %44, %43 : vector<8x128xf32>
    %46 = arith.divf %44, %45 : vector<8x128xf32>
    %47 = arith.mulf %38, %18 : vector<8x128xf32>
    %48 = arith.mulf %32, %40 : vector<8x128xf32>
    %49 = arith.addf %47, %48 : vector<8x128xf32>
    %50 = math.tanh %49 : vector<8x128xf32>
    %51 = arith.mulf %46, %50 : vector<8x128xf32>
    %52 = tpu.concatenate %51, %15 in 1 : vector<8x128xf32>, vector<8x128xf32> -> vector<8x256xf32>
    %53 = arith.truncf %52 : vector<8x256xf32> to vector<8x256xbf16>
    %c0_28 = arith.constant 0 : index
    %c0_29 = arith.constant 0 : index
    %54 = vector.load %arg8[%c0_28, %c0_29] : memref<256x512xbf16, #tpu.memory_space<vmem>>, vector<256x512xbf16>
    %cst_30 = arith.constant dense<0.000000e+00> : vector<8x512xf32>
    %55 = tpu.matmul %53, %54, %cst_30 {dimension_numbers = #tpu.dot_dimension_numbers<[1], [0], [0], [1], [0, 0, 1, 1], [], []>} : vector<8x256xbf16>, vector<256x512xbf16>, vector<8x512xf32> -> vector<8x512xf32>
    %c0_31 = arith.constant 0 : index
    %c0_32 = arith.constant 0 : index
    %56 = vector.load %arg9[%c0_31, %c0_32] : memref<1x512xf32, #tpu.memory_space<vmem>>, vector<1x512xf32>
    %57 = vector.broadcast %56 : vector<1x512xf32> to vector<8x512xf32>
    %58 = arith.addf %55, %57 : vector<8x512xf32>
    %59 = vector.extract_strided_slice %58 {offsets = [0, 0], sizes = [8, 128], strides = [1, 1]} : vector<8x512xf32> to vector<8x128xf32>
    %60 = arith.negf %59 : vector<8x128xf32>
    %61 = math.exp %60 : vector<8x128xf32>
    %cst_33 = arith.constant 1.000000e+00 : f32
    %62 = vector.broadcast %cst_33 : f32 to vector<8x128xf32>
    %63 = arith.addf %62, %61 : vector<8x128xf32>
    %64 = arith.divf %62, %63 : vector<8x128xf32>
    %65 = vector.extract_strided_slice %58 {offsets = [0, 128], sizes = [8, 128], strides = [1, 1]} : vector<8x512xf32> to vector<8x128xf32>
    %66 = arith.negf %65 : vector<8x128xf32>
    %67 = math.exp %66 : vector<8x128xf32>
    %cst_34 = arith.constant 1.000000e+00 : f32
    %68 = vector.broadcast %cst_34 : f32 to vector<8x128xf32>
    %69 = arith.addf %68, %67 : vector<8x128xf32>
    %70 = arith.divf %68, %69 : vector<8x128xf32>
    %71 = vector.extract_strided_slice %58 {offsets = [0, 256], sizes = [8, 128], strides = [1, 1]} : vector<8x512xf32> to vector<8x128xf32>
    %72 = math.tanh %71 : vector<8x128xf32>
    %73 = vector.extract_strided_slice %58 {offsets = [0, 384], sizes = [8, 128], strides = [1, 1]} : vector<8x512xf32> to vector<8x128xf32>
    %74 = arith.negf %73 : vector<8x128xf32>
    %75 = math.exp %74 : vector<8x128xf32>
    %cst_35 = arith.constant 1.000000e+00 : f32
    %76 = vector.broadcast %cst_35 : f32 to vector<8x128xf32>
    %77 = arith.addf %76, %75 : vector<8x128xf32>
    %78 = arith.divf %76, %77 : vector<8x128xf32>
    %79 = arith.mulf %70, %19 : vector<8x128xf32>
    %80 = arith.mulf %64, %72 : vector<8x128xf32>
    %81 = arith.addf %79, %80 : vector<8x128xf32>
    %82 = math.tanh %81 : vector<8x128xf32>
    %83 = arith.mulf %78, %82 : vector<8x128xf32>
    %c8 = arith.constant 8 : index
    %c0_36 = arith.constant 0 : index
    %84 = vector.load %arg51[%c8, %c0_36] : memref<64x512xf32, #tpu.memory_space<vmem>>, vector<8x512xf32>
    %85 = arith.truncf %51 : vector<8x128xf32> to vector<8x128xbf16>
    %c0_37 = arith.constant 0 : index
    %c0_38 = arith.constant 0 : index
    %86 = vector.load %arg6[%c0_37, %c0_38] : memref<128x512xbf16, #tpu.memory_space<vmem>>, vector<128x512xbf16>
    %cst_39 = arith.constant dense<0.000000e+00> : vector<8x512xf32>
    %87 = tpu.matmul %85, %86, %cst_39 {dimension_numbers = #tpu.dot_dimension_numbers<[1], [0], [0], [1], [0, 0, 1, 1], [], []>} : vector<8x128xbf16>, vector<128x512xbf16>, vector<8x512xf32> -> vector<8x512xf32>
    %88 = arith.addf %84, %87 : vector<8x512xf32>
    %89 = vector.extract_strided_slice %88 {offsets = [0, 0], sizes = [8, 128], strides = [1, 1]} : vector<8x512xf32> to vector<8x128xf32>
    %90 = arith.negf %89 : vector<8x128xf32>
    %91 = math.exp %90 : vector<8x128xf32>
    %cst_40 = arith.constant 1.000000e+00 : f32
    %92 = vector.broadcast %cst_40 : f32 to vector<8x128xf32>
    %93 = arith.addf %92, %91 : vector<8x128xf32>
    %94 = arith.divf %92, %93 : vector<8x128xf32>
    %95 = vector.extract_strided_slice %88 {offsets = [0, 128], sizes = [8, 128], strides = [1, 1]} : vector<8x512xf32> to vector<8x128xf32>
    %96 = arith.negf %95 : vector<8x128xf32>
    %97 = math.exp %96 : vector<8x128xf32>
    %cst_41 = arith.constant 1.000000e+00 : f32
    %98 = vector.broadcast %cst_41 : f32 to vector<8x128xf32>
    %99 = arith.addf %98, %97 : vector<8x128xf32>
    %100 = arith.divf %98, %99 : vector<8x128xf32>
    %101 = vector.extract_strided_slice %88 {offsets = [0, 256], sizes = [8, 128], strides = [1, 1]} : vector<8x512xf32> to vector<8x128xf32>
    %102 = math.tanh %101 : vector<8x128xf32>
    %103 = vector.extract_strided_slice %88 {offsets = [0, 384], sizes = [8, 128], strides = [1, 1]} : vector<8x512xf32> to vector<8x128xf32>
    %104 = arith.negf %103 : vector<8x128xf32>
    %105 = math.exp %104 : vector<8x128xf32>
    %cst_42 = arith.constant 1.000000e+00 : f32
    %106 = vector.broadcast %cst_42 : f32 to vector<8x128xf32>
    %107 = arith.addf %106, %105 : vector<8x128xf32>
    %108 = arith.divf %106, %107 : vector<8x128xf32>
    %109 = arith.mulf %100, %49 : vector<8x128xf32>
    %110 = arith.mulf %94, %102 : vector<8x128xf32>
    %111 = arith.addf %109, %110 : vector<8x128xf32>
    %112 = math.tanh %111 : vector<8x128xf32>
    %113 = arith.mulf %108, %112 : vector<8x128xf32>
    %114 = tpu.concatenate %83, %16 in 1 : vector<8x128xf32>, vector<8x128xf32> -> vector<8x256xf32>
    %115 = arith.truncf %114 : vector<8x256xf32> to vector<8x256xbf16>
    %c0_43 = arith.constant 0 : index
    %c0_44 = arith.constant 0 : index
    %116 = vector.load %arg10[%c0_43, %c0_44] : memref<256x512xbf16, #tpu.memory_space<vmem>>, vector<256x512xbf16>
    %cst_45 = arith.constant dense<0.000000e+00> : vector<8x512xf32>
    %117 = tpu.matmul %115, %116, %cst_45 {dimension_numbers = #tpu.dot_dimension_numbers<[1], [0], [0], [1], [0, 0, 1, 1], [], []>} : vector<8x256xbf16>, vector<256x512xbf16>, vector<8x512xf32> -> vector<8x512xf32>
    %c0_46 = arith.constant 0 : index
    %c0_47 = arith.constant 0 : index
    %118 = vector.load %arg11[%c0_46, %c0_47] : memref<1x512xf32, #tpu.memory_space<vmem>>, vector<1x512xf32>
    %119 = vector.broadcast %118 : vector<1x512xf32> to vector<8x512xf32>
    %120 = arith.addf %117, %119 : vector<8x512xf32>
    %121 = vector.extract_strided_slice %120 {offsets = [0, 0], sizes = [8, 128], strides = [1, 1]} : vector<8x512xf32> to vector<8x128xf32>
    %122 = arith.negf %121 : vector<8x128xf32>
    %123 = math.exp %122 : vector<8x128xf32>
    %cst_48 = arith.constant 1.000000e+00 : f32
    %124 = vector.broadcast %cst_48 : f32 to vector<8x128xf32>
    %125 = arith.addf %124, %123 : vector<8x128xf32>
    %126 = arith.divf %124, %125 : vector<8x128xf32>
    %127 = vector.extract_strided_slice %120 {offsets = [0, 128], sizes = [8, 128], strides = [1, 1]} : vector<8x512xf32> to vector<8x128xf32>
    %128 = arith.negf %127 : vector<8x128xf32>
    %129 = math.exp %128 : vector<8x128xf32>
    %cst_49 = arith.constant 1.000000e+00 : f32
    %130 = vector.broadcast %cst_49 : f32 to vector<8x128xf32>
    %131 = arith.addf %130, %129 : vector<8x128xf32>
    %132 = arith.divf %130, %131 : vector<8x128xf32>
    %133 = vector.extract_strided_slice %120 {offsets = [0, 256], sizes = [8, 128], strides = [1, 1]} : vector<8x512xf32> to vector<8x128xf32>
    %134 = math.tanh %133 : vector<8x128xf32>
    %135 = vector.extract_strided_slice %120 {offsets = [0, 384], sizes = [8, 128], strides = [1, 1]} : vector<8x512xf32> to vector<8x128xf32>
    %136 = arith.negf %135 : vector<8x128xf32>
    %137 = math.exp %136 : vector<8x128xf32>
    %cst_50 = arith.constant 1.000000e+00 : f32
    %138 = vector.broadcast %cst_50 : f32 to vector<8x128xf32>
    %139 = arith.addf %138, %137 : vector<8x128xf32>
    %140 = arith.divf %138, %139 : vector<8x128xf32>
    %141 = arith.mulf %132, %20 : vector<8x128xf32>
    %142 = arith.mulf %126, %134 : vector<8x128xf32>
    %143 = arith.addf %141, %142 : vector<8x128xf32>
    %144 = math.tanh %143 : vector<8x128xf32>
    %145 = arith.mulf %140, %144 : vector<8x128xf32>
    %146 = tpu.concatenate %113, %83 in 1 : vector<8x128xf32>, vector<8x128xf32> -> vector<8x256xf32>
    %147 = arith.truncf %146 : vector<8x256xf32> to vector<8x256xbf16>
    %c0_51 = arith.constant 0 : index
    %c0_52 = arith.constant 0 : index
    %148 = vector.load %arg8[%c0_51, %c0_52] : memref<256x512xbf16, #tpu.memory_space<vmem>>, vector<256x512xbf16>
    %cst_53 = arith.constant dense<0.000000e+00> : vector<8x512xf32>
    %149 = tpu.matmul %147, %148, %cst_53 {dimension_numbers = #tpu.dot_dimension_numbers<[1], [0], [0], [1], [0, 0, 1, 1], [], []>} : vector<8x256xbf16>, vector<256x512xbf16>, vector<8x512xf32> -> vector<8x512xf32>
    %c0_54 = arith.constant 0 : index
    %c0_55 = arith.constant 0 : index
    %150 = vector.load %arg9[%c0_54, %c0_55] : memref<1x512xf32, #tpu.memory_space<vmem>>, vector<1x512xf32>
    %151 = vector.broadcast %150 : vector<1x512xf32> to vector<8x512xf32>
    %152 = arith.addf %149, %151 : vector<8x512xf32>
    %153 = vector.extract_strided_slice %152 {offsets = [0, 0], sizes = [8, 128], strides = [1, 1]} : vector<8x512xf32> to vector<8x128xf32>
    %154 = arith.negf %153 : vector<8x128xf32>
    %155 = math.exp %154 : vector<8x128xf32>
    %cst_56 = arith.constant 1.000000e+00 : f32
    %156 = vector.broadcast %cst_56 : f32 to vector<8x128xf32>
    %157 = arith.addf %156, %155 : vector<8x128xf32>
    %158 = arith.divf %156, %157 : vector<8x128xf32>
    %159 = vector.extract_strided_slice %152 {offsets = [0, 128], sizes = [8, 128], strides = [1, 1]} : vector<8x512xf32> to vector<8x128xf32>
    %160 = arith.negf %159 : vector<8x128xf32>
    %161 = math.exp %160 : vector<8x128xf32>
    %cst_57 = arith.constant 1.000000e+00 : f32
    %162 = vector.broadcast %cst_57 : f32 to vector<8x128xf32>
    %163 = arith.addf %162, %161 : vector<8x128xf32>
    %164 = arith.divf %162, %163 : vector<8x128xf32>
    %165 = vector.extract_strided_slice %152 {offsets = [0, 256], sizes = [8, 128], strides = [1, 1]} : vector<8x512xf32> to vector<8x128xf32>
    %166 = math.tanh %165 : vector<8x128xf32>
    %167 = vector.extract_strided_slice %152 {offsets = [0, 384], sizes = [8, 128], strides = [1, 1]} : vector<8x512xf32> to vector<8x128xf32>
    %168 = arith.negf %167 : vector<8x128xf32>
    %169 = math.exp %168 : vector<8x128xf32>
    %cst_58 = arith.constant 1.000000e+00 : f32
    %170 = vector.broadcast %cst_58 : f32 to vector<8x128xf32>
    %171 = arith.addf %170, %169 : vector<8x128xf32>
    %172 = arith.divf %170, %171 : vector<8x128xf32>
    %173 = arith.mulf %164, %81 : vector<8x128xf32>
    %174 = arith.mulf %158, %166 : vector<8x128xf32>
    %175 = arith.addf %173, %174 : vector<8x128xf32>
    %176 = math.tanh %175 : vector<8x128xf32>
    %177 = arith.mulf %172, %176 : vector<8x128xf32>
    %c16 = arith.constant 16 : index
    %c0_59 = arith.constant 0 : index
    %178 = vector.load %arg51[%c16, %c0_59] : memref<64x512xf32, #tpu.memory_space<vmem>>, vector<8x512xf32>
    %179 = arith.truncf %113 : vector<8x128xf32> to vector<8x128xbf16>
    %c0_60 = arith.constant 0 : index
    %c0_61 = arith.constant 0 : index
    %180 = vector.load %arg6[%c0_60, %c0_61] : memref<128x512xbf16, #tpu.memory_space<vmem>>, vector<128x512xbf16>
    %cst_62 = arith.constant dense<0.000000e+00> : vector<8x512xf32>
    %181 = tpu.matmul %179, %180, %cst_62 {dimension_numbers = #tpu.dot_dimension_numbers<[1], [0], [0], [1], [0, 0, 1, 1], [], []>} : vector<8x128xbf16>, vector<128x512xbf16>, vector<8x512xf32> -> vector<8x512xf32>
    %182 = arith.addf %178, %181 : vector<8x512xf32>
    %183 = vector.extract_strided_slice %182 {offsets = [0, 0], sizes = [8, 128], strides = [1, 1]} : vector<8x512xf32> to vector<8x128xf32>
    %184 = arith.negf %183 : vector<8x128xf32>
    %185 = math.exp %184 : vector<8x128xf32>
    %cst_63 = arith.constant 1.000000e+00 : f32
    %186 = vector.broadcast %cst_63 : f32 to vector<8x128xf32>
    %187 = arith.addf %186, %185 : vector<8x128xf32>
    %188 = arith.divf %186, %187 : vector<8x128xf32>
    %189 = vector.extract_strided_slice %182 {offsets = [0, 128], sizes = [8, 128], strides = [1, 1]} : vector<8x512xf32> to vector<8x128xf32>
    %190 = arith.negf %189 : vector<8x128xf32>
    %191 = math.exp %190 : vector<8x128xf32>
    %cst_64 = arith.constant 1.000000e+00 : f32
    %192 = vector.broadcast %cst_64 : f32 to vector<8x128xf32>
    %193 = arith.addf %192, %191 : vector<8x128xf32>
    %194 = arith.divf %192, %193 : vector<8x128xf32>
    %195 = vector.extract_strided_slice %182 {offsets = [0, 256], sizes = [8, 128], strides = [1, 1]} : vector<8x512xf32> to vector<8x128xf32>
    %196 = math.tanh %195 : vector<8x128xf32>
    %197 = vector.extract_strided_slice %182 {offsets = [0, 384], sizes = [8, 128], strides = [1, 1]} : vector<8x512xf32> to vector<8x128xf32>
    %198 = arith.negf %197 : vector<8x128xf32>
    %199 = math.exp %198 : vector<8x128xf32>
    %cst_65 = arith.constant 1.000000e+00 : f32
    %200 = vector.broadcast %cst_65 : f32 to vector<8x128xf32>
    %201 = arith.addf %200, %199 : vector<8x128xf32>
    %202 = arith.divf %200, %201 : vector<8x128xf32>
    %203 = arith.mulf %194, %111 : vector<8x128xf32>
    %204 = arith.mulf %188, %196 : vector<8x128xf32>
    %205 = arith.addf %203, %204 : vector<8x128xf32>
    %206 = math.tanh %205 : vector<8x128xf32>
    %207 = arith.mulf %202, %206 : vector<8x128xf32>
    %208 = tpu.concatenate %145, %17 in 1 : vector<8x128xf32>, vector<8x128xf32> -> vector<8x256xf32>
    %209 = arith.truncf %208 : vector<8x256xf32> to vector<8x256xbf16>
    %c0_66 = arith.constant 0 : index
    %c0_67 = arith.constant 0 : index
    %210 = vector.load %arg12[%c0_66, %c0_67] : memref<256x512xbf16, #tpu.memory_space<vmem>>, vector<256x512xbf16>
    %cst_68 = arith.constant dense<0.000000e+00> : vector<8x512xf32>
    %211 = tpu.matmul %209, %210, %cst_68 {dimension_numbers = #tpu.dot_dimension_numbers<[1], [0], [0], [1], [0, 0, 1, 1], [], []>} : vector<8x256xbf16>, vector<256x512xbf16>, vector<8x512xf32> -> vector<8x512xf32>
    %c0_69 = arith.constant 0 : index
    %c0_70 = arith.constant 0 : index
    %212 = vector.load %arg13[%c0_69, %c0_70] : memref<1x512xf32, #tpu.memory_space<vmem>>, vector<1x512xf32>
    %213 = vector.broadcast %212 : vector<1x512xf32> to vector<8x512xf32>
    %214 = arith.addf %211, %213 : vector<8x512xf32>
    %215 = vector.extract_strided_slice %214 {offsets = [0, 0], sizes = [8, 128], strides = [1, 1]} : vector<8x512xf32> to vector<8x128xf32>
    %216 = arith.negf %215 : vector<8x128xf32>
    %217 = math.exp %216 : vector<8x128xf32>
    %cst_71 = arith.constant 1.000000e+00 : f32
    %218 = vector.broadcast %cst_71 : f32 to vector<8x128xf32>
    %219 = arith.addf %218, %217 : vector<8x128xf32>
    %220 = arith.divf %218, %219 : vector<8x128xf32>
    %221 = vector.extract_strided_slice %214 {offsets = [0, 128], sizes = [8, 128], strides = [1, 1]} : vector<8x512xf32> to vector<8x128xf32>
    %222 = arith.negf %221 : vector<8x128xf32>
    %223 = math.exp %222 : vector<8x128xf32>
    %cst_72 = arith.constant 1.000000e+00 : f32
    %224 = vector.broadcast %cst_72 : f32 to vector<8x128xf32>
    %225 = arith.addf %224, %223 : vector<8x128xf32>
    %226 = arith.divf %224, %225 : vector<8x128xf32>
    %227 = vector.extract_strided_slice %214 {offsets = [0, 256], sizes = [8, 128], strides = [1, 1]} : vector<8x512xf32> to vector<8x128xf32>
    %228 = math.tanh %227 : vector<8x128xf32>
    %229 = vector.extract_strided_slice %214 {offsets = [0, 384], sizes = [8, 128], strides = [1, 1]} : vector<8x512xf32> to vector<8x128xf32>
    %230 = arith.negf %229 : vector<8x128xf32>
    %231 = math.exp %230 : vector<8x128xf32>
    %cst_73 = arith.constant 1.000000e+00 : f32
    %232 = vector.broadcast %cst_73 : f32 to vector<8x128xf32>
    %233 = arith.addf %232, %231 : vector<8x128xf32>
    %234 = arith.divf %232, %233 : vector<8x128xf32>
    %235 = arith.mulf %226, %21 : vector<8x128xf32>
    %236 = arith.mulf %220, %228 : vector<8x128xf32>
    %237 = arith.addf %235, %236 : vector<8x128xf32>
    %238 = math.tanh %237 : vector<8x128xf32>
    %239 = arith.mulf %234, %238 : vector<8x128xf32>
    %240 = tpu.concatenate %177, %145 in 1 : vector<8x128xf32>, vector<8x128xf32> -> vector<8x256xf32>
    %241 = arith.truncf %240 : vector<8x256xf32> to vector<8x256xbf16>
    %c0_74 = arith.constant 0 : index
    %c0_75 = arith.constant 0 : index
    %242 = vector.load %arg10[%c0_74, %c0_75] : memref<256x512xbf16, #tpu.memory_space<vmem>>, vector<256x512xbf16>
    %cst_76 = arith.constant dense<0.000000e+00> : vector<8x512xf32>
    %243 = tpu.matmul %241, %242, %cst_76 {dimension_numbers = #tpu.dot_dimension_numbers<[1], [0], [0], [1], [0, 0, 1, 1], [], []>} : vector<8x256xbf16>, vector<256x512xbf16>, vector<8x512xf32> -> vector<8x512xf32>
    %c0_77 = arith.constant 0 : index
    %c0_78 = arith.constant 0 : index
    %244 = vector.load %arg11[%c0_77, %c0_78] : memref<1x512xf32, #tpu.memory_space<vmem>>, vector<1x512xf32>
    %245 = vector.broadcast %244 : vector<1x512xf32> to vector<8x512xf32>
    %246 = arith.addf %243, %245 : vector<8x512xf32>
    %247 = vector.extract_strided_slice %246 {offsets = [0, 0], sizes = [8, 128], strides = [1, 1]} : vector<8x512xf32> to vector<8x128xf32>
    %248 = arith.negf %247 : vector<8x128xf32>
    %249 = math.exp %248 : vector<8x128xf32>
    %cst_79 = arith.constant 1.000000e+00 : f32
    %250 = vector.broadcast %cst_79 : f32 to vector<8x128xf32>
    %251 = arith.addf %250, %249 : vector<8x128xf32>
    %252 = arith.divf %250, %251 : vector<8x128xf32>
    %253 = vector.extract_strided_slice %246 {offsets = [0, 128], sizes = [8, 128], strides = [1, 1]} : vector<8x512xf32> to vector<8x128xf32>
    %254 = arith.negf %253 : vector<8x128xf32>
    %255 = math.exp %254 : vector<8x128xf32>
    %cst_80 = arith.constant 1.000000e+00 : f32
    %256 = vector.broadcast %cst_80 : f32 to vector<8x128xf32>
    %257 = arith.addf %256, %255 : vector<8x128xf32>
    %258 = arith.divf %256, %257 : vector<8x128xf32>
    %259 = vector.extract_strided_slice %246 {offsets = [0, 256], sizes = [8, 128], strides = [1, 1]} : vector<8x512xf32> to vector<8x128xf32>
    %260 = math.tanh %259 : vector<8x128xf32>
    %261 = vector.extract_strided_slice %246 {offsets = [0, 384], sizes = [8, 128], strides = [1, 1]} : vector<8x512xf32> to vector<8x128xf32>
    %262 = arith.negf %261 : vector<8x128xf32>
    %263 = math.exp %262 : vector<8x128xf32>
    %cst_81 = arith.constant 1.000000e+00 : f32
    %264 = vector.broadcast %cst_81 : f32 to vector<8x128xf32>
    %265 = arith.addf %264, %263 : vector<8x128xf32>
    %266 = arith.divf %264, %265 : vector<8x128xf32>
    %267 = arith.mulf %258, %143 : vector<8x128xf32>
    %268 = arith.mulf %252, %260 : vector<8x128xf32>
    %269 = arith.addf %267, %268 : vector<8x128xf32>
    %270 = math.tanh %269 : vector<8x128xf32>
    %271 = arith.mulf %266, %270 : vector<8x128xf32>
    %272 = tpu.concatenate %207, %177 in 1 : vector<8x128xf32>, vector<8x128xf32> -> vector<8x256xf32>
    %273 = arith.truncf %272 : vector<8x256xf32> to vector<8x256xbf16>
    %c0_82 = arith.constant 0 : index
    %c0_83 = arith.constant 0 : index
    %274 = vector.load %arg8[%c0_82, %c0_83] : memref<256x512xbf16, #tpu.memory_space<vmem>>, vector<256x512xbf16>
    %cst_84 = arith.constant dense<0.000000e+00> : vector<8x512xf32>
    %275 = tpu.matmul %273, %274, %cst_84 {dimension_numbers = #tpu.dot_dimension_numbers<[1], [0], [0], [1], [0, 0, 1, 1], [], []>} : vector<8x256xbf16>, vector<256x512xbf16>, vector<8x512xf32> -> vector<8x512xf32>
    %c0_85 = arith.constant 0 : index
    %c0_86 = arith.constant 0 : index
    %276 = vector.load %arg9[%c0_85, %c0_86] : memref<1x512xf32, #tpu.memory_space<vmem>>, vector<1x512xf32>
    %277 = vector.broadcast %276 : vector<1x512xf32> to vector<8x512xf32>
    %278 = arith.addf %275, %277 : vector<8x512xf32>
    %279 = vector.extract_strided_slice %278 {offsets = [0, 0], sizes = [8, 128], strides = [1, 1]} : vector<8x512xf32> to vector<8x128xf32>
    %280 = arith.negf %279 : vector<8x128xf32>
    %281 = math.exp %280 : vector<8x128xf32>
    %cst_87 = arith.constant 1.000000e+00 : f32
    %282 = vector.broadcast %cst_87 : f32 to vector<8x128xf32>
    %283 = arith.addf %282, %281 : vector<8x128xf32>
    %284 = arith.divf %282, %283 : vector<8x128xf32>
    %285 = vector.extract_strided_slice %278 {offsets = [0, 128], sizes = [8, 128], strides = [1, 1]} : vector<8x512xf32> to vector<8x128xf32>
    %286 = arith.negf %285 : vector<8x128xf32>
    %287 = math.exp %286 : vector<8x128xf32>
    %cst_88 = arith.constant 1.000000e+00 : f32
    %288 = vector.broadcast %cst_88 : f32 to vector<8x128xf32>
    %289 = arith.addf %288, %287 : vector<8x128xf32>
    %290 = arith.divf %288, %289 : vector<8x128xf32>
    %291 = vector.extract_strided_slice %278 {offsets = [0, 256], sizes = [8, 128], strides = [1, 1]} : vector<8x512xf32> to vector<8x128xf32>
    %292 = math.tanh %291 : vector<8x128xf32>
    %293 = vector.extract_strided_slice %278 {offsets = [0, 384], sizes = [8, 128], strides = [1, 1]} : vector<8x512xf32> to vector<8x128xf32>
    %294 = arith.negf %293 : vector<8x128xf32>
    %295 = math.exp %294 : vector<8x128xf32>
    %cst_89 = arith.constant 1.000000e+00 : f32
    %296 = vector.broadcast %cst_89 : f32 to vector<8x128xf32>
    %297 = arith.addf %296, %295 : vector<8x128xf32>
    %298 = arith.divf %296, %297 : vector<8x128xf32>
    %299 = arith.mulf %290, %175 : vector<8x128xf32>
    %300 = arith.mulf %284, %292 : vector<8x128xf32>
    %301 = arith.addf %299, %300 : vector<8x128xf32>
    %302 = math.tanh %301 : vector<8x128xf32>
    %303 = arith.mulf %298, %302 : vector<8x128xf32>
    %c24 = arith.constant 24 : index
    %c0_90 = arith.constant 0 : index
    %304 = vector.load %arg51[%c24, %c0_90] : memref<64x512xf32, #tpu.memory_space<vmem>>, vector<8x512xf32>
    %305 = arith.truncf %207 : vector<8x128xf32> to vector<8x128xbf16>
    %c0_91 = arith.constant 0 : index
    %c0_92 = arith.constant 0 : index
    %306 = vector.load %arg6[%c0_91, %c0_92] : memref<128x512xbf16, #tpu.memory_space<vmem>>, vector<128x512xbf16>
    %cst_93 = arith.constant dense<0.000000e+00> : vector<8x512xf32>
    %307 = tpu.matmul %305, %306, %cst_93 {dimension_numbers = #tpu.dot_dimension_numbers<[1], [0], [0], [1], [0, 0, 1, 1], [], []>} : vector<8x128xbf16>, vector<128x512xbf16>, vector<8x512xf32> -> vector<8x512xf32>
    %308 = arith.addf %304, %307 : vector<8x512xf32>
    %309 = vector.extract_strided_slice %308 {offsets = [0, 0], sizes = [8, 128], strides = [1, 1]} : vector<8x512xf32> to vector<8x128xf32>
    %310 = arith.negf %309 : vector<8x128xf32>
    %311 = math.exp %310 : vector<8x128xf32>
    %cst_94 = arith.constant 1.000000e+00 : f32
    %312 = vector.broadcast %cst_94 : f32 to vector<8x128xf32>
    %313 = arith.addf %312, %311 : vector<8x128xf32>
    %314 = arith.divf %312, %313 : vector<8x128xf32>
    %315 = vector.extract_strided_slice %308 {offsets = [0, 128], sizes = [8, 128], strides = [1, 1]} : vector<8x512xf32> to vector<8x128xf32>
    %316 = arith.negf %315 : vector<8x128xf32>
    %317 = math.exp %316 : vector<8x128xf32>
    %cst_95 = arith.constant 1.000000e+00 : f32
    %318 = vector.broadcast %cst_95 : f32 to vector<8x128xf32>
    %319 = arith.addf %318, %317 : vector<8x128xf32>
    %320 = arith.divf %318, %319 : vector<8x128xf32>
    %321 = vector.extract_strided_slice %308 {offsets = [0, 256], sizes = [8, 128], strides = [1, 1]} : vector<8x512xf32> to vector<8x128xf32>
    %322 = math.tanh %321 : vector<8x128xf32>
    %323 = vector.extract_strided_slice %308 {offsets = [0, 384], sizes = [8, 128], strides = [1, 1]} : vector<8x512xf32> to vector<8x128xf32>
    %324 = arith.negf %323 : vector<8x128xf32>
    %325 = math.exp %324 : vector<8x128xf32>
    %cst_96 = arith.constant 1.000000e+00 : f32
    %326 = vector.broadcast %cst_96 : f32 to vector<8x128xf32>
    %327 = arith.addf %326, %325 : vector<8x128xf32>
    %328 = arith.divf %326, %327 : vector<8x128xf32>
    %329 = arith.mulf %320, %205 : vector<8x128xf32>
    %330 = arith.mulf %314, %322 : vector<8x128xf32>
    %331 = arith.addf %329, %330 : vector<8x128xf32>
    %332 = math.tanh %331 : vector<8x128xf32>
    %333 = arith.mulf %328, %332 : vector<8x128xf32>
    %334 = tpu.concatenate %271, %239 in 1 : vector<8x128xf32>, vector<8x128xf32> -> vector<8x256xf32>
    %335 = arith.truncf %334 : vector<8x256xf32> to vector<8x256xbf16>
    %c0_97 = arith.constant 0 : index
    %c0_98 = arith.constant 0 : index
    %336 = vector.load %arg12[%c0_97, %c0_98] : memref<256x512xbf16, #tpu.memory_space<vmem>>, vector<256x512xbf16>
    %cst_99 = arith.constant dense<0.000000e+00> : vector<8x512xf32>
    %337 = tpu.matmul %335, %336, %cst_99 {dimension_numbers = #tpu.dot_dimension_numbers<[1], [0], [0], [1], [0, 0, 1, 1], [], []>} : vector<8x256xbf16>, vector<256x512xbf16>, vector<8x512xf32> -> vector<8x512xf32>
    %c0_100 = arith.constant 0 : index
    %c0_101 = arith.constant 0 : index
    %338 = vector.load %arg13[%c0_100, %c0_101] : memref<1x512xf32, #tpu.memory_space<vmem>>, vector<1x512xf32>
    %339 = vector.broadcast %338 : vector<1x512xf32> to vector<8x512xf32>
    %340 = arith.addf %337, %339 : vector<8x512xf32>
    %341 = vector.extract_strided_slice %340 {offsets = [0, 0], sizes = [8, 128], strides = [1, 1]} : vector<8x512xf32> to vector<8x128xf32>
    %342 = arith.negf %341 : vector<8x128xf32>
    %343 = math.exp %342 : vector<8x128xf32>
    %cst_102 = arith.constant 1.000000e+00 : f32
    %344 = vector.broadcast %cst_102 : f32 to vector<8x128xf32>
    %345 = arith.addf %344, %343 : vector<8x128xf32>
    %346 = arith.divf %344, %345 : vector<8x128xf32>
    %347 = vector.extract_strided_slice %340 {offsets = [0, 128], sizes = [8, 128], strides = [1, 1]} : vector<8x512xf32> to vector<8x128xf32>
    %348 = arith.negf %347 : vector<8x128xf32>
    %349 = math.exp %348 : vector<8x128xf32>
    %cst_103 = arith.constant 1.000000e+00 : f32
    %350 = vector.broadcast %cst_103 : f32 to vector<8x128xf32>
    %351 = arith.addf %350, %349 : vector<8x128xf32>
    %352 = arith.divf %350, %351 : vector<8x128xf32>
    %353 = vector.extract_strided_slice %340 {offsets = [0, 256], sizes = [8, 128], strides = [1, 1]} : vector<8x512xf32> to vector<8x128xf32>
    %354 = math.tanh %353 : vector<8x128xf32>
    %355 = vector.extract_strided_slice %340 {offsets = [0, 384], sizes = [8, 128], strides = [1, 1]} : vector<8x512xf32> to vector<8x128xf32>
    %356 = arith.negf %355 : vector<8x128xf32>
    %357 = math.exp %356 : vector<8x128xf32>
    %cst_104 = arith.constant 1.000000e+00 : f32
    %358 = vector.broadcast %cst_104 : f32 to vector<8x128xf32>
    %359 = arith.addf %358, %357 : vector<8x128xf32>
    %360 = arith.divf %358, %359 : vector<8x128xf32>
    %361 = arith.mulf %352, %237 : vector<8x128xf32>
    %362 = arith.mulf %346, %354 : vector<8x128xf32>
    %363 = arith.addf %361, %362 : vector<8x128xf32>
    %364 = math.tanh %363 : vector<8x128xf32>
    %365 = arith.mulf %360, %364 : vector<8x128xf32>
    %366 = tpu.concatenate %303, %271 in 1 : vector<8x128xf32>, vector<8x128xf32> -> vector<8x256xf32>
    %367 = arith.truncf %366 : vector<8x256xf32> to vector<8x256xbf16>
    %c0_105 = arith.constant 0 : index
    %c0_106 = arith.constant 0 : index
    %368 = vector.load %arg10[%c0_105, %c0_106] : memref<256x512xbf16, #tpu.memory_space<vmem>>, vector<256x512xbf16>
    %cst_107 = arith.constant dense<0.000000e+00> : vector<8x512xf32>
    %369 = tpu.matmul %367, %368, %cst_107 {dimension_numbers = #tpu.dot_dimension_numbers<[1], [0], [0], [1], [0, 0, 1, 1], [], []>} : vector<8x256xbf16>, vector<256x512xbf16>, vector<8x512xf32> -> vector<8x512xf32>
    %c0_108 = arith.constant 0 : index
    %c0_109 = arith.constant 0 : index
    %370 = vector.load %arg11[%c0_108, %c0_109] : memref<1x512xf32, #tpu.memory_space<vmem>>, vector<1x512xf32>
    %371 = vector.broadcast %370 : vector<1x512xf32> to vector<8x512xf32>
    %372 = arith.addf %369, %371 : vector<8x512xf32>
    %373 = vector.extract_strided_slice %372 {offsets = [0, 0], sizes = [8, 128], strides = [1, 1]} : vector<8x512xf32> to vector<8x128xf32>
    %374 = arith.negf %373 : vector<8x128xf32>
    %375 = math.exp %374 : vector<8x128xf32>
    %cst_110 = arith.constant 1.000000e+00 : f32
    %376 = vector.broadcast %cst_110 : f32 to vector<8x128xf32>
    %377 = arith.addf %376, %375 : vector<8x128xf32>
    %378 = arith.divf %376, %377 : vector<8x128xf32>
    %379 = vector.extract_strided_slice %372 {offsets = [0, 128], sizes = [8, 128], strides = [1, 1]} : vector<8x512xf32> to vector<8x128xf32>
    %380 = arith.negf %379 : vector<8x128xf32>
    %381 = math.exp %380 : vector<8x128xf32>
    %cst_111 = arith.constant 1.000000e+00 : f32
    %382 = vector.broadcast %cst_111 : f32 to vector<8x128xf32>
    %383 = arith.addf %382, %381 : vector<8x128xf32>
    %384 = arith.divf %382, %383 : vector<8x128xf32>
    %385 = vector.extract_strided_slice %372 {offsets = [0, 256], sizes = [8, 128], strides = [1, 1]} : vector<8x512xf32> to vector<8x128xf32>
    %386 = math.tanh %385 : vector<8x128xf32>
    %387 = vector.extract_strided_slice %372 {offsets = [0, 384], sizes = [8, 128], strides = [1, 1]} : vector<8x512xf32> to vector<8x128xf32>
    %388 = arith.negf %387 : vector<8x128xf32>
    %389 = math.exp %388 : vector<8x128xf32>
    %cst_112 = arith.constant 1.000000e+00 : f32
    %390 = vector.broadcast %cst_112 : f32 to vector<8x128xf32>
    %391 = arith.addf %390, %389 : vector<8x128xf32>
    %392 = arith.divf %390, %391 : vector<8x128xf32>
    %393 = arith.mulf %384, %269 : vector<8x128xf32>
    %394 = arith.mulf %378, %386 : vector<8x128xf32>
    %395 = arith.addf %393, %394 : vector<8x128xf32>
    %396 = math.tanh %395 : vector<8x128xf32>
    %397 = arith.mulf %392, %396 : vector<8x128xf32>
    %398 = tpu.concatenate %333, %303 in 1 : vector<8x128xf32>, vector<8x128xf32> -> vector<8x256xf32>
    %399 = arith.truncf %398 : vector<8x256xf32> to vector<8x256xbf16>
    %c0_113 = arith.constant 0 : index
    %c0_114 = arith.constant 0 : index
    %400 = vector.load %arg8[%c0_113, %c0_114] : memref<256x512xbf16, #tpu.memory_space<vmem>>, vector<256x512xbf16>
    %cst_115 = arith.constant dense<0.000000e+00> : vector<8x512xf32>
    %401 = tpu.matmul %399, %400, %cst_115 {dimension_numbers = #tpu.dot_dimension_numbers<[1], [0], [0], [1], [0, 0, 1, 1], [], []>} : vector<8x256xbf16>, vector<256x512xbf16>, vector<8x512xf32> -> vector<8x512xf32>
    %c0_116 = arith.constant 0 : index
    %c0_117 = arith.constant 0 : index
    %402 = vector.load %arg9[%c0_116, %c0_117] : memref<1x512xf32, #tpu.memory_space<vmem>>, vector<1x512xf32>
    %403 = vector.broadcast %402 : vector<1x512xf32> to vector<8x512xf32>
    %404 = arith.addf %401, %403 : vector<8x512xf32>
    %405 = vector.extract_strided_slice %404 {offsets = [0, 0], sizes = [8, 128], strides = [1, 1]} : vector<8x512xf32> to vector<8x128xf32>
    %406 = arith.negf %405 : vector<8x128xf32>
    %407 = math.exp %406 : vector<8x128xf32>
    %cst_118 = arith.constant 1.000000e+00 : f32
    %408 = vector.broadcast %cst_118 : f32 to vector<8x128xf32>
    %409 = arith.addf %408, %407 : vector<8x128xf32>
    %410 = arith.divf %408, %409 : vector<8x128xf32>
    %411 = vector.extract_strided_slice %404 {offsets = [0, 128], sizes = [8, 128], strides = [1, 1]} : vector<8x512xf32> to vector<8x128xf32>
    %412 = arith.negf %411 : vector<8x128xf32>
    %413 = math.exp %412 : vector<8x128xf32>
    %cst_119 = arith.constant 1.000000e+00 : f32
    %414 = vector.broadcast %cst_119 : f32 to vector<8x128xf32>
    %415 = arith.addf %414, %413 : vector<8x128xf32>
    %416 = arith.divf %414, %415 : vector<8x128xf32>
    %417 = vector.extract_strided_slice %404 {offsets = [0, 256], sizes = [8, 128], strides = [1, 1]} : vector<8x512xf32> to vector<8x128xf32>
    %418 = math.tanh %417 : vector<8x128xf32>
    %419 = vector.extract_strided_slice %404 {offsets = [0, 384], sizes = [8, 128], strides = [1, 1]} : vector<8x512xf32> to vector<8x128xf32>
    %420 = arith.negf %419 : vector<8x128xf32>
    %421 = math.exp %420 : vector<8x128xf32>
    %cst_120 = arith.constant 1.000000e+00 : f32
    %422 = vector.broadcast %cst_120 : f32 to vector<8x128xf32>
    %423 = arith.addf %422, %421 : vector<8x128xf32>
    %424 = arith.divf %422, %423 : vector<8x128xf32>
    %425 = arith.mulf %416, %301 : vector<8x128xf32>
    %426 = arith.mulf %410, %418 : vector<8x128xf32>
    %427 = arith.addf %425, %426 : vector<8x128xf32>
    %428 = math.tanh %427 : vector<8x128xf32>
    %429 = arith.mulf %424, %428 : vector<8x128xf32>
    %c32 = arith.constant 32 : index
    %c0_121 = arith.constant 0 : index
    %430 = vector.load %arg51[%c32, %c0_121] : memref<64x512xf32, #tpu.memory_space<vmem>>, vector<8x512xf32>
    %431 = arith.truncf %333 : vector<8x128xf32> to vector<8x128xbf16>
    %c0_122 = arith.constant 0 : index
    %c0_123 = arith.constant 0 : index
    %432 = vector.load %arg6[%c0_122, %c0_123] : memref<128x512xbf16, #tpu.memory_space<vmem>>, vector<128x512xbf16>
    %cst_124 = arith.constant dense<0.000000e+00> : vector<8x512xf32>
    %433 = tpu.matmul %431, %432, %cst_124 {dimension_numbers = #tpu.dot_dimension_numbers<[1], [0], [0], [1], [0, 0, 1, 1], [], []>} : vector<8x128xbf16>, vector<128x512xbf16>, vector<8x512xf32> -> vector<8x512xf32>
    %434 = arith.addf %430, %433 : vector<8x512xf32>
    %435 = vector.extract_strided_slice %434 {offsets = [0, 0], sizes = [8, 128], strides = [1, 1]} : vector<8x512xf32> to vector<8x128xf32>
    %436 = arith.negf %435 : vector<8x128xf32>
    %437 = math.exp %436 : vector<8x128xf32>
    %cst_125 = arith.constant 1.000000e+00 : f32
    %438 = vector.broadcast %cst_125 : f32 to vector<8x128xf32>
    %439 = arith.addf %438, %437 : vector<8x128xf32>
    %440 = arith.divf %438, %439 : vector<8x128xf32>
    %441 = vector.extract_strided_slice %434 {offsets = [0, 128], sizes = [8, 128], strides = [1, 1]} : vector<8x512xf32> to vector<8x128xf32>
    %442 = arith.negf %441 : vector<8x128xf32>
    %443 = math.exp %442 : vector<8x128xf32>
    %cst_126 = arith.constant 1.000000e+00 : f32
    %444 = vector.broadcast %cst_126 : f32 to vector<8x128xf32>
    %445 = arith.addf %444, %443 : vector<8x128xf32>
    %446 = arith.divf %444, %445 : vector<8x128xf32>
    %447 = vector.extract_strided_slice %434 {offsets = [0, 256], sizes = [8, 128], strides = [1, 1]} : vector<8x512xf32> to vector<8x128xf32>
    %448 = math.tanh %447 : vector<8x128xf32>
    %449 = vector.extract_strided_slice %434 {offsets = [0, 384], sizes = [8, 128], strides = [1, 1]} : vector<8x512xf32> to vector<8x128xf32>
    %450 = arith.negf %449 : vector<8x128xf32>
    %451 = math.exp %450 : vector<8x128xf32>
    %cst_127 = arith.constant 1.000000e+00 : f32
    %452 = vector.broadcast %cst_127 : f32 to vector<8x128xf32>
    %453 = arith.addf %452, %451 : vector<8x128xf32>
    %454 = arith.divf %452, %453 : vector<8x128xf32>
    %455 = arith.mulf %446, %331 : vector<8x128xf32>
    %456 = arith.mulf %440, %448 : vector<8x128xf32>
    %457 = arith.addf %455, %456 : vector<8x128xf32>
    %458 = math.tanh %457 : vector<8x128xf32>
    %459 = arith.mulf %454, %458 : vector<8x128xf32>
    %460 = tpu.concatenate %397, %365 in 1 : vector<8x128xf32>, vector<8x128xf32> -> vector<8x256xf32>
    %461 = arith.truncf %460 : vector<8x256xf32> to vector<8x256xbf16>
    %c0_128 = arith.constant 0 : index
    %c0_129 = arith.constant 0 : index
    %462 = vector.load %arg12[%c0_128, %c0_129] : memref<256x512xbf16, #tpu.memory_space<vmem>>, vector<256x512xbf16>
    %cst_130 = arith.constant dense<0.000000e+00> : vector<8x512xf32>
    %463 = tpu.matmul %461, %462, %cst_130 {dimension_numbers = #tpu.dot_dimension_numbers<[1], [0], [0], [1], [0, 0, 1, 1], [], []>} : vector<8x256xbf16>, vector<256x512xbf16>, vector<8x512xf32> -> vector<8x512xf32>
    %c0_131 = arith.constant 0 : index
    %c0_132 = arith.constant 0 : index
    %464 = vector.load %arg13[%c0_131, %c0_132] : memref<1x512xf32, #tpu.memory_space<vmem>>, vector<1x512xf32>
    %465 = vector.broadcast %464 : vector<1x512xf32> to vector<8x512xf32>
    %466 = arith.addf %463, %465 : vector<8x512xf32>
    %467 = vector.extract_strided_slice %466 {offsets = [0, 0], sizes = [8, 128], strides = [1, 1]} : vector<8x512xf32> to vector<8x128xf32>
    %468 = arith.negf %467 : vector<8x128xf32>
    %469 = math.exp %468 : vector<8x128xf32>
    %cst_133 = arith.constant 1.000000e+00 : f32
    %470 = vector.broadcast %cst_133 : f32 to vector<8x128xf32>
    %471 = arith.addf %470, %469 : vector<8x128xf32>
    %472 = arith.divf %470, %471 : vector<8x128xf32>
    %473 = vector.extract_strided_slice %466 {offsets = [0, 128], sizes = [8, 128], strides = [1, 1]} : vector<8x512xf32> to vector<8x128xf32>
    %474 = arith.negf %473 : vector<8x128xf32>
    %475 = math.exp %474 : vector<8x128xf32>
    %cst_134 = arith.constant 1.000000e+00 : f32
    %476 = vector.broadcast %cst_134 : f32 to vector<8x128xf32>
    %477 = arith.addf %476, %475 : vector<8x128xf32>
    %478 = arith.divf %476, %477 : vector<8x128xf32>
    %479 = vector.extract_strided_slice %466 {offsets = [0, 256], sizes = [8, 128], strides = [1, 1]} : vector<8x512xf32> to vector<8x128xf32>
    %480 = math.tanh %479 : vector<8x128xf32>
    %481 = vector.extract_strided_slice %466 {offsets = [0, 384], sizes = [8, 128], strides = [1, 1]} : vector<8x512xf32> to vector<8x128xf32>
    %482 = arith.negf %481 : vector<8x128xf32>
    %483 = math.exp %482 : vector<8x128xf32>
    %cst_135 = arith.constant 1.000000e+00 : f32
    %484 = vector.broadcast %cst_135 : f32 to vector<8x128xf32>
    %485 = arith.addf %484, %483 : vector<8x128xf32>
    %486 = arith.divf %484, %485 : vector<8x128xf32>
    %487 = arith.mulf %478, %363 : vector<8x128xf32>
    %488 = arith.mulf %472, %480 : vector<8x128xf32>
    %489 = arith.addf %487, %488 : vector<8x128xf32>
    %490 = math.tanh %489 : vector<8x128xf32>
    %491 = arith.mulf %486, %490 : vector<8x128xf32>
    %492 = tpu.concatenate %429, %397 in 1 : vector<8x128xf32>, vector<8x128xf32> -> vector<8x256xf32>
    %493 = arith.truncf %492 : vector<8x256xf32> to vector<8x256xbf16>
    %c0_136 = arith.constant 0 : index
    %c0_137 = arith.constant 0 : index
    %494 = vector.load %arg10[%c0_136, %c0_137] : memref<256x512xbf16, #tpu.memory_space<vmem>>, vector<256x512xbf16>
    %cst_138 = arith.constant dense<0.000000e+00> : vector<8x512xf32>
    %495 = tpu.matmul %493, %494, %cst_138 {dimension_numbers = #tpu.dot_dimension_numbers<[1], [0], [0], [1], [0, 0, 1, 1], [], []>} : vector<8x256xbf16>, vector<256x512xbf16>, vector<8x512xf32> -> vector<8x512xf32>
    %c0_139 = arith.constant 0 : index
    %c0_140 = arith.constant 0 : index
    %496 = vector.load %arg11[%c0_139, %c0_140] : memref<1x512xf32, #tpu.memory_space<vmem>>, vector<1x512xf32>
    %497 = vector.broadcast %496 : vector<1x512xf32> to vector<8x512xf32>
    %498 = arith.addf %495, %497 : vector<8x512xf32>
    %499 = vector.extract_strided_slice %498 {offsets = [0, 0], sizes = [8, 128], strides = [1, 1]} : vector<8x512xf32> to vector<8x128xf32>
    %500 = arith.negf %499 : vector<8x128xf32>
    %501 = math.exp %500 : vector<8x128xf32>
    %cst_141 = arith.constant 1.000000e+00 : f32
    %502 = vector.broadcast %cst_141 : f32 to vector<8x128xf32>
    %503 = arith.addf %502, %501 : vector<8x128xf32>
    %504 = arith.divf %502, %503 : vector<8x128xf32>
    %505 = vector.extract_strided_slice %498 {offsets = [0, 128], sizes = [8, 128], strides = [1, 1]} : vector<8x512xf32> to vector<8x128xf32>
    %506 = arith.negf %505 : vector<8x128xf32>
    %507 = math.exp %506 : vector<8x128xf32>
    %cst_142 = arith.constant 1.000000e+00 : f32
    %508 = vector.broadcast %cst_142 : f32 to vector<8x128xf32>
    %509 = arith.addf %508, %507 : vector<8x128xf32>
    %510 = arith.divf %508, %509 : vector<8x128xf32>
    %511 = vector.extract_strided_slice %498 {offsets = [0, 256], sizes = [8, 128], strides = [1, 1]} : vector<8x512xf32> to vector<8x128xf32>
    %512 = math.tanh %511 : vector<8x128xf32>
    %513 = vector.extract_strided_slice %498 {offsets = [0, 384], sizes = [8, 128], strides = [1, 1]} : vector<8x512xf32> to vector<8x128xf32>
    %514 = arith.negf %513 : vector<8x128xf32>
    %515 = math.exp %514 : vector<8x128xf32>
    %cst_143 = arith.constant 1.000000e+00 : f32
    %516 = vector.broadcast %cst_143 : f32 to vector<8x128xf32>
    %517 = arith.addf %516, %515 : vector<8x128xf32>
    %518 = arith.divf %516, %517 : vector<8x128xf32>
    %519 = arith.mulf %510, %395 : vector<8x128xf32>
    %520 = arith.mulf %504, %512 : vector<8x128xf32>
    %521 = arith.addf %519, %520 : vector<8x128xf32>
    %522 = math.tanh %521 : vector<8x128xf32>
    %523 = arith.mulf %518, %522 : vector<8x128xf32>
    %524 = tpu.concatenate %459, %429 in 1 : vector<8x128xf32>, vector<8x128xf32> -> vector<8x256xf32>
    %525 = arith.truncf %524 : vector<8x256xf32> to vector<8x256xbf16>
    %c0_144 = arith.constant 0 : index
    %c0_145 = arith.constant 0 : index
    %526 = vector.load %arg8[%c0_144, %c0_145] : memref<256x512xbf16, #tpu.memory_space<vmem>>, vector<256x512xbf16>
    %cst_146 = arith.constant dense<0.000000e+00> : vector<8x512xf32>
    %527 = tpu.matmul %525, %526, %cst_146 {dimension_numbers = #tpu.dot_dimension_numbers<[1], [0], [0], [1], [0, 0, 1, 1], [], []>} : vector<8x256xbf16>, vector<256x512xbf16>, vector<8x512xf32> -> vector<8x512xf32>
    %c0_147 = arith.constant 0 : index
    %c0_148 = arith.constant 0 : index
    %528 = vector.load %arg9[%c0_147, %c0_148] : memref<1x512xf32, #tpu.memory_space<vmem>>, vector<1x512xf32>
    %529 = vector.broadcast %528 : vector<1x512xf32> to vector<8x512xf32>
    %530 = arith.addf %527, %529 : vector<8x512xf32>
    %531 = vector.extract_strided_slice %530 {offsets = [0, 0], sizes = [8, 128], strides = [1, 1]} : vector<8x512xf32> to vector<8x128xf32>
    %532 = arith.negf %531 : vector<8x128xf32>
    %533 = math.exp %532 : vector<8x128xf32>
    %cst_149 = arith.constant 1.000000e+00 : f32
    %534 = vector.broadcast %cst_149 : f32 to vector<8x128xf32>
    %535 = arith.addf %534, %533 : vector<8x128xf32>
    %536 = arith.divf %534, %535 : vector<8x128xf32>
    %537 = vector.extract_strided_slice %530 {offsets = [0, 128], sizes = [8, 128], strides = [1, 1]} : vector<8x512xf32> to vector<8x128xf32>
    %538 = arith.negf %537 : vector<8x128xf32>
    %539 = math.exp %538 : vector<8x128xf32>
    %cst_150 = arith.constant 1.000000e+00 : f32
    %540 = vector.broadcast %cst_150 : f32 to vector<8x128xf32>
    %541 = arith.addf %540, %539 : vector<8x128xf32>
    %542 = arith.divf %540, %541 : vector<8x128xf32>
    %543 = vector.extract_strided_slice %530 {offsets = [0, 256], sizes = [8, 128], strides = [1, 1]} : vector<8x512xf32> to vector<8x128xf32>
    %544 = math.tanh %543 : vector<8x128xf32>
    %545 = vector.extract_strided_slice %530 {offsets = [0, 384], sizes = [8, 128], strides = [1, 1]} : vector<8x512xf32> to vector<8x128xf32>
    %546 = arith.negf %545 : vector<8x128xf32>
    %547 = math.exp %546 : vector<8x128xf32>
    %cst_151 = arith.constant 1.000000e+00 : f32
    %548 = vector.broadcast %cst_151 : f32 to vector<8x128xf32>
    %549 = arith.addf %548, %547 : vector<8x128xf32>
    %550 = arith.divf %548, %549 : vector<8x128xf32>
    %551 = arith.mulf %542, %427 : vector<8x128xf32>
    %552 = arith.mulf %536, %544 : vector<8x128xf32>
    %553 = arith.addf %551, %552 : vector<8x128xf32>
    %554 = math.tanh %553 : vector<8x128xf32>
    %555 = arith.mulf %550, %554 : vector<8x128xf32>
    %c40 = arith.constant 40 : index
    %c0_152 = arith.constant 0 : index
    %556 = vector.load %arg51[%c40, %c0_152] : memref<64x512xf32, #tpu.memory_space<vmem>>, vector<8x512xf32>
    %557 = arith.truncf %459 : vector<8x128xf32> to vector<8x128xbf16>
    %c0_153 = arith.constant 0 : index
    %c0_154 = arith.constant 0 : index
    %558 = vector.load %arg6[%c0_153, %c0_154] : memref<128x512xbf16, #tpu.memory_space<vmem>>, vector<128x512xbf16>
    %cst_155 = arith.constant dense<0.000000e+00> : vector<8x512xf32>
    %559 = tpu.matmul %557, %558, %cst_155 {dimension_numbers = #tpu.dot_dimension_numbers<[1], [0], [0], [1], [0, 0, 1, 1], [], []>} : vector<8x128xbf16>, vector<128x512xbf16>, vector<8x512xf32> -> vector<8x512xf32>
    %560 = arith.addf %556, %559 : vector<8x512xf32>
    %561 = vector.extract_strided_slice %560 {offsets = [0, 0], sizes = [8, 128], strides = [1, 1]} : vector<8x512xf32> to vector<8x128xf32>
    %562 = arith.negf %561 : vector<8x128xf32>
    %563 = math.exp %562 : vector<8x128xf32>
    %cst_156 = arith.constant 1.000000e+00 : f32
    %564 = vector.broadcast %cst_156 : f32 to vector<8x128xf32>
    %565 = arith.addf %564, %563 : vector<8x128xf32>
    %566 = arith.divf %564, %565 : vector<8x128xf32>
    %567 = vector.extract_strided_slice %560 {offsets = [0, 128], sizes = [8, 128], strides = [1, 1]} : vector<8x512xf32> to vector<8x128xf32>
    %568 = arith.negf %567 : vector<8x128xf32>
    %569 = math.exp %568 : vector<8x128xf32>
    %cst_157 = arith.constant 1.000000e+00 : f32
    %570 = vector.broadcast %cst_157 : f32 to vector<8x128xf32>
    %571 = arith.addf %570, %569 : vector<8x128xf32>
    %572 = arith.divf %570, %571 : vector<8x128xf32>
    %573 = vector.extract_strided_slice %560 {offsets = [0, 256], sizes = [8, 128], strides = [1, 1]} : vector<8x512xf32> to vector<8x128xf32>
    %574 = math.tanh %573 : vector<8x128xf32>
    %575 = vector.extract_strided_slice %560 {offsets = [0, 384], sizes = [8, 128], strides = [1, 1]} : vector<8x512xf32> to vector<8x128xf32>
    %576 = arith.negf %575 : vector<8x128xf32>
    %577 = math.exp %576 : vector<8x128xf32>
    %cst_158 = arith.constant 1.000000e+00 : f32
    %578 = vector.broadcast %cst_158 : f32 to vector<8x128xf32>
    %579 = arith.addf %578, %577 : vector<8x128xf32>
    %580 = arith.divf %578, %579 : vector<8x128xf32>
    %581 = arith.mulf %572, %457 : vector<8x128xf32>
    %582 = arith.mulf %566, %574 : vector<8x128xf32>
    %583 = arith.addf %581, %582 : vector<8x128xf32>
    %584 = math.tanh %583 : vector<8x128xf32>
    %585 = arith.mulf %580, %584 : vector<8x128xf32>
    %586 = tpu.concatenate %523, %491 in 1 : vector<8x128xf32>, vector<8x128xf32> -> vector<8x256xf32>
    %587 = arith.truncf %586 : vector<8x256xf32> to vector<8x256xbf16>
    %c0_159 = arith.constant 0 : index
    %c0_160 = arith.constant 0 : index
    %588 = vector.load %arg12[%c0_159, %c0_160] : memref<256x512xbf16, #tpu.memory_space<vmem>>, vector<256x512xbf16>
    %cst_161 = arith.constant dense<0.000000e+00> : vector<8x512xf32>
    %589 = tpu.matmul %587, %588, %cst_161 {dimension_numbers = #tpu.dot_dimension_numbers<[1], [0], [0], [1], [0, 0, 1, 1], [], []>} : vector<8x256xbf16>, vector<256x512xbf16>, vector<8x512xf32> -> vector<8x512xf32>
    %c0_162 = arith.constant 0 : index
    %c0_163 = arith.constant 0 : index
    %590 = vector.load %arg13[%c0_162, %c0_163] : memref<1x512xf32, #tpu.memory_space<vmem>>, vector<1x512xf32>
    %591 = vector.broadcast %590 : vector<1x512xf32> to vector<8x512xf32>
    %592 = arith.addf %589, %591 : vector<8x512xf32>
    %593 = vector.extract_strided_slice %592 {offsets = [0, 0], sizes = [8, 128], strides = [1, 1]} : vector<8x512xf32> to vector<8x128xf32>
    %594 = arith.negf %593 : vector<8x128xf32>
    %595 = math.exp %594 : vector<8x128xf32>
    %cst_164 = arith.constant 1.000000e+00 : f32
    %596 = vector.broadcast %cst_164 : f32 to vector<8x128xf32>
    %597 = arith.addf %596, %595 : vector<8x128xf32>
    %598 = arith.divf %596, %597 : vector<8x128xf32>
    %599 = vector.extract_strided_slice %592 {offsets = [0, 128], sizes = [8, 128], strides = [1, 1]} : vector<8x512xf32> to vector<8x128xf32>
    %600 = arith.negf %599 : vector<8x128xf32>
    %601 = math.exp %600 : vector<8x128xf32>
    %cst_165 = arith.constant 1.000000e+00 : f32
    %602 = vector.broadcast %cst_165 : f32 to vector<8x128xf32>
    %603 = arith.addf %602, %601 : vector<8x128xf32>
    %604 = arith.divf %602, %603 : vector<8x128xf32>
    %605 = vector.extract_strided_slice %592 {offsets = [0, 256], sizes = [8, 128], strides = [1, 1]} : vector<8x512xf32> to vector<8x128xf32>
    %606 = math.tanh %605 : vector<8x128xf32>
    %607 = vector.extract_strided_slice %592 {offsets = [0, 384], sizes = [8, 128], strides = [1, 1]} : vector<8x512xf32> to vector<8x128xf32>
    %608 = arith.negf %607 : vector<8x128xf32>
    %609 = math.exp %608 : vector<8x128xf32>
    %cst_166 = arith.constant 1.000000e+00 : f32
    %610 = vector.broadcast %cst_166 : f32 to vector<8x128xf32>
    %611 = arith.addf %610, %609 : vector<8x128xf32>
    %612 = arith.divf %610, %611 : vector<8x128xf32>
    %613 = arith.mulf %604, %489 : vector<8x128xf32>
    %614 = arith.mulf %598, %606 : vector<8x128xf32>
    %615 = arith.addf %613, %614 : vector<8x128xf32>
    %616 = math.tanh %615 : vector<8x128xf32>
    %617 = arith.mulf %612, %616 : vector<8x128xf32>
    %618 = tpu.concatenate %555, %523 in 1 : vector<8x128xf32>, vector<8x128xf32> -> vector<8x256xf32>
    %619 = arith.truncf %618 : vector<8x256xf32> to vector<8x256xbf16>
    %c0_167 = arith.constant 0 : index
    %c0_168 = arith.constant 0 : index
    %620 = vector.load %arg10[%c0_167, %c0_168] : memref<256x512xbf16, #tpu.memory_space<vmem>>, vector<256x512xbf16>
    %cst_169 = arith.constant dense<0.000000e+00> : vector<8x512xf32>
    %621 = tpu.matmul %619, %620, %cst_169 {dimension_numbers = #tpu.dot_dimension_numbers<[1], [0], [0], [1], [0, 0, 1, 1], [], []>} : vector<8x256xbf16>, vector<256x512xbf16>, vector<8x512xf32> -> vector<8x512xf32>
    %c0_170 = arith.constant 0 : index
    %c0_171 = arith.constant 0 : index
    %622 = vector.load %arg11[%c0_170, %c0_171] : memref<1x512xf32, #tpu.memory_space<vmem>>, vector<1x512xf32>
    %623 = vector.broadcast %622 : vector<1x512xf32> to vector<8x512xf32>
    %624 = arith.addf %621, %623 : vector<8x512xf32>
    %625 = vector.extract_strided_slice %624 {offsets = [0, 0], sizes = [8, 128], strides = [1, 1]} : vector<8x512xf32> to vector<8x128xf32>
    %626 = arith.negf %625 : vector<8x128xf32>
    %627 = math.exp %626 : vector<8x128xf32>
    %cst_172 = arith.constant 1.000000e+00 : f32
    %628 = vector.broadcast %cst_172 : f32 to vector<8x128xf32>
    %629 = arith.addf %628, %627 : vector<8x128xf32>
    %630 = arith.divf %628, %629 : vector<8x128xf32>
    %631 = vector.extract_strided_slice %624 {offsets = [0, 128], sizes = [8, 128], strides = [1, 1]} : vector<8x512xf32> to vector<8x128xf32>
    %632 = arith.negf %631 : vector<8x128xf32>
    %633 = math.exp %632 : vector<8x128xf32>
    %cst_173 = arith.constant 1.000000e+00 : f32
    %634 = vector.broadcast %cst_173 : f32 to vector<8x128xf32>
    %635 = arith.addf %634, %633 : vector<8x128xf32>
    %636 = arith.divf %634, %635 : vector<8x128xf32>
    %637 = vector.extract_strided_slice %624 {offsets = [0, 256], sizes = [8, 128], strides = [1, 1]} : vector<8x512xf32> to vector<8x128xf32>
    %638 = math.tanh %637 : vector<8x128xf32>
    %639 = vector.extract_strided_slice %624 {offsets = [0, 384], sizes = [8, 128], strides = [1, 1]} : vector<8x512xf32> to vector<8x128xf32>
    %640 = arith.negf %639 : vector<8x128xf32>
    %641 = math.exp %640 : vector<8x128xf32>
    %cst_174 = arith.constant 1.000000e+00 : f32
    %642 = vector.broadcast %cst_174 : f32 to vector<8x128xf32>
    %643 = arith.addf %642, %641 : vector<8x128xf32>
    %644 = arith.divf %642, %643 : vector<8x128xf32>
    %645 = arith.mulf %636, %521 : vector<8x128xf32>
    %646 = arith.mulf %630, %638 : vector<8x128xf32>
    %647 = arith.addf %645, %646 : vector<8x128xf32>
    %648 = math.tanh %647 : vector<8x128xf32>
    %649 = arith.mulf %644, %648 : vector<8x128xf32>
    %650 = tpu.concatenate %585, %555 in 1 : vector<8x128xf32>, vector<8x128xf32> -> vector<8x256xf32>
    %651 = arith.truncf %650 : vector<8x256xf32> to vector<8x256xbf16>
    %c0_175 = arith.constant 0 : index
    %c0_176 = arith.constant 0 : index
    %652 = vector.load %arg8[%c0_175, %c0_176] : memref<256x512xbf16, #tpu.memory_space<vmem>>, vector<256x512xbf16>
    %cst_177 = arith.constant dense<0.000000e+00> : vector<8x512xf32>
    %653 = tpu.matmul %651, %652, %cst_177 {dimension_numbers = #tpu.dot_dimension_numbers<[1], [0], [0], [1], [0, 0, 1, 1], [], []>} : vector<8x256xbf16>, vector<256x512xbf16>, vector<8x512xf32> -> vector<8x512xf32>
    %c0_178 = arith.constant 0 : index
    %c0_179 = arith.constant 0 : index
    %654 = vector.load %arg9[%c0_178, %c0_179] : memref<1x512xf32, #tpu.memory_space<vmem>>, vector<1x512xf32>
    %655 = vector.broadcast %654 : vector<1x512xf32> to vector<8x512xf32>
    %656 = arith.addf %653, %655 : vector<8x512xf32>
    %657 = vector.extract_strided_slice %656 {offsets = [0, 0], sizes = [8, 128], strides = [1, 1]} : vector<8x512xf32> to vector<8x128xf32>
    %658 = arith.negf %657 : vector<8x128xf32>
    %659 = math.exp %658 : vector<8x128xf32>
    %cst_180 = arith.constant 1.000000e+00 : f32
    %660 = vector.broadcast %cst_180 : f32 to vector<8x128xf32>
    %661 = arith.addf %660, %659 : vector<8x128xf32>
    %662 = arith.divf %660, %661 : vector<8x128xf32>
    %663 = vector.extract_strided_slice %656 {offsets = [0, 128], sizes = [8, 128], strides = [1, 1]} : vector<8x512xf32> to vector<8x128xf32>
    %664 = arith.negf %663 : vector<8x128xf32>
    %665 = math.exp %664 : vector<8x128xf32>
    %cst_181 = arith.constant 1.000000e+00 : f32
    %666 = vector.broadcast %cst_181 : f32 to vector<8x128xf32>
    %667 = arith.addf %666, %665 : vector<8x128xf32>
    %668 = arith.divf %666, %667 : vector<8x128xf32>
    %669 = vector.extract_strided_slice %656 {offsets = [0, 256], sizes = [8, 128], strides = [1, 1]} : vector<8x512xf32> to vector<8x128xf32>
    %670 = math.tanh %669 : vector<8x128xf32>
    %671 = vector.extract_strided_slice %656 {offsets = [0, 384], sizes = [8, 128], strides = [1, 1]} : vector<8x512xf32> to vector<8x128xf32>
    %672 = arith.negf %671 : vector<8x128xf32>
    %673 = math.exp %672 : vector<8x128xf32>
    %cst_182 = arith.constant 1.000000e+00 : f32
    %674 = vector.broadcast %cst_182 : f32 to vector<8x128xf32>
    %675 = arith.addf %674, %673 : vector<8x128xf32>
    %676 = arith.divf %674, %675 : vector<8x128xf32>
    %677 = arith.mulf %668, %553 : vector<8x128xf32>
    %678 = arith.mulf %662, %670 : vector<8x128xf32>
    %679 = arith.addf %677, %678 : vector<8x128xf32>
    %680 = math.tanh %679 : vector<8x128xf32>
    %681 = arith.mulf %676, %680 : vector<8x128xf32>
    %c48 = arith.constant 48 : index
    %c0_183 = arith.constant 0 : index
    %682 = vector.load %arg51[%c48, %c0_183] : memref<64x512xf32, #tpu.memory_space<vmem>>, vector<8x512xf32>
    %683 = arith.truncf %585 : vector<8x128xf32> to vector<8x128xbf16>
    %c0_184 = arith.constant 0 : index
    %c0_185 = arith.constant 0 : index
    %684 = vector.load %arg6[%c0_184, %c0_185] : memref<128x512xbf16, #tpu.memory_space<vmem>>, vector<128x512xbf16>
    %cst_186 = arith.constant dense<0.000000e+00> : vector<8x512xf32>
    %685 = tpu.matmul %683, %684, %cst_186 {dimension_numbers = #tpu.dot_dimension_numbers<[1], [0], [0], [1], [0, 0, 1, 1], [], []>} : vector<8x128xbf16>, vector<128x512xbf16>, vector<8x512xf32> -> vector<8x512xf32>
    %686 = arith.addf %682, %685 : vector<8x512xf32>
    %687 = vector.extract_strided_slice %686 {offsets = [0, 0], sizes = [8, 128], strides = [1, 1]} : vector<8x512xf32> to vector<8x128xf32>
    %688 = arith.negf %687 : vector<8x128xf32>
    %689 = math.exp %688 : vector<8x128xf32>
    %cst_187 = arith.constant 1.000000e+00 : f32
    %690 = vector.broadcast %cst_187 : f32 to vector<8x128xf32>
    %691 = arith.addf %690, %689 : vector<8x128xf32>
    %692 = arith.divf %690, %691 : vector<8x128xf32>
    %693 = vector.extract_strided_slice %686 {offsets = [0, 128], sizes = [8, 128], strides = [1, 1]} : vector<8x512xf32> to vector<8x128xf32>
    %694 = arith.negf %693 : vector<8x128xf32>
    %695 = math.exp %694 : vector<8x128xf32>
    %cst_188 = arith.constant 1.000000e+00 : f32
    %696 = vector.broadcast %cst_188 : f32 to vector<8x128xf32>
    %697 = arith.addf %696, %695 : vector<8x128xf32>
    %698 = arith.divf %696, %697 : vector<8x128xf32>
    %699 = vector.extract_strided_slice %686 {offsets = [0, 256], sizes = [8, 128], strides = [1, 1]} : vector<8x512xf32> to vector<8x128xf32>
    %700 = math.tanh %699 : vector<8x128xf32>
    %701 = vector.extract_strided_slice %686 {offsets = [0, 384], sizes = [8, 128], strides = [1, 1]} : vector<8x512xf32> to vector<8x128xf32>
    %702 = arith.negf %701 : vector<8x128xf32>
    %703 = math.exp %702 : vector<8x128xf32>
    %cst_189 = arith.constant 1.000000e+00 : f32
    %704 = vector.broadcast %cst_189 : f32 to vector<8x128xf32>
    %705 = arith.addf %704, %703 : vector<8x128xf32>
    %706 = arith.divf %704, %705 : vector<8x128xf32>
    %707 = arith.mulf %698, %583 : vector<8x128xf32>
    %708 = arith.mulf %692, %700 : vector<8x128xf32>
    %709 = arith.addf %707, %708 : vector<8x128xf32>
    %710 = math.tanh %709 : vector<8x128xf32>
    %711 = arith.mulf %706, %710 : vector<8x128xf32>
    %712 = tpu.concatenate %649, %617 in 1 : vector<8x128xf32>, vector<8x128xf32> -> vector<8x256xf32>
    %713 = arith.truncf %712 : vector<8x256xf32> to vector<8x256xbf16>
    %c0_190 = arith.constant 0 : index
    %c0_191 = arith.constant 0 : index
    %714 = vector.load %arg12[%c0_190, %c0_191] : memref<256x512xbf16, #tpu.memory_space<vmem>>, vector<256x512xbf16>
    %cst_192 = arith.constant dense<0.000000e+00> : vector<8x512xf32>
    %715 = tpu.matmul %713, %714, %cst_192 {dimension_numbers = #tpu.dot_dimension_numbers<[1], [0], [0], [1], [0, 0, 1, 1], [], []>} : vector<8x256xbf16>, vector<256x512xbf16>, vector<8x512xf32> -> vector<8x512xf32>
    %c0_193 = arith.constant 0 : index
    %c0_194 = arith.constant 0 : index
    %716 = vector.load %arg13[%c0_193, %c0_194] : memref<1x512xf32, #tpu.memory_space<vmem>>, vector<1x512xf32>
    %717 = vector.broadcast %716 : vector<1x512xf32> to vector<8x512xf32>
    %718 = arith.addf %715, %717 : vector<8x512xf32>
    %719 = vector.extract_strided_slice %718 {offsets = [0, 0], sizes = [8, 128], strides = [1, 1]} : vector<8x512xf32> to vector<8x128xf32>
    %720 = arith.negf %719 : vector<8x128xf32>
    %721 = math.exp %720 : vector<8x128xf32>
    %cst_195 = arith.constant 1.000000e+00 : f32
    %722 = vector.broadcast %cst_195 : f32 to vector<8x128xf32>
    %723 = arith.addf %722, %721 : vector<8x128xf32>
    %724 = arith.divf %722, %723 : vector<8x128xf32>
    %725 = vector.extract_strided_slice %718 {offsets = [0, 128], sizes = [8, 128], strides = [1, 1]} : vector<8x512xf32> to vector<8x128xf32>
    %726 = arith.negf %725 : vector<8x128xf32>
    %727 = math.exp %726 : vector<8x128xf32>
    %cst_196 = arith.constant 1.000000e+00 : f32
    %728 = vector.broadcast %cst_196 : f32 to vector<8x128xf32>
    %729 = arith.addf %728, %727 : vector<8x128xf32>
    %730 = arith.divf %728, %729 : vector<8x128xf32>
    %731 = vector.extract_strided_slice %718 {offsets = [0, 256], sizes = [8, 128], strides = [1, 1]} : vector<8x512xf32> to vector<8x128xf32>
    %732 = math.tanh %731 : vector<8x128xf32>
    %733 = vector.extract_strided_slice %718 {offsets = [0, 384], sizes = [8, 128], strides = [1, 1]} : vector<8x512xf32> to vector<8x128xf32>
    %734 = arith.negf %733 : vector<8x128xf32>
    %735 = math.exp %734 : vector<8x128xf32>
    %cst_197 = arith.constant 1.000000e+00 : f32
    %736 = vector.broadcast %cst_197 : f32 to vector<8x128xf32>
    %737 = arith.addf %736, %735 : vector<8x128xf32>
    %738 = arith.divf %736, %737 : vector<8x128xf32>
    %739 = arith.mulf %730, %615 : vector<8x128xf32>
    %740 = arith.mulf %724, %732 : vector<8x128xf32>
    %741 = arith.addf %739, %740 : vector<8x128xf32>
    %742 = math.tanh %741 : vector<8x128xf32>
    %743 = arith.mulf %738, %742 : vector<8x128xf32>
    %744 = tpu.concatenate %681, %649 in 1 : vector<8x128xf32>, vector<8x128xf32> -> vector<8x256xf32>
    %745 = arith.truncf %744 : vector<8x256xf32> to vector<8x256xbf16>
    %c0_198 = arith.constant 0 : index
    %c0_199 = arith.constant 0 : index
    %746 = vector.load %arg10[%c0_198, %c0_199] : memref<256x512xbf16, #tpu.memory_space<vmem>>, vector<256x512xbf16>
    %cst_200 = arith.constant dense<0.000000e+00> : vector<8x512xf32>
    %747 = tpu.matmul %745, %746, %cst_200 {dimension_numbers = #tpu.dot_dimension_numbers<[1], [0], [0], [1], [0, 0, 1, 1], [], []>} : vector<8x256xbf16>, vector<256x512xbf16>, vector<8x512xf32> -> vector<8x512xf32>
    %c0_201 = arith.constant 0 : index
    %c0_202 = arith.constant 0 : index
    %748 = vector.load %arg11[%c0_201, %c0_202] : memref<1x512xf32, #tpu.memory_space<vmem>>, vector<1x512xf32>
    %749 = vector.broadcast %748 : vector<1x512xf32> to vector<8x512xf32>
    %750 = arith.addf %747, %749 : vector<8x512xf32>
    %751 = vector.extract_strided_slice %750 {offsets = [0, 0], sizes = [8, 128], strides = [1, 1]} : vector<8x512xf32> to vector<8x128xf32>
    %752 = arith.negf %751 : vector<8x128xf32>
    %753 = math.exp %752 : vector<8x128xf32>
    %cst_203 = arith.constant 1.000000e+00 : f32
    %754 = vector.broadcast %cst_203 : f32 to vector<8x128xf32>
    %755 = arith.addf %754, %753 : vector<8x128xf32>
    %756 = arith.divf %754, %755 : vector<8x128xf32>
    %757 = vector.extract_strided_slice %750 {offsets = [0, 128], sizes = [8, 128], strides = [1, 1]} : vector<8x512xf32> to vector<8x128xf32>
    %758 = arith.negf %757 : vector<8x128xf32>
    %759 = math.exp %758 : vector<8x128xf32>
    %cst_204 = arith.constant 1.000000e+00 : f32
    %760 = vector.broadcast %cst_204 : f32 to vector<8x128xf32>
    %761 = arith.addf %760, %759 : vector<8x128xf32>
    %762 = arith.divf %760, %761 : vector<8x128xf32>
    %763 = vector.extract_strided_slice %750 {offsets = [0, 256], sizes = [8, 128], strides = [1, 1]} : vector<8x512xf32> to vector<8x128xf32>
    %764 = math.tanh %763 : vector<8x128xf32>
    %765 = vector.extract_strided_slice %750 {offsets = [0, 384], sizes = [8, 128], strides = [1, 1]} : vector<8x512xf32> to vector<8x128xf32>
    %766 = arith.negf %765 : vector<8x128xf32>
    %767 = math.exp %766 : vector<8x128xf32>
    %cst_205 = arith.constant 1.000000e+00 : f32
    %768 = vector.broadcast %cst_205 : f32 to vector<8x128xf32>
    %769 = arith.addf %768, %767 : vector<8x128xf32>
    %770 = arith.divf %768, %769 : vector<8x128xf32>
    %771 = arith.mulf %762, %647 : vector<8x128xf32>
    %772 = arith.mulf %756, %764 : vector<8x128xf32>
    %773 = arith.addf %771, %772 : vector<8x128xf32>
    %774 = math.tanh %773 : vector<8x128xf32>
    %775 = arith.mulf %770, %774 : vector<8x128xf32>
    %776 = tpu.concatenate %711, %681 in 1 : vector<8x128xf32>, vector<8x128xf32> -> vector<8x256xf32>
    %777 = arith.truncf %776 : vector<8x256xf32> to vector<8x256xbf16>
    %c0_206 = arith.constant 0 : index
    %c0_207 = arith.constant 0 : index
    %778 = vector.load %arg8[%c0_206, %c0_207] : memref<256x512xbf16, #tpu.memory_space<vmem>>, vector<256x512xbf16>
    %cst_208 = arith.constant dense<0.000000e+00> : vector<8x512xf32>
    %779 = tpu.matmul %777, %778, %cst_208 {dimension_numbers = #tpu.dot_dimension_numbers<[1], [0], [0], [1], [0, 0, 1, 1], [], []>} : vector<8x256xbf16>, vector<256x512xbf16>, vector<8x512xf32> -> vector<8x512xf32>
    %c0_209 = arith.constant 0 : index
    %c0_210 = arith.constant 0 : index
    %780 = vector.load %arg9[%c0_209, %c0_210] : memref<1x512xf32, #tpu.memory_space<vmem>>, vector<1x512xf32>
    %781 = vector.broadcast %780 : vector<1x512xf32> to vector<8x512xf32>
    %782 = arith.addf %779, %781 : vector<8x512xf32>
    %783 = vector.extract_strided_slice %782 {offsets = [0, 0], sizes = [8, 128], strides = [1, 1]} : vector<8x512xf32> to vector<8x128xf32>
    %784 = arith.negf %783 : vector<8x128xf32>
    %785 = math.exp %784 : vector<8x128xf32>
    %cst_211 = arith.constant 1.000000e+00 : f32
    %786 = vector.broadcast %cst_211 : f32 to vector<8x128xf32>
    %787 = arith.addf %786, %785 : vector<8x128xf32>
    %788 = arith.divf %786, %787 : vector<8x128xf32>
    %789 = vector.extract_strided_slice %782 {offsets = [0, 128], sizes = [8, 128], strides = [1, 1]} : vector<8x512xf32> to vector<8x128xf32>
    %790 = arith.negf %789 : vector<8x128xf32>
    %791 = math.exp %790 : vector<8x128xf32>
    %cst_212 = arith.constant 1.000000e+00 : f32
    %792 = vector.broadcast %cst_212 : f32 to vector<8x128xf32>
    %793 = arith.addf %792, %791 : vector<8x128xf32>
    %794 = arith.divf %792, %793 : vector<8x128xf32>
    %795 = vector.extract_strided_slice %782 {offsets = [0, 256], sizes = [8, 128], strides = [1, 1]} : vector<8x512xf32> to vector<8x128xf32>
    %796 = math.tanh %795 : vector<8x128xf32>
    %797 = vector.extract_strided_slice %782 {offsets = [0, 384], sizes = [8, 128], strides = [1, 1]} : vector<8x512xf32> to vector<8x128xf32>
    %798 = arith.negf %797 : vector<8x128xf32>
    %799 = math.exp %798 : vector<8x128xf32>
    %cst_213 = arith.constant 1.000000e+00 : f32
    %800 = vector.broadcast %cst_213 : f32 to vector<8x128xf32>
    %801 = arith.addf %800, %799 : vector<8x128xf32>
    %802 = arith.divf %800, %801 : vector<8x128xf32>
    %803 = arith.mulf %794, %679 : vector<8x128xf32>
    %804 = arith.mulf %788, %796 : vector<8x128xf32>
    %805 = arith.addf %803, %804 : vector<8x128xf32>
    %806 = math.tanh %805 : vector<8x128xf32>
    %807 = arith.mulf %802, %806 : vector<8x128xf32>
    %c56 = arith.constant 56 : index
    %c0_214 = arith.constant 0 : index
    %808 = vector.load %arg51[%c56, %c0_214] : memref<64x512xf32, #tpu.memory_space<vmem>>, vector<8x512xf32>
    %809 = arith.truncf %711 : vector<8x128xf32> to vector<8x128xbf16>
    %c0_215 = arith.constant 0 : index
    %c0_216 = arith.constant 0 : index
    %810 = vector.load %arg6[%c0_215, %c0_216] : memref<128x512xbf16, #tpu.memory_space<vmem>>, vector<128x512xbf16>
    %cst_217 = arith.constant dense<0.000000e+00> : vector<8x512xf32>
    %811 = tpu.matmul %809, %810, %cst_217 {dimension_numbers = #tpu.dot_dimension_numbers<[1], [0], [0], [1], [0, 0, 1, 1], [], []>} : vector<8x128xbf16>, vector<128x512xbf16>, vector<8x512xf32> -> vector<8x512xf32>
    %812 = arith.addf %808, %811 : vector<8x512xf32>
    %813 = vector.extract_strided_slice %812 {offsets = [0, 0], sizes = [8, 128], strides = [1, 1]} : vector<8x512xf32> to vector<8x128xf32>
    %814 = arith.negf %813 : vector<8x128xf32>
    %815 = math.exp %814 : vector<8x128xf32>
    %cst_218 = arith.constant 1.000000e+00 : f32
    %816 = vector.broadcast %cst_218 : f32 to vector<8x128xf32>
    %817 = arith.addf %816, %815 : vector<8x128xf32>
    %818 = arith.divf %816, %817 : vector<8x128xf32>
    %819 = vector.extract_strided_slice %812 {offsets = [0, 128], sizes = [8, 128], strides = [1, 1]} : vector<8x512xf32> to vector<8x128xf32>
    %820 = arith.negf %819 : vector<8x128xf32>
    %821 = math.exp %820 : vector<8x128xf32>
    %cst_219 = arith.constant 1.000000e+00 : f32
    %822 = vector.broadcast %cst_219 : f32 to vector<8x128xf32>
    %823 = arith.addf %822, %821 : vector<8x128xf32>
    %824 = arith.divf %822, %823 : vector<8x128xf32>
    %825 = vector.extract_strided_slice %812 {offsets = [0, 256], sizes = [8, 128], strides = [1, 1]} : vector<8x512xf32> to vector<8x128xf32>
    %826 = math.tanh %825 : vector<8x128xf32>
    %827 = vector.extract_strided_slice %812 {offsets = [0, 384], sizes = [8, 128], strides = [1, 1]} : vector<8x512xf32> to vector<8x128xf32>
    %828 = arith.negf %827 : vector<8x128xf32>
    %829 = math.exp %828 : vector<8x128xf32>
    %cst_220 = arith.constant 1.000000e+00 : f32
    %830 = vector.broadcast %cst_220 : f32 to vector<8x128xf32>
    %831 = arith.addf %830, %829 : vector<8x128xf32>
    %832 = arith.divf %830, %831 : vector<8x128xf32>
    %833 = arith.mulf %824, %709 : vector<8x128xf32>
    %834 = arith.mulf %818, %826 : vector<8x128xf32>
    %835 = arith.addf %833, %834 : vector<8x128xf32>
    %836 = math.tanh %835 : vector<8x128xf32>
    %837 = arith.mulf %832, %836 : vector<8x128xf32>
    %838 = tpu.concatenate %775, %743 in 1 : vector<8x128xf32>, vector<8x128xf32> -> vector<8x256xf32>
    %839 = arith.truncf %838 : vector<8x256xf32> to vector<8x256xbf16>
    %c0_221 = arith.constant 0 : index
    %c0_222 = arith.constant 0 : index
    %840 = vector.load %arg12[%c0_221, %c0_222] : memref<256x512xbf16, #tpu.memory_space<vmem>>, vector<256x512xbf16>
    %cst_223 = arith.constant dense<0.000000e+00> : vector<8x512xf32>
    %841 = tpu.matmul %839, %840, %cst_223 {dimension_numbers = #tpu.dot_dimension_numbers<[1], [0], [0], [1], [0, 0, 1, 1], [], []>} : vector<8x256xbf16>, vector<256x512xbf16>, vector<8x512xf32> -> vector<8x512xf32>
    %c0_224 = arith.constant 0 : index
    %c0_225 = arith.constant 0 : index
    %842 = vector.load %arg13[%c0_224, %c0_225] : memref<1x512xf32, #tpu.memory_space<vmem>>, vector<1x512xf32>
    %843 = vector.broadcast %842 : vector<1x512xf32> to vector<8x512xf32>
    %844 = arith.addf %841, %843 : vector<8x512xf32>
    %845 = vector.extract_strided_slice %844 {offsets = [0, 0], sizes = [8, 128], strides = [1, 1]} : vector<8x512xf32> to vector<8x128xf32>
    %846 = arith.negf %845 : vector<8x128xf32>
    %847 = math.exp %846 : vector<8x128xf32>
    %cst_226 = arith.constant 1.000000e+00 : f32
    %848 = vector.broadcast %cst_226 : f32 to vector<8x128xf32>
    %849 = arith.addf %848, %847 : vector<8x128xf32>
    %850 = arith.divf %848, %849 : vector<8x128xf32>
    %851 = vector.extract_strided_slice %844 {offsets = [0, 128], sizes = [8, 128], strides = [1, 1]} : vector<8x512xf32> to vector<8x128xf32>
    %852 = arith.negf %851 : vector<8x128xf32>
    %853 = math.exp %852 : vector<8x128xf32>
    %cst_227 = arith.constant 1.000000e+00 : f32
    %854 = vector.broadcast %cst_227 : f32 to vector<8x128xf32>
    %855 = arith.addf %854, %853 : vector<8x128xf32>
    %856 = arith.divf %854, %855 : vector<8x128xf32>
    %857 = vector.extract_strided_slice %844 {offsets = [0, 256], sizes = [8, 128], strides = [1, 1]} : vector<8x512xf32> to vector<8x128xf32>
    %858 = math.tanh %857 : vector<8x128xf32>
    %859 = vector.extract_strided_slice %844 {offsets = [0, 384], sizes = [8, 128], strides = [1, 1]} : vector<8x512xf32> to vector<8x128xf32>
    %860 = arith.negf %859 : vector<8x128xf32>
    %861 = math.exp %860 : vector<8x128xf32>
    %cst_228 = arith.constant 1.000000e+00 : f32
    %862 = vector.broadcast %cst_228 : f32 to vector<8x128xf32>
    %863 = arith.addf %862, %861 : vector<8x128xf32>
    %864 = arith.divf %862, %863 : vector<8x128xf32>
    %865 = arith.mulf %856, %741 : vector<8x128xf32>
    %866 = arith.mulf %850, %858 : vector<8x128xf32>
    %867 = arith.addf %865, %866 : vector<8x128xf32>
    %868 = math.tanh %867 : vector<8x128xf32>
    %869 = arith.mulf %864, %868 : vector<8x128xf32>
    %870 = tpu.concatenate %807, %775 in 1 : vector<8x128xf32>, vector<8x128xf32> -> vector<8x256xf32>
    %871 = arith.truncf %870 : vector<8x256xf32> to vector<8x256xbf16>
    %c0_229 = arith.constant 0 : index
    %c0_230 = arith.constant 0 : index
    %872 = vector.load %arg10[%c0_229, %c0_230] : memref<256x512xbf16, #tpu.memory_space<vmem>>, vector<256x512xbf16>
    %cst_231 = arith.constant dense<0.000000e+00> : vector<8x512xf32>
    %873 = tpu.matmul %871, %872, %cst_231 {dimension_numbers = #tpu.dot_dimension_numbers<[1], [0], [0], [1], [0, 0, 1, 1], [], []>} : vector<8x256xbf16>, vector<256x512xbf16>, vector<8x512xf32> -> vector<8x512xf32>
    %c0_232 = arith.constant 0 : index
    %c0_233 = arith.constant 0 : index
    %874 = vector.load %arg11[%c0_232, %c0_233] : memref<1x512xf32, #tpu.memory_space<vmem>>, vector<1x512xf32>
    %875 = vector.broadcast %874 : vector<1x512xf32> to vector<8x512xf32>
    %876 = arith.addf %873, %875 : vector<8x512xf32>
    %877 = vector.extract_strided_slice %876 {offsets = [0, 0], sizes = [8, 128], strides = [1, 1]} : vector<8x512xf32> to vector<8x128xf32>
    %878 = arith.negf %877 : vector<8x128xf32>
    %879 = math.exp %878 : vector<8x128xf32>
    %cst_234 = arith.constant 1.000000e+00 : f32
    %880 = vector.broadcast %cst_234 : f32 to vector<8x128xf32>
    %881 = arith.addf %880, %879 : vector<8x128xf32>
    %882 = arith.divf %880, %881 : vector<8x128xf32>
    %883 = vector.extract_strided_slice %876 {offsets = [0, 128], sizes = [8, 128], strides = [1, 1]} : vector<8x512xf32> to vector<8x128xf32>
    %884 = arith.negf %883 : vector<8x128xf32>
    %885 = math.exp %884 : vector<8x128xf32>
    %cst_235 = arith.constant 1.000000e+00 : f32
    %886 = vector.broadcast %cst_235 : f32 to vector<8x128xf32>
    %887 = arith.addf %886, %885 : vector<8x128xf32>
    %888 = arith.divf %886, %887 : vector<8x128xf32>
    %889 = vector.extract_strided_slice %876 {offsets = [0, 256], sizes = [8, 128], strides = [1, 1]} : vector<8x512xf32> to vector<8x128xf32>
    %890 = math.tanh %889 : vector<8x128xf32>
    %891 = vector.extract_strided_slice %876 {offsets = [0, 384], sizes = [8, 128], strides = [1, 1]} : vector<8x512xf32> to vector<8x128xf32>
    %892 = arith.negf %891 : vector<8x128xf32>
    %893 = math.exp %892 : vector<8x128xf32>
    %cst_236 = arith.constant 1.000000e+00 : f32
    %894 = vector.broadcast %cst_236 : f32 to vector<8x128xf32>
    %895 = arith.addf %894, %893 : vector<8x128xf32>
    %896 = arith.divf %894, %895 : vector<8x128xf32>
    %897 = arith.mulf %888, %773 : vector<8x128xf32>
    %898 = arith.mulf %882, %890 : vector<8x128xf32>
    %899 = arith.addf %897, %898 : vector<8x128xf32>
    %900 = math.tanh %899 : vector<8x128xf32>
    %901 = arith.mulf %896, %900 : vector<8x128xf32>
    %902 = tpu.concatenate %837, %807 in 1 : vector<8x128xf32>, vector<8x128xf32> -> vector<8x256xf32>
    %903 = arith.truncf %902 : vector<8x256xf32> to vector<8x256xbf16>
    %c0_237 = arith.constant 0 : index
    %c0_238 = arith.constant 0 : index
    %904 = vector.load %arg8[%c0_237, %c0_238] : memref<256x512xbf16, #tpu.memory_space<vmem>>, vector<256x512xbf16>
    %cst_239 = arith.constant dense<0.000000e+00> : vector<8x512xf32>
    %905 = tpu.matmul %903, %904, %cst_239 {dimension_numbers = #tpu.dot_dimension_numbers<[1], [0], [0], [1], [0, 0, 1, 1], [], []>} : vector<8x256xbf16>, vector<256x512xbf16>, vector<8x512xf32> -> vector<8x512xf32>
    %c0_240 = arith.constant 0 : index
    %c0_241 = arith.constant 0 : index
    %906 = vector.load %arg9[%c0_240, %c0_241] : memref<1x512xf32, #tpu.memory_space<vmem>>, vector<1x512xf32>
    %907 = vector.broadcast %906 : vector<1x512xf32> to vector<8x512xf32>
    %908 = arith.addf %905, %907 : vector<8x512xf32>
    %909 = vector.extract_strided_slice %908 {offsets = [0, 0], sizes = [8, 128], strides = [1, 1]} : vector<8x512xf32> to vector<8x128xf32>
    %910 = arith.negf %909 : vector<8x128xf32>
    %911 = math.exp %910 : vector<8x128xf32>
    %cst_242 = arith.constant 1.000000e+00 : f32
    %912 = vector.broadcast %cst_242 : f32 to vector<8x128xf32>
    %913 = arith.addf %912, %911 : vector<8x128xf32>
    %914 = arith.divf %912, %913 : vector<8x128xf32>
    %915 = vector.extract_strided_slice %908 {offsets = [0, 128], sizes = [8, 128], strides = [1, 1]} : vector<8x512xf32> to vector<8x128xf32>
    %916 = arith.negf %915 : vector<8x128xf32>
    %917 = math.exp %916 : vector<8x128xf32>
    %cst_243 = arith.constant 1.000000e+00 : f32
    %918 = vector.broadcast %cst_243 : f32 to vector<8x128xf32>
    %919 = arith.addf %918, %917 : vector<8x128xf32>
    %920 = arith.divf %918, %919 : vector<8x128xf32>
    %921 = vector.extract_strided_slice %908 {offsets = [0, 256], sizes = [8, 128], strides = [1, 1]} : vector<8x512xf32> to vector<8x128xf32>
    %922 = math.tanh %921 : vector<8x128xf32>
    %923 = vector.extract_strided_slice %908 {offsets = [0, 384], sizes = [8, 128], strides = [1, 1]} : vector<8x512xf32> to vector<8x128xf32>
    %924 = arith.negf %923 : vector<8x128xf32>
    %925 = math.exp %924 : vector<8x128xf32>
    %cst_244 = arith.constant 1.000000e+00 : f32
    %926 = vector.broadcast %cst_244 : f32 to vector<8x128xf32>
    %927 = arith.addf %926, %925 : vector<8x128xf32>
    %928 = arith.divf %926, %927 : vector<8x128xf32>
    %929 = arith.mulf %920, %805 : vector<8x128xf32>
    %930 = arith.mulf %914, %922 : vector<8x128xf32>
    %931 = arith.addf %929, %930 : vector<8x128xf32>
    %932 = math.tanh %931 : vector<8x128xf32>
    %933 = arith.mulf %928, %932 : vector<8x128xf32>
    %934 = tpu.concatenate %901, %869 in 1 : vector<8x128xf32>, vector<8x128xf32> -> vector<8x256xf32>
    %935 = arith.truncf %934 : vector<8x256xf32> to vector<8x256xbf16>
    %c0_245 = arith.constant 0 : index
    %c0_246 = arith.constant 0 : index
    %936 = vector.load %arg12[%c0_245, %c0_246] : memref<256x512xbf16, #tpu.memory_space<vmem>>, vector<256x512xbf16>
    %cst_247 = arith.constant dense<0.000000e+00> : vector<8x512xf32>
    %937 = tpu.matmul %935, %936, %cst_247 {dimension_numbers = #tpu.dot_dimension_numbers<[1], [0], [0], [1], [0, 0, 1, 1], [], []>} : vector<8x256xbf16>, vector<256x512xbf16>, vector<8x512xf32> -> vector<8x512xf32>
    %c0_248 = arith.constant 0 : index
    %c0_249 = arith.constant 0 : index
    %938 = vector.load %arg13[%c0_248, %c0_249] : memref<1x512xf32, #tpu.memory_space<vmem>>, vector<1x512xf32>
    %939 = vector.broadcast %938 : vector<1x512xf32> to vector<8x512xf32>
    %940 = arith.addf %937, %939 : vector<8x512xf32>
    %941 = vector.extract_strided_slice %940 {offsets = [0, 0], sizes = [8, 128], strides = [1, 1]} : vector<8x512xf32> to vector<8x128xf32>
    %942 = arith.negf %941 : vector<8x128xf32>
    %943 = math.exp %942 : vector<8x128xf32>
    %cst_250 = arith.constant 1.000000e+00 : f32
    %944 = vector.broadcast %cst_250 : f32 to vector<8x128xf32>
    %945 = arith.addf %944, %943 : vector<8x128xf32>
    %946 = arith.divf %944, %945 : vector<8x128xf32>
    %947 = vector.extract_strided_slice %940 {offsets = [0, 128], sizes = [8, 128], strides = [1, 1]} : vector<8x512xf32> to vector<8x128xf32>
    %948 = arith.negf %947 : vector<8x128xf32>
    %949 = math.exp %948 : vector<8x128xf32>
    %cst_251 = arith.constant 1.000000e+00 : f32
    %950 = vector.broadcast %cst_251 : f32 to vector<8x128xf32>
    %951 = arith.addf %950, %949 : vector<8x128xf32>
    %952 = arith.divf %950, %951 : vector<8x128xf32>
    %953 = vector.extract_strided_slice %940 {offsets = [0, 256], sizes = [8, 128], strides = [1, 1]} : vector<8x512xf32> to vector<8x128xf32>
    %954 = math.tanh %953 : vector<8x128xf32>
    %955 = vector.extract_strided_slice %940 {offsets = [0, 384], sizes = [8, 128], strides = [1, 1]} : vector<8x512xf32> to vector<8x128xf32>
    %956 = arith.negf %955 : vector<8x128xf32>
    %957 = math.exp %956 : vector<8x128xf32>
    %cst_252 = arith.constant 1.000000e+00 : f32
    %958 = vector.broadcast %cst_252 : f32 to vector<8x128xf32>
    %959 = arith.addf %958, %957 : vector<8x128xf32>
    %960 = arith.divf %958, %959 : vector<8x128xf32>
    %961 = arith.mulf %952, %867 : vector<8x128xf32>
    %962 = arith.mulf %946, %954 : vector<8x128xf32>
    %963 = arith.addf %961, %962 : vector<8x128xf32>
    %964 = math.tanh %963 : vector<8x128xf32>
    %965 = arith.mulf %960, %964 : vector<8x128xf32>
    %966 = tpu.concatenate %933, %901 in 1 : vector<8x128xf32>, vector<8x128xf32> -> vector<8x256xf32>
    %967 = arith.truncf %966 : vector<8x256xf32> to vector<8x256xbf16>
    %c0_253 = arith.constant 0 : index
    %c0_254 = arith.constant 0 : index
    %968 = vector.load %arg10[%c0_253, %c0_254] : memref<256x512xbf16, #tpu.memory_space<vmem>>, vector<256x512xbf16>
    %cst_255 = arith.constant dense<0.000000e+00> : vector<8x512xf32>
    %969 = tpu.matmul %967, %968, %cst_255 {dimension_numbers = #tpu.dot_dimension_numbers<[1], [0], [0], [1], [0, 0, 1, 1], [], []>} : vector<8x256xbf16>, vector<256x512xbf16>, vector<8x512xf32> -> vector<8x512xf32>
    %c0_256 = arith.constant 0 : index
    %c0_257 = arith.constant 0 : index
    %970 = vector.load %arg11[%c0_256, %c0_257] : memref<1x512xf32, #tpu.memory_space<vmem>>, vector<1x512xf32>
    %971 = vector.broadcast %970 : vector<1x512xf32> to vector<8x512xf32>
    %972 = arith.addf %969, %971 : vector<8x512xf32>
    %973 = vector.extract_strided_slice %972 {offsets = [0, 0], sizes = [8, 128], strides = [1, 1]} : vector<8x512xf32> to vector<8x128xf32>
    %974 = arith.negf %973 : vector<8x128xf32>
    %975 = math.exp %974 : vector<8x128xf32>
    %cst_258 = arith.constant 1.000000e+00 : f32
    %976 = vector.broadcast %cst_258 : f32 to vector<8x128xf32>
    %977 = arith.addf %976, %975 : vector<8x128xf32>
    %978 = arith.divf %976, %977 : vector<8x128xf32>
    %979 = vector.extract_strided_slice %972 {offsets = [0, 128], sizes = [8, 128], strides = [1, 1]} : vector<8x512xf32> to vector<8x128xf32>
    %980 = arith.negf %979 : vector<8x128xf32>
    %981 = math.exp %980 : vector<8x128xf32>
    %cst_259 = arith.constant 1.000000e+00 : f32
    %982 = vector.broadcast %cst_259 : f32 to vector<8x128xf32>
    %983 = arith.addf %982, %981 : vector<8x128xf32>
    %984 = arith.divf %982, %983 : vector<8x128xf32>
    %985 = vector.extract_strided_slice %972 {offsets = [0, 256], sizes = [8, 128], strides = [1, 1]} : vector<8x512xf32> to vector<8x128xf32>
    %986 = math.tanh %985 : vector<8x128xf32>
    %987 = vector.extract_strided_slice %972 {offsets = [0, 384], sizes = [8, 128], strides = [1, 1]} : vector<8x512xf32> to vector<8x128xf32>
    %988 = arith.negf %987 : vector<8x128xf32>
    %989 = math.exp %988 : vector<8x128xf32>
    %cst_260 = arith.constant 1.000000e+00 : f32
    %990 = vector.broadcast %cst_260 : f32 to vector<8x128xf32>
    %991 = arith.addf %990, %989 : vector<8x128xf32>
    %992 = arith.divf %990, %991 : vector<8x128xf32>
    %993 = arith.mulf %984, %899 : vector<8x128xf32>
    %994 = arith.mulf %978, %986 : vector<8x128xf32>
    %995 = arith.addf %993, %994 : vector<8x128xf32>
    %996 = math.tanh %995 : vector<8x128xf32>
    %997 = arith.mulf %992, %996 : vector<8x128xf32>
    %998 = tpu.concatenate %997, %965 in 1 : vector<8x128xf32>, vector<8x128xf32> -> vector<8x256xf32>
    %999 = arith.truncf %998 : vector<8x256xf32> to vector<8x256xbf16>
    %c0_261 = arith.constant 0 : index
    %c0_262 = arith.constant 0 : index
    %1000 = vector.load %arg12[%c0_261, %c0_262] : memref<256x512xbf16, #tpu.memory_space<vmem>>, vector<256x512xbf16>
    %cst_263 = arith.constant dense<0.000000e+00> : vector<8x512xf32>
    %1001 = tpu.matmul %999, %1000, %cst_263 {dimension_numbers = #tpu.dot_dimension_numbers<[1], [0], [0], [1], [0, 0, 1, 1], [], []>} : vector<8x256xbf16>, vector<256x512xbf16>, vector<8x512xf32> -> vector<8x512xf32>
    %c0_264 = arith.constant 0 : index
    %c0_265 = arith.constant 0 : index
    %1002 = vector.load %arg13[%c0_264, %c0_265] : memref<1x512xf32, #tpu.memory_space<vmem>>, vector<1x512xf32>
    %1003 = vector.broadcast %1002 : vector<1x512xf32> to vector<8x512xf32>
    %1004 = arith.addf %1001, %1003 : vector<8x512xf32>
    %1005 = vector.extract_strided_slice %1004 {offsets = [0, 0], sizes = [8, 128], strides = [1, 1]} : vector<8x512xf32> to vector<8x128xf32>
    %1006 = arith.negf %1005 : vector<8x128xf32>
    %1007 = math.exp %1006 : vector<8x128xf32>
    %cst_266 = arith.constant 1.000000e+00 : f32
    %1008 = vector.broadcast %cst_266 : f32 to vector<8x128xf32>
    %1009 = arith.addf %1008, %1007 : vector<8x128xf32>
    %1010 = arith.divf %1008, %1009 : vector<8x128xf32>
    %1011 = vector.extract_strided_slice %1004 {offsets = [0, 128], sizes = [8, 128], strides = [1, 1]} : vector<8x512xf32> to vector<8x128xf32>
    %1012 = arith.negf %1011 : vector<8x128xf32>
    %1013 = math.exp %1012 : vector<8x128xf32>
    %cst_267 = arith.constant 1.000000e+00 : f32
    %1014 = vector.broadcast %cst_267 : f32 to vector<8x128xf32>
    %1015 = arith.addf %1014, %1013 : vector<8x128xf32>
    %1016 = arith.divf %1014, %1015 : vector<8x128xf32>
    %1017 = vector.extract_strided_slice %1004 {offsets = [0, 256], sizes = [8, 128], strides = [1, 1]} : vector<8x512xf32> to vector<8x128xf32>
    %1018 = math.tanh %1017 : vector<8x128xf32>
    %1019 = vector.extract_strided_slice %1004 {offsets = [0, 384], sizes = [8, 128], strides = [1, 1]} : vector<8x512xf32> to vector<8x128xf32>
    %1020 = arith.negf %1019 : vector<8x128xf32>
    %1021 = math.exp %1020 : vector<8x128xf32>
    %cst_268 = arith.constant 1.000000e+00 : f32
    %1022 = vector.broadcast %cst_268 : f32 to vector<8x128xf32>
    %1023 = arith.addf %1022, %1021 : vector<8x128xf32>
    %1024 = arith.divf %1022, %1023 : vector<8x128xf32>
    %1025 = arith.mulf %1016, %963 : vector<8x128xf32>
    %1026 = arith.mulf %1010, %1018 : vector<8x128xf32>
    %1027 = arith.addf %1025, %1026 : vector<8x128xf32>
    %1028 = math.tanh %1027 : vector<8x128xf32>
    %1029 = arith.mulf %1024, %1028 : vector<8x128xf32>
    %1030 = tpu.concatenate %837, %933, %997, %1029 in 0 : vector<8x128xf32>, vector<8x128xf32>, vector<8x128xf32>, vector<8x128xf32> -> vector<32x128xf32>
    %c0_269 = arith.constant 0 : index
    %c0_270 = arith.constant 0 : index
    %1031 = vector.load %arg1[%c0_269, %c0_270] : memref<128x32xf32, #tpu.memory_space<vmem>>, vector<128x32xf32>
    %c0_271 = arith.constant 0 : index
    %c0_272 = arith.constant 0 : index
    %1032 = vector.load %arg2[%c0_271, %c0_272] : memref<4x128xf32, #tpu.memory_space<vmem>>, vector<4x128xf32>
    %1033 = arith.truncf %1030 : vector<32x128xf32> to vector<32x128xbf16>
    %c0_273 = arith.constant 0 : index
    %c0_274 = arith.constant 0 : index
    %1034 = vector.load %arg14[%c0_273, %c0_274] : memref<128x384xbf16, #tpu.memory_space<vmem>>, vector<128x384xbf16>
    %cst_275 = arith.constant dense<0.000000e+00> : vector<32x384xf32>
    %1035 = tpu.matmul %1033, %1034, %cst_275 {dimension_numbers = #tpu.dot_dimension_numbers<[1], [0], [0], [1], [0, 0, 1, 1], [], []>} : vector<32x128xbf16>, vector<128x384xbf16>, vector<32x384xf32> -> vector<32x384xf32>
    %c0_276 = arith.constant 0 : index
    %c0_277 = arith.constant 0 : index
    %1036 = vector.load %arg15[%c0_276, %c0_277] : memref<1x384xf32, #tpu.memory_space<vmem>>, vector<1x384xf32>
    %1037 = vector.broadcast %1036 : vector<1x384xf32> to vector<32x384xf32>
    %1038 = arith.addf %1035, %1037 : vector<32x384xf32>
    %1039 = vector.extract_strided_slice %1038 {offsets = [0, 0], sizes = [32, 128], strides = [1, 1]} : vector<32x384xf32> to vector<32x128xf32>
    %cst_278 = arith.constant 0.176776692 : f32
    %1040 = vector.broadcast %cst_278 : f32 to vector<32x128xf32>
    %1041 = arith.mulf %1039, %1040 : vector<32x128xf32>
    %1042 = vector.extract_strided_slice %1038 {offsets = [0, 128], sizes = [32, 128], strides = [1, 1]} : vector<32x384xf32> to vector<32x128xf32>
    %1043 = arith.truncf %1042 : vector<32x128xf32> to vector<32x128xbf16>
    %1044 = vector.extract_strided_slice %1038 {offsets = [0, 256], sizes = [32, 128], strides = [1, 1]} : vector<32x384xf32> to vector<32x128xf32>
    %1045 = vector.extract_strided_slice %1032 {offsets = [0, 0], sizes = [1, 128], strides = [1, 1]} : vector<4x128xf32> to vector<1x128xf32>
    %1046 = vector.broadcast %1045 : vector<1x128xf32> to vector<32x128xf32>
    %1047 = arith.mulf %1041, %1046 : vector<32x128xf32>
    %1048 = vector.extract_strided_slice %1032 {offsets = [1, 0], sizes = [1, 128], strides = [1, 1]} : vector<4x128xf32> to vector<1x128xf32>
    %1049 = vector.broadcast %1048 : vector<1x128xf32> to vector<32x128xf32>
    %1050 = arith.mulf %1041, %1049 : vector<32x128xf32>
    %1051 = vector.extract_strided_slice %1032 {offsets = [2, 0], sizes = [1, 128], strides = [1, 1]} : vector<4x128xf32> to vector<1x128xf32>
    %1052 = vector.broadcast %1051 : vector<1x128xf32> to vector<32x128xf32>
    %1053 = arith.mulf %1041, %1052 : vector<32x128xf32>
    %1054 = vector.extract_strided_slice %1032 {offsets = [3, 0], sizes = [1, 128], strides = [1, 1]} : vector<4x128xf32> to vector<1x128xf32>
    %1055 = vector.broadcast %1054 : vector<1x128xf32> to vector<32x128xf32>
    %1056 = arith.mulf %1041, %1055 : vector<32x128xf32>
    %1057 = tpu.concatenate %1047, %1050, %1053, %1056 in 0 : vector<32x128xf32>, vector<32x128xf32>, vector<32x128xf32>, vector<32x128xf32> -> vector<128x128xf32>
    %1058 = arith.truncf %1057 : vector<128x128xf32> to vector<128x128xbf16>
    %cst_279 = arith.constant dense<0.000000e+00> : vector<128x32xf32>
    %1059 = tpu.matmul %1058, %1043, %cst_279 {dimension_numbers = #tpu.dot_dimension_numbers<[1], [1], [0], [0], [0, 0, 1, 0], [], []>} : vector<128x128xbf16>, vector<32x128xbf16>, vector<128x32xf32> -> vector<128x32xf32>
    %1060 = arith.addf %1059, %1031 : vector<128x32xf32>
    %cst_280 = arith.constant dense<0xFF800000> : vector<128xf32>
    %1061 = vector.multi_reduction <maximumf>, %1060, %cst_280 [1] : vector<128x32xf32> to vector<128xf32>
    %1062 = vector.shape_cast %1061 : vector<128xf32> to vector<128x1xf32>
    %1063 = vector.broadcast %1062 : vector<128x1xf32> to vector<128x32xf32>
    %1064 = arith.subf %1060, %1063 : vector<128x32xf32>
    %1065 = math.exp %1064 : vector<128x32xf32>
    %cst_281 = arith.constant dense<0.000000e+00> : vector<128xf32>
    %1066 = vector.multi_reduction <add>, %1065, %cst_281 [1] : vector<128x32xf32> to vector<128xf32>
    %1067 = vector.shape_cast %1066 : vector<128xf32> to vector<128x1xf32>
    %1068 = tpu.reciprocal %1067 {approx = true} : vector<128x1xf32> -> vector<128x1xf32>
    %1069 = vector.broadcast %1068 : vector<128x1xf32> to vector<128x32xf32>
    %1070 = arith.mulf %1065, %1069 : vector<128x32xf32>
    %1071 = arith.truncf %1070 : vector<128x32xf32> to vector<128x32xbf16>
    %cst_282 = arith.constant 0.000000e+00 : f32
    %1072 = vector.broadcast %cst_282 : f32 to vector<32x128xf32>
    %1073 = vector.extract_strided_slice %1032 {offsets = [0, 0], sizes = [1, 128], strides = [1, 1]} : vector<4x128xf32> to vector<1x128xf32>
    %1074 = vector.broadcast %1073 : vector<1x128xf32> to vector<32x128xf32>
    %1075 = arith.mulf %1044, %1074 : vector<32x128xf32>
    %1076 = arith.truncf %1075 : vector<32x128xf32> to vector<32x128xbf16>
    %1077 = vector.extract_strided_slice %1071 {offsets = [0, 0], sizes = [32, 32], strides = [1, 1]} : vector<128x32xbf16> to vector<32x32xbf16>
    %cst_283 = arith.constant dense<0.000000e+00> : vector<32x128xf32>
    %1078 = tpu.matmul %1077, %1076, %cst_283 {dimension_numbers = #tpu.dot_dimension_numbers<[1], [0], [0], [1], [0, 0, 1, 1], [], []>} : vector<32x32xbf16>, vector<32x128xbf16>, vector<32x128xf32> -> vector<32x128xf32>
    %1079 = arith.addf %1072, %1078 : vector<32x128xf32>
    %1080 = vector.extract_strided_slice %1032 {offsets = [1, 0], sizes = [1, 128], strides = [1, 1]} : vector<4x128xf32> to vector<1x128xf32>
    %1081 = vector.broadcast %1080 : vector<1x128xf32> to vector<32x128xf32>
    %1082 = arith.mulf %1044, %1081 : vector<32x128xf32>
    %1083 = arith.truncf %1082 : vector<32x128xf32> to vector<32x128xbf16>
    %1084 = vector.extract_strided_slice %1071 {offsets = [32, 0], sizes = [32, 32], strides = [1, 1]} : vector<128x32xbf16> to vector<32x32xbf16>
    %cst_284 = arith.constant dense<0.000000e+00> : vector<32x128xf32>
    %1085 = tpu.matmul %1084, %1083, %cst_284 {dimension_numbers = #tpu.dot_dimension_numbers<[1], [0], [0], [1], [0, 0, 1, 1], [], []>} : vector<32x32xbf16>, vector<32x128xbf16>, vector<32x128xf32> -> vector<32x128xf32>
    %1086 = arith.addf %1079, %1085 : vector<32x128xf32>
    %1087 = vector.extract_strided_slice %1032 {offsets = [2, 0], sizes = [1, 128], strides = [1, 1]} : vector<4x128xf32> to vector<1x128xf32>
    %1088 = vector.broadcast %1087 : vector<1x128xf32> to vector<32x128xf32>
    %1089 = arith.mulf %1044, %1088 : vector<32x128xf32>
    %1090 = arith.truncf %1089 : vector<32x128xf32> to vector<32x128xbf16>
    %1091 = vector.extract_strided_slice %1071 {offsets = [64, 0], sizes = [32, 32], strides = [1, 1]} : vector<128x32xbf16> to vector<32x32xbf16>
    %cst_285 = arith.constant dense<0.000000e+00> : vector<32x128xf32>
    %1092 = tpu.matmul %1091, %1090, %cst_285 {dimension_numbers = #tpu.dot_dimension_numbers<[1], [0], [0], [1], [0, 0, 1, 1], [], []>} : vector<32x32xbf16>, vector<32x128xbf16>, vector<32x128xf32> -> vector<32x128xf32>
    %1093 = arith.addf %1086, %1092 : vector<32x128xf32>
    %1094 = vector.extract_strided_slice %1032 {offsets = [3, 0], sizes = [1, 128], strides = [1, 1]} : vector<4x128xf32> to vector<1x128xf32>
    %1095 = vector.broadcast %1094 : vector<1x128xf32> to vector<32x128xf32>
    %1096 = arith.mulf %1044, %1095 : vector<32x128xf32>
    %1097 = arith.truncf %1096 : vector<32x128xf32> to vector<32x128xbf16>
    %1098 = vector.extract_strided_slice %1071 {offsets = [96, 0], sizes = [32, 32], strides = [1, 1]} : vector<128x32xbf16> to vector<32x32xbf16>
    %cst_286 = arith.constant dense<0.000000e+00> : vector<32x128xf32>
    %1099 = tpu.matmul %1098, %1097, %cst_286 {dimension_numbers = #tpu.dot_dimension_numbers<[1], [0], [0], [1], [0, 0, 1, 1], [], []>} : vector<32x32xbf16>, vector<32x128xbf16>, vector<32x128xf32> -> vector<32x128xf32>
    %1100 = arith.addf %1093, %1099 : vector<32x128xf32>
    %1101 = arith.truncf %1100 : vector<32x128xf32> to vector<32x128xbf16>
    %c0_287 = arith.constant 0 : index
    %c0_288 = arith.constant 0 : index
    %1102 = vector.load %arg16[%c0_287, %c0_288] : memref<128x128xbf16, #tpu.memory_space<vmem>>, vector<128x128xbf16>
    %cst_289 = arith.constant dense<0.000000e+00> : vector<32x128xf32>
    %1103 = tpu.matmul %1101, %1102, %cst_289 {dimension_numbers = #tpu.dot_dimension_numbers<[1], [0], [0], [1], [0, 0, 1, 1], [], []>} : vector<32x128xbf16>, vector<128x128xbf16>, vector<32x128xf32> -> vector<32x128xf32>
    %c0_290 = arith.constant 0 : index
    %c0_291 = arith.constant 0 : index
    %1104 = vector.load %arg17[%c0_290, %c0_291] : memref<1x128xf32, #tpu.memory_space<vmem>>, vector<1x128xf32>
    %1105 = vector.broadcast %1104 : vector<1x128xf32> to vector<32x128xf32>
    %1106 = arith.addf %1103, %1105 : vector<32x128xf32>
    %1107 = arith.addf %1030, %1106 : vector<32x128xf32>
    %c0_292 = arith.constant 0 : index
    %c0_293 = arith.constant 0 : index
    %1108 = vector.load %arg18[%c0_292, %c0_293] : memref<1x128xf32, #tpu.memory_space<vmem>>, vector<1x128xf32>
    %c0_294 = arith.constant 0 : index
    %c0_295 = arith.constant 0 : index
    %1109 = vector.load %arg19[%c0_294, %c0_295] : memref<1x128xf32, #tpu.memory_space<vmem>>, vector<1x128xf32>
    %cst_296 = arith.constant dense<0.000000e+00> : vector<32xf32>
    %1110 = vector.multi_reduction <add>, %1107, %cst_296 [1] : vector<32x128xf32> to vector<32xf32>
    %1111 = vector.shape_cast %1110 : vector<32xf32> to vector<32x1xf32>
    %cst_297 = arith.constant 1.280000e+02 : f32
    %1112 = vector.broadcast %cst_297 : f32 to vector<32x1xf32>
    %1113 = arith.divf %1111, %1112 : vector<32x1xf32>
    %1114 = vector.broadcast %1113 : vector<32x1xf32> to vector<32x128xf32>
    %1115 = arith.subf %1107, %1114 : vector<32x128xf32>
    %1116 = arith.mulf %1115, %1115 : vector<32x128xf32>
    %cst_298 = arith.constant dense<0.000000e+00> : vector<32xf32>
    %1117 = vector.multi_reduction <add>, %1116, %cst_298 [1] : vector<32x128xf32> to vector<32xf32>
    %1118 = vector.shape_cast %1117 : vector<32xf32> to vector<32x1xf32>
    %cst_299 = arith.constant 1.280000e+02 : f32
    %1119 = vector.broadcast %cst_299 : f32 to vector<32x1xf32>
    %1120 = arith.divf %1118, %1119 : vector<32x1xf32>
    %1121 = vector.broadcast %1113 : vector<32x1xf32> to vector<32x128xf32>
    %1122 = arith.subf %1107, %1121 : vector<32x128xf32>
    %cst_300 = arith.constant 9.99999974E-6 : f32
    %1123 = vector.broadcast %cst_300 : f32 to vector<32x1xf32>
    %1124 = arith.addf %1120, %1123 : vector<32x1xf32>
    %1125 = math.rsqrt %1124 : vector<32x1xf32>
    %1126 = vector.broadcast %1125 : vector<32x1xf32> to vector<32x128xf32>
    %1127 = arith.mulf %1122, %1126 : vector<32x128xf32>
    %1128 = vector.broadcast %1108 : vector<1x128xf32> to vector<32x128xf32>
    %1129 = arith.mulf %1127, %1128 : vector<32x128xf32>
    %1130 = vector.broadcast %1109 : vector<1x128xf32> to vector<32x128xf32>
    %1131 = arith.addf %1129, %1130 : vector<32x128xf32>
    %1132 = arith.truncf %1131 : vector<32x128xf32> to vector<32x128xbf16>
    %c0_301 = arith.constant 0 : index
    %c0_302 = arith.constant 0 : index
    %1133 = vector.load %arg20[%c0_301, %c0_302] : memref<128x256xbf16, #tpu.memory_space<vmem>>, vector<128x256xbf16>
    %cst_303 = arith.constant dense<0.000000e+00> : vector<32x256xf32>
    %1134 = tpu.matmul %1132, %1133, %cst_303 {dimension_numbers = #tpu.dot_dimension_numbers<[1], [0], [0], [1], [0, 0, 1, 1], [], []>} : vector<32x128xbf16>, vector<128x256xbf16>, vector<32x256xf32> -> vector<32x256xf32>
    %c0_304 = arith.constant 0 : index
    %c0_305 = arith.constant 0 : index
    %1135 = vector.load %arg21[%c0_304, %c0_305] : memref<1x256xf32, #tpu.memory_space<vmem>>, vector<1x256xf32>
    %1136 = vector.broadcast %1135 : vector<1x256xf32> to vector<32x256xf32>
    %1137 = arith.addf %1134, %1136 : vector<32x256xf32>
    %cst_306 = arith.constant 0.000000e+00 : f32
    %1138 = vector.broadcast %cst_306 : f32 to vector<32x256xf32>
    %1139 = arith.maximumf %1137, %1138 : vector<32x256xf32>
    %1140 = arith.truncf %1139 : vector<32x256xf32> to vector<32x256xbf16>
    %c0_307 = arith.constant 0 : index
    %c0_308 = arith.constant 0 : index
    %1141 = vector.load %arg22[%c0_307, %c0_308] : memref<256x128xbf16, #tpu.memory_space<vmem>>, vector<256x128xbf16>
    %cst_309 = arith.constant dense<0.000000e+00> : vector<32x128xf32>
    %1142 = tpu.matmul %1140, %1141, %cst_309 {dimension_numbers = #tpu.dot_dimension_numbers<[1], [0], [0], [1], [0, 0, 1, 1], [], []>} : vector<32x256xbf16>, vector<256x128xbf16>, vector<32x128xf32> -> vector<32x128xf32>
    %c0_310 = arith.constant 0 : index
    %c0_311 = arith.constant 0 : index
    %1143 = vector.load %arg23[%c0_310, %c0_311] : memref<1x128xf32, #tpu.memory_space<vmem>>, vector<1x128xf32>
    %1144 = vector.broadcast %1143 : vector<1x128xf32> to vector<32x128xf32>
    %1145 = arith.addf %1142, %1144 : vector<32x128xf32>
    %1146 = arith.addf %1131, %1145 : vector<32x128xf32>
    %c0_312 = arith.constant 0 : index
    %c0_313 = arith.constant 0 : index
    %1147 = vector.load %arg24[%c0_312, %c0_313] : memref<1x128xf32, #tpu.memory_space<vmem>>, vector<1x128xf32>
    %c0_314 = arith.constant 0 : index
    %c0_315 = arith.constant 0 : index
    %1148 = vector.load %arg25[%c0_314, %c0_315] : memref<1x128xf32, #tpu.memory_space<vmem>>, vector<1x128xf32>
    %cst_316 = arith.constant dense<0.000000e+00> : vector<32xf32>
    %1149 = vector.multi_reduction <add>, %1146, %cst_316 [1] : vector<32x128xf32> to vector<32xf32>
    %1150 = vector.shape_cast %1149 : vector<32xf32> to vector<32x1xf32>
    %cst_317 = arith.constant 1.280000e+02 : f32
    %1151 = vector.broadcast %cst_317 : f32 to vector<32x1xf32>
    %1152 = arith.divf %1150, %1151 : vector<32x1xf32>
    %1153 = vector.broadcast %1152 : vector<32x1xf32> to vector<32x128xf32>
    %1154 = arith.subf %1146, %1153 : vector<32x128xf32>
    %1155 = arith.mulf %1154, %1154 : vector<32x128xf32>
    %cst_318 = arith.constant dense<0.000000e+00> : vector<32xf32>
    %1156 = vector.multi_reduction <add>, %1155, %cst_318 [1] : vector<32x128xf32> to vector<32xf32>
    %1157 = vector.shape_cast %1156 : vector<32xf32> to vector<32x1xf32>
    %cst_319 = arith.constant 1.280000e+02 : f32
    %1158 = vector.broadcast %cst_319 : f32 to vector<32x1xf32>
    %1159 = arith.divf %1157, %1158 : vector<32x1xf32>
    %1160 = vector.broadcast %1152 : vector<32x1xf32> to vector<32x128xf32>
    %1161 = arith.subf %1146, %1160 : vector<32x128xf32>
    %cst_320 = arith.constant 9.99999974E-6 : f32
    %1162 = vector.broadcast %cst_320 : f32 to vector<32x1xf32>
    %1163 = arith.addf %1159, %1162 : vector<32x1xf32>
    %1164 = math.rsqrt %1163 : vector<32x1xf32>
    %1165 = vector.broadcast %1164 : vector<32x1xf32> to vector<32x128xf32>
    %1166 = arith.mulf %1161, %1165 : vector<32x128xf32>
    %1167 = vector.broadcast %1147 : vector<1x128xf32> to vector<32x128xf32>
    %1168 = arith.mulf %1166, %1167 : vector<32x128xf32>
    %1169 = vector.broadcast %1148 : vector<1x128xf32> to vector<32x128xf32>
    %1170 = arith.addf %1168, %1169 : vector<32x128xf32>
    %1171 = arith.truncf %1170 : vector<32x128xf32> to vector<32x128xbf16>
    %c0_321 = arith.constant 0 : index
    %c0_322 = arith.constant 0 : index
    %1172 = vector.load %arg26[%c0_321, %c0_322] : memref<128x384xbf16, #tpu.memory_space<vmem>>, vector<128x384xbf16>
    %cst_323 = arith.constant dense<0.000000e+00> : vector<32x384xf32>
    %1173 = tpu.matmul %1171, %1172, %cst_323 {dimension_numbers = #tpu.dot_dimension_numbers<[1], [0], [0], [1], [0, 0, 1, 1], [], []>} : vector<32x128xbf16>, vector<128x384xbf16>, vector<32x384xf32> -> vector<32x384xf32>
    %c0_324 = arith.constant 0 : index
    %c0_325 = arith.constant 0 : index
    %1174 = vector.load %arg27[%c0_324, %c0_325] : memref<1x384xf32, #tpu.memory_space<vmem>>, vector<1x384xf32>
    %1175 = vector.broadcast %1174 : vector<1x384xf32> to vector<32x384xf32>
    %1176 = arith.addf %1173, %1175 : vector<32x384xf32>
    %1177 = vector.extract_strided_slice %1176 {offsets = [0, 0], sizes = [32, 128], strides = [1, 1]} : vector<32x384xf32> to vector<32x128xf32>
    %cst_326 = arith.constant 0.176776692 : f32
    %1178 = vector.broadcast %cst_326 : f32 to vector<32x128xf32>
    %1179 = arith.mulf %1177, %1178 : vector<32x128xf32>
    %1180 = vector.extract_strided_slice %1176 {offsets = [0, 128], sizes = [32, 128], strides = [1, 1]} : vector<32x384xf32> to vector<32x128xf32>
    %1181 = arith.truncf %1180 : vector<32x128xf32> to vector<32x128xbf16>
    %1182 = vector.extract_strided_slice %1176 {offsets = [0, 256], sizes = [32, 128], strides = [1, 1]} : vector<32x384xf32> to vector<32x128xf32>
    %1183 = vector.extract_strided_slice %1032 {offsets = [0, 0], sizes = [1, 128], strides = [1, 1]} : vector<4x128xf32> to vector<1x128xf32>
    %1184 = vector.broadcast %1183 : vector<1x128xf32> to vector<32x128xf32>
    %1185 = arith.mulf %1179, %1184 : vector<32x128xf32>
    %1186 = vector.extract_strided_slice %1032 {offsets = [1, 0], sizes = [1, 128], strides = [1, 1]} : vector<4x128xf32> to vector<1x128xf32>
    %1187 = vector.broadcast %1186 : vector<1x128xf32> to vector<32x128xf32>
    %1188 = arith.mulf %1179, %1187 : vector<32x128xf32>
    %1189 = vector.extract_strided_slice %1032 {offsets = [2, 0], sizes = [1, 128], strides = [1, 1]} : vector<4x128xf32> to vector<1x128xf32>
    %1190 = vector.broadcast %1189 : vector<1x128xf32> to vector<32x128xf32>
    %1191 = arith.mulf %1179, %1190 : vector<32x128xf32>
    %1192 = vector.extract_strided_slice %1032 {offsets = [3, 0], sizes = [1, 128], strides = [1, 1]} : vector<4x128xf32> to vector<1x128xf32>
    %1193 = vector.broadcast %1192 : vector<1x128xf32> to vector<32x128xf32>
    %1194 = arith.mulf %1179, %1193 : vector<32x128xf32>
    %1195 = tpu.concatenate %1185, %1188, %1191, %1194 in 0 : vector<32x128xf32>, vector<32x128xf32>, vector<32x128xf32>, vector<32x128xf32> -> vector<128x128xf32>
    %1196 = arith.truncf %1195 : vector<128x128xf32> to vector<128x128xbf16>
    %cst_327 = arith.constant dense<0.000000e+00> : vector<128x32xf32>
    %1197 = tpu.matmul %1196, %1181, %cst_327 {dimension_numbers = #tpu.dot_dimension_numbers<[1], [1], [0], [0], [0, 0, 1, 0], [], []>} : vector<128x128xbf16>, vector<32x128xbf16>, vector<128x32xf32> -> vector<128x32xf32>
    %1198 = arith.addf %1197, %1031 : vector<128x32xf32>
    %cst_328 = arith.constant dense<0xFF800000> : vector<128xf32>
    %1199 = vector.multi_reduction <maximumf>, %1198, %cst_328 [1] : vector<128x32xf32> to vector<128xf32>
    %1200 = vector.shape_cast %1199 : vector<128xf32> to vector<128x1xf32>
    %1201 = vector.broadcast %1200 : vector<128x1xf32> to vector<128x32xf32>
    %1202 = arith.subf %1198, %1201 : vector<128x32xf32>
    %1203 = math.exp %1202 : vector<128x32xf32>
    %cst_329 = arith.constant dense<0.000000e+00> : vector<128xf32>
    %1204 = vector.multi_reduction <add>, %1203, %cst_329 [1] : vector<128x32xf32> to vector<128xf32>
    %1205 = vector.shape_cast %1204 : vector<128xf32> to vector<128x1xf32>
    %1206 = tpu.reciprocal %1205 {approx = true} : vector<128x1xf32> -> vector<128x1xf32>
    %1207 = vector.broadcast %1206 : vector<128x1xf32> to vector<128x32xf32>
    %1208 = arith.mulf %1203, %1207 : vector<128x32xf32>
    %1209 = arith.truncf %1208 : vector<128x32xf32> to vector<128x32xbf16>
    %cst_330 = arith.constant 0.000000e+00 : f32
    %1210 = vector.broadcast %cst_330 : f32 to vector<32x128xf32>
    %1211 = vector.extract_strided_slice %1032 {offsets = [0, 0], sizes = [1, 128], strides = [1, 1]} : vector<4x128xf32> to vector<1x128xf32>
    %1212 = vector.broadcast %1211 : vector<1x128xf32> to vector<32x128xf32>
    %1213 = arith.mulf %1182, %1212 : vector<32x128xf32>
    %1214 = arith.truncf %1213 : vector<32x128xf32> to vector<32x128xbf16>
    %1215 = vector.extract_strided_slice %1209 {offsets = [0, 0], sizes = [32, 32], strides = [1, 1]} : vector<128x32xbf16> to vector<32x32xbf16>
    %cst_331 = arith.constant dense<0.000000e+00> : vector<32x128xf32>
    %1216 = tpu.matmul %1215, %1214, %cst_331 {dimension_numbers = #tpu.dot_dimension_numbers<[1], [0], [0], [1], [0, 0, 1, 1], [], []>} : vector<32x32xbf16>, vector<32x128xbf16>, vector<32x128xf32> -> vector<32x128xf32>
    %1217 = arith.addf %1210, %1216 : vector<32x128xf32>
    %1218 = vector.extract_strided_slice %1032 {offsets = [1, 0], sizes = [1, 128], strides = [1, 1]} : vector<4x128xf32> to vector<1x128xf32>
    %1219 = vector.broadcast %1218 : vector<1x128xf32> to vector<32x128xf32>
    %1220 = arith.mulf %1182, %1219 : vector<32x128xf32>
    %1221 = arith.truncf %1220 : vector<32x128xf32> to vector<32x128xbf16>
    %1222 = vector.extract_strided_slice %1209 {offsets = [32, 0], sizes = [32, 32], strides = [1, 1]} : vector<128x32xbf16> to vector<32x32xbf16>
    %cst_332 = arith.constant dense<0.000000e+00> : vector<32x128xf32>
    %1223 = tpu.matmul %1222, %1221, %cst_332 {dimension_numbers = #tpu.dot_dimension_numbers<[1], [0], [0], [1], [0, 0, 1, 1], [], []>} : vector<32x32xbf16>, vector<32x128xbf16>, vector<32x128xf32> -> vector<32x128xf32>
    %1224 = arith.addf %1217, %1223 : vector<32x128xf32>
    %1225 = vector.extract_strided_slice %1032 {offsets = [2, 0], sizes = [1, 128], strides = [1, 1]} : vector<4x128xf32> to vector<1x128xf32>
    %1226 = vector.broadcast %1225 : vector<1x128xf32> to vector<32x128xf32>
    %1227 = arith.mulf %1182, %1226 : vector<32x128xf32>
    %1228 = arith.truncf %1227 : vector<32x128xf32> to vector<32x128xbf16>
    %1229 = vector.extract_strided_slice %1209 {offsets = [64, 0], sizes = [32, 32], strides = [1, 1]} : vector<128x32xbf16> to vector<32x32xbf16>
    %cst_333 = arith.constant dense<0.000000e+00> : vector<32x128xf32>
    %1230 = tpu.matmul %1229, %1228, %cst_333 {dimension_numbers = #tpu.dot_dimension_numbers<[1], [0], [0], [1], [0, 0, 1, 1], [], []>} : vector<32x32xbf16>, vector<32x128xbf16>, vector<32x128xf32> -> vector<32x128xf32>
    %1231 = arith.addf %1224, %1230 : vector<32x128xf32>
    %1232 = vector.extract_strided_slice %1032 {offsets = [3, 0], sizes = [1, 128], strides = [1, 1]} : vector<4x128xf32> to vector<1x128xf32>
    %1233 = vector.broadcast %1232 : vector<1x128xf32> to vector<32x128xf32>
    %1234 = arith.mulf %1182, %1233 : vector<32x128xf32>
    %1235 = arith.truncf %1234 : vector<32x128xf32> to vector<32x128xbf16>
    %1236 = vector.extract_strided_slice %1209 {offsets = [96, 0], sizes = [32, 32], strides = [1, 1]} : vector<128x32xbf16> to vector<32x32xbf16>
    %cst_334 = arith.constant dense<0.000000e+00> : vector<32x128xf32>
    %1237 = tpu.matmul %1236, %1235, %cst_334 {dimension_numbers = #tpu.dot_dimension_numbers<[1], [0], [0], [1], [0, 0, 1, 1], [], []>} : vector<32x32xbf16>, vector<32x128xbf16>, vector<32x128xf32> -> vector<32x128xf32>
    %1238 = arith.addf %1231, %1237 : vector<32x128xf32>
    %1239 = arith.truncf %1238 : vector<32x128xf32> to vector<32x128xbf16>
    %c0_335 = arith.constant 0 : index
    %c0_336 = arith.constant 0 : index
    %1240 = vector.load %arg28[%c0_335, %c0_336] : memref<128x128xbf16, #tpu.memory_space<vmem>>, vector<128x128xbf16>
    %cst_337 = arith.constant dense<0.000000e+00> : vector<32x128xf32>
    %1241 = tpu.matmul %1239, %1240, %cst_337 {dimension_numbers = #tpu.dot_dimension_numbers<[1], [0], [0], [1], [0, 0, 1, 1], [], []>} : vector<32x128xbf16>, vector<128x128xbf16>, vector<32x128xf32> -> vector<32x128xf32>
    %c0_338 = arith.constant 0 : index
    %c0_339 = arith.constant 0 : index
    %1242 = vector.load %arg29[%c0_338, %c0_339] : memref<1x128xf32, #tpu.memory_space<vmem>>, vector<1x128xf32>
    %1243 = vector.broadcast %1242 : vector<1x128xf32> to vector<32x128xf32>
    %1244 = arith.addf %1241, %1243 : vector<32x128xf32>
    %1245 = arith.addf %1170, %1244 : vector<32x128xf32>
    %c0_340 = arith.constant 0 : index
    %c0_341 = arith.constant 0 : index
    %1246 = vector.load %arg30[%c0_340, %c0_341] : memref<1x128xf32, #tpu.memory_space<vmem>>, vector<1x128xf32>
    %c0_342 = arith.constant 0 : index
    %c0_343 = arith.constant 0 : index
    %1247 = vector.load %arg31[%c0_342, %c0_343] : memref<1x128xf32, #tpu.memory_space<vmem>>, vector<1x128xf32>
    %cst_344 = arith.constant dense<0.000000e+00> : vector<32xf32>
    %1248 = vector.multi_reduction <add>, %1245, %cst_344 [1] : vector<32x128xf32> to vector<32xf32>
    %1249 = vector.shape_cast %1248 : vector<32xf32> to vector<32x1xf32>
    %cst_345 = arith.constant 1.280000e+02 : f32
    %1250 = vector.broadcast %cst_345 : f32 to vector<32x1xf32>
    %1251 = arith.divf %1249, %1250 : vector<32x1xf32>
    %1252 = vector.broadcast %1251 : vector<32x1xf32> to vector<32x128xf32>
    %1253 = arith.subf %1245, %1252 : vector<32x128xf32>
    %1254 = arith.mulf %1253, %1253 : vector<32x128xf32>
    %cst_346 = arith.constant dense<0.000000e+00> : vector<32xf32>
    %1255 = vector.multi_reduction <add>, %1254, %cst_346 [1] : vector<32x128xf32> to vector<32xf32>
    %1256 = vector.shape_cast %1255 : vector<32xf32> to vector<32x1xf32>
    %cst_347 = arith.constant 1.280000e+02 : f32
    %1257 = vector.broadcast %cst_347 : f32 to vector<32x1xf32>
    %1258 = arith.divf %1256, %1257 : vector<32x1xf32>
    %1259 = vector.broadcast %1251 : vector<32x1xf32> to vector<32x128xf32>
    %1260 = arith.subf %1245, %1259 : vector<32x128xf32>
    %cst_348 = arith.constant 9.99999974E-6 : f32
    %1261 = vector.broadcast %cst_348 : f32 to vector<32x1xf32>
    %1262 = arith.addf %1258, %1261 : vector<32x1xf32>
    %1263 = math.rsqrt %1262 : vector<32x1xf32>
    %1264 = vector.broadcast %1263 : vector<32x1xf32> to vector<32x128xf32>
    %1265 = arith.mulf %1260, %1264 : vector<32x128xf32>
    %1266 = vector.broadcast %1246 : vector<1x128xf32> to vector<32x128xf32>
    %1267 = arith.mulf %1265, %1266 : vector<32x128xf32>
    %1268 = vector.broadcast %1247 : vector<1x128xf32> to vector<32x128xf32>
    %1269 = arith.addf %1267, %1268 : vector<32x128xf32>
    %1270 = arith.truncf %1269 : vector<32x128xf32> to vector<32x128xbf16>
    %c0_349 = arith.constant 0 : index
    %c0_350 = arith.constant 0 : index
    %1271 = vector.load %arg32[%c0_349, %c0_350] : memref<128x256xbf16, #tpu.memory_space<vmem>>, vector<128x256xbf16>
    %cst_351 = arith.constant dense<0.000000e+00> : vector<32x256xf32>
    %1272 = tpu.matmul %1270, %1271, %cst_351 {dimension_numbers = #tpu.dot_dimension_numbers<[1], [0], [0], [1], [0, 0, 1, 1], [], []>} : vector<32x128xbf16>, vector<128x256xbf16>, vector<32x256xf32> -> vector<32x256xf32>
    %c0_352 = arith.constant 0 : index
    %c0_353 = arith.constant 0 : index
    %1273 = vector.load %arg33[%c0_352, %c0_353] : memref<1x256xf32, #tpu.memory_space<vmem>>, vector<1x256xf32>
    %1274 = vector.broadcast %1273 : vector<1x256xf32> to vector<32x256xf32>
    %1275 = arith.addf %1272, %1274 : vector<32x256xf32>
    %cst_354 = arith.constant 0.000000e+00 : f32
    %1276 = vector.broadcast %cst_354 : f32 to vector<32x256xf32>
    %1277 = arith.maximumf %1275, %1276 : vector<32x256xf32>
    %1278 = arith.truncf %1277 : vector<32x256xf32> to vector<32x256xbf16>
    %c0_355 = arith.constant 0 : index
    %c0_356 = arith.constant 0 : index
    %1279 = vector.load %arg34[%c0_355, %c0_356] : memref<256x128xbf16, #tpu.memory_space<vmem>>, vector<256x128xbf16>
    %cst_357 = arith.constant dense<0.000000e+00> : vector<32x128xf32>
    %1280 = tpu.matmul %1278, %1279, %cst_357 {dimension_numbers = #tpu.dot_dimension_numbers<[1], [0], [0], [1], [0, 0, 1, 1], [], []>} : vector<32x256xbf16>, vector<256x128xbf16>, vector<32x128xf32> -> vector<32x128xf32>
    %c0_358 = arith.constant 0 : index
    %c0_359 = arith.constant 0 : index
    %1281 = vector.load %arg35[%c0_358, %c0_359] : memref<1x128xf32, #tpu.memory_space<vmem>>, vector<1x128xf32>
    %1282 = vector.broadcast %1281 : vector<1x128xf32> to vector<32x128xf32>
    %1283 = arith.addf %1280, %1282 : vector<32x128xf32>
    %1284 = arith.addf %1269, %1283 : vector<32x128xf32>
    %c0_360 = arith.constant 0 : index
    %c0_361 = arith.constant 0 : index
    %1285 = vector.load %arg36[%c0_360, %c0_361] : memref<1x128xf32, #tpu.memory_space<vmem>>, vector<1x128xf32>
    %c0_362 = arith.constant 0 : index
    %c0_363 = arith.constant 0 : index
    %1286 = vector.load %arg37[%c0_362, %c0_363] : memref<1x128xf32, #tpu.memory_space<vmem>>, vector<1x128xf32>
    %cst_364 = arith.constant dense<0.000000e+00> : vector<32xf32>
    %1287 = vector.multi_reduction <add>, %1284, %cst_364 [1] : vector<32x128xf32> to vector<32xf32>
    %1288 = vector.shape_cast %1287 : vector<32xf32> to vector<32x1xf32>
    %cst_365 = arith.constant 1.280000e+02 : f32
    %1289 = vector.broadcast %cst_365 : f32 to vector<32x1xf32>
    %1290 = arith.divf %1288, %1289 : vector<32x1xf32>
    %1291 = vector.broadcast %1290 : vector<32x1xf32> to vector<32x128xf32>
    %1292 = arith.subf %1284, %1291 : vector<32x128xf32>
    %1293 = arith.mulf %1292, %1292 : vector<32x128xf32>
    %cst_366 = arith.constant dense<0.000000e+00> : vector<32xf32>
    %1294 = vector.multi_reduction <add>, %1293, %cst_366 [1] : vector<32x128xf32> to vector<32xf32>
    %1295 = vector.shape_cast %1294 : vector<32xf32> to vector<32x1xf32>
    %cst_367 = arith.constant 1.280000e+02 : f32
    %1296 = vector.broadcast %cst_367 : f32 to vector<32x1xf32>
    %1297 = arith.divf %1295, %1296 : vector<32x1xf32>
    %1298 = vector.broadcast %1290 : vector<32x1xf32> to vector<32x128xf32>
    %1299 = arith.subf %1284, %1298 : vector<32x128xf32>
    %cst_368 = arith.constant 9.99999974E-6 : f32
    %1300 = vector.broadcast %cst_368 : f32 to vector<32x1xf32>
    %1301 = arith.addf %1297, %1300 : vector<32x1xf32>
    %1302 = math.rsqrt %1301 : vector<32x1xf32>
    %1303 = vector.broadcast %1302 : vector<32x1xf32> to vector<32x128xf32>
    %1304 = arith.mulf %1299, %1303 : vector<32x128xf32>
    %1305 = vector.broadcast %1285 : vector<1x128xf32> to vector<32x128xf32>
    %1306 = arith.mulf %1304, %1305 : vector<32x128xf32>
    %1307 = vector.broadcast %1286 : vector<1x128xf32> to vector<32x128xf32>
    %1308 = arith.addf %1306, %1307 : vector<32x128xf32>
    %1309 = arith.truncf %1308 : vector<32x128xf32> to vector<32x128xbf16>
    %c0_369 = arith.constant 0 : index
    %c0_370 = arith.constant 0 : index
    %1310 = vector.load %arg38[%c0_369, %c0_370] : memref<128x128xbf16, #tpu.memory_space<vmem>>, vector<128x128xbf16>
    %cst_371 = arith.constant dense<0.000000e+00> : vector<32x128xf32>
    %1311 = tpu.matmul %1309, %1310, %cst_371 {dimension_numbers = #tpu.dot_dimension_numbers<[1], [0], [0], [1], [0, 0, 1, 1], [], []>} : vector<32x128xbf16>, vector<128x128xbf16>, vector<32x128xf32> -> vector<32x128xf32>
    %c0_372 = arith.constant 0 : index
    %c0_373 = arith.constant 0 : index
    %1312 = vector.load %arg39[%c0_372, %c0_373] : memref<1x128xf32, #tpu.memory_space<vmem>>, vector<1x128xf32>
    %1313 = vector.broadcast %1312 : vector<1x128xf32> to vector<32x128xf32>
    %1314 = arith.addf %1311, %1313 : vector<32x128xf32>
    %c0_374 = arith.constant 0 : index
    %c0_375 = arith.constant 0 : index
    %1315 = vector.load %arg40[%c0_374, %c0_375] : memref<1x128xf32, #tpu.memory_space<vmem>>, vector<1x128xf32>
    %1316 = vector.broadcast %1315 : vector<1x128xf32> to vector<32x128xf32>
    %1317 = arith.mulf %1316, %1314 : vector<32x128xf32>
    %cst_376 = arith.constant 5.000000e-01 : f32
    %1318 = vector.broadcast %cst_376 : f32 to vector<32x128xf32>
    %1319 = arith.mulf %1317, %1318 : vector<32x128xf32>
    %1320 = arith.addf %1314, %1319 : vector<32x128xf32>
    %1321 = arith.mulf %1320, %1320 : vector<32x128xf32>
    %1322 = arith.mulf %1320, %1321 : vector<32x128xf32>
    %cst_377 = arith.constant 4.471500e-02 : f32
    %1323 = vector.broadcast %cst_377 : f32 to vector<32x128xf32>
    %1324 = arith.mulf %1323, %1322 : vector<32x128xf32>
    %1325 = arith.addf %1320, %1324 : vector<32x128xf32>
    %cst_378 = arith.constant 0.797884583 : f32
    %1326 = vector.broadcast %cst_378 : f32 to vector<32x128xf32>
    %1327 = arith.mulf %1326, %1325 : vector<32x128xf32>
    %1328 = math.tanh %1327 : vector<32x128xf32>
    %cst_379 = arith.constant 1.000000e+00 : f32
    %1329 = vector.broadcast %cst_379 : f32 to vector<32x128xf32>
    %1330 = arith.addf %1329, %1328 : vector<32x128xf32>
    %cst_380 = arith.constant 5.000000e-01 : f32
    %1331 = vector.broadcast %cst_380 : f32 to vector<32x128xf32>
    %1332 = arith.mulf %1331, %1330 : vector<32x128xf32>
    %1333 = arith.mulf %1320, %1332 : vector<32x128xf32>
    %c0_381 = arith.constant 0 : index
    %c0_382 = arith.constant 0 : index
    %1334 = vector.load %arg41[%c0_381, %c0_382] : memref<1x128xf32, #tpu.memory_space<vmem>>, vector<1x128xf32>
    %c0_383 = arith.constant 0 : index
    %c0_384 = arith.constant 0 : index
    %1335 = vector.load %arg42[%c0_383, %c0_384] : memref<1x128xf32, #tpu.memory_space<vmem>>, vector<1x128xf32>
    %cst_385 = arith.constant dense<0.000000e+00> : vector<32xf32>
    %1336 = vector.multi_reduction <add>, %1333, %cst_385 [1] : vector<32x128xf32> to vector<32xf32>
    %1337 = vector.shape_cast %1336 : vector<32xf32> to vector<32x1xf32>
    %cst_386 = arith.constant 1.280000e+02 : f32
    %1338 = vector.broadcast %cst_386 : f32 to vector<32x1xf32>
    %1339 = arith.divf %1337, %1338 : vector<32x1xf32>
    %1340 = vector.broadcast %1339 : vector<32x1xf32> to vector<32x128xf32>
    %1341 = arith.subf %1333, %1340 : vector<32x128xf32>
    %1342 = arith.mulf %1341, %1341 : vector<32x128xf32>
    %cst_387 = arith.constant dense<0.000000e+00> : vector<32xf32>
    %1343 = vector.multi_reduction <add>, %1342, %cst_387 [1] : vector<32x128xf32> to vector<32xf32>
    %1344 = vector.shape_cast %1343 : vector<32xf32> to vector<32x1xf32>
    %cst_388 = arith.constant 1.280000e+02 : f32
    %1345 = vector.broadcast %cst_388 : f32 to vector<32x1xf32>
    %1346 = arith.divf %1344, %1345 : vector<32x1xf32>
    %1347 = vector.broadcast %1339 : vector<32x1xf32> to vector<32x128xf32>
    %1348 = arith.subf %1333, %1347 : vector<32x128xf32>
    %cst_389 = arith.constant 9.99999974E-6 : f32
    %1349 = vector.broadcast %cst_389 : f32 to vector<32x1xf32>
    %1350 = arith.addf %1346, %1349 : vector<32x1xf32>
    %1351 = math.rsqrt %1350 : vector<32x1xf32>
    %1352 = vector.broadcast %1351 : vector<32x1xf32> to vector<32x128xf32>
    %1353 = arith.mulf %1348, %1352 : vector<32x128xf32>
    %1354 = vector.broadcast %1334 : vector<1x128xf32> to vector<32x128xf32>
    %1355 = arith.mulf %1353, %1354 : vector<32x128xf32>
    %1356 = vector.broadcast %1335 : vector<1x128xf32> to vector<32x128xf32>
    %1357 = arith.addf %1355, %1356 : vector<32x128xf32>
    %1358 = arith.truncf %1357 : vector<32x128xf32> to vector<32x128xbf16>
    %c0_390 = arith.constant 0 : index
    %c0_391 = arith.constant 0 : index
    %1359 = vector.load %arg43[%c0_390, %c0_391] : memref<128x128xbf16, #tpu.memory_space<vmem>>, vector<128x128xbf16>
    %cst_392 = arith.constant dense<0.000000e+00> : vector<32x128xf32>
    %1360 = tpu.matmul %1358, %1359, %cst_392 {dimension_numbers = #tpu.dot_dimension_numbers<[1], [0], [0], [1], [0, 0, 1, 1], [], []>} : vector<32x128xbf16>, vector<128x128xbf16>, vector<32x128xf32> -> vector<32x128xf32>
    %c0_393 = arith.constant 0 : index
    %c0_394 = arith.constant 0 : index
    %1361 = vector.load %arg44[%c0_393, %c0_394] : memref<1x128xf32, #tpu.memory_space<vmem>>, vector<1x128xf32>
    %1362 = vector.broadcast %1361 : vector<1x128xf32> to vector<32x128xf32>
    %1363 = arith.addf %1360, %1362 : vector<32x128xf32>
    %c0_395 = arith.constant 0 : index
    %c0_396 = arith.constant 0 : index
    %1364 = vector.load %arg45[%c0_395, %c0_396] : memref<1x128xf32, #tpu.memory_space<vmem>>, vector<1x128xf32>
    %1365 = vector.broadcast %1364 : vector<1x128xf32> to vector<32x128xf32>
    %1366 = arith.mulf %1365, %1363 : vector<32x128xf32>
    %cst_397 = arith.constant 5.000000e-01 : f32
    %1367 = vector.broadcast %cst_397 : f32 to vector<32x128xf32>
    %1368 = arith.mulf %1366, %1367 : vector<32x128xf32>
    %1369 = arith.addf %1363, %1368 : vector<32x128xf32>
    %1370 = arith.mulf %1369, %1369 : vector<32x128xf32>
    %1371 = arith.mulf %1369, %1370 : vector<32x128xf32>
    %cst_398 = arith.constant 4.471500e-02 : f32
    %1372 = vector.broadcast %cst_398 : f32 to vector<32x128xf32>
    %1373 = arith.mulf %1372, %1371 : vector<32x128xf32>
    %1374 = arith.addf %1369, %1373 : vector<32x128xf32>
    %cst_399 = arith.constant 0.797884583 : f32
    %1375 = vector.broadcast %cst_399 : f32 to vector<32x128xf32>
    %1376 = arith.mulf %1375, %1374 : vector<32x128xf32>
    %1377 = math.tanh %1376 : vector<32x128xf32>
    %cst_400 = arith.constant 1.000000e+00 : f32
    %1378 = vector.broadcast %cst_400 : f32 to vector<32x128xf32>
    %1379 = arith.addf %1378, %1377 : vector<32x128xf32>
    %cst_401 = arith.constant 5.000000e-01 : f32
    %1380 = vector.broadcast %cst_401 : f32 to vector<32x128xf32>
    %1381 = arith.mulf %1380, %1379 : vector<32x128xf32>
    %1382 = arith.mulf %1369, %1381 : vector<32x128xf32>
    %c0_402 = arith.constant 0 : index
    %c0_403 = arith.constant 0 : index
    %1383 = vector.load %arg46[%c0_402, %c0_403] : memref<1x128xf32, #tpu.memory_space<vmem>>, vector<1x128xf32>
    %c0_404 = arith.constant 0 : index
    %c0_405 = arith.constant 0 : index
    %1384 = vector.load %arg47[%c0_404, %c0_405] : memref<1x128xf32, #tpu.memory_space<vmem>>, vector<1x128xf32>
    %cst_406 = arith.constant dense<0.000000e+00> : vector<32xf32>
    %1385 = vector.multi_reduction <add>, %1382, %cst_406 [1] : vector<32x128xf32> to vector<32xf32>
    %1386 = vector.shape_cast %1385 : vector<32xf32> to vector<32x1xf32>
    %cst_407 = arith.constant 1.280000e+02 : f32
    %1387 = vector.broadcast %cst_407 : f32 to vector<32x1xf32>
    %1388 = arith.divf %1386, %1387 : vector<32x1xf32>
    %1389 = vector.broadcast %1388 : vector<32x1xf32> to vector<32x128xf32>
    %1390 = arith.subf %1382, %1389 : vector<32x128xf32>
    %1391 = arith.mulf %1390, %1390 : vector<32x128xf32>
    %cst_408 = arith.constant dense<0.000000e+00> : vector<32xf32>
    %1392 = vector.multi_reduction <add>, %1391, %cst_408 [1] : vector<32x128xf32> to vector<32xf32>
    %1393 = vector.shape_cast %1392 : vector<32xf32> to vector<32x1xf32>
    %cst_409 = arith.constant 1.280000e+02 : f32
    %1394 = vector.broadcast %cst_409 : f32 to vector<32x1xf32>
    %1395 = arith.divf %1393, %1394 : vector<32x1xf32>
    %1396 = vector.broadcast %1388 : vector<32x1xf32> to vector<32x128xf32>
    %1397 = arith.subf %1382, %1396 : vector<32x128xf32>
    %cst_410 = arith.constant 9.99999974E-6 : f32
    %1398 = vector.broadcast %cst_410 : f32 to vector<32x1xf32>
    %1399 = arith.addf %1395, %1398 : vector<32x1xf32>
    %1400 = math.rsqrt %1399 : vector<32x1xf32>
    %1401 = vector.broadcast %1400 : vector<32x1xf32> to vector<32x128xf32>
    %1402 = arith.mulf %1397, %1401 : vector<32x128xf32>
    %1403 = vector.broadcast %1383 : vector<1x128xf32> to vector<32x128xf32>
    %1404 = arith.mulf %1402, %1403 : vector<32x128xf32>
    %1405 = vector.broadcast %1384 : vector<1x128xf32> to vector<32x128xf32>
    %1406 = arith.addf %1404, %1405 : vector<32x128xf32>
    %1407 = vector.extract_strided_slice %1406 {offsets = [24, 0], sizes = [8, 128], strides = [1, 1]} : vector<32x128xf32> to vector<8x128xf32>
    %1408 = arith.truncf %1407 : vector<8x128xf32> to vector<8x128xbf16>
    %c0_411 = arith.constant 0 : index
    %c0_412 = arith.constant 0 : index
    %1409 = vector.load %arg48[%c0_411, %c0_412] : memref<128x128xbf16, #tpu.memory_space<vmem>>, vector<128x128xbf16>
    %cst_413 = arith.constant dense<0.000000e+00> : vector<8x128xf32>
    %1410 = tpu.matmul %1408, %1409, %cst_413 {dimension_numbers = #tpu.dot_dimension_numbers<[1], [0], [0], [1], [0, 0, 1, 1], [], []>} : vector<8x128xbf16>, vector<128x128xbf16>, vector<8x128xf32> -> vector<8x128xf32>
    %c0_414 = arith.constant 0 : index
    %c0_415 = arith.constant 0 : index
    %1411 = vector.load %arg49[%c0_414, %c0_415] : memref<1x128xf32, #tpu.memory_space<vmem>>, vector<1x128xf32>
    %1412 = vector.broadcast %1411 : vector<1x128xf32> to vector<8x128xf32>
    %1413 = arith.addf %1410, %1412 : vector<8x128xf32>
    %1414 = arith.negf %1413 : vector<8x128xf32>
    %1415 = math.exp %1414 : vector<8x128xf32>
    %cst_416 = arith.constant 1.000000e+00 : f32
    %1416 = vector.broadcast %cst_416 : f32 to vector<8x128xf32>
    %1417 = arith.addf %1416, %1415 : vector<8x128xf32>
    %1418 = arith.divf %1416, %1417 : vector<8x128xf32>
    %c0_417 = arith.constant 0 : index
    %c0_418 = arith.constant 0 : index
    %1419 = vector.load %arg50[%c0_417, %c0_418] : memref<8x128xf32, #tpu.memory_space<vmem>>, vector<8x128xf32>
    tpu.vector_store %arg50[%c0_417, %c0_418], %1418 {strides = array<i32>} : memref<8x128xf32, #tpu.memory_space<vmem>>, vector<8x128xf32>,
    return
  }
}

</mosaic_0001>

<llo_original>
// kernel: political_predictor_forward.1
$region0: #{political_predictor_forward.1}
  #allocation0 [shape = 'u32[]', space=smem, size = 0x4, offset = 0x4, fixed_abs, tag = 'smem constant byte address 0x4 - core index']
  #allocation1 [shape = 'u32[144,128]{1,0:T(1,128)}', space=vmem, size = 0x12000, scoped, tag = 'internal scratch']
  #allocation2 [shape = 'f32[64,512]{1,0:T(8,128)}', space=vmem, size = 0x20000, scoped, tag = 'scratch operand']
  %s0 = inlined_call_operand.smem [shape: u32[51], index: -1, kind: input, shape index: {}]
  %s1 = sld [smem:[%s0]]
  %s2 = scalar_lea.smem %s0, 1
  %s3 = sld [smem:[%s2]]
  %s4 = scalar_lea.smem %s0, 2
  %s5 = sld [smem:[%s4]]
  %s6 = scalar_lea.smem %s0, 3
  %s7 = sld [smem:[%s6]]
  %s8 = scalar_lea.smem %s0, 4
  %s9 = sld [smem:[%s8]]
  %s10 = scalar_lea.smem %s0, 5
  %s11 = sld [smem:[%s10]]
  %s12 = scalar_lea.smem %s0, 6
  %s13 = sld [smem:[%s12]]
  %s14 = scalar_lea.smem %s0, 7
  %s15 = sld [smem:[%s14]]
  %s16 = scalar_lea.smem %s0, 8
  %s17 = sld [smem:[%s16]]
  %s18 = scalar_lea.smem %s0, 9
  %s19 = sld [smem:[%s18]]
  %s20 = scalar_lea.smem %s0, 10
  %s21 = sld [smem:[%s20]]
  %s22 = scalar_lea.smem %s0, 11
  %s23 = sld [smem:[%s22]]
  %s24 = scalar_lea.smem %s0, 12
  %s25 = sld [smem:[%s24]]
  %s26 = scalar_lea.smem %s0, 13
  %s27 = sld [smem:[%s26]]
  %s28 = scalar_lea.smem %s0, 14
  %s29 = sld [smem:[%s28]]
  %s30 = scalar_lea.smem %s0, 15
  %s31 = sld [smem:[%s30]]
  %s32 = scalar_lea.smem %s0, 16
  %s33 = sld [smem:[%s32]]
  %s34 = scalar_lea.smem %s0, 17
  %s35 = sld [smem:[%s34]]
  %s36 = scalar_lea.smem %s0, 18
  %s37 = sld [smem:[%s36]]
  %s38 = scalar_lea.smem %s0, 19
  %s39 = sld [smem:[%s38]]
  %s40 = scalar_lea.smem %s0, 20
  %s41 = sld [smem:[%s40]]
  %s42 = scalar_lea.smem %s0, 21
  %s43 = sld [smem:[%s42]]
  %s44 = scalar_lea.smem %s0, 22
  %s45 = sld [smem:[%s44]]
  %s46 = scalar_lea.smem %s0, 23
  %s47 = sld [smem:[%s46]]
  %s48 = scalar_lea.smem %s0, 24
  %s49 = sld [smem:[%s48]]
  %s50 = scalar_lea.smem %s0, 25
  %s51 = sld [smem:[%s50]]
  %s52 = scalar_lea.smem %s0, 26
  %s53 = sld [smem:[%s52]]
  %s54 = scalar_lea.smem %s0, 27
  %s55 = sld [smem:[%s54]]
  %s56 = scalar_lea.smem %s0, 28
  %s57 = sld [smem:[%s56]]
  %s58 = scalar_lea.smem %s0, 29
  %s59 = sld [smem:[%s58]]
  %s60 = scalar_lea.smem %s0, 30
  %s61 = sld [smem:[%s60]]
  %s62 = scalar_lea.smem %s0, 31
  %s63 = sld [smem:[%s62]]
  %s64 = scalar_lea.smem %s0, 32
  %s65 = sld [smem:[%s64]]
  %s66 = scalar_lea.smem %s0, 33
  %s67 = sld [smem:[%s66]]
  %s68 = scalar_lea.smem %s0, 34
  %s69 = sld [smem:[%s68]]
  %s70 = scalar_lea.smem %s0, 35
  %s71 = sld [smem:[%s70]]
  %s72 = scalar_lea.smem %s0, 36
  %s73 = sld [smem:[%s72]]
  %s74 = scalar_lea.smem %s0, 37
  %s75 = sld [smem:[%s74]]
  %s76 = scalar_lea.smem %s0, 38
  %s77 = sld [smem:[%s76]]
  %s78 = scalar_lea.smem %s0, 39
  %s79 = sld [smem:[%s78]]
  %s80 = scalar_lea.smem %s0, 40
  %s81 = sld [smem:[%s80]]
  %s82 = scalar_lea.smem %s0, 41
  %s83 = sld [smem:[%s82]]
  %s84 = scalar_lea.smem %s0, 42
  %s85 = sld [smem:[%s84]]
  %s86 = scalar_lea.smem %s0, 43
  %s87 = sld [smem:[%s86]]
  %s88 = scalar_lea.smem %s0, 44
  %s89 = sld [smem:[%s88]]
  %s90 = scalar_lea.smem %s0, 45
  %s91 = sld [smem:[%s90]]
  %s92 = scalar_lea.smem %s0, 46
  %s93 = sld [smem:[%s92]]
  %s94 = scalar_lea.smem %s0, 47
  %s95 = sld [smem:[%s94]]
  %s96 = scalar_lea.smem %s0, 48
  %s97 = sld [smem:[%s96]]
  %s98 = scalar_lea.smem %s0, 49
  %s99 = sld [smem:[%s98]]
  %s100 = scalar_lea.smem %s0, 50
  %s101 = sld [smem:[%s100]]
  %s102 = sld [smem:[#allocation0]]
  $region226: #{political_predictor_forward.1} parent=0
    _
  %s104 = ssub.s32 1, %s102
  %s105 = scalar_select 0, %s104, %s102
  $region1: #{political_predictor_forward.1} parent=0
    #allocation3 [shape = 'u8[512]{0}', space=vmem, size = 0x400, scoped, tag = 'input window, operand 42, single buffered']
    #allocation4 [shape = 's32[1]{0}', space=sflag, size = 0x4, scoped, tag = 'scoped memory for political_predictor_forward.1']
    #allocation5 [shape = 'u8[512]{0}', space=vmem, size = 0x400, scoped, tag = 'input window, operand 44, single buffered']
    #allocation6 [shape = 's32[1]{0}', space=sflag, size = 0x4, scoped, tag = 'scoped memory for political_predictor_forward.1']
    #allocation7 [shape = 'u8[512]{0}', space=vmem, size = 0x400, scoped, tag = 'input window, operand 46, single buffered']
    #allocation8 [shape = 'u8[512]{0}', space=vmem, size = 0x400, scoped, tag = 'input window, operand 47, single buffered']
    #allocation9 [shape = 's32[1]{0}', space=sflag, size = 0x4, scoped, tag = 'scoped memory for political_predictor_forward.1']
    %106 = vsyncpa [#allocation4], 0
    %107 = vsyncpa [#allocation6], 0
    %108 = vsyncpa [#allocation9], 0
    // Predicated region
    $region2: #{political_predictor_forward.1} parent=1 // pred_check
      _
    $region3: #{political_predictor_forward.1} parent=1 // pred_check_branch
      %110 = sbr.rel (0) target = $region5
    $region4: #{political_predictor_forward.1} parent=1 // pred_region
      _
    $region5: #{political_predictor_forward.1} parent=1 // pred_fallthru
      _
    // Predicated region
    $region6: #{political_predictor_forward.1} parent=1 // pred_check
      _
    $region7: #{political_predictor_forward.1} parent=1 // pred_check_branch
      %112 = sbr.rel (0) target = $region9
    $region8: #{political_predictor_forward.1} parent=1 // pred_region
      _
    $region9: #{political_predictor_forward.1} parent=1 // pred_fallthru
      _
    // Predicated region
    $region10: #{political_predictor_forward.1} parent=1 // pred_check
      _
    $region11: #{political_predictor_forward.1} parent=1 // pred_check_branch
      %114 = sbr.rel (0) target = $region13
    $region12: #{political_predictor_forward.1} parent=1 // pred_region
      _
    $region13: #{political_predictor_forward.1} parent=1 // pred_fallthru
      _
    // Predicated region
    $region14: #{political_predictor_forward.1} parent=1 // pred_check
      _
    $region15: #{political_predictor_forward.1} parent=1 // pred_check_branch
      %116 = sbr.rel (0) target = $region17
    $region16: #{political_predictor_forward.1} parent=1 // pred_region
      _
    $region17: #{political_predictor_forward.1} parent=1 // pred_fallthru
      _
    // Predicated region
    $region18: #{political_predictor_forward.1} parent=1 // pred_check
      _
    $region19: #{political_predictor_forward.1} parent=1 // pred_check_branch
      %118 = sbr.rel (0) target = $region21
    $region20: #{political_predictor_forward.1} parent=1 // pred_region
      _
    $region21: #{political_predictor_forward.1} parent=1 // pred_fallthru
      _
    // Predicated region
    $region22: #{political_predictor_forward.1} parent=1 // pred_check
      _
    $region23: #{political_predictor_forward.1} parent=1 // pred_check_branch
      %120 = sbr.rel (0) target = $region25
    $region24: #{political_predictor_forward.1} parent=1 // pred_region
      _
    $region25: #{political_predictor_forward.1} parent=1 // pred_fallthru
      _
    // Predicated region
    $region26: #{political_predictor_forward.1} parent=1 // pred_check
      _
    $region27: #{political_predictor_forward.1} parent=1 // pred_check_branch
      %122 = sbr.rel (0) target = $region29
    $region28: #{political_predictor_forward.1} parent=1 // pred_region
      _
    $region29: #{political_predictor_forward.1} parent=1 // pred_fallthru
      _
    // Predicated region
    $region30: #{political_predictor_forward.1} parent=1 // pred_check
      _
    $region31: #{political_predictor_forward.1} parent=1 // pred_check_branch
      %124 = sbr.rel (0) target = $region33
    $region32: #{political_predictor_forward.1} parent=1 // pred_region
      _
    $region33: #{political_predictor_forward.1} parent=1 // pred_fallthru
      _
    // Predicated region
    $region34: #{political_predictor_forward.1} parent=1 // pred_check
      _
    $region35: #{political_predictor_forward.1} parent=1 // pred_check_branch
      %126 = sbr.rel (0) target = $region37
    $region36: #{political_predictor_forward.1} parent=1 // pred_region
      _
    $region37: #{political_predictor_forward.1} parent=1 // pred_fallthru
      _
    // Predicated region
    $region38: #{political_predictor_forward.1} parent=1 // pred_check
      _
    $region39: #{political_predictor_forward.1} parent=1 // pred_check_branch
      %128 = sbr.rel (0) target = $region41
    $region40: #{political_predictor_forward.1} parent=1 // pred_region
      _
    $region41: #{political_predictor_forward.1} parent=1 // pred_fallthru
      _
    // Predicated region
    $region42: #{political_predictor_forward.1} parent=1 // pred_check
      _
    $region43: #{political_predictor_forward.1} parent=1 // pred_check_branch
      %130 = sbr.rel (0) target = $region45
    $region44: #{political_predictor_forward.1} parent=1 // pred_region
      _
    $region45: #{political_predictor_forward.1} parent=1 // pred_fallthru
      _
    // Predicated region
    $region46: #{political_predictor_forward.1} parent=1 // pred_check
      _
    $region47: #{political_predictor_forward.1} parent=1 // pred_check_branch
      %132 = sbr.rel (0) target = $region49
    $region48: #{political_predictor_forward.1} parent=1 // pred_region
      _
    $region49: #{political_predictor_forward.1} parent=1 // pred_fallthru
      _
    // Predicated region
    $region50: #{political_predictor_forward.1} parent=1 // pred_check
      _
    $region51: #{political_predictor_forward.1} parent=1 // pred_check_branch
      %134 = sbr.rel (0) target = $region53
    $region52: #{political_predictor_forward.1} parent=1 // pred_region
      _
    $region53: #{political_predictor_forward.1} parent=1 // pred_fallthru
      _
    // Predicated region
    $region54: #{political_predictor_forward.1} parent=1 // pred_check
      _
    $region55: #{political_predictor_forward.1} parent=1 // pred_check_branch
      %136 = sbr.rel (0) target = $region57
    $region56: #{political_predictor_forward.1} parent=1 // pred_region
      _
    $region57: #{political_predictor_forward.1} parent=1 // pred_fallthru
      _
    // Predicated region
    $region58: #{political_predictor_forward.1} parent=1 // pred_check
      _
    $region59: #{political_predictor_forward.1} parent=1 // pred_check_branch
      %138 = sbr.rel (0) target = $region61
    $region60: #{political_predictor_forward.1} parent=1 // pred_region
      _
    $region61: #{political_predictor_forward.1} parent=1 // pred_fallthru
      _
    // Predicated region
    $region62: #{political_predictor_forward.1} parent=1 // pred_check
      _
    $region63: #{political_predictor_forward.1} parent=1 // pred_check_branch
      %140 = sbr.rel (0) target = $region65
    $region64: #{political_predictor_forward.1} parent=1 // pred_region
      _
    $region65: #{political_predictor_forward.1} parent=1 // pred_fallthru
      _
    // Predicated region
    $region66: #{political_predictor_forward.1} parent=1 // pred_check
      _
    $region67: #{political_predictor_forward.1} parent=1 // pred_check_branch
      %142 = sbr.rel (0) target = $region69
    $region68: #{political_predictor_forward.1} parent=1 // pred_region
      _
    $region69: #{political_predictor_forward.1} parent=1 // pred_fallthru
      _
    // Predicated region
    $region70: #{political_predictor_forward.1} parent=1 // pred_check
      _
    $region71: #{political_predictor_forward.1} parent=1 // pred_check_branch
      %144 = sbr.rel (0) target = $region73
    $region72: #{political_predictor_forward.1} parent=1 // pred_region
      _
    $region73: #{political_predictor_forward.1} parent=1 // pred_fallthru
      _
    // Predicated region
    $region74: #{political_predictor_forward.1} parent=1 // pred_check
      _
    $region75: #{political_predictor_forward.1} parent=1 // pred_check_branch
      %146 = sbr.rel (0) target = $region77
    $region76: #{political_predictor_forward.1} parent=1 // pred_region
      _
    $region77: #{political_predictor_forward.1} parent=1 // pred_fallthru
      _
    // Predicated region
    $region78: #{political_predictor_forward.1} parent=1 // pred_check
      _
    $region79: #{political_predictor_forward.1} parent=1 // pred_check_branch
      %148 = sbr.rel (0) target = $region81
    $region80: #{political_predictor_forward.1} parent=1 // pred_region
      _
    $region81: #{political_predictor_forward.1} parent=1 // pred_fallthru
      _
    // Predicated region
    $region82: #{political_predictor_forward.1} parent=1 // pred_check
      _
    $region83: #{political_predictor_forward.1} parent=1 // pred_check_branch
      %150 = sbr.rel (0) target = $region85
    $region84: #{political_predictor_forward.1} parent=1 // pred_region
      _
    $region85: #{political_predictor_forward.1} parent=1 // pred_fallthru
      _
    // Predicated region
    $region86: #{political_predictor_forward.1} parent=1 // pred_check
      _
    $region87: #{political_predictor_forward.1} parent=1 // pred_check_branch
      %152 = sbr.rel (0) target = $region89
    $region88: #{political_predictor_forward.1} parent=1 // pred_region
      _
    $region89: #{political_predictor_forward.1} parent=1 // pred_fallthru
      _
    // Predicated region
    $region90: #{political_predictor_forward.1} parent=1 // pred_check
      _
    $region91: #{political_predictor_forward.1} parent=1 // pred_check_branch
      %154 = sbr.rel (0) target = $region93
    $region92: #{political_predictor_forward.1} parent=1 // pred_region
      _
    $region93: #{political_predictor_forward.1} parent=1 // pred_fallthru
      _
    // Predicated region
    $region94: #{political_predictor_forward.1} parent=1 // pred_check
      _
    $region95: #{political_predictor_forward.1} parent=1 // pred_check_branch
      %156 = sbr.rel (0) target = $region97
    $region96: #{political_predictor_forward.1} parent=1 // pred_region
      _
    $region97: #{political_predictor_forward.1} parent=1 // pred_fallthru
      _
    // Predicated region
    $region98: #{political_predictor_forward.1} parent=1 // pred_check
      _
    $region99: #{political_predictor_forward.1} parent=1 // pred_check_branch
      %158 = sbr.rel (0) target = $region101
    $region100: #{political_predictor_forward.1} parent=1 // pred_region
      _
    $region101: #{political_predictor_forward.1} parent=1 // pred_fallthru
      _
    // Predicated region
    $region102: #{political_predictor_forward.1} parent=1 // pred_check
      _
    $region103: #{political_predictor_forward.1} parent=1 // pred_check_branch
      %160 = sbr.rel (0) target = $region105
    $region104: #{political_predictor_forward.1} parent=1 // pred_region
      _
    $region105: #{political_predictor_forward.1} parent=1 // pred_fallthru
      _
    // Predicated region
    $region106: #{political_predictor_forward.1} parent=1 // pred_check
      _
    $region107: #{political_predictor_forward.1} parent=1 // pred_check_branch
      %162 = sbr.rel (0) target = $region109
    $region108: #{political_predictor_forward.1} parent=1 // pred_region
      _
    $region109: #{political_predictor_forward.1} parent=1 // pred_fallthru
      _
    // Predicated region
    $region110: #{political_predictor_forward.1} parent=1 // pred_check
      _
    $region111: #{political_predictor_forward.1} parent=1 // pred_check_branch
      %164 = sbr.rel (0) target = $region113
    $region112: #{political_predictor_forward.1} parent=1 // pred_region
      _
    $region113: #{political_predictor_forward.1} parent=1 // pred_fallthru
      _
    // Predicated region
    $region114: #{political_predictor_forward.1} parent=1 // pred_check
      _
    $region115: #{political_predictor_forward.1} parent=1 // pred_check_branch
      %166 = sbr.rel (0) target = $region117
    $region116: #{political_predictor_forward.1} parent=1 // pred_region
      _
    $region117: #{political_predictor_forward.1} parent=1 // pred_fallthru
      _
    // Predicated region
    $region118: #{political_predictor_forward.1} parent=1 // pred_check
      _
    $region119: #{political_predictor_forward.1} parent=1 // pred_check_branch
      %168 = sbr.rel (0) target = $region121
    $region120: #{political_predictor_forward.1} parent=1 // pred_region
      _
    $region121: #{political_predictor_forward.1} parent=1 // pred_fallthru
      _
    // Predicated region
    $region122: #{political_predictor_forward.1} parent=1 // pred_check
      _
    $region123: #{political_predictor_forward.1} parent=1 // pred_check_branch
      %170 = sbr.rel (0) target = $region125
    $region124: #{political_predictor_forward.1} parent=1 // pred_region
      _
    $region125: #{political_predictor_forward.1} parent=1 // pred_fallthru
      _
    // Predicated region
    $region126: #{political_predictor_forward.1} parent=1 // pred_check
      _
    $region127: #{political_predictor_forward.1} parent=1 // pred_check_branch
      %172 = sbr.rel (0) target = $region129
    $region128: #{political_predictor_forward.1} parent=1 // pred_region
      _
    $region129: #{political_predictor_forward.1} parent=1 // pred_fallthru
      _
    // Predicated region
    $region130: #{political_predictor_forward.1} parent=1 // pred_check
      _
    $region131: #{political_predictor_forward.1} parent=1 // pred_check_branch
      %174 = sbr.rel (0) target = $region133
    $region132: #{political_predictor_forward.1} parent=1 // pred_region
      _
    $region133: #{political_predictor_forward.1} parent=1 // pred_fallthru
      _
    // Predicated region
    $region134: #{political_predictor_forward.1} parent=1 // pred_check
      _
    $region135: #{political_predictor_forward.1} parent=1 // pred_check_branch
      %176 = sbr.rel (0) target = $region137
    $region136: #{political_predictor_forward.1} parent=1 // pred_region
      _
    $region137: #{political_predictor_forward.1} parent=1 // pred_fallthru
      _
    // Predicated region
    $region138: #{political_predictor_forward.1} parent=1 // pred_check
      _
    $region139: #{political_predictor_forward.1} parent=1 // pred_check_branch
      %178 = sbr.rel (0) target = $region141
    $region140: #{political_predictor_forward.1} parent=1 // pred_region
      _
    $region141: #{political_predictor_forward.1} parent=1 // pred_fallthru
      _
    // Predicated region
    $region142: #{political_predictor_forward.1} parent=1 // pred_check
      _
    $region143: #{political_predictor_forward.1} parent=1 // pred_check_branch
      %180 = sbr.rel (0) target = $region145
    $region144: #{political_predictor_forward.1} parent=1 // pred_region
      _
    $region145: #{political_predictor_forward.1} parent=1 // pred_fallthru
      _
    // Predicated region
    $region146: #{political_predictor_forward.1} parent=1 // pred_check
      _
    $region147: #{political_predictor_forward.1} parent=1 // pred_check_branch
      %182 = sbr.rel (0) target = $region149
    $region148: #{political_predictor_forward.1} parent=1 // pred_region
      _
    $region149: #{political_predictor_forward.1} parent=1 // pred_fallthru
      _
    // Predicated region
    $region150: #{political_predictor_forward.1} parent=1 // pred_check
      _
    $region151: #{political_predictor_forward.1} parent=1 // pred_check_branch
      %184 = sbr.rel (0) target = $region153
    $region152: #{political_predictor_forward.1} parent=1 // pred_region
      _
    $region153: #{political_predictor_forward.1} parent=1 // pred_fallthru
      _
    // Predicated region
    $region154: #{political_predictor_forward.1} parent=1 // pred_check
      _
    $region155: #{political_predictor_forward.1} parent=1 // pred_check_branch
      %186 = sbr.rel (0) target = $region157
    $region156: #{political_predictor_forward.1} parent=1 // pred_region
      _
    $region157: #{political_predictor_forward.1} parent=1 // pred_fallthru
      _
    // Predicated region
    $region158: #{political_predictor_forward.1} parent=1 // pred_check
      _
    $region159: #{political_predictor_forward.1} parent=1 // pred_check_branch
      %188 = sbr.rel (0) target = $region161
    $region160: #{political_predictor_forward.1} parent=1 // pred_region
      _
    $region161: #{political_predictor_forward.1} parent=1 // pred_fallthru
      _
    // Predicated region
    $region162: #{political_predictor_forward.1} parent=1 // pred_check
      _
    $region163: #{political_predictor_forward.1} parent=1 // pred_check_branch
      %190 = sbr.rel (0) target = $region165
    $region164: #{political_predictor_forward.1} parent=1 // pred_region
      _
    $region165: #{political_predictor_forward.1} parent=1 // pred_fallthru
      _
    // Predicated region
    $region166: #{political_predictor_forward.1} parent=1 // pred_check
      _
    $region167: #{political_predictor_forward.1} parent=1 // pred_check_branch
      %192 = sbr.rel (0) target = $region169
    $region168: #{political_predictor_forward.1} parent=1 // pred_region
      _
    $region169: #{political_predictor_forward.1} parent=1 // pred_fallthru
      _
    // Predicated region
    $region170: #{political_predictor_forward.1} parent=1 // pred_check
      _
    $region171: #{political_predictor_forward.1} parent=1 // pred_check_branch
      %194 = sbr.rel (0) target = $region173
    $region172: #{political_predictor_forward.1} parent=1 // pred_region
      %s196 = ssub.s32 16, 16
      %197 = vsyncadd [#allocation4], %s196
      %s199 = sshll.u32 [#allocation3], 4
      %s200 = int_to_ptr.vmem [resolvable:$true] %s199
      %202 = dma.hbm_to_vmem [thread:$0]  %s85, 16, %s200, [#allocation4]
    $region173: #{political_predictor_forward.1} parent=1 // pred_fallthru
      _
    // Predicated region
    $region174: #{political_predictor_forward.1} parent=1 // pred_check
      _
    $region175: #{political_predictor_forward.1} parent=1 // pred_check_branch
      %204 = sbr.rel (0) target = $region177
    $region176: #{political_predictor_forward.1} parent=1 // pred_region
      _
    $region177: #{political_predictor_forward.1} parent=1 // pred_fallthru
      _
    // Predicated region
    $region178: #{political_predictor_forward.1} parent=1 // pred_check
      _
    $region179: #{political_predictor_forward.1} parent=1 // pred_check_branch
      %206 = sbr.rel (0) target = $region181
    $region180: #{political_predictor_forward.1} parent=1 // pred_region
      %s208 = ssub.s32 16, 16
      %209 = vsyncadd [#allocation6], %s208
      %s211 = sshll.u32 [#allocation5], 4
      %s212 = int_to_ptr.vmem [resolvable:$true] %s211
      %214 = dma.hbm_to_vmem [thread:$0]  %s89, 16, %s212, [#allocation6]
    $region181: #{political_predictor_forward.1} parent=1 // pred_fallthru
      _
    // Predicated region
    $region182: #{political_predictor_forward.1} parent=1 // pred_check
      _
    $region183: #{political_predictor_forward.1} parent=1 // pred_check_branch
      %216 = sbr.rel (0) target = $region185
    $region184: #{political_predictor_forward.1} parent=1 // pred_region
      _
    $region185: #{political_predictor_forward.1} parent=1 // pred_fallthru
      _
    // Predicated region
    $region186: #{political_predictor_forward.1} parent=1 // pred_check
      _
    $region187: #{political_predictor_forward.1} parent=1 // pred_check_branch
      %218 = sbr.rel (0) target = $region189
    $region188: #{political_predictor_forward.1} parent=1 // pred_region
      %s220 = ssub.s32 16, 16
      %221 = vsyncadd [#allocation6], %s220
      %s223 = sshll.u32 [#allocation7], 4
      %s224 = int_to_ptr.vmem [resolvable:$true] %s223
      %226 = dma.hbm_to_vmem [thread:$0]  %s93, 16, %s224, [#allocation6]
    $region189: #{political_predictor_forward.1} parent=1 // pred_fallthru
      _
    // Predicated region
    $region190: #{political_predictor_forward.1} parent=1 // pred_check
      _
    $region191: #{political_predictor_forward.1} parent=1 // pred_check_branch
      %228 = sbr.rel (0) target = $region193
    $region192: #{political_predictor_forward.1} parent=1 // pred_region
      %s230 = ssub.s32 16, 16
      %231 = vsyncadd [#allocation9], %s230
      %s233 = sshll.u32 [#allocation8], 4
      %s234 = int_to_ptr.vmem [resolvable:$true] %s233
      %236 = dma.hbm_to_vmem [thread:$0]  %s95, 16, %s234, [#allocation9]
    $region193: #{political_predictor_forward.1} parent=1 // pred_fallthru
      _
    // Predicated region
    $region194: #{political_predictor_forward.1} parent=1 // pred_check
      _
    $region195: #{political_predictor_forward.1} parent=1 // pred_check_branch
      %238 = sbr.rel (0) target = $region197
    $region196: #{political_predictor_forward.1} parent=1 // pred_region
      _
    $region197: #{political_predictor_forward.1} parent=1 // pred_fallthru
      _
    // Predicated region
    $region198: #{political_predictor_forward.1} parent=1 // pred_check
      _
    $region199: #{political_predictor_forward.1} parent=1 // pred_check_branch
      %240 = sbr.rel (0) target = $region201
    $region200: #{political_predictor_forward.1} parent=1 // pred_region
      _
    $region201: #{political_predictor_forward.1} parent=1 // pred_fallthru
      _
    // Predicated region
    $region202: #{political_predictor_forward.1} parent=1 // pred_check
      _
    $region203: #{political_predictor_forward.1} parent=1 // pred_check_branch
      %242 = sbr.rel (0) target = $region205
    $region204: #{political_predictor_forward.1} parent=1 // pred_region
      %243 = dma.done [#allocation4], 16
    $region205: #{political_predictor_forward.1} parent=1 // pred_fallthru
      _
    // Predicated region
    $region206: #{political_predictor_forward.1} parent=1 // pred_check
      _
    $region207: #{political_predictor_forward.1} parent=1 // pred_check_branch
      %245 = sbr.rel (0) target = $region209
    $region208: #{political_predictor_forward.1} parent=1 // pred_region
      %246 = dma.done [#allocation6], 16
    $region209: #{political_predictor_forward.1} parent=1 // pred_fallthru
      _
    // Predicated region
    $region210: #{political_predictor_forward.1} parent=1 // pred_check
      _
    $region211: #{political_predictor_forward.1} parent=1 // pred_check_branch
      %248 = sbr.rel (0) target = $region213
    $region212: #{political_predictor_forward.1} parent=1 // pred_region
      %249 = dma.done [#allocation6], 16
    $region213: #{political_predictor_forward.1} parent=1 // pred_fallthru
      _
    // Predicated region
    $region214: #{political_predictor_forward.1} parent=1 // pred_check
      _
    $region215: #{political_predictor_forward.1} parent=1 // pred_check_branch
      %251 = sbr.rel (0) target = $region217
    $region216: #{political_predictor_forward.1} parent=1 // pred_region
      %252 = dma.done [#allocation9], 16
    $region217: #{political_predictor_forward.1} parent=1 // pred_fallthru
      _
    %v254 = vld [vmem:[%s1] sm:$0xff]
    %v255 = vld [vmem:[%s1 + $0x8] sm:$0xff]
    %v256 = vld [vmem:[%s1 + $0x10] sm:$0xff]
    %v257 = vld [vmem:[%s1 + $0x18] sm:$0xff]
    %v258 = vld [vmem:[%s1 + $0x20] sm:$0xff]
    %v259 = vld [vmem:[%s1 + $0x28] sm:$0xff]
    %v260 = vld [vmem:[%s1 + $0x30] sm:$0xff]
    %v261 = vld [vmem:[%s1 + $0x38] sm:$0xff]
    %v262 = vpack.c.bf16 %v255, %v254
    %v263 = vpack.c.bf16 %v257, %v256
    %v264 = vpack.c.bf16 %v259, %v258
    %v265 = vpack.c.bf16 %v261, %v260
    %v266 = vld [vmem:[%s7] sm:$0xf]
    %v267 = vld [vmem:[%s7 + $0x4] sm:$0xf]
    %v268 = vld [vmem:[%s9] sm:$0x1]
    %v270 = vlaneseq
    %v271 = vshrl.u32 %v270, 7
    %v272 = vsub.s32 0, %v271
    %v273 = vrot.slane %v268, %v272
    %v277 = vunpack.c.l.b16 %v266
    %v278 = vunpack.c.l.b16 %v267
    %v279 = vpack.c.b16 %v278, %v277
    %vm281 = vcmask 130048
    %v283 = vsel %vm281, %v262, 0
    %v286 = vsel %vm281, %v263, 0
    %v289 = vsel %vm281, %v264, 0
    %v292 = vsel %vm281, %v265, 0
    %294 = vmatprep.subr.bf16.mxu0 0
    %295 = vmatpush1.bf16.msra.mxu0 %v279
    %296 = vmatprep.subr.bf16.mxu0 0
    %297 = vmatpush1.bf16.msra.mxu0 0
    %298 = vmatprep.subr.bf16.mxu0 0
    %299 = vmatpush1.bf16.msra.mxu0 0
    %300 = vmatprep.subr.bf16.mxu0 0
    %301 = vmatpush1.bf16.msra.mxu0 0
    %302 = vmatprep.subr.bf16.mxu0 0
    %303 = vmatpush1.bf16.msra.mxu0 0
    %304 = vmatprep.subr.bf16.mxu0 0
    %305 = vmatpush1.bf16.msra.mxu0 0
    %306 = vmatprep.subr.bf16.mxu0 0
    %307 = vmatpush1.bf16.msra.mxu0 0
    %308 = vmatprep.subr.bf16.mxu0 0
    %309 = vmatpush1.bf16.msra.mxu0 0
    %310 = vmatprep.subr.bf16.mxu0 0
    %311 = vmatpush1.bf16.msra.mxu0 0
    %312 = vmatprep.subr.bf16.mxu0 0
    %313 = vmatpush1.bf16.msra.mxu0 0
    %314 = vmatprep.subr.bf16.mxu0 0
    %315 = vmatpush1.bf16.msra.mxu0 0
    %316 = vmatprep.subr.bf16.mxu0 0
    %317 = vmatpush1.bf16.msra.mxu0 0
    %318 = vmatprep.subr.bf16.mxu0 0
    %319 = vmatpush1.bf16.msra.mxu0 0
    %320 = vmatprep.subr.bf16.mxu0 0
    %321 = vmatpush1.bf16.msra.mxu0 0
    %322 = vmatprep.subr.bf16.mxu0 0
    %323 = vmatpush1.bf16.msra.mxu0 0
    %324 = vmatprep.subr.bf16.mxu0 0
    %325 = vmatpush1.bf16.msra.mxu0 0
    %326 = vmatprep.mubr.bf16.mxu0 0
    %327 = vmatmul.mubr.bf16.gmra.mrb[0].mxu0 %v283
    %v328 = vpop.f32.mrb[0].mxu0
    %v329 = vadd.f32 %v273, %v328
    %v330 = vpop.f32.mrb[0].mxu0
    %v331 = vpop.f32.mrb[0].mxu0
    %v332 = vadd.f32 %v273, %v331
    %v333 = vpop.f32.mrb[0].mxu0
    %334 = vmatprep.mubr.bf16.mxu0 0
    %335 = vmatmul.mubr.bf16.gmra.mrb[0].mxu0 %v286
    %v336 = vpop.f32.mrb[0].mxu0
    %v337 = vadd.f32 %v273, %v336
    %v338 = vpop.f32.mrb[0].mxu0
    %v339 = vpop.f32.mrb[0].mxu0
    %v340 = vadd.f32 %v273, %v339
    %v341 = vpop.f32.mrb[0].mxu0
    %342 = vmatprep.mubr.bf16.mxu0 0
    %343 = vmatmul.mubr.bf16.gmra.mrb[0].mxu0 %v289
    %v344 = vpop.f32.mrb[0].mxu0
    %v345 = vadd.f32 %v273, %v344
    %v346 = vpop.f32.mrb[0].mxu0
    %v347 = vpop.f32.mrb[0].mxu0
    %v348 = vadd.f32 %v273, %v347
    %v349 = vpop.f32.mrb[0].mxu0
    %350 = vmatprep.mubr.bf16.mxu0 0
    %351 = vmatmul.mubr.bf16.gmra.mrb[0].mxu0 %v292
    %v352 = vpop.f32.mrb[0].mxu0
    %v353 = vadd.f32 %v273, %v352
    %v354 = vpop.f32.mrb[0].mxu0
    %v355 = vpop.f32.mrb[0].mxu0
    %v356 = vadd.f32 %v273, %v355
    %v357 = vpop.f32.mrb[0].mxu0
    %358 = vdwg.mxu0
    %v359 = vpack.c.bf16 %v332, %v329
    %v360 = vpack.c.bf16 %v340, %v337
    %v361 = vpack.c.bf16 %v348, %v345
    %v362 = vpack.c.bf16 %v356, %v353
    %v363 = vld [vmem:[%s11] sm:$0xff]
    %v364 = vld [vmem:[%s11 + $0x8] sm:$0xff]
    %v365 = vld [vmem:[%s11 + $0x10] sm:$0xff]
    %v366 = vld [vmem:[%s11 + $0x18] sm:$0xff]
    %v367 = vld [vmem:[%s11 + $0x20] sm:$0xff]
    %v368 = vld [vmem:[%s11 + $0x28] sm:$0xff]
    %v369 = vld [vmem:[%s11 + $0x30] sm:$0xff]
    %v370 = vld [vmem:[%s11 + $0x38] sm:$0xff]
    %v371 = vld [vmem:[%s11 + $0x40] sm:$0xff]
    %v372 = vld [vmem:[%s11 + $0x48] sm:$0xff]
    %v373 = vld [vmem:[%s11 + $0x50] sm:$0xff]
    %v374 = vld [vmem:[%s11 + $0x58] sm:$0xff]
    %v375 = vld [vmem:[%s11 + $0x60] sm:$0xff]
    %v376 = vld [vmem:[%s11 + $0x68] sm:$0xff]
    %v377 = vld [vmem:[%s11 + $0x70] sm:$0xff]
    %v378 = vld [vmem:[%s11 + $0x78] sm:$0xff]
    %v379 = vld [vmem:[%s15] sm:$0xf]
    %v381 = vlaneseq
    %v382 = vshrl.u32 %v381, 7
    %v383 = vsub.s32 0, %v382
    %v384 = vrot.slane %v379, %v383
    %v385 = vlaneseq
    %v386 = vshrl.u32 %v385, 7
    %v387 = vsub.s32 1, %v386
    %v388 = vrot.slane %v379, %v387
    %v389 = vlaneseq
    %v390 = vshrl.u32 %v389, 7
    %v391 = vsub.s32 2, %v390
    %v392 = vrot.slane %v379, %v391
    %v393 = vlaneseq
    %v394 = vshrl.u32 %v393, 7
    %v395 = vsub.s32 3, %v394
    %v396 = vrot.slane %v379, %v395
    %v417 = vunpack.c.l.b16 %v363
    %v418 = vunpack.c.h.b16 %v363
    %v419 = vunpack.c.l.b16 %v364
    %v420 = vunpack.c.h.b16 %v364
    %v421 = vunpack.c.l.b16 %v365
    %v422 = vunpack.c.h.b16 %v365
    %v423 = vunpack.c.l.b16 %v366
    %v424 = vunpack.c.h.b16 %v366
    %v425 = vunpack.c.l.b16 %v367
    %v426 = vunpack.c.h.b16 %v367
    %v427 = vunpack.c.l.b16 %v368
    %v428 = vunpack.c.h.b16 %v368
    %v429 = vunpack.c.l.b16 %v369
    %v430 = vunpack.c.h.b16 %v369
    %v431 = vunpack.c.l.b16 %v370
    %v432 = vunpack.c.h.b16 %v370
    %v433 = vunpack.c.l.b16 %v371
    %v434 = vunpack.c.h.b16 %v371
    %v435 = vunpack.c.l.b16 %v372
    %v436 = vunpack.c.h.b16 %v372
    %v437 = vunpack.c.l.b16 %v373
    %v438 = vunpack.c.h.b16 %v373
    %v439 = vunpack.c.l.b16 %v374
    %v440 = vunpack.c.h.b16 %v374
    %v441 = vunpack.c.l.b16 %v375
    %v442 = vunpack.c.h.b16 %v375
    %v443 = vunpack.c.l.b16 %v376
    %v444 = vunpack.c.h.b16 %v376
    %v445 = vunpack.c.l.b16 %v377
    %v446 = vunpack.c.h.b16 %v377
    %v447 = vunpack.c.l.b16 %v378
    %v448 = vunpack.c.h.b16 %v378
    %v449 = vpack.c.b16 %v421, %v417
    %v450 = vpack.c.b16 %v422, %v418
    %v451 = vpack.c.b16 %v423, %v419
    %v452 = vpack.c.b16 %v424, %v420
    %v453 = vpack.c.b16 %v429, %v425
    %v454 = vpack.c.b16 %v430, %v426
    %v455 = vpack.c.b16 %v431, %v427
    %v456 = vpack.c.b16 %v432, %v428
    %v457 = vpack.c.b16 %v437, %v433
    %v458 = vpack.c.b16 %v438, %v434
    %v459 = vpack.c.b16 %v439, %v435
    %v460 = vpack.c.b16 %v440, %v436
    %v461 = vpack.c.b16 %v445, %v441
    %v462 = vpack.c.b16 %v446, %v442
    %v463 = vpack.c.b16 %v447, %v443
    %v464 = vpack.c.b16 %v448, %v444
    %vm481 = vcmask 523264
    %v483 = vsel %vm481, %v359, 0
    %v486 = vsel %vm481, %v360, 0
    %v489 = vsel %vm481, %v361, 0
    %v492 = vsel %vm481, %v362, 0
    %494 = vmatprep.subr.bf16.mxu0 %v450
    %495 = vmatpush1.bf16.msra.mxu0 %v449
    %496 = vmatprep.subr.bf16.mxu0 %v454
    %497 = vmatpush1.bf16.msra.mxu0 %v453
    %498 = vmatprep.subr.bf16.mxu0 %v458
    %499 = vmatpush1.bf16.msra.mxu0 %v457
    %500 = vmatprep.subr.bf16.mxu0 %v462
    %501 = vmatpush1.bf16.msra.mxu0 %v461
    %502 = vmatprep.subr.bf16.mxu0 0
    %503 = vmatpush1.bf16.msra.mxu0 0
    %504 = vmatprep.subr.bf16.mxu0 0
    %505 = vmatpush1.bf16.msra.mxu0 0
    %506 = vmatprep.subr.bf16.mxu0 0
    %507 = vmatpush1.bf16.msra.mxu0 0
    %508 = vmatprep.subr.bf16.mxu0 0
    %509 = vmatpush1.bf16.msra.mxu0 0
    %510 = vmatprep.subr.bf16.mxu0 0
    %511 = vmatpush1.bf16.msra.mxu0 0
    %512 = vmatprep.subr.bf16.mxu0 0
    %513 = vmatpush1.bf16.msra.mxu0 0
    %514 = vmatprep.subr.bf16.mxu0 0
    %515 = vmatpush1.bf16.msra.mxu0 0
    %516 = vmatprep.subr.bf16.mxu0 0
    %517 = vmatpush1.bf16.msra.mxu0 0
    %518 = vmatprep.subr.bf16.mxu0 0
    %519 = vmatpush1.bf16.msra.mxu0 0
    %520 = vmatprep.subr.bf16.mxu0 0
    %521 = vmatpush1.bf16.msra.mxu0 0
    %522 = vmatprep.subr.bf16.mxu0 0
    %523 = vmatpush1.bf16.msra.mxu0 0
    %524 = vmatprep.subr.bf16.mxu0 0
    %525 = vmatpush1.bf16.msra.mxu0 0
    %526 = vmatprep.mubr.bf16.mxu0 0
    %527 = vmatmul.mubr.bf16.gmra.mrb[0].mxu0 %v483
    %v528 = vpop.f32.mrb[0].mxu0
    %v529 = vadd.f32 %v384, %v528
    %v530 = vpop.f32.mrb[0].mxu0
    %v531 = vadd.f32 %v388, %v530
    %v532 = vpop.f32.mrb[0].mxu0
    %v533 = vadd.f32 %v384, %v532
    %v534 = vpop.f32.mrb[0].mxu0
    %v535 = vadd.f32 %v388, %v534
    %536 = vmatprep.mubr.bf16.mxu0 0
    %537 = vmatmul.mubr.bf16.gmra.mrb[0].mxu0 %v486
    %v538 = vpop.f32.mrb[0].mxu0
    %v539 = vadd.f32 %v384, %v538
    %v540 = vpop.f32.mrb[0].mxu0
    %v541 = vadd.f32 %v388, %v540
    %v542 = vpop.f32.mrb[0].mxu0
    %v543 = vadd.f32 %v384, %v542
    %v544 = vpop.f32.mrb[0].mxu0
    %v545 = vadd.f32 %v388, %v544
    %546 = vmatprep.mubr.bf16.mxu0 0
    %547 = vmatmul.mubr.bf16.gmra.mrb[0].mxu0 %v489
    %v548 = vpop.f32.mrb[0].mxu0
    %v549 = vadd.f32 %v384, %v548
    %v550 = vpop.f32.mrb[0].mxu0
    %v551 = vadd.f32 %v388, %v550
    %v552 = vpop.f32.mrb[0].mxu0
    %v553 = vadd.f32 %v384, %v552
    %v554 = vpop.f32.mrb[0].mxu0
    %v555 = vadd.f32 %v388, %v554
    %556 = vmatprep.mubr.bf16.mxu0 0
    %557 = vmatmul.mubr.bf16.gmra.mrb[0].mxu0 %v492
    %v558 = vpop.f32.mrb[0].mxu0
    %v559 = vadd.f32 %v384, %v558
    %v560 = vpop.f32.mrb[0].mxu0
    %v561 = vadd.f32 %v388, %v560
    %v562 = vpop.f32.mrb[0].mxu0
    %v563 = vadd.f32 %v384, %v562
    %v564 = vpop.f32.mrb[0].mxu0
    %v565 = vadd.f32 %v388, %v564
    %566 = vdwg.mxu0
    %567 = vmatprep.subr.bf16.mxu0 %v452
    %568 = vmatpush1.bf16.msra.mxu0 %v451
    %569 = vmatprep.subr.bf16.mxu0 %v456
    %570 = vmatpush1.bf16.msra.mxu0 %v455
    %571 = vmatprep.subr.bf16.mxu0 %v460
    %572 = vmatpush1.bf16.msra.mxu0 %v459
    %573 = vmatprep.subr.bf16.mxu0 %v464
    %574 = vmatpush1.bf16.msra.mxu0 %v463
    %575 = vmatprep.subr.bf16.mxu0 0
    %576 = vmatpush1.bf16.msra.mxu0 0
    %577 = vmatprep.subr.bf16.mxu0 0
    %578 = vmatpush1.bf16.msra.mxu0 0
    %579 = vmatprep.subr.bf16.mxu0 0
    %580 = vmatpush1.bf16.msra.mxu0 0
    %581 = vmatprep.subr.bf16.mxu0 0
    %582 = vmatpush1.bf16.msra.mxu0 0
    %583 = vmatprep.subr.bf16.mxu0 0
    %584 = vmatpush1.bf16.msra.mxu0 0
    %585 = vmatprep.subr.bf16.mxu0 0
    %586 = vmatpush1.bf16.msra.mxu0 0
    %587 = vmatprep.subr.bf16.mxu0 0
    %588 = vmatpush1.bf16.msra.mxu0 0
    %589 = vmatprep.subr.bf16.mxu0 0
    %590 = vmatpush1.bf16.msra.mxu0 0
    %591 = vmatprep.subr.bf16.mxu0 0
    %592 = vmatpush1.bf16.msra.mxu0 0
    %593 = vmatprep.subr.bf16.mxu0 0
    %594 = vmatpush1.bf16.msra.mxu0 0
    %595 = vmatprep.subr.bf16.mxu0 0
    %596 = vmatpush1.bf16.msra.mxu0 0
    %597 = vmatprep.subr.bf16.mxu0 0
    %598 = vmatpush1.bf16.msra.mxu0 0
    %599 = vmatprep.mubr.bf16.mxu0 0
    %600 = vmatmul.mubr.bf16.gmra.mrb[0].mxu0 %v483
    %v601 = vpop.f32.mrb[0].mxu0
    %v602 = vadd.f32 %v392, %v601
    %v603 = vpop.f32.mrb[0].mxu0
    %v604 = vadd.f32 %v396, %v603
    %v605 = vpop.f32.mrb[0].mxu0
    %v606 = vadd.f32 %v392, %v605
    %v607 = vpop.f32.mrb[0].mxu0
    %v608 = vadd.f32 %v396, %v607
    %609 = vmatprep.mubr.bf16.mxu0 0
    %610 = vmatmul.mubr.bf16.gmra.mrb[0].mxu0 %v486
    %v611 = vpop.f32.mrb[0].mxu0
    %v612 = vadd.f32 %v392, %v611
    %v613 = vpop.f32.mrb[0].mxu0
    %v614 = vadd.f32 %v396, %v613
    %v615 = vpop.f32.mrb[0].mxu0
    %v616 = vadd.f32 %v392, %v615
    %v617 = vpop.f32.mrb[0].mxu0
    %v618 = vadd.f32 %v396, %v617
    %619 = vmatprep.mubr.bf16.mxu0 0
    %620 = vmatmul.mubr.bf16.gmra.mrb[0].mxu0 %v489
    %v621 = vpop.f32.mrb[0].mxu0
    %v622 = vadd.f32 %v392, %v621
    %v623 = vpop.f32.mrb[0].mxu0
    %v624 = vadd.f32 %v396, %v623
    %v625 = vpop.f32.mrb[0].mxu0
    %v626 = vadd.f32 %v392, %v625
    %v627 = vpop.f32.mrb[0].mxu0
    %v628 = vadd.f32 %v396, %v627
    %629 = vmatprep.mubr.bf16.mxu0 0
    %630 = vmatmul.mubr.bf16.gmra.mrb[0].mxu0 %v492
    %v631 = vpop.f32.mrb[0].mxu0
    %v632 = vadd.f32 %v392, %v631
    %v633 = vpop.f32.mrb[0].mxu0
    %v634 = vadd.f32 %v396, %v633
    %v635 = vpop.f32.mrb[0].mxu0
    %v636 = vadd.f32 %v392, %v635
    %v637 = vpop.f32.mrb[0].mxu0
    %v638 = vadd.f32 %v396, %v637
    %639 = vdwg.mxu0
    %640 = vst [vmem:[#allocation2] sm:$0xff] %v529
    %641 = vst [vmem:[#allocation2 + $0x8] sm:$0xff] %v531
    %642 = vst [vmem:[#allocation2 + $0x10] sm:$0xff] %v602
    %643 = vst [vmem:[#allocation2 + $0x18] sm:$0xff] %v604
    %644 = vst [vmem:[#allocation2 + $0x20] sm:$0xff] %v533
    %645 = vst [vmem:[#allocation2 + $0x28] sm:$0xff] %v535
    %646 = vst [vmem:[#allocation2 + $0x30] sm:$0xff] %v606
    %647 = vst [vmem:[#allocation2 + $0x38] sm:$0xff] %v608
    %648 = vst [vmem:[#allocation2 + $0x40] sm:$0xff] %v539
    %649 = vst [vmem:[#allocation2 + $0x48] sm:$0xff] %v541
    %650 = vst [vmem:[#allocation2 + $0x50] sm:$0xff] %v612
    %651 = vst [vmem:[#allocation2 + $0x58] sm:$0xff] %v614
    %652 = vst [vmem:[#allocation2 + $0x60] sm:$0xff] %v543
    %653 = vst [vmem:[#allocation2 + $0x68] sm:$0xff] %v545
    %654 = vst [vmem:[#allocation2 + $0x70] sm:$0xff] %v616
    %655 = vst [vmem:[#allocation2 + $0x78] sm:$0xff] %v618
    %656 = vst [vmem:[#allocation2 + $0x80] sm:$0xff] %v549
    %657 = vst [vmem:[#allocation2 + $0x88] sm:$0xff] %v551
    %658 = vst [vmem:[#allocation2 + $0x90] sm:$0xff] %v622
    %659 = vst [vmem:[#allocation2 + $0x98] sm:$0xff] %v624
    %660 = vst [vmem:[#allocation2 + $0xa0] sm:$0xff] %v553
    %661 = vst [vmem:[#allocation2 + $0xa8] sm:$0xff] %v555
    %662 = vst [vmem:[#allocation2 + $0xb0] sm:$0xff] %v626
    %663 = vst [vmem:[#allocation2 + $0xb8] sm:$0xff] %v628
    %664 = vst [vmem:[#allocation2 + $0xc0] sm:$0xff] %v559
    %665 = vst [vmem:[#allocation2 + $0xc8] sm:$0xff] %v561
    %666 = vst [vmem:[#allocation2 + $0xd0] sm:$0xff] %v632
    %667 = vst [vmem:[#allocation2 + $0xd8] sm:$0xff] %v634
    %668 = vst [vmem:[#allocation2 + $0xe0] sm:$0xff] %v563
    %669 = vst [vmem:[#allocation2 + $0xe8] sm:$0xff] %v565
    %670 = vst [vmem:[#allocation2 + $0xf0] sm:$0xff] %v636
    %671 = vst [vmem:[#allocation2 + $0xf8] sm:$0xff] %v638
    %v672 = vld [vmem:[#allocation2] sm:$0xff]
    %v673 = vld [vmem:[#allocation2 + $0x8] sm:$0xff]
    %v674 = vld [vmem:[#allocation2 + $0x10] sm:$0xff]
    %v675 = vld [vmem:[#allocation2 + $0x18] sm:$0xff]
    %v676 = vld [vmem:[%s13] sm:$0xff]
    %v677 = vld [vmem:[%s13 + $0x8] sm:$0xff]
    %v678 = vld [vmem:[%s13 + $0x10] sm:$0xff]
    %v679 = vld [vmem:[%s13 + $0x18] sm:$0xff]
    %v680 = vld [vmem:[%s13 + $0x20] sm:$0xff]
    %v681 = vld [vmem:[%s13 + $0x28] sm:$0xff]
    %v682 = vld [vmem:[%s13 + $0x30] sm:$0xff]
    %v683 = vld [vmem:[%s13 + $0x38] sm:$0xff]
    %v684 = vld [vmem:[%s13 + $0x40] sm:$0xff]
    %v685 = vld [vmem:[%s13 + $0x48] sm:$0xff]
    %v686 = vld [vmem:[%s13 + $0x50] sm:$0xff]
    %v687 = vld [vmem:[%s13 + $0x58] sm:$0xff]
    %v688 = vld [vmem:[%s13 + $0x60] sm:$0xff]
    %v689 = vld [vmem:[%s13 + $0x68] sm:$0xff]
    %v690 = vld [vmem:[%s13 + $0x70] sm:$0xff]
    %v691 = vld [vmem:[%s13 + $0x78] sm:$0xff]
    %v692 = vld [vmem:[%s13 + $0x80] sm:$0xff]
    %v693 = vld [vmem:[%s13 + $0x88] sm:$0xff]
    %v694 = vld [vmem:[%s13 + $0x90] sm:$0xff]
    %v695 = vld [vmem:[%s13 + $0x98] sm:$0xff]
    %v696 = vld [vmem:[%s13 + $0xa0] sm:$0xff]
    %v697 = vld [vmem:[%s13 + $0xa8] sm:$0xff]
    %v698 = vld [vmem:[%s13 + $0xb0] sm:$0xff]
    %v699 = vld [vmem:[%s13 + $0xb8] sm:$0xff]
    %v700 = vld [vmem:[%s13 + $0xc0] sm:$0xff]
    %v701 = vld [vmem:[%s13 + $0xc8] sm:$0xff]
    %v702 = vld [vmem:[%s13 + $0xd0] sm:$0xff]
    %v703 = vld [vmem:[%s13 + $0xd8] sm:$0xff]
    %v704 = vld [vmem:[%s13 + $0xe0] sm:$0xff]
    %v705 = vld [vmem:[%s13 + $0xe8] sm:$0xff]
    %v706 = vld [vmem:[%s13 + $0xf0] sm:$0xff]
    %v707 = vld [vmem:[%s13 + $0xf8] sm:$0xff]
    %v740 = vunpack.c.l.b16 %v676
    %v741 = vunpack.c.h.b16 %v676
    %v742 = vunpack.c.l.b16 %v677
    %v743 = vunpack.c.h.b16 %v677
    %v744 = vunpack.c.l.b16 %v678
    %v745 = vunpack.c.h.b16 %v678
    %v746 = vunpack.c.l.b16 %v679
    %v747 = vunpack.c.h.b16 %v679
    %v748 = vunpack.c.l.b16 %v680
    %v749 = vunpack.c.h.b16 %v680
    %v750 = vunpack.c.l.b16 %v681
    %v751 = vunpack.c.h.b16 %v681
    %v752 = vunpack.c.l.b16 %v682
    %v753 = vunpack.c.h.b16 %v682
    %v754 = vunpack.c.l.b16 %v683
    %v755 = vunpack.c.h.b16 %v683
    %v756 = vunpack.c.l.b16 %v684
    %v757 = vunpack.c.h.b16 %v684
    %v758 = vunpack.c.l.b16 %v685
    %v759 = vunpack.c.h.b16 %v685
    %v760 = vunpack.c.l.b16 %v686
    %v761 = vunpack.c.h.b16 %v686
    %v762 = vunpack.c.l.b16 %v687
    %v763 = vunpack.c.h.b16 %v687
    %v764 = vunpack.c.l.b16 %v688
    %v765 = vunpack.c.h.b16 %v688
    %v766 = vunpack.c.l.b16 %v689
    %v767 = vunpack.c.h.b16 %v689
    %v768 = vunpack.c.l.b16 %v690
    %v769 = vunpack.c.h.b16 %v690
    %v770 = vunpack.c.l.b16 %v691
    %v771 = vunpack.c.h.b16 %v691
    %v772 = vunpack.c.l.b16 %v692
    %v773 = vunpack.c.h.b16 %v692
    %v774 = vunpack.c.l.b16 %v693
    %v775 = vunpack.c.h.b16 %v693
    %v776 = vunpack.c.l.b16 %v694
    %v777 = vunpack.c.h.b16 %v694
    %v778 = vunpack.c.l.b16 %v695
    %v779 = vunpack.c.h.b16 %v695
    %v780 = vunpack.c.l.b16 %v696
    %v781 = vunpack.c.h.b16 %v696
    %v782 = vunpack.c.l.b16 %v697
    %v783 = vunpack.c.h.b16 %v697
    %v784 = vunpack.c.l.b16 %v698
    %v785 = vunpack.c.h.b16 %v698
    %v786 = vunpack.c.l.b16 %v699
    %v787 = vunpack.c.h.b16 %v699
    %v788 = vunpack.c.l.b16 %v700
    %v789 = vunpack.c.h.b16 %v700
    %v790 = vunpack.c.l.b16 %v701
    %v791 = vunpack.c.h.b16 %v701
    %v792 = vunpack.c.l.b16 %v702
    %v793 = vunpack.c.h.b16 %v702
    %v794 = vunpack.c.l.b16 %v703
    %v795 = vunpack.c.h.b16 %v703
    %v796 = vunpack.c.l.b16 %v704
    %v797 = vunpack.c.h.b16 %v704
    %v798 = vunpack.c.l.b16 %v705
    %v799 = vunpack.c.h.b16 %v705
    %v800 = vunpack.c.l.b16 %v706
    %v801 = vunpack.c.h.b16 %v706
    %v802 = vunpack.c.l.b16 %v707
    %v803 = vunpack.c.h.b16 %v707
    %v804 = vpack.c.b16 %v744, %v740
    %v805 = vpack.c.b16 %v745, %v741
    %v806 = vpack.c.b16 %v746, %v742
    %v807 = vpack.c.b16 %v747, %v743
    %v808 = vpack.c.b16 %v752, %v748
    %v809 = vpack.c.b16 %v753, %v749
    %v810 = vpack.c.b16 %v754, %v750
    %v811 = vpack.c.b16 %v755, %v751
    %v812 = vpack.c.b16 %v760, %v756
    %v813 = vpack.c.b16 %v761, %v757
    %v814 = vpack.c.b16 %v762, %v758
    %v815 = vpack.c.b16 %v763, %v759
    %v816 = vpack.c.b16 %v768, %v764
    %v817 = vpack.c.b16 %v769, %v765
    %v818 = vpack.c.b16 %v770, %v766
    %v819 = vpack.c.b16 %v771, %v767
    %v820 = vpack.c.b16 %v776, %v772
    %v821 = vpack.c.b16 %v777, %v773
    %v822 = vpack.c.b16 %v778, %v774
    %v823 = vpack.c.b16 %v779, %v775
    %v824 = vpack.c.b16 %v784, %v780
    %v825 = vpack.c.b16 %v785, %v781
    %v826 = vpack.c.b16 %v786, %v782
    %v827 = vpack.c.b16 %v787, %v783
    %v828 = vpack.c.b16 %v792, %v788
    %v829 = vpack.c.b16 %v793, %v789
    %v830 = vpack.c.b16 %v794, %v790
    %v831 = vpack.c.b16 %v795, %v791
    %v832 = vpack.c.b16 %v800, %v796
    %v833 = vpack.c.b16 %v801, %v797
    %v834 = vpack.c.b16 %v802, %v798
    %v835 = vpack.c.b16 %v803, %v799
    %868 = vmatprep.subr.bf16.mxu0 %v805
    %869 = vmatpush1.bf16.msra.mxu0 %v804
    %870 = vmatprep.subr.bf16.mxu0 %v809
    %871 = vmatpush1.bf16.msra.mxu0 %v808
    %872 = vmatprep.subr.bf16.mxu0 %v813
    %873 = vmatpush1.bf16.msra.mxu0 %v812
    %874 = vmatprep.subr.bf16.mxu0 %v817
    %875 = vmatpush1.bf16.msra.mxu0 %v816
    %876 = vmatprep.subr.bf16.mxu0 %v821
    %877 = vmatpush1.bf16.msra.mxu0 %v820
    %878 = vmatprep.subr.bf16.mxu0 %v825
    %879 = vmatpush1.bf16.msra.mxu0 %v824
    %880 = vmatprep.subr.bf16.mxu0 %v829
    %881 = vmatpush1.bf16.msra.mxu0 %v828
    %882 = vmatprep.subr.bf16.mxu0 %v833
    %883 = vmatpush1.bf16.msra.mxu0 %v832
    %884 = vmatprep.subr.bf16.mxu0 0
    %885 = vmatpush1.bf16.msra.mxu0 0
    %886 = vmatprep.subr.bf16.mxu0 0
    %887 = vmatpush1.bf16.msra.mxu0 0
    %888 = vmatprep.subr.bf16.mxu0 0
    %889 = vmatpush1.bf16.msra.mxu0 0
    %890 = vmatprep.subr.bf16.mxu0 0
    %891 = vmatpush1.bf16.msra.mxu0 0
    %892 = vmatprep.subr.bf16.mxu0 0
    %893 = vmatpush1.bf16.msra.mxu0 0
    %894 = vmatprep.subr.bf16.mxu0 0
    %895 = vmatpush1.bf16.msra.mxu0 0
    %896 = vmatprep.subr.bf16.mxu0 0
    %897 = vmatpush1.bf16.msra.mxu0 0
    %898 = vmatprep.subr.bf16.mxu0 0
    %899 = vmatpush1.bf16.msra.mxu0 0
    %900 = vmatprep.mubr.bf16.mxu0 0
    %901 = vmatmul.mubr.bf16.gmra.mrb[0].mxu0 0
    %v902 = vpop.f32.mrb[0].mxu0
    %v903 = vadd.f32 0.0, %v902
    %v904 = vpop.f32.mrb[0].mxu0
    %v905 = vadd.f32 0.0, %v904
    %v906 = vpop.f32.mrb[0].mxu0
    %v907 = vpop.f32.mrb[0].mxu0
    %908 = vdwg.mxu0
    %909 = vmatprep.subr.bf16.mxu0 %v807
    %910 = vmatpush1.bf16.msra.mxu0 %v806
    %911 = vmatprep.subr.bf16.mxu0 %v811
    %912 = vmatpush1.bf16.msra.mxu0 %v810
    %913 = vmatprep.subr.bf16.mxu0 %v815
    %914 = vmatpush1.bf16.msra.mxu0 %v814
    %915 = vmatprep.subr.bf16.mxu0 %v819
    %916 = vmatpush1.bf16.msra.mxu0 %v818
    %917 = vmatprep.subr.bf16.mxu0 %v823
    %918 = vmatpush1.bf16.msra.mxu0 %v822
    %919 = vmatprep.subr.bf16.mxu0 %v827
    %920 = vmatpush1.bf16.msra.mxu0 %v826
    %921 = vmatprep.subr.bf16.mxu0 %v831
    %922 = vmatpush1.bf16.msra.mxu0 %v830
    %923 = vmatprep.subr.bf16.mxu0 %v835
    %924 = vmatpush1.bf16.msra.mxu0 %v834
    %925 = vmatprep.subr.bf16.mxu0 0
    %926 = vmatpush1.bf16.msra.mxu0 0
    %927 = vmatprep.subr.bf16.mxu0 0
    %928 = vmatpush1.bf16.msra.mxu0 0
    %929 = vmatprep.subr.bf16.mxu0 0
    %930 = vmatpush1.bf16.msra.mxu0 0
    %931 = vmatprep.subr.bf16.mxu0 0
    %932 = vmatpush1.bf16.msra.mxu0 0
    %933 = vmatprep.subr.bf16.mxu0 0
    %934 = vmatpush1.bf16.msra.mxu0 0
    %935 = vmatprep.subr.bf16.mxu0 0
    %936 = vmatpush1.bf16.msra.mxu0 0
    %937 = vmatprep.subr.bf16.mxu0 0
    %938 = vmatpush1.bf16.msra.mxu0 0
    %939 = vmatprep.subr.bf16.mxu0 0
    %940 = vmatpush1.bf16.msra.mxu0 0
    %941 = vmatprep.mubr.bf16.mxu0 0
    %942 = vmatmul.mubr.bf16.gmra.mrb[0].mxu0 0
    %v943 = vpop.f32.mrb[0].mxu0
    %v944 = vadd.f32 0.0, %v943
    %v945 = vpop.f32.mrb[0].mxu0
    %v946 = vadd.f32 0.0, %v945
    %v947 = vpop.f32.mrb[0].mxu0
    %v948 = vpop.f32.mrb[0].mxu0
    %949 = vdwg.mxu0
    %v950 = vadd.f32 %v672, %v903
    %v951 = vadd.f32 %v673, %v905
    %v952 = vadd.f32 %v674, %v944
    %v953 = vadd.f32 %v675, %v946
    %v954 = vxor.u32 %v950, 2147483648
    %v955 = vmul.f32 %v954, 1.442695
    %v956 = vpow.pop %v955
    %v957 = vadd.f32 %v956, 1.0
    %v958 = vrcp.pop %v957
    %v959 = vmul.f32 1.0, %v958
    %v960 = vxor.u32 %v951, 2147483648
    %v961 = vmul.f32 %v960, 1.442695
    %v962 = vpow.pop %v961
    %v963 = vadd.f32 %v962, 1.0
    %v964 = vrcp.pop %v963
    %v965 = vmul.f32 1.0, %v964
    %v966 = vtanh.pop %v952
    %v967 = vxor.u32 %v953, 2147483648
    %v968 = vmul.f32 %v967, 1.442695
    %v969 = vpow.pop %v968
    %v970 = vadd.f32 %v969, 1.0
    %v971 = vrcp.pop %v970
    %v972 = vmul.f32 1.0, %v971
    %v973 = vmul.f32 %v965, 0.0
    %v974 = vmul.f32 %v959, %v966
    %v975 = vadd.f32 %v973, %v974
    %v976 = vtanh.pop %v975
    %v977 = vmul.f32 %v972, %v976
    %v978 = vpack.c.bf16 %v977, %v977
    %v979 = vpack.c.bf16 0.0, 0.0
    %v980 = vld [vmem:[%s17] sm:$0xff]
    %v981 = vld [vmem:[%s17 + $0x8] sm:$0xff]
    %v982 = vld [vmem:[%s17 + $0x10] sm:$0xff]
    %v983 = vld [vmem:[%s17 + $0x18] sm:$0xff]
    %v984 = vld [vmem:[%s17 + $0x20] sm:$0xff]
    %v985 = vld [vmem:[%s17 + $0x28] sm:$0xff]
    %v986 = vld [vmem:[%s17 + $0x30] sm:$0xff]
    %v987 = vld [vmem:[%s17 + $0x38] sm:$0xff]
    %v988 = vld [vmem:[%s17 + $0x40] sm:$0xff]
    %v989 = vld [vmem:[%s17 + $0x48] sm:$0xff]
    %v990 = vld [vmem:[%s17 + $0x50] sm:$0xff]
    %v991 = vld [vmem:[%s17 + $0x58] sm:$0xff]
    %v992 = vld [vmem:[%s17 + $0x60] sm:$0xff]
    %v993 = vld [vmem:[%s17 + $0x68] sm:$0xff]
    %v994 = vld [vmem:[%s17 + $0x70] sm:$0xff]
    %v995 = vld [vmem:[%s17 + $0x78] sm:$0xff]
    %v996 = vld [vmem:[%s17 + $0x80] sm:$0xff]
    %v997 = vld [vmem:[%s17 + $0x88] sm:$0xff]
    %v998 = vld [vmem:[%s17 + $0x90] sm:$0xff]
    %v999 = vld [vmem:[%s17 + $0x98] sm:$0xff]
    %v1000 = vld [vmem:[%s17 + $0xa0] sm:$0xff]
    %v1001 = vld [vmem:[%s17 + $0xa8] sm:$0xff]
    %v1002 = vld [vmem:[%s17 + $0xb0] sm:$0xff]
    %v1003 = vld [vmem:[%s17 + $0xb8] sm:$0xff]
    %v1004 = vld [vmem:[%s17 + $0xc0] sm:$0xff]
    %v1005 = vld [vmem:[%s17 + $0xc8] sm:$0xff]
    %v1006 = vld [vmem:[%s17 + $0xd0] sm:$0xff]
    %v1007 = vld [vmem:[%s17 + $0xd8] sm:$0xff]
    %v1008 = vld [vmem:[%s17 + $0xe0] sm:$0xff]
    %v1009 = vld [vmem:[%s17 + $0xe8] sm:$0xff]
    %v1010 = vld [vmem:[%s17 + $0xf0] sm:$0xff]
    %v1011 = vld [vmem:[%s17 + $0xf8] sm:$0xff]
    %v1012 = vld [vmem:[%s17 + $0x100] sm:$0xff]
    %v1013 = vld [vmem:[%s17 + $0x108] sm:$0xff]
    %v1014 = vld [vmem:[%s17 + $0x110] sm:$0xff]
    %v1015 = vld [vmem:[%s17 + $0x118] sm:$0xff]
    %v1016 = vld [vmem:[%s17 + $0x120] sm:$0xff]
    %v1017 = vld [vmem:[%s17 + $0x128] sm:$0xff]
    %v1018 = vld [vmem:[%s17 + $0x130] sm:$0xff]
    %v1019 = vld [vmem:[%s17 + $0x138] sm:$0xff]
    %v1020 = vld [vmem:[%s17 + $0x140] sm:$0xff]
    %v1021 = vld [vmem:[%s17 + $0x148] sm:$0xff]
    %v1022 = vld [vmem:[%s17 + $0x150] sm:$0xff]
    %v1023 = vld [vmem:[%s17 + $0x158] sm:$0xff]
    %v1024 = vld [vmem:[%s17 + $0x160] sm:$0xff]
    %v1025 = vld [vmem:[%s17 + $0x168] sm:$0xff]
    %v1026 = vld [vmem:[%s17 + $0x170] sm:$0xff]
    %v1027 = vld [vmem:[%s17 + $0x178] sm:$0xff]
    %v1028 = vld [vmem:[%s17 + $0x180] sm:$0xff]
    %v1029 = vld [vmem:[%s17 + $0x188] sm:$0xff]
    %v1030 = vld [vmem:[%s17 + $0x190] sm:$0xff]
    %v1031 = vld [vmem:[%s17 + $0x198] sm:$0xff]
    %v1032 = vld [vmem:[%s17 + $0x1a0] sm:$0xff]
    %v1033 = vld [vmem:[%s17 + $0x1a8] sm:$0xff]
    %v1034 = vld [vmem:[%s17 + $0x1b0] sm:$0xff]
    %v1035 = vld [vmem:[%s17 + $0x1b8] sm:$0xff]
    %v1036 = vld [vmem:[%s17 + $0x1c0] sm:$0xff]
    %v1037 = vld [vmem:[%s17 + $0x1c8] sm:$0xff]
    %v1038 = vld [vmem:[%s17 + $0x1d0] sm:$0xff]
    %v1039 = vld [vmem:[%s17 + $0x1d8] sm:$0xff]
    %v1040 = vld [vmem:[%s17 + $0x1e0] sm:$0xff]
    %v1041 = vld [vmem:[%s17 + $0x1e8] sm:$0xff]
    %v1042 = vld [vmem:[%s17 + $0x1f0] sm:$0xff]
    %v1043 = vld [vmem:[%s17 + $0x1f8] sm:$0xff]
    %v1044 = vld [vmem:[%s19] sm:$0xf]
    %v1046 = vlaneseq
    %v1047 = vshrl.u32 %v1046, 7
    %v1048 = vsub.s32 0, %v1047
    %v1049 = vrot.slane %v1044, %v1048
    %v1050 = vlaneseq
    %v1051 = vshrl.u32 %v1050, 7
    %v1052 = vsub.s32 1, %v1051
    %v1053 = vrot.slane %v1044, %v1052
    %v1054 = vlaneseq
    %v1055 = vshrl.u32 %v1054, 7
    %v1056 = vsub.s32 2, %v1055
    %v1057 = vrot.slane %v1044, %v1056
    %v1058 = vlaneseq
    %v1059 = vshrl.u32 %v1058, 7
    %v1060 = vsub.s32 3, %v1059
    %v1061 = vrot.slane %v1044, %v1060
    %v1130 = vunpack.c.l.b16 %v980
    %v1131 = vunpack.c.h.b16 %v980
    %v1132 = vunpack.c.l.b16 %v981
    %v1133 = vunpack.c.h.b16 %v981
    %v1134 = vunpack.c.l.b16 %v982
    %v1135 = vunpack.c.h.b16 %v982
    %v1136 = vunpack.c.l.b16 %v983
    %v1137 = vunpack.c.h.b16 %v983
    %v1138 = vunpack.c.l.b16 %v984
    %v1139 = vunpack.c.h.b16 %v984
    %v1140 = vunpack.c.l.b16 %v985
    %v1141 = vunpack.c.h.b16 %v985
    %v1142 = vunpack.c.l.b16 %v986
    %v1143 = vunpack.c.h.b16 %v986
    %v1144 = vunpack.c.l.b16 %v987
    %v1145 = vunpack.c.h.b16 %v987
    %v1146 = vunpack.c.l.b16 %v988
    %v1147 = vunpack.c.h.b16 %v988
    %v1148 = vunpack.c.l.b16 %v989
    %v1149 = vunpack.c.h.b16 %v989
    %v1150 = vunpack.c.l.b16 %v990
    %v1151 = vunpack.c.h.b16 %v990
    %v1152 = vunpack.c.l.b16 %v991
    %v1153 = vunpack.c.h.b16 %v991
    %v1154 = vunpack.c.l.b16 %v992
    %v1155 = vunpack.c.h.b16 %v992
    %v1156 = vunpack.c.l.b16 %v993
    %v1157 = vunpack.c.h.b16 %v993
    %v1158 = vunpack.c.l.b16 %v994
    %v1159 = vunpack.c.h.b16 %v994
    %v1160 = vunpack.c.l.b16 %v995
    %v1161 = vunpack.c.h.b16 %v995
    %v1162 = vunpack.c.l.b16 %v996
    %v1163 = vunpack.c.h.b16 %v996
    %v1164 = vunpack.c.l.b16 %v997
    %v1165 = vunpack.c.h.b16 %v997
    %v1166 = vunpack.c.l.b16 %v998
    %v1167 = vunpack.c.h.b16 %v998
    %v1168 = vunpack.c.l.b16 %v999
    %v1169 = vunpack.c.h.b16 %v999
    %v1170 = vunpack.c.l.b16 %v1000
    %v1171 = vunpack.c.h.b16 %v1000
    %v1172 = vunpack.c.l.b16 %v1001
    %v1173 = vunpack.c.h.b16 %v1001
    %v1174 = vunpack.c.l.b16 %v1002
    %v1175 = vunpack.c.h.b16 %v1002
    %v1176 = vunpack.c.l.b16 %v1003
    %v1177 = vunpack.c.h.b16 %v1003
    %v1178 = vunpack.c.l.b16 %v1004
    %v1179 = vunpack.c.h.b16 %v1004
    %v1180 = vunpack.c.l.b16 %v1005
    %v1181 = vunpack.c.h.b16 %v1005
    %v1182 = vunpack.c.l.b16 %v1006
    %v1183 = vunpack.c.h.b16 %v1006
    %v1184 = vunpack.c.l.b16 %v1007
    %v1185 = vunpack.c.h.b16 %v1007
    %v1186 = vunpack.c.l.b16 %v1008
    %v1187 = vunpack.c.h.b16 %v1008
    %v1188 = vunpack.c.l.b16 %v1009
    %v1189 = vunpack.c.h.b16 %v1009
    %v1190 = vunpack.c.l.b16 %v1010
    %v1191 = vunpack.c.h.b16 %v1010
    %v1192 = vunpack.c.l.b16 %v1011
    %v1193 = vunpack.c.h.b16 %v1011
    %v1194 = vunpack.c.l.b16 %v1012
    %v1195 = vunpack.c.h.b16 %v1012
    %v1196 = vunpack.c.l.b16 %v1013
    %v1197 = vunpack.c.h.b16 %v1013
    %v1198 = vunpack.c.l.b16 %v1014
    %v1199 = vunpack.c.h.b16 %v1014
    %v1200 = vunpack.c.l.b16 %v1015
    %v1201 = vunpack.c.h.b16 %v1015
    %v1202 = vunpack.c.l.b16 %v1016
    %v1203 = vunpack.c.h.b16 %v1016
    %v1204 = vunpack.c.l.b16 %v1017
    %v1205 = vunpack.c.h.b16 %v1017
    %v1206 = vunpack.c.l.b16 %v1018
    %v1207 = vunpack.c.h.b16 %v1018
    %v1208 = vunpack.c.l.b16 %v1019
    %v1209 = vunpack.c.h.b16 %v1019
    %v1210 = vunpack.c.l.b16 %v1020
    %v1211 = vunpack.c.h.b16 %v1020
    %v1212 = vunpack.c.l.b16 %v1021
    %v1213 = vunpack.c.h.b16 %v1021
    %v1214 = vunpack.c.l.b16 %v1022
    %v1215 = vunpack.c.h.b16 %v1022
    %v1216 = vunpack.c.l.b16 %v1023
    %v1217 = vunpack.c.h.b16 %v1023
    %v1218 = vunpack.c.l.b16 %v1024
    %v1219 = vunpack.c.h.b16 %v1024
    %v1220 = vunpack.c.l.b16 %v1025
    %v1221 = vunpack.c.h.b16 %v1025
    %v1222 = vunpack.c.l.b16 %v1026
    %v1223 = vunpack.c.h.b16 %v1026
    %v1224 = vunpack.c.l.b16 %v1027
    %v1225 = vunpack.c.h.b16 %v1027
    %v1226 = vunpack.c.l.b16 %v1028
    %v1227 = vunpack.c.h.b16 %v1028
    %v1228 = vunpack.c.l.b16 %v1029
    %v1229 = vunpack.c.h.b16 %v1029
    %v1230 = vunpack.c.l.b16 %v1030
    %v1231 = vunpack.c.h.b16 %v1030
    %v1232 = vunpack.c.l.b16 %v1031
    %v1233 = vunpack.c.h.b16 %v1031
    %v1234 = vunpack.c.l.b16 %v1032
    %v1235 = vunpack.c.h.b16 %v1032
    %v1236 = vunpack.c.l.b16 %v1033
    %v1237 = vunpack.c.h.b16 %v1033
    %v1238 = vunpack.c.l.b16 %v1034
    %v1239 = vunpack.c.h.b16 %v1034
    %v1240 = vunpack.c.l.b16 %v1035
    %v1241 = vunpack.c.h.b16 %v1035
    %v1242 = vunpack.c.l.b16 %v1036
    %v1243 = vunpack.c.h.b16 %v1036
    %v1244 = vunpack.c.l.b16 %v1037
    %v1245 = vunpack.c.h.b16 %v1037
    %v1246 = vunpack.c.l.b16 %v1038
    %v1247 = vunpack.c.h.b16 %v1038
    %v1248 = vunpack.c.l.b16 %v1039
    %v1249 = vunpack.c.h.b16 %v1039
    %v1250 = vunpack.c.l.b16 %v1040
    %v1251 = vunpack.c.h.b16 %v1040
    %v1252 = vunpack.c.l.b16 %v1041
    %v1253 = vunpack.c.h.b16 %v1041
    %v1254 = vunpack.c.l.b16 %v1042
    %v1255 = vunpack.c.h.b16 %v1042
    %v1256 = vunpack.c.l.b16 %v1043
    %v1257 = vunpack.c.h.b16 %v1043
    %v1258 = vpack.c.b16 %v1134, %v1130
    %v1259 = vpack.c.b16 %v1135, %v1131
    %v1260 = vpack.c.b16 %v1136, %v1132
    %v1261 = vpack.c.b16 %v1137, %v1133
    %v1262 = vpack.c.b16 %v1142, %v1138
    %v1263 = vpack.c.b16 %v1143, %v1139
    %v1264 = vpack.c.b16 %v1144, %v1140
    %v1265 = vpack.c.b16 %v1145, %v1141
    %v1266 = vpack.c.b16 %v1150, %v1146
    %v1267 = vpack.c.b16 %v1151, %v1147
    %v1268 = vpack.c.b16 %v1152, %v1148
    %v1269 = vpack.c.b16 %v1153, %v1149
    %v1270 = vpack.c.b16 %v1158, %v1154
    %v1271 = vpack.c.b16 %v1159, %v1155
    %v1272 = vpack.c.b16 %v1160, %v1156
    %v1273 = vpack.c.b16 %v1161, %v1157
    %v1274 = vpack.c.b16 %v1166, %v1162
    %v1275 = vpack.c.b16 %v1167, %v1163
    %v1276 = vpack.c.b16 %v1168, %v1164
    %v1277 = vpack.c.b16 %v1169, %v1165
    %v1278 = vpack.c.b16 %v1174, %v1170
    %v1279 = vpack.c.b16 %v1175, %v1171
    %v1280 = vpack.c.b16 %v1176, %v1172
    %v1281 = vpack.c.b16 %v1177, %v1173
    %v1282 = vpack.c.b16 %v1182, %v1178
    %v1283 = vpack.c.b16 %v1183, %v1179
    %v1284 = vpack.c.b16 %v1184, %v1180
    %v1285 = vpack.c.b16 %v1185, %v1181
    %v1286 = vpack.c.b16 %v1190, %v1186
    %v1287 = vpack.c.b16 %v1191, %v1187
    %v1288 = vpack.c.b16 %v1192, %v1188
    %v1289 = vpack.c.b16 %v1193, %v1189
    %v1290 = vpack.c.b16 %v1198, %v1194
    %v1291 = vpack.c.b16 %v1199, %v1195
    %v1292 = vpack.c.b16 %v1200, %v1196
    %v1293 = vpack.c.b16 %v1201, %v1197
    %v1294 = vpack.c.b16 %v1206, %v1202
    %v1295 = vpack.c.b16 %v1207, %v1203
    %v1296 = vpack.c.b16 %v1208, %v1204
    %v1297 = vpack.c.b16 %v1209, %v1205
    %v1298 = vpack.c.b16 %v1214, %v1210
    %v1299 = vpack.c.b16 %v1215, %v1211
    %v1300 = vpack.c.b16 %v1216, %v1212
    %v1301 = vpack.c.b16 %v1217, %v1213
    %v1302 = vpack.c.b16 %v1222, %v1218
    %v1303 = vpack.c.b16 %v1223, %v1219
    %v1304 = vpack.c.b16 %v1224, %v1220
    %v1305 = vpack.c.b16 %v1225, %v1221
    %v1306 = vpack.c.b16 %v1230, %v1226
    %v1307 = vpack.c.b16 %v1231, %v1227
    %v1308 = vpack.c.b16 %v1232, %v1228
    %v1309 = vpack.c.b16 %v1233, %v1229
    %v1310 = vpack.c.b16 %v1238, %v1234
    %v1311 = vpack.c.b16 %v1239, %v1235
    %v1312 = vpack.c.b16 %v1240, %v1236
    %v1313 = vpack.c.b16 %v1241, %v1237
    %v1314 = vpack.c.b16 %v1246, %v1242
    %v1315 = vpack.c.b16 %v1247, %v1243
    %v1316 = vpack.c.b16 %v1248, %v1244
    %v1317 = vpack.c.b16 %v1249, %v1245
    %v1318 = vpack.c.b16 %v1254, %v1250
    %v1319 = vpack.c.b16 %v1255, %v1251
    %v1320 = vpack.c.b16 %v1256, %v1252
    %v1321 = vpack.c.b16 %v1257, %v1253
    %1386 = vmatprep.subr.bf16.mxu0 %v1259
    %1387 = vmatpush1.bf16.msra.mxu0 %v1258
    %1388 = vmatprep.subr.bf16.mxu0 %v1263
    %1389 = vmatpush1.bf16.msra.mxu0 %v1262
    %1390 = vmatprep.subr.bf16.mxu0 %v1267
    %1391 = vmatpush1.bf16.msra.mxu0 %v1266
    %1392 = vmatprep.subr.bf16.mxu0 %v1271
    %1393 = vmatpush1.bf16.msra.mxu0 %v1270
    %1394 = vmatprep.subr.bf16.mxu0 %v1275
    %1395 = vmatpush1.bf16.msra.mxu0 %v1274
    %1396 = vmatprep.subr.bf16.mxu0 %v1279
    %1397 = vmatpush1.bf16.msra.mxu0 %v1278
    %1398 = vmatprep.subr.bf16.mxu0 %v1283
    %1399 = vmatpush1.bf16.msra.mxu0 %v1282
    %1400 = vmatprep.subr.bf16.mxu0 %v1287
    %1401 = vmatpush1.bf16.msra.mxu0 %v1286
    %1402 = vmatprep.subr.bf16.mxu0 %v1291
    %1403 = vmatpush1.bf16.msra.mxu0 %v1290
    %1404 = vmatprep.subr.bf16.mxu0 %v1295
    %1405 = vmatpush1.bf16.msra.mxu0 %v1294
    %1406 = vmatprep.subr.bf16.mxu0 %v1299
    %1407 = vmatpush1.bf16.msra.mxu0 %v1298
    %1408 = vmatprep.subr.bf16.mxu0 %v1303
    %1409 = vmatpush1.bf16.msra.mxu0 %v1302
    %1410 = vmatprep.subr.bf16.mxu0 %v1307
    %1411 = vmatpush1.bf16.msra.mxu0 %v1306
    %1412 = vmatprep.subr.bf16.mxu0 %v1311
    %1413 = vmatpush1.bf16.msra.mxu0 %v1310
    %1414 = vmatprep.subr.bf16.mxu0 %v1315
    %1415 = vmatpush1.bf16.msra.mxu0 %v1314
    %1416 = vmatprep.subr.bf16.mxu0 %v1319
    %1417 = vmatpush1.bf16.msra.mxu0 %v1318
    %1418 = vmatprep.mubr.bf16.mxu0 %v979
    %1419 = vmatmul.mubr.bf16.gmra.mrb[0].mxu0 %v978
    %v1420 = vpop.f32.mrb[0].mxu0
    %v1421 = vadd.f32 %v1049, %v1420
    %v1422 = vpop.f32.mrb[0].mxu0
    %v1423 = vadd.f32 %v1053, %v1422
    %v1424 = vpop.f32.mrb[0].mxu0
    %v1425 = vpop.f32.mrb[0].mxu0
    %1426 = vdwg.mxu0
    %1427 = vmatprep.subr.bf16.mxu0 %v1261
    %1428 = vmatpush1.bf16.msra.mxu0 %v1260
    %1429 = vmatprep.subr.bf16.mxu0 %v1265
    %1430 = vmatpush1.bf16.msra.mxu0 %v1264
    %1431 = vmatprep.subr.bf16.mxu0 %v1269
    %1432 = vmatpush1.bf16.msra.mxu0 %v1268
    %1433 = vmatprep.subr.bf16.mxu0 %v1273
    %1434 = vmatpush1.bf16.msra.mxu0 %v1272
    %1435 = vmatprep.subr.bf16.mxu0 %v1277
    %1436 = vmatpush1.bf16.msra.mxu0 %v1276
    %1437 = vmatprep.subr.bf16.mxu0 %v1281
    %1438 = vmatpush1.bf16.msra.mxu0 %v1280
    %1439 = vmatprep.subr.bf16.mxu0 %v1285
    %1440 = vmatpush1.bf16.msra.mxu0 %v1284
    %1441 = vmatprep.subr.bf16.mxu0 %v1289
    %1442 = vmatpush1.bf16.msra.mxu0 %v1288
    %1443 = vmatprep.subr.bf16.mxu0 %v1293
    %1444 = vmatpush1.bf16.msra.mxu0 %v1292
    %1445 = vmatprep.subr.bf16.mxu0 %v1297
    %1446 = vmatpush1.bf16.msra.mxu0 %v1296
    %1447 = vmatprep.subr.bf16.mxu0 %v1301
    %1448 = vmatpush1.bf16.msra.mxu0 %v1300
    %1449 = vmatprep.subr.bf16.mxu0 %v1305
    %1450 = vmatpush1.bf16.msra.mxu0 %v1304
    %1451 = vmatprep.subr.bf16.mxu0 %v1309
    %1452 = vmatpush1.bf16.msra.mxu0 %v1308
    %1453 = vmatprep.subr.bf16.mxu0 %v1313
    %1454 = vmatpush1.bf16.msra.mxu0 %v1312
    %1455 = vmatprep.subr.bf16.mxu0 %v1317
    %1456 = vmatpush1.bf16.msra.mxu0 %v1316
    %1457 = vmatprep.subr.bf16.mxu0 %v1321
    %1458 = vmatpush1.bf16.msra.mxu0 %v1320
    %1459 = vmatprep.mubr.bf16.mxu0 %v979
    %1460 = vmatmul.mubr.bf16.gmra.mrb[0].mxu0 %v978
    %v1461 = vpop.f32.mrb[0].mxu0
    %v1462 = vadd.f32 %v1057, %v1461
    %v1463 = vpop.f32.mrb[0].mxu0
    %v1464 = vadd.f32 %v1061, %v1463
    %v1465 = vpop.f32.mrb[0].mxu0
    %v1466 = vpop.f32.mrb[0].mxu0
    %1467 = vdwg.mxu0
    %v1468 = vxor.u32 %v1421, 2147483648
    %v1469 = vmul.f32 %v1468, 1.442695
    %v1470 = vpow.pop %v1469
    %v1471 = vadd.f32 %v1470, 1.0
    %v1472 = vrcp.pop %v1471
    %v1473 = vmul.f32 1.0, %v1472
    %v1474 = vxor.u32 %v1423, 2147483648
    %v1475 = vmul.f32 %v1474, 1.442695
    %v1476 = vpow.pop %v1475
    %v1477 = vadd.f32 %v1476, 1.0
    %v1478 = vrcp.pop %v1477
    %v1479 = vmul.f32 1.0, %v1478
    %v1480 = vtanh.pop %v1462
    %v1481 = vxor.u32 %v1464, 2147483648
    %v1482 = vmul.f32 %v1481, 1.442695
    %v1483 = vpow.pop %v1482
    %v1484 = vadd.f32 %v1483, 1.0
    %v1485 = vrcp.pop %v1484
    %v1486 = vmul.f32 1.0, %v1485
    %v1487 = vmul.f32 %v1479, 0.0
    %v1488 = vmul.f32 %v1473, %v1480
    %v1489 = vadd.f32 %v1487, %v1488
    %v1490 = vtanh.pop %v1489
    %v1491 = vmul.f32 %v1486, %v1490
    %v1492 = vld [vmem:[#allocation2 + $0x20] sm:$0xff]
    %v1493 = vld [vmem:[#allocation2 + $0x28] sm:$0xff]
    %v1494 = vld [vmem:[#allocation2 + $0x30] sm:$0xff]
    %v1495 = vld [vmem:[#allocation2 + $0x38] sm:$0xff]
    %1496 = vmatprep.subr.bf16.mxu0 %v805
    %1497 = vmatpush1.bf16.msra.mxu0 %v804
    %1498 = vmatprep.subr.bf16.mxu0 %v809
    %1499 = vmatpush1.bf16.msra.mxu0 %v808
    %1500 = vmatprep.subr.bf16.mxu0 %v813
    %1501 = vmatpush1.bf16.msra.mxu0 %v812
    %1502 = vmatprep.subr.bf16.mxu0 %v817
    %1503 = vmatpush1.bf16.msra.mxu0 %v816
    %1504 = vmatprep.subr.bf16.mxu0 %v821
    %1505 = vmatpush1.bf16.msra.mxu0 %v820
    %1506 = vmatprep.subr.bf16.mxu0 %v825
    %1507 = vmatpush1.bf16.msra.mxu0 %v824
    %1508 = vmatprep.subr.bf16.mxu0 %v829
    %1509 = vmatpush1.bf16.msra.mxu0 %v828
    %1510 = vmatprep.subr.bf16.mxu0 %v833
    %1511 = vmatpush1.bf16.msra.mxu0 %v832
    %1512 = vmatprep.subr.bf16.mxu0 0
    %1513 = vmatpush1.bf16.msra.mxu0 0
    %1514 = vmatprep.subr.bf16.mxu0 0
    %1515 = vmatpush1.bf16.msra.mxu0 0
    %1516 = vmatprep.subr.bf16.mxu0 0
    %1517 = vmatpush1.bf16.msra.mxu0 0
    %1518 = vmatprep.subr.bf16.mxu0 0
    %1519 = vmatpush1.bf16.msra.mxu0 0
    %1520 = vmatprep.subr.bf16.mxu0 0
    %1521 = vmatpush1.bf16.msra.mxu0 0
    %1522 = vmatprep.subr.bf16.mxu0 0
    %1523 = vmatpush1.bf16.msra.mxu0 0
    %1524 = vmatprep.subr.bf16.mxu0 0
    %1525 = vmatpush1.bf16.msra.mxu0 0
    %1526 = vmatprep.subr.bf16.mxu0 0
    %1527 = vmatpush1.bf16.msra.mxu0 0
    %1528 = vmatprep.mubr.bf16.mxu0 0
    %1529 = vmatmul.mubr.bf16.gmra.mrb[0].mxu0 %v978
    %v1530 = vpop.f32.mrb[0].mxu0
    %v1531 = vadd.f32 0.0, %v1530
    %v1532 = vpop.f32.mrb[0].mxu0
    %v1533 = vadd.f32 0.0, %v1532
    %v1534 = vpop.f32.mrb[0].mxu0
    %v1535 = vpop.f32.mrb[0].mxu0
    %1536 = vdwg.mxu0
    %1537 = vmatprep.subr.bf16.mxu0 %v807
    %1538 = vmatpush1.bf16.msra.mxu0 %v806
    %1539 = vmatprep.subr.bf16.mxu0 %v811
    %1540 = vmatpush1.bf16.msra.mxu0 %v810
    %1541 = vmatprep.subr.bf16.mxu0 %v815
    %1542 = vmatpush1.bf16.msra.mxu0 %v814
    %1543 = vmatprep.subr.bf16.mxu0 %v819
    %1544 = vmatpush1.bf16.msra.mxu0 %v818
    %1545 = vmatprep.subr.bf16.mxu0 %v823
    %1546 = vmatpush1.bf16.msra.mxu0 %v822
    %1547 = vmatprep.subr.bf16.mxu0 %v827
    %1548 = vmatpush1.bf16.msra.mxu0 %v826
    %1549 = vmatprep.subr.bf16.mxu0 %v831
    %1550 = vmatpush1.bf16.msra.mxu0 %v830
    %1551 = vmatprep.subr.bf16.mxu0 %v835
    %1552 = vmatpush1.bf16.msra.mxu0 %v834
    %1553 = vmatprep.subr.bf16.mxu0 0
    %1554 = vmatpush1.bf16.msra.mxu0 0
    %1555 = vmatprep.subr.bf16.mxu0 0
    %1556 = vmatpush1.bf16.msra.mxu0 0
    %1557 = vmatprep.subr.bf16.mxu0 0
    %1558 = vmatpush1.bf16.msra.mxu0 0
    %1559 = vmatprep.subr.bf16.mxu0 0
    %1560 = vmatpush1.bf16.msra.mxu0 0
    %1561 = vmatprep.subr.bf16.mxu0 0
    %1562 = vmatpush1.bf16.msra.mxu0 0
    %1563 = vmatprep.subr.bf16.mxu0 0
    %1564 = vmatpush1.bf16.msra.mxu0 0
    %1565 = vmatprep.subr.bf16.mxu0 0
    %1566 = vmatpush1.bf16.msra.mxu0 0
    %1567 = vmatprep.subr.bf16.mxu0 0
    %1568 = vmatpush1.bf16.msra.mxu0 0
    %1569 = vmatprep.mubr.bf16.mxu0 0
    %1570 = vmatmul.mubr.bf16.gmra.mrb[0].mxu0 %v978
    %v1571 = vpop.f32.mrb[0].mxu0
    %v1572 = vadd.f32 0.0, %v1571
    %v1573 = vpop.f32.mrb[0].mxu0
    %v1574 = vadd.f32 0.0, %v1573
    %v1575 = vpop.f32.mrb[0].mxu0
    %v1576 = vpop.f32.mrb[0].mxu0
    %1577 = vdwg.mxu0
    %v1578 = vadd.f32 %v1492, %v1531
    %v1579 = vadd.f32 %v1493, %v1533
    %v1580 = vadd.f32 %v1494, %v1572
    %v1581 = vadd.f32 %v1495, %v1574
    %v1582 = vxor.u32 %v1578, 2147483648
    %v1583 = vmul.f32 %v1582, 1.442695
    %v1584 = vpow.pop %v1583
    %v1585 = vadd.f32 %v1584, 1.0
    %v1586 = vrcp.pop %v1585
    %v1587 = vmul.f32 1.0, %v1586
    %v1588 = vxor.u32 %v1579, 2147483648
    %v1589 = vmul.f32 %v1588, 1.442695
    %v1590 = vpow.pop %v1589
    %v1591 = vadd.f32 %v1590, 1.0
    %v1592 = vrcp.pop %v1591
    %v1593 = vmul.f32 1.0, %v1592
    %v1594 = vtanh.pop %v1580
    %v1595 = vxor.u32 %v1581, 2147483648
    %v1596 = vmul.f32 %v1595, 1.442695
    %v1597 = vpow.pop %v1596
    %v1598 = vadd.f32 %v1597, 1.0
    %v1599 = vrcp.pop %v1598
    %v1600 = vmul.f32 1.0, %v1599
    %v1601 = vmul.f32 %v1593, %v975
    %v1602 = vmul.f32 %v1587, %v1594
    %v1603 = vadd.f32 %v1601, %v1602
    %v1604 = vtanh.pop %v1603
    %v1605 = vmul.f32 %v1600, %v1604
    %v1606 = vpack.c.bf16 %v1491, %v1491
    %v1607 = vld [vmem:[%s21] sm:$0xff]
    %v1608 = vld [vmem:[%s21 + $0x8] sm:$0xff]
    %v1609 = vld [vmem:[%s21 + $0x10] sm:$0xff]
    %v1610 = vld [vmem:[%s21 + $0x18] sm:$0xff]
    %v1611 = vld [vmem:[%s21 + $0x20] sm:$0xff]
    %v1612 = vld [vmem:[%s21 + $0x28] sm:$0xff]
    %v1613 = vld [vmem:[%s21 + $0x30] sm:$0xff]
    %v1614 = vld [vmem:[%s21 + $0x38] sm:$0xff]
    %v1615 = vld [vmem:[%s21 + $0x40] sm:$0xff]
    %v1616 = vld [vmem:[%s21 + $0x48] sm:$0xff]
    %v1617 = vld [vmem:[%s21 + $0x50] sm:$0xff]
    %v1618 = vld [vmem:[%s21 + $0x58] sm:$0xff]
    %v1619 = vld [vmem:[%s21 + $0x60] sm:$0xff]
    %v1620 = vld [vmem:[%s21 + $0x68] sm:$0xff]
    %v1621 = vld [vmem:[%s21 + $0x70] sm:$0xff]
    %v1622 = vld [vmem:[%s21 + $0x78] sm:$0xff]
    %v1623 = vld [vmem:[%s21 + $0x80] sm:$0xff]
    %v1624 = vld [vmem:[%s21 + $0x88] sm:$0xff]
    %v1625 = vld [vmem:[%s21 + $0x90] sm:$0xff]
    %v1626 = vld [vmem:[%s21 + $0x98] sm:$0xff]
    %v1627 = vld [vmem:[%s21 + $0xa0] sm:$0xff]
    %v1628 = vld [vmem:[%s21 + $0xa8] sm:$0xff]
    %v1629 = vld [vmem:[%s21 + $0xb0] sm:$0xff]
    %v1630 = vld [vmem:[%s21 + $0xb8] sm:$0xff]
    %v1631 = vld [vmem:[%s21 + $0xc0] sm:$0xff]
    %v1632 = vld [vmem:[%s21 + $0xc8] sm:$0xff]
    %v1633 = vld [vmem:[%s21 + $0xd0] sm:$0xff]
    %v1634 = vld [vmem:[%s21 + $0xd8] sm:$0xff]
    %v1635 = vld [vmem:[%s21 + $0xe0] sm:$0xff]
    %v1636 = vld [vmem:[%s21 + $0xe8] sm:$0xff]
    %v1637 = vld [vmem:[%s21 + $0xf0] sm:$0xff]
    %v1638 = vld [vmem:[%s21 + $0xf8] sm:$0xff]
    %v1639 = vld [vmem:[%s21 + $0x100] sm:$0xff]
    %v1640 = vld [vmem:[%s21 + $0x108] sm:$0xff]
    %v1641 = vld [vmem:[%s21 + $0x110] sm:$0xff]
    %v1642 = vld [vmem:[%s21 + $0x118] sm:$0xff]
    %v1643 = vld [vmem:[%s21 + $0x120] sm:$0xff]
    %v1644 = vld [vmem:[%s21 + $0x128] sm:$0xff]
    %v1645 = vld [vmem:[%s21 + $0x130] sm:$0xff]
    %v1646 = vld [vmem:[%s21 + $0x138] sm:$0xff]
    %v1647 = vld [vmem:[%s21 + $0x140] sm:$0xff]
    %v1648 = vld [vmem:[%s21 + $0x148] sm:$0xff]
    %v1649 = vld [vmem:[%s21 + $0x150] sm:$0xff]
    %v1650 = vld [vmem:[%s21 + $0x158] sm:$0xff]
    %v1651 = vld [vmem:[%s21 + $0x160] sm:$0xff]
    %v1652 = vld [vmem:[%s21 + $0x168] sm:$0xff]
    %v1653 = vld [vmem:[%s21 + $0x170] sm:$0xff]
    %v1654 = vld [vmem:[%s21 + $0x178] sm:$0xff]
    %v1655 = vld [vmem:[%s21 + $0x180] sm:$0xff]
    %v1656 = vld [vmem:[%s21 + $0x188] sm:$0xff]
    %v1657 = vld [vmem:[%s21 + $0x190] sm:$0xff]
    %v1658 = vld [vmem:[%s21 + $0x198] sm:$0xff]
    %v1659 = vld [vmem:[%s21 + $0x1a0] sm:$0xff]
    %v1660 = vld [vmem:[%s21 + $0x1a8] sm:$0xff]
    %v1661 = vld [vmem:[%s21 + $0x1b0] sm:$0xff]
    %v1662 = vld [vmem:[%s21 + $0x1b8] sm:$0xff]
    %v1663 = vld [vmem:[%s21 + $0x1c0] sm:$0xff]
    %v1664 = vld [vmem:[%s21 + $0x1c8] sm:$0xff]
    %v1665 = vld [vmem:[%s21 + $0x1d0] sm:$0xff]
    %v1666 = vld [vmem:[%s21 + $0x1d8] sm:$0xff]
    %v1667 = vld [vmem:[%s21 + $0x1e0] sm:$0xff]
    %v1668 = vld [vmem:[%s21 + $0x1e8] sm:$0xff]
    %v1669 = vld [vmem:[%s21 + $0x1f0] sm:$0xff]
    %v1670 = vld [vmem:[%s21 + $0x1f8] sm:$0xff]
    %v1671 = vld [vmem:[%s23] sm:$0xf]
    %v1673 = vlaneseq
    %v1674 = vshrl.u32 %v1673, 7
    %v1675 = vsub.s32 0, %v1674
    %v1676 = vrot.slane %v1671, %v1675
    %v1677 = vlaneseq
    %v1678 = vshrl.u32 %v1677, 7
    %v1679 = vsub.s32 1, %v1678
    %v1680 = vrot.slane %v1671, %v1679
    %v1681 = vlaneseq
    %v1682 = vshrl.u32 %v1681, 7
    %v1683 = vsub.s32 2, %v1682
    %v1684 = vrot.slane %v1671, %v1683
    %v1685 = vlaneseq
    %v1686 = vshrl.u32 %v1685, 7
    %v1687 = vsub.s32 3, %v1686
    %v1688 = vrot.slane %v1671, %v1687
    %v1757 = vunpack.c.l.b16 %v1607
    %v1758 = vunpack.c.h.b16 %v1607
    %v1759 = vunpack.c.l.b16 %v1608
    %v1760 = vunpack.c.h.b16 %v1608
    %v1761 = vunpack.c.l.b16 %v1609
    %v1762 = vunpack.c.h.b16 %v1609
    %v1763 = vunpack.c.l.b16 %v1610
    %v1764 = vunpack.c.h.b16 %v1610
    %v1765 = vunpack.c.l.b16 %v1611
    %v1766 = vunpack.c.h.b16 %v1611
    %v1767 = vunpack.c.l.b16 %v1612
    %v1768 = vunpack.c.h.b16 %v1612
    %v1769 = vunpack.c.l.b16 %v1613
    %v1770 = vunpack.c.h.b16 %v1613
    %v1771 = vunpack.c.l.b16 %v1614
    %v1772 = vunpack.c.h.b16 %v1614
    %v1773 = vunpack.c.l.b16 %v1615
    %v1774 = vunpack.c.h.b16 %v1615
    %v1775 = vunpack.c.l.b16 %v1616
    %v1776 = vunpack.c.h.b16 %v1616
    %v1777 = vunpack.c.l.b16 %v1617
    %v1778 = vunpack.c.h.b16 %v1617
    %v1779 = vunpack.c.l.b16 %v1618
    %v1780 = vunpack.c.h.b16 %v1618
    %v1781 = vunpack.c.l.b16 %v1619
    %v1782 = vunpack.c.h.b16 %v1619
    %v1783 = vunpack.c.l.b16 %v1620
    %v1784 = vunpack.c.h.b16 %v1620
    %v1785 = vunpack.c.l.b16 %v1621
    %v1786 = vunpack.c.h.b16 %v1621
    %v1787 = vunpack.c.l.b16 %v1622
    %v1788 = vunpack.c.h.b16 %v1622
    %v1789 = vunpack.c.l.b16 %v1623
    %v1790 = vunpack.c.h.b16 %v1623
    %v1791 = vunpack.c.l.b16 %v1624
    %v1792 = vunpack.c.h.b16 %v1624
    %v1793 = vunpack.c.l.b16 %v1625
    %v1794 = vunpack.c.h.b16 %v1625
    %v1795 = vunpack.c.l.b16 %v1626
    %v1796 = vunpack.c.h.b16 %v1626
    %v1797 = vunpack.c.l.b16 %v1627
    %v1798 = vunpack.c.h.b16 %v1627
    %v1799 = vunpack.c.l.b16 %v1628
    %v1800 = vunpack.c.h.b16 %v1628
    %v1801 = vunpack.c.l.b16 %v1629
    %v1802 = vunpack.c.h.b16 %v1629
    %v1803 = vunpack.c.l.b16 %v1630
    %v1804 = vunpack.c.h.b16 %v1630
    %v1805 = vunpack.c.l.b16 %v1631
    %v1806 = vunpack.c.h.b16 %v1631
    %v1807 = vunpack.c.l.b16 %v1632
    %v1808 = vunpack.c.h.b16 %v1632
    %v1809 = vunpack.c.l.b16 %v1633
    %v1810 = vunpack.c.h.b16 %v1633
    %v1811 = vunpack.c.l.b16 %v1634
    %v1812 = vunpack.c.h.b16 %v1634
    %v1813 = vunpack.c.l.b16 %v1635
    %v1814 = vunpack.c.h.b16 %v1635
    %v1815 = vunpack.c.l.b16 %v1636
    %v1816 = vunpack.c.h.b16 %v1636
    %v1817 = vunpack.c.l.b16 %v1637
    %v1818 = vunpack.c.h.b16 %v1637
    %v1819 = vunpack.c.l.b16 %v1638
    %v1820 = vunpack.c.h.b16 %v1638
    %v1821 = vunpack.c.l.b16 %v1639
    %v1822 = vunpack.c.h.b16 %v1639
    %v1823 = vunpack.c.l.b16 %v1640
    %v1824 = vunpack.c.h.b16 %v1640
    %v1825 = vunpack.c.l.b16 %v1641
    %v1826 = vunpack.c.h.b16 %v1641
    %v1827 = vunpack.c.l.b16 %v1642
    %v1828 = vunpack.c.h.b16 %v1642
    %v1829 = vunpack.c.l.b16 %v1643
    %v1830 = vunpack.c.h.b16 %v1643
    %v1831 = vunpack.c.l.b16 %v1644
    %v1832 = vunpack.c.h.b16 %v1644
    %v1833 = vunpack.c.l.b16 %v1645
    %v1834 = vunpack.c.h.b16 %v1645
    %v1835 = vunpack.c.l.b16 %v1646
    %v1836 = vunpack.c.h.b16 %v1646
    %v1837 = vunpack.c.l.b16 %v1647
    %v1838 = vunpack.c.h.b16 %v1647
    %v1839 = vunpack.c.l.b16 %v1648
    %v1840 = vunpack.c.h.b16 %v1648
    %v1841 = vunpack.c.l.b16 %v1649
    %v1842 = vunpack.c.h.b16 %v1649
    %v1843 = vunpack.c.l.b16 %v1650
    %v1844 = vunpack.c.h.b16 %v1650
    %v1845 = vunpack.c.l.b16 %v1651
    %v1846 = vunpack.c.h.b16 %v1651
    %v1847 = vunpack.c.l.b16 %v1652
    %v1848 = vunpack.c.h.b16 %v1652
    %v1849 = vunpack.c.l.b16 %v1653
    %v1850 = vunpack.c.h.b16 %v1653
    %v1851 = vunpack.c.l.b16 %v1654
    %v1852 = vunpack.c.h.b16 %v1654
    %v1853 = vunpack.c.l.b16 %v1655
    %v1854 = vunpack.c.h.b16 %v1655
    %v1855 = vunpack.c.l.b16 %v1656
    %v1856 = vunpack.c.h.b16 %v1656
    %v1857 = vunpack.c.l.b16 %v1657
    %v1858 = vunpack.c.h.b16 %v1657
    %v1859 = vunpack.c.l.b16 %v1658
    %v1860 = vunpack.c.h.b16 %v1658
    %v1861 = vunpack.c.l.b16 %v1659
    %v1862 = vunpack.c.h.b16 %v1659
    %v1863 = vunpack.c.l.b16 %v1660
    %v1864 = vunpack.c.h.b16 %v1660
    %v1865 = vunpack.c.l.b16 %v1661
    %v1866 = vunpack.c.h.b16 %v1661
    %v1867 = vunpack.c.l.b16 %v1662
    %v1868 = vunpack.c.h.b16 %v1662
    %v1869 = vunpack.c.l.b16 %v1663
    %v1870 = vunpack.c.h.b16 %v1663
    %v1871 = vunpack.c.l.b16 %v1664
    %v1872 = vunpack.c.h.b16 %v1664
    %v1873 = vunpack.c.l.b16 %v1665
    %v1874 = vunpack.c.h.b16 %v1665
    %v1875 = vunpack.c.l.b16 %v1666
    %v1876 = vunpack.c.h.b16 %v1666
    %v1877 = vunpack.c.l.b16 %v1667
    %v1878 = vunpack.c.h.b16 %v1667
    %v1879 = vunpack.c.l.b16 %v1668
    %v1880 = vunpack.c.h.b16 %v1668
    %v1881 = vunpack.c.l.b16 %v1669
    %v1882 = vunpack.c.h.b16 %v1669
    %v1883 = vunpack.c.l.b16 %v1670
    %v1884 = vunpack.c.h.b16 %v1670
    %v1885 = vpack.c.b16 %v1761, %v1757
    %v1886 = vpack.c.b16 %v1762, %v1758
    %v1887 = vpack.c.b16 %v1763, %v1759
    %v1888 = vpack.c.b16 %v1764, %v1760
    %v1889 = vpack.c.b16 %v1769, %v1765
    %v1890 = vpack.c.b16 %v1770, %v1766
    %v1891 = vpack.c.b16 %v1771, %v1767
    %v1892 = vpack.c.b16 %v1772, %v1768
    %v1893 = vpack.c.b16 %v1777, %v1773
    %v1894 = vpack.c.b16 %v1778, %v1774
    %v1895 = vpack.c.b16 %v1779, %v1775
    %v1896 = vpack.c.b16 %v1780, %v1776
    %v1897 = vpack.c.b16 %v1785, %v1781
    %v1898 = vpack.c.b16 %v1786, %v1782
    %v1899 = vpack.c.b16 %v1787, %v1783
    %v1900 = vpack.c.b16 %v1788, %v1784
    %v1901 = vpack.c.b16 %v1793, %v1789
    %v1902 = vpack.c.b16 %v1794, %v1790
    %v1903 = vpack.c.b16 %v1795, %v1791
    %v1904 = vpack.c.b16 %v1796, %v1792
    %v1905 = vpack.c.b16 %v1801, %v1797
    %v1906 = vpack.c.b16 %v1802, %v1798
    %v1907 = vpack.c.b16 %v1803, %v1799
    %v1908 = vpack.c.b16 %v1804, %v1800
    %v1909 = vpack.c.b16 %v1809, %v1805
    %v1910 = vpack.c.b16 %v1810, %v1806
    %v1911 = vpack.c.b16 %v1811, %v1807
    %v1912 = vpack.c.b16 %v1812, %v1808
    %v1913 = vpack.c.b16 %v1817, %v1813
    %v1914 = vpack.c.b16 %v1818, %v1814
    %v1915 = vpack.c.b16 %v1819, %v1815
    %v1916 = vpack.c.b16 %v1820, %v1816
    %v1917 = vpack.c.b16 %v1825, %v1821
    %v1918 = vpack.c.b16 %v1826, %v1822
    %v1919 = vpack.c.b16 %v1827, %v1823
    %v1920 = vpack.c.b16 %v1828, %v1824
    %v1921 = vpack.c.b16 %v1833, %v1829
    %v1922 = vpack.c.b16 %v1834, %v1830
    %v1923 = vpack.c.b16 %v1835, %v1831
    %v1924 = vpack.c.b16 %v1836, %v1832
    %v1925 = vpack.c.b16 %v1841, %v1837
    %v1926 = vpack.c.b16 %v1842, %v1838
    %v1927 = vpack.c.b16 %v1843, %v1839
    %v1928 = vpack.c.b16 %v1844, %v1840
    %v1929 = vpack.c.b16 %v1849, %v1845
    %v1930 = vpack.c.b16 %v1850, %v1846
    %v1931 = vpack.c.b16 %v1851, %v1847
    %v1932 = vpack.c.b16 %v1852, %v1848
    %v1933 = vpack.c.b16 %v1857, %v1853
    %v1934 = vpack.c.b16 %v1858, %v1854
    %v1935 = vpack.c.b16 %v1859, %v1855
    %v1936 = vpack.c.b16 %v1860, %v1856
    %v1937 = vpack.c.b16 %v1865, %v1861
    %v1938 = vpack.c.b16 %v1866, %v1862
    %v1939 = vpack.c.b16 %v1867, %v1863
    %v1940 = vpack.c.b16 %v1868, %v1864
    %v1941 = vpack.c.b16 %v1873, %v1869
    %v1942 = vpack.c.b16 %v1874, %v1870
    %v1943 = vpack.c.b16 %v1875, %v1871
    %v1944 = vpack.c.b16 %v1876, %v1872
    %v1945 = vpack.c.b16 %v1881, %v1877
    %v1946 = vpack.c.b16 %v1882, %v1878
    %v1947 = vpack.c.b16 %v1883, %v1879
    %v1948 = vpack.c.b16 %v1884, %v1880
    %2013 = vmatprep.subr.bf16.mxu0 %v1886
    %2014 = vmatpush1.bf16.msra.mxu0 %v1885
    %2015 = vmatprep.subr.bf16.mxu0 %v1890
    %2016 = vmatpush1.bf16.msra.mxu0 %v1889
    %2017 = vmatprep.subr.bf16.mxu0 %v1894
    %2018 = vmatpush1.bf16.msra.mxu0 %v1893
    %2019 = vmatprep.subr.bf16.mxu0 %v1898
    %2020 = vmatpush1.bf16.msra.mxu0 %v1897
    %2021 = vmatprep.subr.bf16.mxu0 %v1902
    %2022 = vmatpush1.bf16.msra.mxu0 %v1901
    %2023 = vmatprep.subr.bf16.mxu0 %v1906
    %2024 = vmatpush1.bf16.msra.mxu0 %v1905
    %2025 = vmatprep.subr.bf16.mxu0 %v1910
    %2026 = vmatpush1.bf16.msra.mxu0 %v1909
    %2027 = vmatprep.subr.bf16.mxu0 %v1914
    %2028 = vmatpush1.bf16.msra.mxu0 %v1913
    %2029 = vmatprep.subr.bf16.mxu0 %v1918
    %2030 = vmatpush1.bf16.msra.mxu0 %v1917
    %2031 = vmatprep.subr.bf16.mxu0 %v1922
    %2032 = vmatpush1.bf16.msra.mxu0 %v1921
    %2033 = vmatprep.subr.bf16.mxu0 %v1926
    %2034 = vmatpush1.bf16.msra.mxu0 %v1925
    %2035 = vmatprep.subr.bf16.mxu0 %v1930
    %2036 = vmatpush1.bf16.msra.mxu0 %v1929
    %2037 = vmatprep.subr.bf16.mxu0 %v1934
    %2038 = vmatpush1.bf16.msra.mxu0 %v1933
    %2039 = vmatprep.subr.bf16.mxu0 %v1938
    %2040 = vmatpush1.bf16.msra.mxu0 %v1937
    %2041 = vmatprep.subr.bf16.mxu0 %v1942
    %2042 = vmatpush1.bf16.msra.mxu0 %v1941
    %2043 = vmatprep.subr.bf16.mxu0 %v1946
    %2044 = vmatpush1.bf16.msra.mxu0 %v1945
    %2045 = vmatprep.mubr.bf16.mxu0 %v979
    %2046 = vmatmul.mubr.bf16.gmra.mrb[0].mxu0 %v1606
    %v2047 = vpop.f32.mrb[0].mxu0
    %v2048 = vadd.f32 %v1676, %v2047
    %v2049 = vpop.f32.mrb[0].mxu0
    %v2050 = vadd.f32 %v1680, %v2049
    %v2051 = vpop.f32.mrb[0].mxu0
    %v2052 = vpop.f32.mrb[0].mxu0
    %2053 = vdwg.mxu0
    %2054 = vmatprep.subr.bf16.mxu0 %v1888
    %2055 = vmatpush1.bf16.msra.mxu0 %v1887
    %2056 = vmatprep.subr.bf16.mxu0 %v1892
    %2057 = vmatpush1.bf16.msra.mxu0 %v1891
    %2058 = vmatprep.subr.bf16.mxu0 %v1896
    %2059 = vmatpush1.bf16.msra.mxu0 %v1895
    %2060 = vmatprep.subr.bf16.mxu0 %v1900
    %2061 = vmatpush1.bf16.msra.mxu0 %v1899
    %2062 = vmatprep.subr.bf16.mxu0 %v1904
    %2063 = vmatpush1.bf16.msra.mxu0 %v1903
    %2064 = vmatprep.subr.bf16.mxu0 %v1908
    %2065 = vmatpush1.bf16.msra.mxu0 %v1907
    %2066 = vmatprep.subr.bf16.mxu0 %v1912
    %2067 = vmatpush1.bf16.msra.mxu0 %v1911
    %2068 = vmatprep.subr.bf16.mxu0 %v1916
    %2069 = vmatpush1.bf16.msra.mxu0 %v1915
    %2070 = vmatprep.subr.bf16.mxu0 %v1920
    %2071 = vmatpush1.bf16.msra.mxu0 %v1919
    %2072 = vmatprep.subr.bf16.mxu0 %v1924
    %2073 = vmatpush1.bf16.msra.mxu0 %v1923
    %2074 = vmatprep.subr.bf16.mxu0 %v1928
    %2075 = vmatpush1.bf16.msra.mxu0 %v1927
    %2076 = vmatprep.subr.bf16.mxu0 %v1932
    %2077 = vmatpush1.bf16.msra.mxu0 %v1931
    %2078 = vmatprep.subr.bf16.mxu0 %v1936
    %2079 = vmatpush1.bf16.msra.mxu0 %v1935
    %2080 = vmatprep.subr.bf16.mxu0 %v1940
    %2081 = vmatpush1.bf16.msra.mxu0 %v1939
    %2082 = vmatprep.subr.bf16.mxu0 %v1944
    %2083 = vmatpush1.bf16.msra.mxu0 %v1943
    %2084 = vmatprep.subr.bf16.mxu0 %v1948
    %2085 = vmatpush1.bf16.msra.mxu0 %v1947
    %2086 = vmatprep.mubr.bf16.mxu0 %v979
    %2087 = vmatmul.mubr.bf16.gmra.mrb[0].mxu0 %v1606
    %v2088 = vpop.f32.mrb[0].mxu0
    %v2089 = vadd.f32 %v1684, %v2088
    %v2090 = vpop.f32.mrb[0].mxu0
    %v2091 = vadd.f32 %v1688, %v2090
    %v2092 = vpop.f32.mrb[0].mxu0
    %v2093 = vpop.f32.mrb[0].mxu0
    %2094 = vdwg.mxu0
    %v2095 = vxor.u32 %v2048, 2147483648
    %v2096 = vmul.f32 %v2095, 1.442695
    %v2097 = vpow.pop %v2096
    %v2098 = vadd.f32 %v2097, 1.0
    %v2099 = vrcp.pop %v2098
    %v2100 = vmul.f32 1.0, %v2099
    %v2101 = vxor.u32 %v2050, 2147483648
    %v2102 = vmul.f32 %v2101, 1.442695
    %v2103 = vpow.pop %v2102
    %v2104 = vadd.f32 %v2103, 1.0
    %v2105 = vrcp.pop %v2104
    %v2106 = vmul.f32 1.0, %v2105
    %v2107 = vtanh.pop %v2089
    %v2108 = vxor.u32 %v2091, 2147483648
    %v2109 = vmul.f32 %v2108, 1.442695
    %v2110 = vpow.pop %v2109
    %v2111 = vadd.f32 %v2110, 1.0
    %v2112 = vrcp.pop %v2111
    %v2113 = vmul.f32 1.0, %v2112
    %v2114 = vmul.f32 %v2106, 0.0
    %v2115 = vmul.f32 %v2100, %v2107
    %v2116 = vadd.f32 %v2114, %v2115
    %v2117 = vtanh.pop %v2116
    %v2118 = vmul.f32 %v2113, %v2117
    %v2119 = vpack.c.bf16 %v1605, %v1605
    %2120 = vmatprep.subr.bf16.mxu0 %v1259
    %2121 = vmatpush1.bf16.msra.mxu0 %v1258
    %2122 = vmatprep.subr.bf16.mxu0 %v1263
    %2123 = vmatpush1.bf16.msra.mxu0 %v1262
    %2124 = vmatprep.subr.bf16.mxu0 %v1267
    %2125 = vmatpush1.bf16.msra.mxu0 %v1266
    %2126 = vmatprep.subr.bf16.mxu0 %v1271
    %2127 = vmatpush1.bf16.msra.mxu0 %v1270
    %2128 = vmatprep.subr.bf16.mxu0 %v1275
    %2129 = vmatpush1.bf16.msra.mxu0 %v1274
    %2130 = vmatprep.subr.bf16.mxu0 %v1279
    %2131 = vmatpush1.bf16.msra.mxu0 %v1278
    %2132 = vmatprep.subr.bf16.mxu0 %v1283
    %2133 = vmatpush1.bf16.msra.mxu0 %v1282
    %2134 = vmatprep.subr.bf16.mxu0 %v1287
    %2135 = vmatpush1.bf16.msra.mxu0 %v1286
    %2136 = vmatprep.subr.bf16.mxu0 %v1291
    %2137 = vmatpush1.bf16.msra.mxu0 %v1290
    %2138 = vmatprep.subr.bf16.mxu0 %v1295
    %2139 = vmatpush1.bf16.msra.mxu0 %v1294
    %2140 = vmatprep.subr.bf16.mxu0 %v1299
    %2141 = vmatpush1.bf16.msra.mxu0 %v1298
    %2142 = vmatprep.subr.bf16.mxu0 %v1303
    %2143 = vmatpush1.bf16.msra.mxu0 %v1302
    %2144 = vmatprep.subr.bf16.mxu0 %v1307
    %2145 = vmatpush1.bf16.msra.mxu0 %v1306
    %2146 = vmatprep.subr.bf16.mxu0 %v1311
    %2147 = vmatpush1.bf16.msra.mxu0 %v1310
    %2148 = vmatprep.subr.bf16.mxu0 %v1315
    %2149 = vmatpush1.bf16.msra.mxu0 %v1314
    %2150 = vmatprep.subr.bf16.mxu0 %v1319
    %2151 = vmatpush1.bf16.msra.mxu0 %v1318
    %2152 = vmatprep.mubr.bf16.mxu0 %v1606
    %2153 = vmatmul.mubr.bf16.gmra.mrb[0].mxu0 %v2119
    %v2154 = vpop.f32.mrb[0].mxu0
    %v2155 = vadd.f32 %v1049, %v2154
    %v2156 = vpop.f32.mrb[0].mxu0
    %v2157 = vadd.f32 %v1053, %v2156
    %v2158 = vpop.f32.mrb[0].mxu0
    %v2159 = vpop.f32.mrb[0].mxu0
    %2160 = vdwg.mxu0
    %2161 = vmatprep.subr.bf16.mxu0 %v1261
    %2162 = vmatpush1.bf16.msra.mxu0 %v1260
    %2163 = vmatprep.subr.bf16.mxu0 %v1265
    %2164 = vmatpush1.bf16.msra.mxu0 %v1264
    %2165 = vmatprep.subr.bf16.mxu0 %v1269
    %2166 = vmatpush1.bf16.msra.mxu0 %v1268
    %2167 = vmatprep.subr.bf16.mxu0 %v1273
    %2168 = vmatpush1.bf16.msra.mxu0 %v1272
    %2169 = vmatprep.subr.bf16.mxu0 %v1277
    %2170 = vmatpush1.bf16.msra.mxu0 %v1276
    %2171 = vmatprep.subr.bf16.mxu0 %v1281
    %2172 = vmatpush1.bf16.msra.mxu0 %v1280
    %2173 = vmatprep.subr.bf16.mxu0 %v1285
    %2174 = vmatpush1.bf16.msra.mxu0 %v1284
    %2175 = vmatprep.subr.bf16.mxu0 %v1289
    %2176 = vmatpush1.bf16.msra.mxu0 %v1288
    %2177 = vmatprep.subr.bf16.mxu0 %v1293
    %2178 = vmatpush1.bf16.msra.mxu0 %v1292
    %2179 = vmatprep.subr.bf16.mxu0 %v1297
    %2180 = vmatpush1.bf16.msra.mxu0 %v1296
    %2181 = vmatprep.subr.bf16.mxu0 %v1301
    %2182 = vmatpush1.bf16.msra.mxu0 %v1300
    %2183 = vmatprep.subr.bf16.mxu0 %v1305
    %2184 = vmatpush1.bf16.msra.mxu0 %v1304
    %2185 = vmatprep.subr.bf16.mxu0 %v1309
    %2186 = vmatpush1.bf16.msra.mxu0 %v1308
    %2187 = vmatprep.subr.bf16.mxu0 %v1313
    %2188 = vmatpush1.bf16.msra.mxu0 %v1312
    %2189 = vmatprep.subr.bf16.mxu0 %v1317
    %2190 = vmatpush1.bf16.msra.mxu0 %v1316
    %2191 = vmatprep.subr.bf16.mxu0 %v1321
    %2192 = vmatpush1.bf16.msra.mxu0 %v1320
    %2193 = vmatprep.mubr.bf16.mxu0 %v1606
    %2194 = vmatmul.mubr.bf16.gmra.mrb[0].mxu0 %v2119
    %v2195 = vpop.f32.mrb[0].mxu0
    %v2196 = vadd.f32 %v1057, %v2195
    %v2197 = vpop.f32.mrb[0].mxu0
    %v2198 = vadd.f32 %v1061, %v2197
    %v2199 = vpop.f32.mrb[0].mxu0
    %v2200 = vpop.f32.mrb[0].mxu0
    %2201 = vdwg.mxu0
    %v2202 = vxor.u32 %v2155, 2147483648
    %v2203 = vmul.f32 %v2202, 1.442695
    %v2204 = vpow.pop %v2203
    %v2205 = vadd.f32 %v2204, 1.0
    %v2206 = vrcp.pop %v2205
    %v2207 = vmul.f32 1.0, %v2206
    %v2208 = vxor.u32 %v2157, 2147483648
    %v2209 = vmul.f32 %v2208, 1.442695
    %v2210 = vpow.pop %v2209
    %v2211 = vadd.f32 %v2210, 1.0
    %v2212 = vrcp.pop %v2211
    %v2213 = vmul.f32 1.0, %v2212
    %v2214 = vtanh.pop %v2196
    %v2215 = vxor.u32 %v2198, 2147483648
    %v2216 = vmul.f32 %v2215, 1.442695
    %v2217 = vpow.pop %v2216
    %v2218 = vadd.f32 %v2217, 1.0
    %v2219 = vrcp.pop %v2218
    %v2220 = vmul.f32 1.0, %v2219
    %v2221 = vmul.f32 %v2213, %v1489
    %v2222 = vmul.f32 %v2207, %v2214
    %v2223 = vadd.f32 %v2221, %v2222
    %v2224 = vtanh.pop %v2223
    %v2225 = vmul.f32 %v2220, %v2224
    %v2226 = vld [vmem:[#allocation2 + $0x40] sm:$0xff]
    %v2227 = vld [vmem:[#allocation2 + $0x48] sm:$0xff]
    %v2228 = vld [vmem:[#allocation2 + $0x50] sm:$0xff]
    %v2229 = vld [vmem:[#allocation2 + $0x58] sm:$0xff]
    %2230 = vmatprep.subr.bf16.mxu0 %v805
    %2231 = vmatpush1.bf16.msra.mxu0 %v804
    %2232 = vmatprep.subr.bf16.mxu0 %v809
    %2233 = vmatpush1.bf16.msra.mxu0 %v808
    %2234 = vmatprep.subr.bf16.mxu0 %v813
    %2235 = vmatpush1.bf16.msra.mxu0 %v812
    %2236 = vmatprep.subr.bf16.mxu0 %v817
    %2237 = vmatpush1.bf16.msra.mxu0 %v816
    %2238 = vmatprep.subr.bf16.mxu0 %v821
    %2239 = vmatpush1.bf16.msra.mxu0 %v820
    %2240 = vmatprep.subr.bf16.mxu0 %v825
    %2241 = vmatpush1.bf16.msra.mxu0 %v824
    %2242 = vmatprep.subr.bf16.mxu0 %v829
    %2243 = vmatpush1.bf16.msra.mxu0 %v828
    %2244 = vmatprep.subr.bf16.mxu0 %v833
    %2245 = vmatpush1.bf16.msra.mxu0 %v832
    %2246 = vmatprep.subr.bf16.mxu0 0
    %2247 = vmatpush1.bf16.msra.mxu0 0
    %2248 = vmatprep.subr.bf16.mxu0 0
    %2249 = vmatpush1.bf16.msra.mxu0 0
    %2250 = vmatprep.subr.bf16.mxu0 0
    %2251 = vmatpush1.bf16.msra.mxu0 0
    %2252 = vmatprep.subr.bf16.mxu0 0
    %2253 = vmatpush1.bf16.msra.mxu0 0
    %2254 = vmatprep.subr.bf16.mxu0 0
    %2255 = vmatpush1.bf16.msra.mxu0 0
    %2256 = vmatprep.subr.bf16.mxu0 0
    %2257 = vmatpush1.bf16.msra.mxu0 0
    %2258 = vmatprep.subr.bf16.mxu0 0
    %2259 = vmatpush1.bf16.msra.mxu0 0
    %2260 = vmatprep.subr.bf16.mxu0 0
    %2261 = vmatpush1.bf16.msra.mxu0 0
    %2262 = vmatprep.mubr.bf16.mxu0 0
    %2263 = vmatmul.mubr.bf16.gmra.mrb[0].mxu0 %v2119
    %v2264 = vpop.f32.mrb[0].mxu0
    %v2265 = vadd.f32 0.0, %v2264
    %v2266 = vpop.f32.mrb[0].mxu0
    %v2267 = vadd.f32 0.0, %v2266
    %v2268 = vpop.f32.mrb[0].mxu0
    %v2269 = vpop.f32.mrb[0].mxu0
    %2270 = vdwg.mxu0
    %2271 = vmatprep.subr.bf16.mxu0 %v807
    %2272 = vmatpush1.bf16.msra.mxu0 %v806
    %2273 = vmatprep.subr.bf16.mxu0 %v811
    %2274 = vmatpush1.bf16.msra.mxu0 %v810
    %2275 = vmatprep.subr.bf16.mxu0 %v815
    %2276 = vmatpush1.bf16.msra.mxu0 %v814
    %2277 = vmatprep.subr.bf16.mxu0 %v819
    %2278 = vmatpush1.bf16.msra.mxu0 %v818
    %2279 = vmatprep.subr.bf16.mxu0 %v823
    %2280 = vmatpush1.bf16.msra.mxu0 %v822
    %2281 = vmatprep.subr.bf16.mxu0 %v827
    %2282 = vmatpush1.bf16.msra.mxu0 %v826
    %2283 = vmatprep.subr.bf16.mxu0 %v831
    %2284 = vmatpush1.bf16.msra.mxu0 %v830
    %2285 = vmatprep.subr.bf16.mxu0 %v835
    %2286 = vmatpush1.bf16.msra.mxu0 %v834
    %2287 = vmatprep.subr.bf16.mxu0 0
    %2288 = vmatpush1.bf16.msra.mxu0 0
    %2289 = vmatprep.subr.bf16.mxu0 0
    %2290 = vmatpush1.bf16.msra.mxu0 0
    %2291 = vmatprep.subr.bf16.mxu0 0
    %2292 = vmatpush1.bf16.msra.mxu0 0
    %2293 = vmatprep.subr.bf16.mxu0 0
    %2294 = vmatpush1.bf16.msra.mxu0 0
    %2295 = vmatprep.subr.bf16.mxu0 0
    %2296 = vmatpush1.bf16.msra.mxu0 0
    %2297 = vmatprep.subr.bf16.mxu0 0
    %2298 = vmatpush1.bf16.msra.mxu0 0
    %2299 = vmatprep.subr.bf16.mxu0 0
    %2300 = vmatpush1.bf16.msra.mxu0 0
    %2301 = vmatprep.subr.bf16.mxu0 0
    %2302 = vmatpush1.bf16.msra.mxu0 0
    %2303 = vmatprep.mubr.bf16.mxu0 0
    %2304 = vmatmul.mubr.bf16.gmra.mrb[0].mxu0 %v2119
    %v2305 = vpop.f32.mrb[0].mxu0
    %v2306 = vadd.f32 0.0, %v2305
    %v2307 = vpop.f32.mrb[0].mxu0
    %v2308 = vadd.f32 0.0, %v2307
    %v2309 = vpop.f32.mrb[0].mxu0
    %v2310 = vpop.f32.mrb[0].mxu0
    %2311 = vdwg.mxu0
    %v2312 = vadd.f32 %v2226, %v2265
    %v2313 = vadd.f32 %v2227, %v2267
    %v2314 = vadd.f32 %v2228, %v2306
    %v2315 = vadd.f32 %v2229, %v2308
    %v2316 = vxor.u32 %v2312, 2147483648
    %v2317 = vmul.f32 %v2316, 1.442695
    %v2318 = vpow.pop %v2317
    %v2319 = vadd.f32 %v2318, 1.0
    %v2320 = vrcp.pop %v2319
    %v2321 = vmul.f32 1.0, %v2320
    %v2322 = vxor.u32 %v2313, 2147483648
    %v2323 = vmul.f32 %v2322, 1.442695
    %v2324 = vpow.pop %v2323
    %v2325 = vadd.f32 %v2324, 1.0
    %v2326 = vrcp.pop %v2325
    %v2327 = vmul.f32 1.0, %v2326
    %v2328 = vtanh.pop %v2314
    %v2329 = vxor.u32 %v2315, 2147483648
    %v2330 = vmul.f32 %v2329, 1.442695
    %v2331 = vpow.pop %v2330
    %v2332 = vadd.f32 %v2331, 1.0
    %v2333 = vrcp.pop %v2332
    %v2334 = vmul.f32 1.0, %v2333
    %v2335 = vmul.f32 %v2327, %v1603
    %v2336 = vmul.f32 %v2321, %v2328
    %v2337 = vadd.f32 %v2335, %v2336
    %v2338 = vtanh.pop %v2337
    %v2339 = vmul.f32 %v2334, %v2338
    %v2340 = vpack.c.bf16 %v2118, %v2118
    %v2341 = vld [vmem:[%s25] sm:$0xff]
    %v2342 = vld [vmem:[%s25 + $0x8] sm:$0xff]
    %v2343 = vld [vmem:[%s25 + $0x10] sm:$0xff]
    %v2344 = vld [vmem:[%s25 + $0x18] sm:$0xff]
    %v2345 = vld [vmem:[%s25 + $0x20] sm:$0xff]
    %v2346 = vld [vmem:[%s25 + $0x28] sm:$0xff]
    %v2347 = vld [vmem:[%s25 + $0x30] sm:$0xff]
    %v2348 = vld [vmem:[%s25 + $0x38] sm:$0xff]
    %v2349 = vld [vmem:[%s25 + $0x40] sm:$0xff]
    %v2350 = vld [vmem:[%s25 + $0x48] sm:$0xff]
    %v2351 = vld [vmem:[%s25 + $0x50] sm:$0xff]
    %v2352 = vld [vmem:[%s25 + $0x58] sm:$0xff]
    %v2353 = vld [vmem:[%s25 + $0x60] sm:$0xff]
    %v2354 = vld [vmem:[%s25 + $0x68] sm:$0xff]
    %v2355 = vld [vmem:[%s25 + $0x70] sm:$0xff]
    %v2356 = vld [vmem:[%s25 + $0x78] sm:$0xff]
    %v2357 = vld [vmem:[%s25 + $0x80] sm:$0xff]
    %v2358 = vld [vmem:[%s25 + $0x88] sm:$0xff]
    %v2359 = vld [vmem:[%s25 + $0x90] sm:$0xff]
    %v2360 = vld [vmem:[%s25 + $0x98] sm:$0xff]
    %v2361 = vld [vmem:[%s25 + $0xa0] sm:$0xff]
    %v2362 = vld [vmem:[%s25 + $0xa8] sm:$0xff]
    %v2363 = vld [vmem:[%s25 + $0xb0] sm:$0xff]
    %v2364 = vld [vmem:[%s25 + $0xb8] sm:$0xff]
    %v2365 = vld [vmem:[%s25 + $0xc0] sm:$0xff]
    %v2366 = vld [vmem:[%s25 + $0xc8] sm:$0xff]
    %v2367 = vld [vmem:[%s25 + $0xd0] sm:$0xff]
    %v2368 = vld [vmem:[%s25 + $0xd8] sm:$0xff]
    %v2369 = vld [vmem:[%s25 + $0xe0] sm:$0xff]
    %v2370 = vld [vmem:[%s25 + $0xe8] sm:$0xff]
    %v2371 = vld [vmem:[%s25 + $0xf0] sm:$0xff]
    %v2372 = vld [vmem:[%s25 + $0xf8] sm:$0xff]
    %v2373 = vld [vmem:[%s25 + $0x100] sm:$0xff]
    %v2374 = vld [vmem:[%s25 + $0x108] sm:$0xff]
    %v2375 = vld [vmem:[%s25 + $0x110] sm:$0xff]
    %v2376 = vld [vmem:[%s25 + $0x118] sm:$0xff]
    %v2377 = vld [vmem:[%s25 + $0x120] sm:$0xff]
    %v2378 = vld [vmem:[%s25 + $0x128] sm:$0xff]
    %v2379 = vld [vmem:[%s25 + $0x130] sm:$0xff]
    %v2380 = vld [vmem:[%s25 + $0x138] sm:$0xff]
    %v2381 = vld [vmem:[%s25 + $0x140] sm:$0xff]
    %v2382 = vld [vmem:[%s25 + $0x148] sm:$0xff]
    %v2383 = vld [vmem:[%s25 + $0x150] sm:$0xff]
    %v2384 = vld [vmem:[%s25 + $0x158] sm:$0xff]
    %v2385 = vld [vmem:[%s25 + $0x160] sm:$0xff]
    %v2386 = vld [vmem:[%s25 + $0x168] sm:$0xff]
    %v2387 = vld [vmem:[%s25 + $0x170] sm:$0xff]
    %v2388 = vld [vmem:[%s25 + $0x178] sm:$0xff]
    %v2389 = vld [vmem:[%s25 + $0x180] sm:$0xff]
    %v2390 = vld [vmem:[%s25 + $0x188] sm:$0xff]
    %v2391 = vld [vmem:[%s25 + $0x190] sm:$0xff]
    %v2392 = vld [vmem:[%s25 + $0x198] sm:$0xff]
    %v2393 = vld [vmem:[%s25 + $0x1a0] sm:$0xff]
    %v2394 = vld [vmem:[%s25 + $0x1a8] sm:$0xff]
    %v2395 = vld [vmem:[%s25 + $0x1b0] sm:$0xff]
    %v2396 = vld [vmem:[%s25 + $0x1b8] sm:$0xff]
    %v2397 = vld [vmem:[%s25 + $0x1c0] sm:$0xff]
    %v2398 = vld [vmem:[%s25 + $0x1c8] sm:$0xff]
    %v2399 = vld [vmem:[%s25 + $0x1d0] sm:$0xff]
    %v2400 = vld [vmem:[%s25 + $0x1d8] sm:$0xff]
    %v2401 = vld [vmem:[%s25 + $0x1e0] sm:$0xff]
    %v2402 = vld [vmem:[%s25 + $0x1e8] sm:$0xff]
    %v2403 = vld [vmem:[%s25 + $0x1f0] sm:$0xff]
    %v2404 = vld [vmem:[%s25 + $0x1f8] sm:$0xff]
    %v2405 = vld [vmem:[%s27] sm:$0xf]
    %v2407 = vlaneseq
    %v2408 = vshrl.u32 %v2407, 7
    %v2409 = vsub.s32 0, %v2408
    %v2410 = vrot.slane %v2405, %v2409
    %v2411 = vlaneseq
    %v2412 = vshrl.u32 %v2411, 7
    %v2413 = vsub.s32 1, %v2412
    %v2414 = vrot.slane %v2405, %v2413
    %v2415 = vlaneseq
    %v2416 = vshrl.u32 %v2415, 7
    %v2417 = vsub.s32 2, %v2416
    %v2418 = vrot.slane %v2405, %v2417
    %v2419 = vlaneseq
    %v2420 = vshrl.u32 %v2419, 7
    %v2421 = vsub.s32 3, %v2420
    %v2422 = vrot.slane %v2405, %v2421
    %v2491 = vunpack.c.l.b16 %v2341
    %v2492 = vunpack.c.h.b16 %v2341
    %v2493 = vunpack.c.l.b16 %v2342
    %v2494 = vunpack.c.h.b16 %v2342
    %v2495 = vunpack.c.l.b16 %v2343
    %v2496 = vunpack.c.h.b16 %v2343
    %v2497 = vunpack.c.l.b16 %v2344
    %v2498 = vunpack.c.h.b16 %v2344
    %v2499 = vunpack.c.l.b16 %v2345
    %v2500 = vunpack.c.h.b16 %v2345
    %v2501 = vunpack.c.l.b16 %v2346
    %v2502 = vunpack.c.h.b16 %v2346
    %v2503 = vunpack.c.l.b16 %v2347
    %v2504 = vunpack.c.h.b16 %v2347
    %v2505 = vunpack.c.l.b16 %v2348
    %v2506 = vunpack.c.h.b16 %v2348
    %v2507 = vunpack.c.l.b16 %v2349
    %v2508 = vunpack.c.h.b16 %v2349
    %v2509 = vunpack.c.l.b16 %v2350
    %v2510 = vunpack.c.h.b16 %v2350
    %v2511 = vunpack.c.l.b16 %v2351
    %v2512 = vunpack.c.h.b16 %v2351
    %v2513 = vunpack.c.l.b16 %v2352
    %v2514 = vunpack.c.h.b16 %v2352
    %v2515 = vunpack.c.l.b16 %v2353
    %v2516 = vunpack.c.h.b16 %v2353
    %v2517 = vunpack.c.l.b16 %v2354
    %v2518 = vunpack.c.h.b16 %v2354
    %v2519 = vunpack.c.l.b16 %v2355
    %v2520 = vunpack.c.h.b16 %v2355
    %v2521 = vunpack.c.l.b16 %v2356
    %v2522 = vunpack.c.h.b16 %v2356
    %v2523 = vunpack.c.l.b16 %v2357
    %v2524 = vunpack.c.h.b16 %v2357
    %v2525 = vunpack.c.l.b16 %v2358
    %v2526 = vunpack.c.h.b16 %v2358
    %v2527 = vunpack.c.l.b16 %v2359
    %v2528 = vunpack.c.h.b16 %v2359
    %v2529 = vunpack.c.l.b16 %v2360
    %v2530 = vunpack.c.h.b16 %v2360
    %v2531 = vunpack.c.l.b16 %v2361
    %v2532 = vunpack.c.h.b16 %v2361
    %v2533 = vunpack.c.l.b16 %v2362
    %v2534 = vunpack.c.h.b16 %v2362
    %v2535 = vunpack.c.l.b16 %v2363
    %v2536 = vunpack.c.h.b16 %v2363
    %v2537 = vunpack.c.l.b16 %v2364
    %v2538 = vunpack.c.h.b16 %v2364
    %v2539 = vunpack.c.l.b16 %v2365
    %v2540 = vunpack.c.h.b16 %v2365
    %v2541 = vunpack.c.l.b16 %v2366
    %v2542 = vunpack.c.h.b16 %v2366
    %v2543 = vunpack.c.l.b16 %v2367
    %v2544 = vunpack.c.h.b16 %v2367
    %v2545 = vunpack.c.l.b16 %v2368
    %v2546 = vunpack.c.h.b16 %v2368
    %v2547 = vunpack.c.l.b16 %v2369
    %v2548 = vunpack.c.h.b16 %v2369
    %v2549 = vunpack.c.l.b16 %v2370
    %v2550 = vunpack.c.h.b16 %v2370
    %v2551 = vunpack.c.l.b16 %v2371
    %v2552 = vunpack.c.h.b16 %v2371
    %v2553 = vunpack.c.l.b16 %v2372
    %v2554 = vunpack.c.h.b16 %v2372
    %v2555 = vunpack.c.l.b16 %v2373
    %v2556 = vunpack.c.h.b16 %v2373
    %v2557 = vunpack.c.l.b16 %v2374
    %v2558 = vunpack.c.h.b16 %v2374
    %v2559 = vunpack.c.l.b16 %v2375
    %v2560 = vunpack.c.h.b16 %v2375
    %v2561 = vunpack.c.l.b16 %v2376
    %v2562 = vunpack.c.h.b16 %v2376
    %v2563 = vunpack.c.l.b16 %v2377
    %v2564 = vunpack.c.h.b16 %v2377
    %v2565 = vunpack.c.l.b16 %v2378
    %v2566 = vunpack.c.h.b16 %v2378
    %v2567 = vunpack.c.l.b16 %v2379
    %v2568 = vunpack.c.h.b16 %v2379
    %v2569 = vunpack.c.l.b16 %v2380
    %v2570 = vunpack.c.h.b16 %v2380
    %v2571 = vunpack.c.l.b16 %v2381
    %v2572 = vunpack.c.h.b16 %v2381
    %v2573 = vunpack.c.l.b16 %v2382
    %v2574 = vunpack.c.h.b16 %v2382
    %v2575 = vunpack.c.l.b16 %v2383
    %v2576 = vunpack.c.h.b16 %v2383
    %v2577 = vunpack.c.l.b16 %v2384
    %v2578 = vunpack.c.h.b16 %v2384
    %v2579 = vunpack.c.l.b16 %v2385
    %v2580 = vunpack.c.h.b16 %v2385
    %v2581 = vunpack.c.l.b16 %v2386
    %v2582 = vunpack.c.h.b16 %v2386
    %v2583 = vunpack.c.l.b16 %v2387
    %v2584 = vunpack.c.h.b16 %v2387
    %v2585 = vunpack.c.l.b16 %v2388
    %v2586 = vunpack.c.h.b16 %v2388
    %v2587 = vunpack.c.l.b16 %v2389
    %v2588 = vunpack.c.h.b16 %v2389
    %v2589 = vunpack.c.l.b16 %v2390
    %v2590 = vunpack.c.h.b16 %v2390
    %v2591 = vunpack.c.l.b16 %v2391
    %v2592 = vunpack.c.h.b16 %v2391
    %v2593 = vunpack.c.l.b16 %v2392
    %v2594 = vunpack.c.h.b16 %v2392
    %v2595 = vunpack.c.l.b16 %v2393
    %v2596 = vunpack.c.h.b16 %v2393
    %v2597 = vunpack.c.l.b16 %v2394
    %v2598 = vunpack.c.h.b16 %v2394
    %v2599 = vunpack.c.l.b16 %v2395
    %v2600 = vunpack.c.h.b16 %v2395
    %v2601 = vunpack.c.l.b16 %v2396
    %v2602 = vunpack.c.h.b16 %v2396
    %v2603 = vunpack.c.l.b16 %v2397
    %v2604 = vunpack.c.h.b16 %v2397
    %v2605 = vunpack.c.l.b16 %v2398
    %v2606 = vunpack.c.h.b16 %v2398
    %v2607 = vunpack.c.l.b16 %v2399
    %v2608 = vunpack.c.h.b16 %v2399
    %v2609 = vunpack.c.l.b16 %v2400
    %v2610 = vunpack.c.h.b16 %v2400
    %v2611 = vunpack.c.l.b16 %v2401
    %v2612 = vunpack.c.h.b16 %v2401
    %v2613 = vunpack.c.l.b16 %v2402
    %v2614 = vunpack.c.h.b16 %v2402
    %v2615 = vunpack.c.l.b16 %v2403
    %v2616 = vunpack.c.h.b16 %v2403
    %v2617 = vunpack.c.l.b16 %v2404
    %v2618 = vunpack.c.h.b16 %v2404
    %v2619 = vpack.c.b16 %v2495, %v2491
    %v2620 = vpack.c.b16 %v2496, %v2492
    %v2621 = vpack.c.b16 %v2497, %v2493
    %v2622 = vpack.c.b16 %v2498, %v2494
    %v2623 = vpack.c.b16 %v2503, %v2499
    %v2624 = vpack.c.b16 %v2504, %v2500
    %v2625 = vpack.c.b16 %v2505, %v2501
    %v2626 = vpack.c.b16 %v2506, %v2502
    %v2627 = vpack.c.b16 %v2511, %v2507
    %v2628 = vpack.c.b16 %v2512, %v2508
    %v2629 = vpack.c.b16 %v2513, %v2509
    %v2630 = vpack.c.b16 %v2514, %v2510
    %v2631 = vpack.c.b16 %v2519, %v2515
    %v2632 = vpack.c.b16 %v2520, %v2516
    %v2633 = vpack.c.b16 %v2521, %v2517
    %v2634 = vpack.c.b16 %v2522, %v2518
    %v2635 = vpack.c.b16 %v2527, %v2523
    %v2636 = vpack.c.b16 %v2528, %v2524
    %v2637 = vpack.c.b16 %v2529, %v2525
    %v2638 = vpack.c.b16 %v2530, %v2526
    %v2639 = vpack.c.b16 %v2535, %v2531
    %v2640 = vpack.c.b16 %v2536, %v2532
    %v2641 = vpack.c.b16 %v2537, %v2533
    %v2642 = vpack.c.b16 %v2538, %v2534
    %v2643 = vpack.c.b16 %v2543, %v2539
    %v2644 = vpack.c.b16 %v2544, %v2540
    %v2645 = vpack.c.b16 %v2545, %v2541
    %v2646 = vpack.c.b16 %v2546, %v2542
    %v2647 = vpack.c.b16 %v2551, %v2547
    %v2648 = vpack.c.b16 %v2552, %v2548
    %v2649 = vpack.c.b16 %v2553, %v2549
    %v2650 = vpack.c.b16 %v2554, %v2550
    %v2651 = vpack.c.b16 %v2559, %v2555
    %v2652 = vpack.c.b16 %v2560, %v2556
    %v2653 = vpack.c.b16 %v2561, %v2557
    %v2654 = vpack.c.b16 %v2562, %v2558
    %v2655 = vpack.c.b16 %v2567, %v2563
    %v2656 = vpack.c.b16 %v2568, %v2564
    %v2657 = vpack.c.b16 %v2569, %v2565
    %v2658 = vpack.c.b16 %v2570, %v2566
    %v2659 = vpack.c.b16 %v2575, %v2571
    %v2660 = vpack.c.b16 %v2576, %v2572
    %v2661 = vpack.c.b16 %v2577, %v2573
    %v2662 = vpack.c.b16 %v2578, %v2574
    %v2663 = vpack.c.b16 %v2583, %v2579
    %v2664 = vpack.c.b16 %v2584, %v2580
    %v2665 = vpack.c.b16 %v2585, %v2581
    %v2666 = vpack.c.b16 %v2586, %v2582
    %v2667 = vpack.c.b16 %v2591, %v2587
    %v2668 = vpack.c.b16 %v2592, %v2588
    %v2669 = vpack.c.b16 %v2593, %v2589
    %v2670 = vpack.c.b16 %v2594, %v2590
    %v2671 = vpack.c.b16 %v2599, %v2595
    %v2672 = vpack.c.b16 %v2600, %v2596
    %v2673 = vpack.c.b16 %v2601, %v2597
    %v2674 = vpack.c.b16 %v2602, %v2598
    %v2675 = vpack.c.b16 %v2607, %v2603
    %v2676 = vpack.c.b16 %v2608, %v2604
    %v2677 = vpack.c.b16 %v2609, %v2605
    %v2678 = vpack.c.b16 %v2610, %v2606
    %v2679 = vpack.c.b16 %v2615, %v2611
    %v2680 = vpack.c.b16 %v2616, %v2612
    %v2681 = vpack.c.b16 %v2617, %v2613
    %v2682 = vpack.c.b16 %v2618, %v2614
    %2747 = vmatprep.subr.bf16.mxu0 %v2620
    %2748 = vmatpush1.bf16.msra.mxu0 %v2619
    %2749 = vmatprep.subr.bf16.mxu0 %v2624
    %2750 = vmatpush1.bf16.msra.mxu0 %v2623
    %2751 = vmatprep.subr.bf16.mxu0 %v2628
    %2752 = vmatpush1.bf16.msra.mxu0 %v2627
    %2753 = vmatprep.subr.bf16.mxu0 %v2632
    %2754 = vmatpush1.bf16.msra.mxu0 %v2631
    %2755 = vmatprep.subr.bf16.mxu0 %v2636
    %2756 = vmatpush1.bf16.msra.mxu0 %v2635
    %2757 = vmatprep.subr.bf16.mxu0 %v2640
    %2758 = vmatpush1.bf16.msra.mxu0 %v2639
    %2759 = vmatprep.subr.bf16.mxu0 %v2644
    %2760 = vmatpush1.bf16.msra.mxu0 %v2643
    %2761 = vmatprep.subr.bf16.mxu0 %v2648
    %2762 = vmatpush1.bf16.msra.mxu0 %v2647
    %2763 = vmatprep.subr.bf16.mxu0 %v2652
    %2764 = vmatpush1.bf16.msra.mxu0 %v2651
    %2765 = vmatprep.subr.bf16.mxu0 %v2656
    %2766 = vmatpush1.bf16.msra.mxu0 %v2655
    %2767 = vmatprep.subr.bf16.mxu0 %v2660
    %2768 = vmatpush1.bf16.msra.mxu0 %v2659
    %2769 = vmatprep.subr.bf16.mxu0 %v2664
    %2770 = vmatpush1.bf16.msra.mxu0 %v2663
    %2771 = vmatprep.subr.bf16.mxu0 %v2668
    %2772 = vmatpush1.bf16.msra.mxu0 %v2667
    %2773 = vmatprep.subr.bf16.mxu0 %v2672
    %2774 = vmatpush1.bf16.msra.mxu0 %v2671
    %2775 = vmatprep.subr.bf16.mxu0 %v2676
    %2776 = vmatpush1.bf16.msra.mxu0 %v2675
    %2777 = vmatprep.subr.bf16.mxu0 %v2680
    %2778 = vmatpush1.bf16.msra.mxu0 %v2679
    %2779 = vmatprep.mubr.bf16.mxu0 %v979
    %2780 = vmatmul.mubr.bf16.gmra.mrb[0].mxu0 %v2340
    %v2781 = vpop.f32.mrb[0].mxu0
    %v2782 = vadd.f32 %v2410, %v2781
    %v2783 = vpop.f32.mrb[0].mxu0
    %v2784 = vadd.f32 %v2414, %v2783
    %v2785 = vpop.f32.mrb[0].mxu0
    %v2786 = vpop.f32.mrb[0].mxu0
    %2787 = vdwg.mxu0
    %2788 = vmatprep.subr.bf16.mxu0 %v2622
    %2789 = vmatpush1.bf16.msra.mxu0 %v2621
    %2790 = vmatprep.subr.bf16.mxu0 %v2626
    %2791 = vmatpush1.bf16.msra.mxu0 %v2625
    %2792 = vmatprep.subr.bf16.mxu0 %v2630
    %2793 = vmatpush1.bf16.msra.mxu0 %v2629
    %2794 = vmatprep.subr.bf16.mxu0 %v2634
    %2795 = vmatpush1.bf16.msra.mxu0 %v2633
    %2796 = vmatprep.subr.bf16.mxu0 %v2638
    %2797 = vmatpush1.bf16.msra.mxu0 %v2637
    %2798 = vmatprep.subr.bf16.mxu0 %v2642
    %2799 = vmatpush1.bf16.msra.mxu0 %v2641
    %2800 = vmatprep.subr.bf16.mxu0 %v2646
    %2801 = vmatpush1.bf16.msra.mxu0 %v2645
    %2802 = vmatprep.subr.bf16.mxu0 %v2650
    %2803 = vmatpush1.bf16.msra.mxu0 %v2649
    %2804 = vmatprep.subr.bf16.mxu0 %v2654
    %2805 = vmatpush1.bf16.msra.mxu0 %v2653
    %2806 = vmatprep.subr.bf16.mxu0 %v2658
    %2807 = vmatpush1.bf16.msra.mxu0 %v2657
    %2808 = vmatprep.subr.bf16.mxu0 %v2662
    %2809 = vmatpush1.bf16.msra.mxu0 %v2661
    %2810 = vmatprep.subr.bf16.mxu0 %v2666
    %2811 = vmatpush1.bf16.msra.mxu0 %v2665
    %2812 = vmatprep.subr.bf16.mxu0 %v2670
    %2813 = vmatpush1.bf16.msra.mxu0 %v2669
    %2814 = vmatprep.subr.bf16.mxu0 %v2674
    %2815 = vmatpush1.bf16.msra.mxu0 %v2673
    %2816 = vmatprep.subr.bf16.mxu0 %v2678
    %2817 = vmatpush1.bf16.msra.mxu0 %v2677
    %2818 = vmatprep.subr.bf16.mxu0 %v2682
    %2819 = vmatpush1.bf16.msra.mxu0 %v2681
    %2820 = vmatprep.mubr.bf16.mxu0 %v979
    %2821 = vmatmul.mubr.bf16.gmra.mrb[0].mxu0 %v2340
    %v2822 = vpop.f32.mrb[0].mxu0
    %v2823 = vadd.f32 %v2418, %v2822
    %v2824 = vpop.f32.mrb[0].mxu0
    %v2825 = vadd.f32 %v2422, %v2824
    %v2826 = vpop.f32.mrb[0].mxu0
    %v2827 = vpop.f32.mrb[0].mxu0
    %2828 = vdwg.mxu0
    %v2829 = vxor.u32 %v2782, 2147483648
    %v2830 = vmul.f32 %v2829, 1.442695
    %v2831 = vpow.pop %v2830
    %v2832 = vadd.f32 %v2831, 1.0
    %v2833 = vrcp.pop %v2832
    %v2834 = vmul.f32 1.0, %v2833
    %v2835 = vxor.u32 %v2784, 2147483648
    %v2836 = vmul.f32 %v2835, 1.442695
    %v2837 = vpow.pop %v2836
    %v2838 = vadd.f32 %v2837, 1.0
    %v2839 = vrcp.pop %v2838
    %v2840 = vmul.f32 1.0, %v2839
    %v2841 = vtanh.pop %v2823
    %v2842 = vxor.u32 %v2825, 2147483648
    %v2843 = vmul.f32 %v2842, 1.442695
    %v2844 = vpow.pop %v2843
    %v2845 = vadd.f32 %v2844, 1.0
    %v2846 = vrcp.pop %v2845
    %v2847 = vmul.f32 1.0, %v2846
    %v2848 = vmul.f32 %v2840, 0.0
    %v2849 = vmul.f32 %v2834, %v2841
    %v2850 = vadd.f32 %v2848, %v2849
    %v2851 = vtanh.pop %v2850
    %v2852 = vmul.f32 %v2847, %v2851
    %v2853 = vpack.c.bf16 %v2225, %v2225
    %2854 = vmatprep.subr.bf16.mxu0 %v1886
    %2855 = vmatpush1.bf16.msra.mxu0 %v1885
    %2856 = vmatprep.subr.bf16.mxu0 %v1890
    %2857 = vmatpush1.bf16.msra.mxu0 %v1889
    %2858 = vmatprep.subr.bf16.mxu0 %v1894
    %2859 = vmatpush1.bf16.msra.mxu0 %v1893
    %2860 = vmatprep.subr.bf16.mxu0 %v1898
    %2861 = vmatpush1.bf16.msra.mxu0 %v1897
    %2862 = vmatprep.subr.bf16.mxu0 %v1902
    %2863 = vmatpush1.bf16.msra.mxu0 %v1901
    %2864 = vmatprep.subr.bf16.mxu0 %v1906
    %2865 = vmatpush1.bf16.msra.mxu0 %v1905
    %2866 = vmatprep.subr.bf16.mxu0 %v1910
    %2867 = vmatpush1.bf16.msra.mxu0 %v1909
    %2868 = vmatprep.subr.bf16.mxu0 %v1914
    %2869 = vmatpush1.bf16.msra.mxu0 %v1913
    %2870 = vmatprep.subr.bf16.mxu0 %v1918
    %2871 = vmatpush1.bf16.msra.mxu0 %v1917
    %2872 = vmatprep.subr.bf16.mxu0 %v1922
    %2873 = vmatpush1.bf16.msra.mxu0 %v1921
    %2874 = vmatprep.subr.bf16.mxu0 %v1926
    %2875 = vmatpush1.bf16.msra.mxu0 %v1925
    %2876 = vmatprep.subr.bf16.mxu0 %v1930
    %2877 = vmatpush1.bf16.msra.mxu0 %v1929
    %2878 = vmatprep.subr.bf16.mxu0 %v1934
    %2879 = vmatpush1.bf16.msra.mxu0 %v1933
    %2880 = vmatprep.subr.bf16.mxu0 %v1938
    %2881 = vmatpush1.bf16.msra.mxu0 %v1937
    %2882 = vmatprep.subr.bf16.mxu0 %v1942
    %2883 = vmatpush1.bf16.msra.mxu0 %v1941
    %2884 = vmatprep.subr.bf16.mxu0 %v1946
    %2885 = vmatpush1.bf16.msra.mxu0 %v1945
    %2886 = vmatprep.mubr.bf16.mxu0 %v2340
    %2887 = vmatmul.mubr.bf16.gmra.mrb[0].mxu0 %v2853
    %v2888 = vpop.f32.mrb[0].mxu0
    %v2889 = vadd.f32 %v1676, %v2888
    %v2890 = vpop.f32.mrb[0].mxu0
    %v2891 = vadd.f32 %v1680, %v2890
    %v2892 = vpop.f32.mrb[0].mxu0
    %v2893 = vpop.f32.mrb[0].mxu0
    %2894 = vdwg.mxu0
    %2895 = vmatprep.subr.bf16.mxu0 %v1888
    %2896 = vmatpush1.bf16.msra.mxu0 %v1887
    %2897 = vmatprep.subr.bf16.mxu0 %v1892
    %2898 = vmatpush1.bf16.msra.mxu0 %v1891
    %2899 = vmatprep.subr.bf16.mxu0 %v1896
    %2900 = vmatpush1.bf16.msra.mxu0 %v1895
    %2901 = vmatprep.subr.bf16.mxu0 %v1900
    %2902 = vmatpush1.bf16.msra.mxu0 %v1899
    %2903 = vmatprep.subr.bf16.mxu0 %v1904
    %2904 = vmatpush1.bf16.msra.mxu0 %v1903
    %2905 = vmatprep.subr.bf16.mxu0 %v1908
    %2906 = vmatpush1.bf16.msra.mxu0 %v1907
    %2907 = vmatprep.subr.bf16.mxu0 %v1912
    %2908 = vmatpush1.bf16.msra.mxu0 %v1911
    %2909 = vmatprep.subr.bf16.mxu0 %v1916
    %2910 = vmatpush1.bf16.msra.mxu0 %v1915
    %2911 = vmatprep.subr.bf16.mxu0 %v1920
    %2912 = vmatpush1.bf16.msra.mxu0 %v1919
    %2913 = vmatprep.subr.bf16.mxu0 %v1924
    %2914 = vmatpush1.bf16.msra.mxu0 %v1923
    %2915 = vmatprep.subr.bf16.mxu0 %v1928
    %2916 = vmatpush1.bf16.msra.mxu0 %v1927
    %2917 = vmatprep.subr.bf16.mxu0 %v1932
    %2918 = vmatpush1.bf16.msra.mxu0 %v1931
    %2919 = vmatprep.subr.bf16.mxu0 %v1936
    %2920 = vmatpush1.bf16.msra.mxu0 %v1935
    %2921 = vmatprep.subr.bf16.mxu0 %v1940
    %2922 = vmatpush1.bf16.msra.mxu0 %v1939
    %2923 = vmatprep.subr.bf16.mxu0 %v1944
    %2924 = vmatpush1.bf16.msra.mxu0 %v1943
    %2925 = vmatprep.subr.bf16.mxu0 %v1948
    %2926 = vmatpush1.bf16.msra.mxu0 %v1947
    %2927 = vmatprep.mubr.bf16.mxu0 %v2340
    %2928 = vmatmul.mubr.bf16.gmra.mrb[0].mxu0 %v2853
    %v2929 = vpop.f32.mrb[0].mxu0
    %v2930 = vadd.f32 %v1684, %v2929
    %v2931 = vpop.f32.mrb[0].mxu0
    %v2932 = vadd.f32 %v1688, %v2931
    %v2933 = vpop.f32.mrb[0].mxu0
    %v2934 = vpop.f32.mrb[0].mxu0
    %2935 = vdwg.mxu0
    %v2936 = vxor.u32 %v2889, 2147483648
    %v2937 = vmul.f32 %v2936, 1.442695
    %v2938 = vpow.pop %v2937
    %v2939 = vadd.f32 %v2938, 1.0
    %v2940 = vrcp.pop %v2939
    %v2941 = vmul.f32 1.0, %v2940
    %v2942 = vxor.u32 %v2891, 2147483648
    %v2943 = vmul.f32 %v2942, 1.442695
    %v2944 = vpow.pop %v2943
    %v2945 = vadd.f32 %v2944, 1.0
    %v2946 = vrcp.pop %v2945
    %v2947 = vmul.f32 1.0, %v2946
    %v2948 = vtanh.pop %v2930
    %v2949 = vxor.u32 %v2932, 2147483648
    %v2950 = vmul.f32 %v2949, 1.442695
    %v2951 = vpow.pop %v2950
    %v2952 = vadd.f32 %v2951, 1.0
    %v2953 = vrcp.pop %v2952
    %v2954 = vmul.f32 1.0, %v2953
    %v2955 = vmul.f32 %v2947, %v2116
    %v2956 = vmul.f32 %v2941, %v2948
    %v2957 = vadd.f32 %v2955, %v2956
    %v2958 = vtanh.pop %v2957
    %v2959 = vmul.f32 %v2954, %v2958
    %v2960 = vpack.c.bf16 %v2339, %v2339
    %2961 = vmatprep.subr.bf16.mxu0 %v1259
    %2962 = vmatpush1.bf16.msra.mxu0 %v1258
    %2963 = vmatprep.subr.bf16.mxu0 %v1263
    %2964 = vmatpush1.bf16.msra.mxu0 %v1262
    %2965 = vmatprep.subr.bf16.mxu0 %v1267
    %2966 = vmatpush1.bf16.msra.mxu0 %v1266
    %2967 = vmatprep.subr.bf16.mxu0 %v1271
    %2968 = vmatpush1.bf16.msra.mxu0 %v1270
    %2969 = vmatprep.subr.bf16.mxu0 %v1275
    %2970 = vmatpush1.bf16.msra.mxu0 %v1274
    %2971 = vmatprep.subr.bf16.mxu0 %v1279
    %2972 = vmatpush1.bf16.msra.mxu0 %v1278
    %2973 = vmatprep.subr.bf16.mxu0 %v1283
    %2974 = vmatpush1.bf16.msra.mxu0 %v1282
    %2975 = vmatprep.subr.bf16.mxu0 %v1287
    %2976 = vmatpush1.bf16.msra.mxu0 %v1286
    %2977 = vmatprep.subr.bf16.mxu0 %v1291
    %2978 = vmatpush1.bf16.msra.mxu0 %v1290
    %2979 = vmatprep.subr.bf16.mxu0 %v1295
    %2980 = vmatpush1.bf16.msra.mxu0 %v1294
    %2981 = vmatprep.subr.bf16.mxu0 %v1299
    %2982 = vmatpush1.bf16.msra.mxu0 %v1298
    %2983 = vmatprep.subr.bf16.mxu0 %v1303
    %2984 = vmatpush1.bf16.msra.mxu0 %v1302
    %2985 = vmatprep.subr.bf16.mxu0 %v1307
    %2986 = vmatpush1.bf16.msra.mxu0 %v1306
    %2987 = vmatprep.subr.bf16.mxu0 %v1311
    %2988 = vmatpush1.bf16.msra.mxu0 %v1310
    %2989 = vmatprep.subr.bf16.mxu0 %v1315
    %2990 = vmatpush1.bf16.msra.mxu0 %v1314
    %2991 = vmatprep.subr.bf16.mxu0 %v1319
    %2992 = vmatpush1.bf16.msra.mxu0 %v1318
    %2993 = vmatprep.mubr.bf16.mxu0 %v2853
    %2994 = vmatmul.mubr.bf16.gmra.mrb[0].mxu0 %v2960
    %v2995 = vpop.f32.mrb[0].mxu0
    %v2996 = vadd.f32 %v1049, %v2995
    %v2997 = vpop.f32.mrb[0].mxu0
    %v2998 = vadd.f32 %v1053, %v2997
    %v2999 = vpop.f32.mrb[0].mxu0
    %v3000 = vpop.f32.mrb[0].mxu0
    %3001 = vdwg.mxu0
    %3002 = vmatprep.subr.bf16.mxu0 %v1261
    %3003 = vmatpush1.bf16.msra.mxu0 %v1260
    %3004 = vmatprep.subr.bf16.mxu0 %v1265
    %3005 = vmatpush1.bf16.msra.mxu0 %v1264
    %3006 = vmatprep.subr.bf16.mxu0 %v1269
    %3007 = vmatpush1.bf16.msra.mxu0 %v1268
    %3008 = vmatprep.subr.bf16.mxu0 %v1273
    %3009 = vmatpush1.bf16.msra.mxu0 %v1272
    %3010 = vmatprep.subr.bf16.mxu0 %v1277
    %3011 = vmatpush1.bf16.msra.mxu0 %v1276
    %3012 = vmatprep.subr.bf16.mxu0 %v1281
    %3013 = vmatpush1.bf16.msra.mxu0 %v1280
    %3014 = vmatprep.subr.bf16.mxu0 %v1285
    %3015 = vmatpush1.bf16.msra.mxu0 %v1284
    %3016 = vmatprep.subr.bf16.mxu0 %v1289
    %3017 = vmatpush1.bf16.msra.mxu0 %v1288
    %3018 = vmatprep.subr.bf16.mxu0 %v1293
    %3019 = vmatpush1.bf16.msra.mxu0 %v1292
    %3020 = vmatprep.subr.bf16.mxu0 %v1297
    %3021 = vmatpush1.bf16.msra.mxu0 %v1296
    %3022 = vmatprep.subr.bf16.mxu0 %v1301
    %3023 = vmatpush1.bf16.msra.mxu0 %v1300
    %3024 = vmatprep.subr.bf16.mxu0 %v1305
    %3025 = vmatpush1.bf16.msra.mxu0 %v1304
    %3026 = vmatprep.subr.bf16.mxu0 %v1309
    %3027 = vmatpush1.bf16.msra.mxu0 %v1308
    %3028 = vmatprep.subr.bf16.mxu0 %v1313
    %3029 = vmatpush1.bf16.msra.mxu0 %v1312
    %3030 = vmatprep.subr.bf16.mxu0 %v1317
    %3031 = vmatpush1.bf16.msra.mxu0 %v1316
    %3032 = vmatprep.subr.bf16.mxu0 %v1321
    %3033 = vmatpush1.bf16.msra.mxu0 %v1320
    %3034 = vmatprep.mubr.bf16.mxu0 %v2853
    %3035 = vmatmul.mubr.bf16.gmra.mrb[0].mxu0 %v2960
    %v3036 = vpop.f32.mrb[0].mxu0
    %v3037 = vadd.f32 %v1057, %v3036
    %v3038 = vpop.f32.mrb[0].mxu0
    %v3039 = vadd.f32 %v1061, %v3038
    %v3040 = vpop.f32.mrb[0].mxu0
    %v3041 = vpop.f32.mrb[0].mxu0
    %3042 = vdwg.mxu0
    %v3043 = vxor.u32 %v2996, 2147483648
    %v3044 = vmul.f32 %v3043, 1.442695
    %v3045 = vpow.pop %v3044
    %v3046 = vadd.f32 %v3045, 1.0
    %v3047 = vrcp.pop %v3046
    %v3048 = vmul.f32 1.0, %v3047
    %v3049 = vxor.u32 %v2998, 2147483648
    %v3050 = vmul.f32 %v3049, 1.442695
    %v3051 = vpow.pop %v3050
    %v3052 = vadd.f32 %v3051, 1.0
    %v3053 = vrcp.pop %v3052
    %v3054 = vmul.f32 1.0, %v3053
    %v3055 = vtanh.pop %v3037
    %v3056 = vxor.u32 %v3039, 2147483648
    %v3057 = vmul.f32 %v3056, 1.442695
    %v3058 = vpow.pop %v3057
    %v3059 = vadd.f32 %v3058, 1.0
    %v3060 = vrcp.pop %v3059
    %v3061 = vmul.f32 1.0, %v3060
    %v3062 = vmul.f32 %v3054, %v2223
    %v3063 = vmul.f32 %v3048, %v3055
    %v3064 = vadd.f32 %v3062, %v3063
    %v3065 = vtanh.pop %v3064
    %v3066 = vmul.f32 %v3061, %v3065
    %v3067 = vld [vmem:[#allocation2 + $0x60] sm:$0xff]
    %v3068 = vld [vmem:[#allocation2 + $0x68] sm:$0xff]
    %v3069 = vld [vmem:[#allocation2 + $0x70] sm:$0xff]
    %v3070 = vld [vmem:[#allocation2 + $0x78] sm:$0xff]
    %3071 = vmatprep.subr.bf16.mxu0 %v805
    %3072 = vmatpush1.bf16.msra.mxu0 %v804
    %3073 = vmatprep.subr.bf16.mxu0 %v809
    %3074 = vmatpush1.bf16.msra.mxu0 %v808
    %3075 = vmatprep.subr.bf16.mxu0 %v813
    %3076 = vmatpush1.bf16.msra.mxu0 %v812
    %3077 = vmatprep.subr.bf16.mxu0 %v817
    %3078 = vmatpush1.bf16.msra.mxu0 %v816
    %3079 = vmatprep.subr.bf16.mxu0 %v821
    %3080 = vmatpush1.bf16.msra.mxu0 %v820
    %3081 = vmatprep.subr.bf16.mxu0 %v825
    %3082 = vmatpush1.bf16.msra.mxu0 %v824
    %3083 = vmatprep.subr.bf16.mxu0 %v829
    %3084 = vmatpush1.bf16.msra.mxu0 %v828
    %3085 = vmatprep.subr.bf16.mxu0 %v833
    %3086 = vmatpush1.bf16.msra.mxu0 %v832
    %3087 = vmatprep.subr.bf16.mxu0 0
    %3088 = vmatpush1.bf16.msra.mxu0 0
    %3089 = vmatprep.subr.bf16.mxu0 0
    %3090 = vmatpush1.bf16.msra.mxu0 0
    %3091 = vmatprep.subr.bf16.mxu0 0
    %3092 = vmatpush1.bf16.msra.mxu0 0
    %3093 = vmatprep.subr.bf16.mxu0 0
    %3094 = vmatpush1.bf16.msra.mxu0 0
    %3095 = vmatprep.subr.bf16.mxu0 0
    %3096 = vmatpush1.bf16.msra.mxu0 0
    %3097 = vmatprep.subr.bf16.mxu0 0
    %3098 = vmatpush1.bf16.msra.mxu0 0
    %3099 = vmatprep.subr.bf16.mxu0 0
    %3100 = vmatpush1.bf16.msra.mxu0 0
    %3101 = vmatprep.subr.bf16.mxu0 0
    %3102 = vmatpush1.bf16.msra.mxu0 0
    %3103 = vmatprep.mubr.bf16.mxu0 0
    %3104 = vmatmul.mubr.bf16.gmra.mrb[0].mxu0 %v2960
    %v3105 = vpop.f32.mrb[0].mxu0
    %v3106 = vadd.f32 0.0, %v3105
    %v3107 = vpop.f32.mrb[0].mxu0
    %v3108 = vadd.f32 0.0, %v3107
    %v3109 = vpop.f32.mrb[0].mxu0
    %v3110 = vpop.f32.mrb[0].mxu0
    %3111 = vdwg.mxu0
    %3112 = vmatprep.subr.bf16.mxu0 %v807
    %3113 = vmatpush1.bf16.msra.mxu0 %v806
    %3114 = vmatprep.subr.bf16.mxu0 %v811
    %3115 = vmatpush1.bf16.msra.mxu0 %v810
    %3116 = vmatprep.subr.bf16.mxu0 %v815
    %3117 = vmatpush1.bf16.msra.mxu0 %v814
    %3118 = vmatprep.subr.bf16.mxu0 %v819
    %3119 = vmatpush1.bf16.msra.mxu0 %v818
    %3120 = vmatprep.subr.bf16.mxu0 %v823
    %3121 = vmatpush1.bf16.msra.mxu0 %v822
    %3122 = vmatprep.subr.bf16.mxu0 %v827
    %3123 = vmatpush1.bf16.msra.mxu0 %v826
    %3124 = vmatprep.subr.bf16.mxu0 %v831
    %3125 = vmatpush1.bf16.msra.mxu0 %v830
    %3126 = vmatprep.subr.bf16.mxu0 %v835
    %3127 = vmatpush1.bf16.msra.mxu0 %v834
    %3128 = vmatprep.subr.bf16.mxu0 0
    %3129 = vmatpush1.bf16.msra.mxu0 0
    %3130 = vmatprep.subr.bf16.mxu0 0
    %3131 = vmatpush1.bf16.msra.mxu0 0
    %3132 = vmatprep.subr.bf16.mxu0 0
    %3133 = vmatpush1.bf16.msra.mxu0 0
    %3134 = vmatprep.subr.bf16.mxu0 0
    %3135 = vmatpush1.bf16.msra.mxu0 0
    %3136 = vmatprep.subr.bf16.mxu0 0
    %3137 = vmatpush1.bf16.msra.mxu0 0
    %3138 = vmatprep.subr.bf16.mxu0 0
    %3139 = vmatpush1.bf16.msra.mxu0 0
    %3140 = vmatprep.subr.bf16.mxu0 0
    %3141 = vmatpush1.bf16.msra.mxu0 0
    %3142 = vmatprep.subr.bf16.mxu0 0
    %3143 = vmatpush1.bf16.msra.mxu0 0
    %3144 = vmatprep.mubr.bf16.mxu0 0
    %3145 = vmatmul.mubr.bf16.gmra.mrb[0].mxu0 %v2960
    %v3146 = vpop.f32.mrb[0].mxu0
    %v3147 = vadd.f32 0.0, %v3146
    %v3148 = vpop.f32.mrb[0].mxu0
    %v3149 = vadd.f32 0.0, %v3148
    %v3150 = vpop.f32.mrb[0].mxu0
    %v3151 = vpop.f32.mrb[0].mxu0
    %3152 = vdwg.mxu0
    %v3153 = vadd.f32 %v3067, %v3106
    %v3154 = vadd.f32 %v3068, %v3108
    %v3155 = vadd.f32 %v3069, %v3147
    %v3156 = vadd.f32 %v3070, %v3149
    %v3157 = vxor.u32 %v3153, 2147483648
    %v3158 = vmul.f32 %v3157, 1.442695
    %v3159 = vpow.pop %v3158
    %v3160 = vadd.f32 %v3159, 1.0
    %v3161 = vrcp.pop %v3160
    %v3162 = vmul.f32 1.0, %v3161
    %v3163 = vxor.u32 %v3154, 2147483648
    %v3164 = vmul.f32 %v3163, 1.442695
    %v3165 = vpow.pop %v3164
    %v3166 = vadd.f32 %v3165, 1.0
    %v3167 = vrcp.pop %v3166
    %v3168 = vmul.f32 1.0, %v3167
    %v3169 = vtanh.pop %v3155
    %v3170 = vxor.u32 %v3156, 2147483648
    %v3171 = vmul.f32 %v3170, 1.442695
    %v3172 = vpow.pop %v3171
    %v3173 = vadd.f32 %v3172, 1.0
    %v3174 = vrcp.pop %v3173
    %v3175 = vmul.f32 1.0, %v3174
    %v3176 = vmul.f32 %v3168, %v2337
    %v3177 = vmul.f32 %v3162, %v3169
    %v3178 = vadd.f32 %v3176, %v3177
    %v3179 = vtanh.pop %v3178
    %v3180 = vmul.f32 %v3175, %v3179
    %v3181 = vpack.c.bf16 %v2959, %v2959
    %v3182 = vpack.c.bf16 %v2852, %v2852
    %3183 = vmatprep.subr.bf16.mxu0 %v2620
    %3184 = vmatpush1.bf16.msra.mxu0 %v2619
    %3185 = vmatprep.subr.bf16.mxu0 %v2624
    %3186 = vmatpush1.bf16.msra.mxu0 %v2623
    %3187 = vmatprep.subr.bf16.mxu0 %v2628
    %3188 = vmatpush1.bf16.msra.mxu0 %v2627
    %3189 = vmatprep.subr.bf16.mxu0 %v2632
    %3190 = vmatpush1.bf16.msra.mxu0 %v2631
    %3191 = vmatprep.subr.bf16.mxu0 %v2636
    %3192 = vmatpush1.bf16.msra.mxu0 %v2635
    %3193 = vmatprep.subr.bf16.mxu0 %v2640
    %3194 = vmatpush1.bf16.msra.mxu0 %v2639
    %3195 = vmatprep.subr.bf16.mxu0 %v2644
    %3196 = vmatpush1.bf16.msra.mxu0 %v2643
    %3197 = vmatprep.subr.bf16.mxu0 %v2648
    %3198 = vmatpush1.bf16.msra.mxu0 %v2647
    %3199 = vmatprep.subr.bf16.mxu0 %v2652
    %3200 = vmatpush1.bf16.msra.mxu0 %v2651
    %3201 = vmatprep.subr.bf16.mxu0 %v2656
    %3202 = vmatpush1.bf16.msra.mxu0 %v2655
    %3203 = vmatprep.subr.bf16.mxu0 %v2660
    %3204 = vmatpush1.bf16.msra.mxu0 %v2659
    %3205 = vmatprep.subr.bf16.mxu0 %v2664
    %3206 = vmatpush1.bf16.msra.mxu0 %v2663
    %3207 = vmatprep.subr.bf16.mxu0 %v2668
    %3208 = vmatpush1.bf16.msra.mxu0 %v2667
    %3209 = vmatprep.subr.bf16.mxu0 %v2672
    %3210 = vmatpush1.bf16.msra.mxu0 %v2671
    %3211 = vmatprep.subr.bf16.mxu0 %v2676
    %3212 = vmatpush1.bf16.msra.mxu0 %v2675
    %3213 = vmatprep.subr.bf16.mxu0 %v2680
    %3214 = vmatpush1.bf16.msra.mxu0 %v2679
    %3215 = vmatprep.mubr.bf16.mxu0 %v3182
    %3216 = vmatmul.mubr.bf16.gmra.mrb[0].mxu0 %v3181
    %v3217 = vpop.f32.mrb[0].mxu0
    %v3218 = vadd.f32 %v2410, %v3217
    %v3219 = vpop.f32.mrb[0].mxu0
    %v3220 = vadd.f32 %v2414, %v3219
    %v3221 = vpop.f32.mrb[0].mxu0
    %v3222 = vpop.f32.mrb[0].mxu0
    %3223 = vdwg.mxu0
    %3224 = vmatprep.subr.bf16.mxu0 %v2622
    %3225 = vmatpush1.bf16.msra.mxu0 %v2621
    %3226 = vmatprep.subr.bf16.mxu0 %v2626
    %3227 = vmatpush1.bf16.msra.mxu0 %v2625
    %3228 = vmatprep.subr.bf16.mxu0 %v2630
    %3229 = vmatpush1.bf16.msra.mxu0 %v2629
    %3230 = vmatprep.subr.bf16.mxu0 %v2634
    %3231 = vmatpush1.bf16.msra.mxu0 %v2633
    %3232 = vmatprep.subr.bf16.mxu0 %v2638
    %3233 = vmatpush1.bf16.msra.mxu0 %v2637
    %3234 = vmatprep.subr.bf16.mxu0 %v2642
    %3235 = vmatpush1.bf16.msra.mxu0 %v2641
    %3236 = vmatprep.subr.bf16.mxu0 %v2646
    %3237 = vmatpush1.bf16.msra.mxu0 %v2645
    %3238 = vmatprep.subr.bf16.mxu0 %v2650
    %3239 = vmatpush1.bf16.msra.mxu0 %v2649
    %3240 = vmatprep.subr.bf16.mxu0 %v2654
    %3241 = vmatpush1.bf16.msra.mxu0 %v2653
    %3242 = vmatprep.subr.bf16.mxu0 %v2658
    %3243 = vmatpush1.bf16.msra.mxu0 %v2657
    %3244 = vmatprep.subr.bf16.mxu0 %v2662
    %3245 = vmatpush1.bf16.msra.mxu0 %v2661
    %3246 = vmatprep.subr.bf16.mxu0 %v2666
    %3247 = vmatpush1.bf16.msra.mxu0 %v2665
    %3248 = vmatprep.subr.bf16.mxu0 %v2670
    %3249 = vmatpush1.bf16.msra.mxu0 %v2669
    %3250 = vmatprep.subr.bf16.mxu0 %v2674
    %3251 = vmatpush1.bf16.msra.mxu0 %v2673
    %3252 = vmatprep.subr.bf16.mxu0 %v2678
    %3253 = vmatpush1.bf16.msra.mxu0 %v2677
    %3254 = vmatprep.subr.bf16.mxu0 %v2682
    %3255 = vmatpush1.bf16.msra.mxu0 %v2681
    %3256 = vmatprep.mubr.bf16.mxu0 %v3182
    %3257 = vmatmul.mubr.bf16.gmra.mrb[0].mxu0 %v3181
    %v3258 = vpop.f32.mrb[0].mxu0
    %v3259 = vadd.f32 %v2418, %v3258
    %v3260 = vpop.f32.mrb[0].mxu0
    %v3261 = vadd.f32 %v2422, %v3260
    %v3262 = vpop.f32.mrb[0].mxu0
    %v3263 = vpop.f32.mrb[0].mxu0
    %3264 = vdwg.mxu0
    %v3265 = vxor.u32 %v3218, 2147483648
    %v3266 = vmul.f32 %v3265, 1.442695
    %v3267 = vpow.pop %v3266
    %v3268 = vadd.f32 %v3267, 1.0
    %v3269 = vrcp.pop %v3268
    %v3270 = vmul.f32 1.0, %v3269
    %v3271 = vxor.u32 %v3220, 2147483648
    %v3272 = vmul.f32 %v3271, 1.442695
    %v3273 = vpow.pop %v3272
    %v3274 = vadd.f32 %v3273, 1.0
    %v3275 = vrcp.pop %v3274
    %v3276 = vmul.f32 1.0, %v3275
    %v3277 = vtanh.pop %v3259
    %v3278 = vxor.u32 %v3261, 2147483648
    %v3279 = vmul.f32 %v3278, 1.442695
    %v3280 = vpow.pop %v3279
    %v3281 = vadd.f32 %v3280, 1.0
    %v3282 = vrcp.pop %v3281
    %v3283 = vmul.f32 1.0, %v3282
    %v3284 = vmul.f32 %v3276, %v2850
    %v3285 = vmul.f32 %v3270, %v3277
    %v3286 = vadd.f32 %v3284, %v3285
    %v3287 = vtanh.pop %v3286
    %v3288 = vmul.f32 %v3283, %v3287
    %v3289 = vpack.c.bf16 %v3066, %v3066
    %3290 = vmatprep.subr.bf16.mxu0 %v1886
    %3291 = vmatpush1.bf16.msra.mxu0 %v1885
    %3292 = vmatprep.subr.bf16.mxu0 %v1890
    %3293 = vmatpush1.bf16.msra.mxu0 %v1889
    %3294 = vmatprep.subr.bf16.mxu0 %v1894
    %3295 = vmatpush1.bf16.msra.mxu0 %v1893
    %3296 = vmatprep.subr.bf16.mxu0 %v1898
    %3297 = vmatpush1.bf16.msra.mxu0 %v1897
    %3298 = vmatprep.subr.bf16.mxu0 %v1902
    %3299 = vmatpush1.bf16.msra.mxu0 %v1901
    %3300 = vmatprep.subr.bf16.mxu0 %v1906
    %3301 = vmatpush1.bf16.msra.mxu0 %v1905
    %3302 = vmatprep.subr.bf16.mxu0 %v1910
    %3303 = vmatpush1.bf16.msra.mxu0 %v1909
    %3304 = vmatprep.subr.bf16.mxu0 %v1914
    %3305 = vmatpush1.bf16.msra.mxu0 %v1913
    %3306 = vmatprep.subr.bf16.mxu0 %v1918
    %3307 = vmatpush1.bf16.msra.mxu0 %v1917
    %3308 = vmatprep.subr.bf16.mxu0 %v1922
    %3309 = vmatpush1.bf16.msra.mxu0 %v1921
    %3310 = vmatprep.subr.bf16.mxu0 %v1926
    %3311 = vmatpush1.bf16.msra.mxu0 %v1925
    %3312 = vmatprep.subr.bf16.mxu0 %v1930
    %3313 = vmatpush1.bf16.msra.mxu0 %v1929
    %3314 = vmatprep.subr.bf16.mxu0 %v1934
    %3315 = vmatpush1.bf16.msra.mxu0 %v1933
    %3316 = vmatprep.subr.bf16.mxu0 %v1938
    %3317 = vmatpush1.bf16.msra.mxu0 %v1937
    %3318 = vmatprep.subr.bf16.mxu0 %v1942
    %3319 = vmatpush1.bf16.msra.mxu0 %v1941
    %3320 = vmatprep.subr.bf16.mxu0 %v1946
    %3321 = vmatpush1.bf16.msra.mxu0 %v1945
    %3322 = vmatprep.mubr.bf16.mxu0 %v3181
    %3323 = vmatmul.mubr.bf16.gmra.mrb[0].mxu0 %v3289
    %v3324 = vpop.f32.mrb[0].mxu0
    %v3325 = vadd.f32 %v1676, %v3324
    %v3326 = vpop.f32.mrb[0].mxu0
    %v3327 = vadd.f32 %v1680, %v3326
    %v3328 = vpop.f32.mrb[0].mxu0
    %v3329 = vpop.f32.mrb[0].mxu0
    %3330 = vdwg.mxu0
    %3331 = vmatprep.subr.bf16.mxu0 %v1888
    %3332 = vmatpush1.bf16.msra.mxu0 %v1887
    %3333 = vmatprep.subr.bf16.mxu0 %v1892
    %3334 = vmatpush1.bf16.msra.mxu0 %v1891
    %3335 = vmatprep.subr.bf16.mxu0 %v1896
    %3336 = vmatpush1.bf16.msra.mxu0 %v1895
    %3337 = vmatprep.subr.bf16.mxu0 %v1900
    %3338 = vmatpush1.bf16.msra.mxu0 %v1899
    %3339 = vmatprep.subr.bf16.mxu0 %v1904
    %3340 = vmatpush1.bf16.msra.mxu0 %v1903
    %3341 = vmatprep.subr.bf16.mxu0 %v1908
    %3342 = vmatpush1.bf16.msra.mxu0 %v1907
    %3343 = vmatprep.subr.bf16.mxu0 %v1912
    %3344 = vmatpush1.bf16.msra.mxu0 %v1911
    %3345 = vmatprep.subr.bf16.mxu0 %v1916
    %3346 = vmatpush1.bf16.msra.mxu0 %v1915
    %3347 = vmatprep.subr.bf16.mxu0 %v1920
    %3348 = vmatpush1.bf16.msra.mxu0 %v1919
    %3349 = vmatprep.subr.bf16.mxu0 %v1924
    %3350 = vmatpush1.bf16.msra.mxu0 %v1923
    %3351 = vmatprep.subr.bf16.mxu0 %v1928
    %3352 = vmatpush1.bf16.msra.mxu0 %v1927
    %3353 = vmatprep.subr.bf16.mxu0 %v1932
    %3354 = vmatpush1.bf16.msra.mxu0 %v1931
    %3355 = vmatprep.subr.bf16.mxu0 %v1936
    %3356 = vmatpush1.bf16.msra.mxu0 %v1935
    %3357 = vmatprep.subr.bf16.mxu0 %v1940
    %3358 = vmatpush1.bf16.msra.mxu0 %v1939
    %3359 = vmatprep.subr.bf16.mxu0 %v1944
    %3360 = vmatpush1.bf16.msra.mxu0 %v1943
    %3361 = vmatprep.subr.bf16.mxu0 %v1948
    %3362 = vmatpush1.bf16.msra.mxu0 %v1947
    %3363 = vmatprep.mubr.bf16.mxu0 %v3181
    %3364 = vmatmul.mubr.bf16.gmra.mrb[0].mxu0 %v3289
    %v3365 = vpop.f32.mrb[0].mxu0
    %v3366 = vadd.f32 %v1684, %v3365
    %v3367 = vpop.f32.mrb[0].mxu0
    %v3368 = vadd.f32 %v1688, %v3367
    %v3369 = vpop.f32.mrb[0].mxu0
    %v3370 = vpop.f32.mrb[0].mxu0
    %3371 = vdwg.mxu0
    %v3372 = vxor.u32 %v3325, 2147483648
    %v3373 = vmul.f32 %v3372, 1.442695
    %v3374 = vpow.pop %v3373
    %v3375 = vadd.f32 %v3374, 1.0
    %v3376 = vrcp.pop %v3375
    %v3377 = vmul.f32 1.0, %v3376
    %v3378 = vxor.u32 %v3327, 2147483648
    %v3379 = vmul.f32 %v3378, 1.442695
    %v3380 = vpow.pop %v3379
    %v3381 = vadd.f32 %v3380, 1.0
    %v3382 = vrcp.pop %v3381
    %v3383 = vmul.f32 1.0, %v3382
    %v3384 = vtanh.pop %v3366
    %v3385 = vxor.u32 %v3368, 2147483648
    %v3386 = vmul.f32 %v3385, 1.442695
    %v3387 = vpow.pop %v3386
    %v3388 = vadd.f32 %v3387, 1.0
    %v3389 = vrcp.pop %v3388
    %v3390 = vmul.f32 1.0, %v3389
    %v3391 = vmul.f32 %v3383, %v2957
    %v3392 = vmul.f32 %v3377, %v3384
    %v3393 = vadd.f32 %v3391, %v3392
    %v3394 = vtanh.pop %v3393
    %v3395 = vmul.f32 %v3390, %v3394
    %v3396 = vpack.c.bf16 %v3180, %v3180
    %3397 = vmatprep.subr.bf16.mxu0 %v1259
    %3398 = vmatpush1.bf16.msra.mxu0 %v1258
    %3399 = vmatprep.subr.bf16.mxu0 %v1263
    %3400 = vmatpush1.bf16.msra.mxu0 %v1262
    %3401 = vmatprep.subr.bf16.mxu0 %v1267
    %3402 = vmatpush1.bf16.msra.mxu0 %v1266
    %3403 = vmatprep.subr.bf16.mxu0 %v1271
    %3404 = vmatpush1.bf16.msra.mxu0 %v1270
    %3405 = vmatprep.subr.bf16.mxu0 %v1275
    %3406 = vmatpush1.bf16.msra.mxu0 %v1274
    %3407 = vmatprep.subr.bf16.mxu0 %v1279
    %3408 = vmatpush1.bf16.msra.mxu0 %v1278
    %3409 = vmatprep.subr.bf16.mxu0 %v1283
    %3410 = vmatpush1.bf16.msra.mxu0 %v1282
    %3411 = vmatprep.subr.bf16.mxu0 %v1287
    %3412 = vmatpush1.bf16.msra.mxu0 %v1286
    %3413 = vmatprep.subr.bf16.mxu0 %v1291
    %3414 = vmatpush1.bf16.msra.mxu0 %v1290
    %3415 = vmatprep.subr.bf16.mxu0 %v1295
    %3416 = vmatpush1.bf16.msra.mxu0 %v1294
    %3417 = vmatprep.subr.bf16.mxu0 %v1299
    %3418 = vmatpush1.bf16.msra.mxu0 %v1298
    %3419 = vmatprep.subr.bf16.mxu0 %v1303
    %3420 = vmatpush1.bf16.msra.mxu0 %v1302
    %3421 = vmatprep.subr.bf16.mxu0 %v1307
    %3422 = vmatpush1.bf16.msra.mxu0 %v1306
    %3423 = vmatprep.subr.bf16.mxu0 %v1311
    %3424 = vmatpush1.bf16.msra.mxu0 %v1310
    %3425 = vmatprep.subr.bf16.mxu0 %v1315
    %3426 = vmatpush1.bf16.msra.mxu0 %v1314
    %3427 = vmatprep.subr.bf16.mxu0 %v1319
    %3428 = vmatpush1.bf16.msra.mxu0 %v1318
    %3429 = vmatprep.mubr.bf16.mxu0 %v3289
    %3430 = vmatmul.mubr.bf16.gmra.mrb[0].mxu0 %v3396
    %v3431 = vpop.f32.mrb[0].mxu0
    %v3432 = vadd.f32 %v1049, %v3431
    %v3433 = vpop.f32.mrb[0].mxu0
    %v3434 = vadd.f32 %v1053, %v3433
    %v3435 = vpop.f32.mrb[0].mxu0
    %v3436 = vpop.f32.mrb[0].mxu0
    %3437 = vdwg.mxu0
    %3438 = vmatprep.subr.bf16.mxu0 %v1261
    %3439 = vmatpush1.bf16.msra.mxu0 %v1260
    %3440 = vmatprep.subr.bf16.mxu0 %v1265
    %3441 = vmatpush1.bf16.msra.mxu0 %v1264
    %3442 = vmatprep.subr.bf16.mxu0 %v1269
    %3443 = vmatpush1.bf16.msra.mxu0 %v1268
    %3444 = vmatprep.subr.bf16.mxu0 %v1273
    %3445 = vmatpush1.bf16.msra.mxu0 %v1272
    %3446 = vmatprep.subr.bf16.mxu0 %v1277
    %3447 = vmatpush1.bf16.msra.mxu0 %v1276
    %3448 = vmatprep.subr.bf16.mxu0 %v1281
    %3449 = vmatpush1.bf16.msra.mxu0 %v1280
    %3450 = vmatprep.subr.bf16.mxu0 %v1285
    %3451 = vmatpush1.bf16.msra.mxu0 %v1284
    %3452 = vmatprep.subr.bf16.mxu0 %v1289
    %3453 = vmatpush1.bf16.msra.mxu0 %v1288
    %3454 = vmatprep.subr.bf16.mxu0 %v1293
    %3455 = vmatpush1.bf16.msra.mxu0 %v1292
    %3456 = vmatprep.subr.bf16.mxu0 %v1297
    %3457 = vmatpush1.bf16.msra.mxu0 %v1296
    %3458 = vmatprep.subr.bf16.mxu0 %v1301
    %3459 = vmatpush1.bf16.msra.mxu0 %v1300
    %3460 = vmatprep.subr.bf16.mxu0 %v1305
    %3461 = vmatpush1.bf16.msra.mxu0 %v1304
    %3462 = vmatprep.subr.bf16.mxu0 %v1309
    %3463 = vmatpush1.bf16.msra.mxu0 %v1308
    %3464 = vmatprep.subr.bf16.mxu0 %v1313
    %3465 = vmatpush1.bf16.msra.mxu0 %v1312
    %3466 = vmatprep.subr.bf16.mxu0 %v1317
    %3467 = vmatpush1.bf16.msra.mxu0 %v1316
    %3468 = vmatprep.subr.bf16.mxu0 %v1321
    %3469 = vmatpush1.bf16.msra.mxu0 %v1320
    %3470 = vmatprep.mubr.bf16.mxu0 %v3289
    %3471 = vmatmul.mubr.bf16.gmra.mrb[0].mxu0 %v3396
    %v3472 = vpop.f32.mrb[0].mxu0
    %v3473 = vadd.f32 %v1057, %v3472
    %v3474 = vpop.f32.mrb[0].mxu0
    %v3475 = vadd.f32 %v1061, %v3474
    %v3476 = vpop.f32.mrb[0].mxu0
    %v3477 = vpop.f32.mrb[0].mxu0
    %3478 = vdwg.mxu0
    %v3479 = vxor.u32 %v3432, 2147483648
    %v3480 = vmul.f32 %v3479, 1.442695
    %v3481 = vpow.pop %v3480
    %v3482 = vadd.f32 %v3481, 1.0
    %v3483 = vrcp.pop %v3482
    %v3484 = vmul.f32 1.0, %v3483
    %v3485 = vxor.u32 %v3434, 2147483648
    %v3486 = vmul.f32 %v3485, 1.442695
    %v3487 = vpow.pop %v3486
    %v3488 = vadd.f32 %v3487, 1.0
    %v3489 = vrcp.pop %v3488
    %v3490 = vmul.f32 1.0, %v3489
    %v3491 = vtanh.pop %v3473
    %v3492 = vxor.u32 %v3475, 2147483648
    %v3493 = vmul.f32 %v3492, 1.442695
    %v3494 = vpow.pop %v3493
    %v3495 = vadd.f32 %v3494, 1.0
    %v3496 = vrcp.pop %v3495
    %v3497 = vmul.f32 1.0, %v3496
    %v3498 = vmul.f32 %v3490, %v3064
    %v3499 = vmul.f32 %v3484, %v3491
    %v3500 = vadd.f32 %v3498, %v3499
    %v3501 = vtanh.pop %v3500
    %v3502 = vmul.f32 %v3497, %v3501
    %v3503 = vld [vmem:[#allocation2 + $0x80] sm:$0xff]
    %v3504 = vld [vmem:[#allocation2 + $0x88] sm:$0xff]
    %v3505 = vld [vmem:[#allocation2 + $0x90] sm:$0xff]
    %v3506 = vld [vmem:[#allocation2 + $0x98] sm:$0xff]
    %3507 = vmatprep.subr.bf16.mxu0 %v805
    %3508 = vmatpush1.bf16.msra.mxu0 %v804
    %3509 = vmatprep.subr.bf16.mxu0 %v809
    %3510 = vmatpush1.bf16.msra.mxu0 %v808
    %3511 = vmatprep.subr.bf16.mxu0 %v813
    %3512 = vmatpush1.bf16.msra.mxu0 %v812
    %3513 = vmatprep.subr.bf16.mxu0 %v817
    %3514 = vmatpush1.bf16.msra.mxu0 %v816
    %3515 = vmatprep.subr.bf16.mxu0 %v821
    %3516 = vmatpush1.bf16.msra.mxu0 %v820
    %3517 = vmatprep.subr.bf16.mxu0 %v825
    %3518 = vmatpush1.bf16.msra.mxu0 %v824
    %3519 = vmatprep.subr.bf16.mxu0 %v829
    %3520 = vmatpush1.bf16.msra.mxu0 %v828
    %3521 = vmatprep.subr.bf16.mxu0 %v833
    %3522 = vmatpush1.bf16.msra.mxu0 %v832
    %3523 = vmatprep.subr.bf16.mxu0 0
    %3524 = vmatpush1.bf16.msra.mxu0 0
    %3525 = vmatprep.subr.bf16.mxu0 0
    %3526 = vmatpush1.bf16.msra.mxu0 0
    %3527 = vmatprep.subr.bf16.mxu0 0
    %3528 = vmatpush1.bf16.msra.mxu0 0
    %3529 = vmatprep.subr.bf16.mxu0 0
    %3530 = vmatpush1.bf16.msra.mxu0 0
    %3531 = vmatprep.subr.bf16.mxu0 0
    %3532 = vmatpush1.bf16.msra.mxu0 0
    %3533 = vmatprep.subr.bf16.mxu0 0
    %3534 = vmatpush1.bf16.msra.mxu0 0
    %3535 = vmatprep.subr.bf16.mxu0 0
    %3536 = vmatpush1.bf16.msra.mxu0 0
    %3537 = vmatprep.subr.bf16.mxu0 0
    %3538 = vmatpush1.bf16.msra.mxu0 0
    %3539 = vmatprep.mubr.bf16.mxu0 0
    %3540 = vmatmul.mubr.bf16.gmra.mrb[0].mxu0 %v3396
    %v3541 = vpop.f32.mrb[0].mxu0
    %v3542 = vadd.f32 0.0, %v3541
    %v3543 = vpop.f32.mrb[0].mxu0
    %v3544 = vadd.f32 0.0, %v3543
    %v3545 = vpop.f32.mrb[0].mxu0
    %v3546 = vpop.f32.mrb[0].mxu0
    %3547 = vdwg.mxu0
    %3548 = vmatprep.subr.bf16.mxu0 %v807
    %3549 = vmatpush1.bf16.msra.mxu0 %v806
    %3550 = vmatprep.subr.bf16.mxu0 %v811
    %3551 = vmatpush1.bf16.msra.mxu0 %v810
    %3552 = vmatprep.subr.bf16.mxu0 %v815
    %3553 = vmatpush1.bf16.msra.mxu0 %v814
    %3554 = vmatprep.subr.bf16.mxu0 %v819
    %3555 = vmatpush1.bf16.msra.mxu0 %v818
    %3556 = vmatprep.subr.bf16.mxu0 %v823
    %3557 = vmatpush1.bf16.msra.mxu0 %v822
    %3558 = vmatprep.subr.bf16.mxu0 %v827
    %3559 = vmatpush1.bf16.msra.mxu0 %v826
    %3560 = vmatprep.subr.bf16.mxu0 %v831
    %3561 = vmatpush1.bf16.msra.mxu0 %v830
    %3562 = vmatprep.subr.bf16.mxu0 %v835
    %3563 = vmatpush1.bf16.msra.mxu0 %v834
    %3564 = vmatprep.subr.bf16.mxu0 0
    %3565 = vmatpush1.bf16.msra.mxu0 0
    %3566 = vmatprep.subr.bf16.mxu0 0
    %3567 = vmatpush1.bf16.msra.mxu0 0
    %3568 = vmatprep.subr.bf16.mxu0 0
    %3569 = vmatpush1.bf16.msra.mxu0 0
    %3570 = vmatprep.subr.bf16.mxu0 0
    %3571 = vmatpush1.bf16.msra.mxu0 0
    %3572 = vmatprep.subr.bf16.mxu0 0
    %3573 = vmatpush1.bf16.msra.mxu0 0
    %3574 = vmatprep.subr.bf16.mxu0 0
    %3575 = vmatpush1.bf16.msra.mxu0 0
    %3576 = vmatprep.subr.bf16.mxu0 0
    %3577 = vmatpush1.bf16.msra.mxu0 0
    %3578 = vmatprep.subr.bf16.mxu0 0
    %3579 = vmatpush1.bf16.msra.mxu0 0
    %3580 = vmatprep.mubr.bf16.mxu0 0
    %3581 = vmatmul.mubr.bf16.gmra.mrb[0].mxu0 %v3396
    %v3582 = vpop.f32.mrb[0].mxu0
    %v3583 = vadd.f32 0.0, %v3582
    %v3584 = vpop.f32.mrb[0].mxu0
    %v3585 = vadd.f32 0.0, %v3584
    %v3586 = vpop.f32.mrb[0].mxu0
    %v3587 = vpop.f32.mrb[0].mxu0
    %3588 = vdwg.mxu0
    %v3589 = vadd.f32 %v3503, %v3542
    %v3590 = vadd.f32 %v3504, %v3544
    %v3591 = vadd.f32 %v3505, %v3583
    %v3592 = vadd.f32 %v3506, %v3585
    %v3593 = vxor.u32 %v3589, 2147483648
    %v3594 = vmul.f32 %v3593, 1.442695
    %v3595 = vpow.pop %v3594
    %v3596 = vadd.f32 %v3595, 1.0
    %v3597 = vrcp.pop %v3596
    %v3598 = vmul.f32 1.0, %v3597
    %v3599 = vxor.u32 %v3590, 2147483648
    %v3600 = vmul.f32 %v3599, 1.442695
    %v3601 = vpow.pop %v3600
    %v3602 = vadd.f32 %v3601, 1.0
    %v3603 = vrcp.pop %v3602
    %v3604 = vmul.f32 1.0, %v3603
    %v3605 = vtanh.pop %v3591
    %v3606 = vxor.u32 %v3592, 2147483648
    %v3607 = vmul.f32 %v3606, 1.442695
    %v3608 = vpow.pop %v3607
    %v3609 = vadd.f32 %v3608, 1.0
    %v3610 = vrcp.pop %v3609
    %v3611 = vmul.f32 1.0, %v3610
    %v3612 = vmul.f32 %v3604, %v3178
    %v3613 = vmul.f32 %v3598, %v3605
    %v3614 = vadd.f32 %v3612, %v3613
    %v3615 = vtanh.pop %v3614
    %v3616 = vmul.f32 %v3611, %v3615
    %v3617 = vpack.c.bf16 %v3395, %v3395
    %v3618 = vpack.c.bf16 %v3288, %v3288
    %3619 = vmatprep.subr.bf16.mxu0 %v2620
    %3620 = vmatpush1.bf16.msra.mxu0 %v2619
    %3621 = vmatprep.subr.bf16.mxu0 %v2624
    %3622 = vmatpush1.bf16.msra.mxu0 %v2623
    %3623 = vmatprep.subr.bf16.mxu0 %v2628
    %3624 = vmatpush1.bf16.msra.mxu0 %v2627
    %3625 = vmatprep.subr.bf16.mxu0 %v2632
    %3626 = vmatpush1.bf16.msra.mxu0 %v2631
    %3627 = vmatprep.subr.bf16.mxu0 %v2636
    %3628 = vmatpush1.bf16.msra.mxu0 %v2635
    %3629 = vmatprep.subr.bf16.mxu0 %v2640
    %3630 = vmatpush1.bf16.msra.mxu0 %v2639
    %3631 = vmatprep.subr.bf16.mxu0 %v2644
    %3632 = vmatpush1.bf16.msra.mxu0 %v2643
    %3633 = vmatprep.subr.bf16.mxu0 %v2648
    %3634 = vmatpush1.bf16.msra.mxu0 %v2647
    %3635 = vmatprep.subr.bf16.mxu0 %v2652
    %3636 = vmatpush1.bf16.msra.mxu0 %v2651
    %3637 = vmatprep.subr.bf16.mxu0 %v2656
    %3638 = vmatpush1.bf16.msra.mxu0 %v2655
    %3639 = vmatprep.subr.bf16.mxu0 %v2660
    %3640 = vmatpush1.bf16.msra.mxu0 %v2659
    %3641 = vmatprep.subr.bf16.mxu0 %v2664
    %3642 = vmatpush1.bf16.msra.mxu0 %v2663
    %3643 = vmatprep.subr.bf16.mxu0 %v2668
    %3644 = vmatpush1.bf16.msra.mxu0 %v2667
    %3645 = vmatprep.subr.bf16.mxu0 %v2672
    %3646 = vmatpush1.bf16.msra.mxu0 %v2671
    %3647 = vmatprep.subr.bf16.mxu0 %v2676
    %3648 = vmatpush1.bf16.msra.mxu0 %v2675
    %3649 = vmatprep.subr.bf16.mxu0 %v2680
    %3650 = vmatpush1.bf16.msra.mxu0 %v2679
    %3651 = vmatprep.mubr.bf16.mxu0 %v3618
    %3652 = vmatmul.mubr.bf16.gmra.mrb[0].mxu0 %v3617
    %v3653 = vpop.f32.mrb[0].mxu0
    %v3654 = vadd.f32 %v2410, %v3653
    %v3655 = vpop.f32.mrb[0].mxu0
    %v3656 = vadd.f32 %v2414, %v3655
    %v3657 = vpop.f32.mrb[0].mxu0
    %v3658 = vpop.f32.mrb[0].mxu0
    %3659 = vdwg.mxu0
    %3660 = vmatprep.subr.bf16.mxu0 %v2622
    %3661 = vmatpush1.bf16.msra.mxu0 %v2621
    %3662 = vmatprep.subr.bf16.mxu0 %v2626
    %3663 = vmatpush1.bf16.msra.mxu0 %v2625
    %3664 = vmatprep.subr.bf16.mxu0 %v2630
    %3665 = vmatpush1.bf16.msra.mxu0 %v2629
    %3666 = vmatprep.subr.bf16.mxu0 %v2634
    %3667 = vmatpush1.bf16.msra.mxu0 %v2633
    %3668 = vmatprep.subr.bf16.mxu0 %v2638
    %3669 = vmatpush1.bf16.msra.mxu0 %v2637
    %3670 = vmatprep.subr.bf16.mxu0 %v2642
    %3671 = vmatpush1.bf16.msra.mxu0 %v2641
    %3672 = vmatprep.subr.bf16.mxu0 %v2646
    %3673 = vmatpush1.bf16.msra.mxu0 %v2645
    %3674 = vmatprep.subr.bf16.mxu0 %v2650
    %3675 = vmatpush1.bf16.msra.mxu0 %v2649
    %3676 = vmatprep.subr.bf16.mxu0 %v2654
    %3677 = vmatpush1.bf16.msra.mxu0 %v2653
    %3678 = vmatprep.subr.bf16.mxu0 %v2658
    %3679 = vmatpush1.bf16.msra.mxu0 %v2657
    %3680 = vmatprep.subr.bf16.mxu0 %v2662
    %3681 = vmatpush1.bf16.msra.mxu0 %v2661
    %3682 = vmatprep.subr.bf16.mxu0 %v2666
    %3683 = vmatpush1.bf16.msra.mxu0 %v2665
    %3684 = vmatprep.subr.bf16.mxu0 %v2670
    %3685 = vmatpush1.bf16.msra.mxu0 %v2669
    %3686 = vmatprep.subr.bf16.mxu0 %v2674
    %3687 = vmatpush1.bf16.msra.mxu0 %v2673
    %3688 = vmatprep.subr.bf16.mxu0 %v2678
    %3689 = vmatpush1.bf16.msra.mxu0 %v2677
    %3690 = vmatprep.subr.bf16.mxu0 %v2682
    %3691 = vmatpush1.bf16.msra.mxu0 %v2681
    %3692 = vmatprep.mubr.bf16.mxu0 %v3618
    %3693 = vmatmul.mubr.bf16.gmra.mrb[0].mxu0 %v3617
    %v3694 = vpop.f32.mrb[0].mxu0
    %v3695 = vadd.f32 %v2418, %v3694
    %v3696 = vpop.f32.mrb[0].mxu0
    %v3697 = vadd.f32 %v2422, %v3696
    %v3698 = vpop.f32.mrb[0].mxu0
    %v3699 = vpop.f32.mrb[0].mxu0
    %3700 = vdwg.mxu0
    %v3701 = vxor.u32 %v3654, 2147483648
    %v3702 = vmul.f32 %v3701, 1.442695
    %v3703 = vpow.pop %v3702
    %v3704 = vadd.f32 %v3703, 1.0
    %v3705 = vrcp.pop %v3704
    %v3706 = vmul.f32 1.0, %v3705
    %v3707 = vxor.u32 %v3656, 2147483648
    %v3708 = vmul.f32 %v3707, 1.442695
    %v3709 = vpow.pop %v3708
    %v3710 = vadd.f32 %v3709, 1.0
    %v3711 = vrcp.pop %v3710
    %v3712 = vmul.f32 1.0, %v3711
    %v3713 = vtanh.pop %v3695
    %v3714 = vxor.u32 %v3697, 2147483648
    %v3715 = vmul.f32 %v3714, 1.442695
    %v3716 = vpow.pop %v3715
    %v3717 = vadd.f32 %v3716, 1.0
    %v3718 = vrcp.pop %v3717
    %v3719 = vmul.f32 1.0, %v3718
    %v3720 = vmul.f32 %v3712, %v3286
    %v3721 = vmul.f32 %v3706, %v3713
    %v3722 = vadd.f32 %v3720, %v3721
    %v3723 = vtanh.pop %v3722
    %v3724 = vmul.f32 %v3719, %v3723
    %v3725 = vpack.c.bf16 %v3502, %v3502
    %3726 = vmatprep.subr.bf16.mxu0 %v1886
    %3727 = vmatpush1.bf16.msra.mxu0 %v1885
    %3728 = vmatprep.subr.bf16.mxu0 %v1890
    %3729 = vmatpush1.bf16.msra.mxu0 %v1889
    %3730 = vmatprep.subr.bf16.mxu0 %v1894
    %3731 = vmatpush1.bf16.msra.mxu0 %v1893
    %3732 = vmatprep.subr.bf16.mxu0 %v1898
    %3733 = vmatpush1.bf16.msra.mxu0 %v1897
    %3734 = vmatprep.subr.bf16.mxu0 %v1902
    %3735 = vmatpush1.bf16.msra.mxu0 %v1901
    %3736 = vmatprep.subr.bf16.mxu0 %v1906
    %3737 = vmatpush1.bf16.msra.mxu0 %v1905
    %3738 = vmatprep.subr.bf16.mxu0 %v1910
    %3739 = vmatpush1.bf16.msra.mxu0 %v1909
    %3740 = vmatprep.subr.bf16.mxu0 %v1914
    %3741 = vmatpush1.bf16.msra.mxu0 %v1913
    %3742 = vmatprep.subr.bf16.mxu0 %v1918
    %3743 = vmatpush1.bf16.msra.mxu0 %v1917
    %3744 = vmatprep.subr.bf16.mxu0 %v1922
    %3745 = vmatpush1.bf16.msra.mxu0 %v1921
    %3746 = vmatprep.subr.bf16.mxu0 %v1926
    %3747 = vmatpush1.bf16.msra.mxu0 %v1925
    %3748 = vmatprep.subr.bf16.mxu0 %v1930
    %3749 = vmatpush1.bf16.msra.mxu0 %v1929
    %3750 = vmatprep.subr.bf16.mxu0 %v1934
    %3751 = vmatpush1.bf16.msra.mxu0 %v1933
    %3752 = vmatprep.subr.bf16.mxu0 %v1938
    %3753 = vmatpush1.bf16.msra.mxu0 %v1937
    %3754 = vmatprep.subr.bf16.mxu0 %v1942
    %3755 = vmatpush1.bf16.msra.mxu0 %v1941
    %3756 = vmatprep.subr.bf16.mxu0 %v1946
    %3757 = vmatpush1.bf16.msra.mxu0 %v1945
    %3758 = vmatprep.mubr.bf16.mxu0 %v3617
    %3759 = vmatmul.mubr.bf16.gmra.mrb[0].mxu0 %v3725
    %v3760 = vpop.f32.mrb[0].mxu0
    %v3761 = vadd.f32 %v1676, %v3760
    %v3762 = vpop.f32.mrb[0].mxu0
    %v3763 = vadd.f32 %v1680, %v3762
    %v3764 = vpop.f32.mrb[0].mxu0
    %v3765 = vpop.f32.mrb[0].mxu0
    %3766 = vdwg.mxu0
    %3767 = vmatprep.subr.bf16.mxu0 %v1888
    %3768 = vmatpush1.bf16.msra.mxu0 %v1887
    %3769 = vmatprep.subr.bf16.mxu0 %v1892
    %3770 = vmatpush1.bf16.msra.mxu0 %v1891
    %3771 = vmatprep.subr.bf16.mxu0 %v1896
    %3772 = vmatpush1.bf16.msra.mxu0 %v1895
    %3773 = vmatprep.subr.bf16.mxu0 %v1900
    %3774 = vmatpush1.bf16.msra.mxu0 %v1899
    %3775 = vmatprep.subr.bf16.mxu0 %v1904
    %3776 = vmatpush1.bf16.msra.mxu0 %v1903
    %3777 = vmatprep.subr.bf16.mxu0 %v1908
    %3778 = vmatpush1.bf16.msra.mxu0 %v1907
    %3779 = vmatprep.subr.bf16.mxu0 %v1912
    %3780 = vmatpush1.bf16.msra.mxu0 %v1911
    %3781 = vmatprep.subr.bf16.mxu0 %v1916
    %3782 = vmatpush1.bf16.msra.mxu0 %v1915
    %3783 = vmatprep.subr.bf16.mxu0 %v1920
    %3784 = vmatpush1.bf16.msra.mxu0 %v1919
    %3785 = vmatprep.subr.bf16.mxu0 %v1924
    %3786 = vmatpush1.bf16.msra.mxu0 %v1923
    %3787 = vmatprep.subr.bf16.mxu0 %v1928
    %3788 = vmatpush1.bf16.msra.mxu0 %v1927
    %3789 = vmatprep.subr.bf16.mxu0 %v1932
    %3790 = vmatpush1.bf16.msra.mxu0 %v1931
    %3791 = vmatprep.subr.bf16.mxu0 %v1936
    %3792 = vmatpush1.bf16.msra.mxu0 %v1935
    %3793 = vmatprep.subr.bf16.mxu0 %v1940
    %3794 = vmatpush1.bf16.msra.mxu0 %v1939
    %3795 = vmatprep.subr.bf16.mxu0 %v1944
    %3796 = vmatpush1.bf16.msra.mxu0 %v1943
    %3797 = vmatprep.subr.bf16.mxu0 %v1948
    %3798 = vmatpush1.bf16.msra.mxu0 %v1947
    %3799 = vmatprep.mubr.bf16.mxu0 %v3617
    %3800 = vmatmul.mubr.bf16.gmra.mrb[0].mxu0 %v3725
    %v3801 = vpop.f32.mrb[0].mxu0
    %v3802 = vadd.f32 %v1684, %v3801
    %v3803 = vpop.f32.mrb[0].mxu0
    %v3804 = vadd.f32 %v1688, %v3803
    %v3805 = vpop.f32.mrb[0].mxu0
    %v3806 = vpop.f32.mrb[0].mxu0
    %3807 = vdwg.mxu0
    %v3808 = vxor.u32 %v3761, 2147483648
    %v3809 = vmul.f32 %v3808, 1.442695
    %v3810 = vpow.pop %v3809
    %v3811 = vadd.f32 %v3810, 1.0
    %v3812 = vrcp.pop %v3811
    %v3813 = vmul.f32 1.0, %v3812
    %v3814 = vxor.u32 %v3763, 2147483648
    %v3815 = vmul.f32 %v3814, 1.442695
    %v3816 = vpow.pop %v3815
    %v3817 = vadd.f32 %v3816, 1.0
    %v3818 = vrcp.pop %v3817
    %v3819 = vmul.f32 1.0, %v3818
    %v3820 = vtanh.pop %v3802
    %v3821 = vxor.u32 %v3804, 2147483648
    %v3822 = vmul.f32 %v3821, 1.442695
    %v3823 = vpow.pop %v3822
    %v3824 = vadd.f32 %v3823, 1.0
    %v3825 = vrcp.pop %v3824
    %v3826 = vmul.f32 1.0, %v3825
    %v3827 = vmul.f32 %v3819, %v3393
    %v3828 = vmul.f32 %v3813, %v3820
    %v3829 = vadd.f32 %v3827, %v3828
    %v3830 = vtanh.pop %v3829
    %v3831 = vmul.f32 %v3826, %v3830
    %v3832 = vpack.c.bf16 %v3616, %v3616
    %3833 = vmatprep.subr.bf16.mxu0 %v1259
    %3834 = vmatpush1.bf16.msra.mxu0 %v1258
    %3835 = vmatprep.subr.bf16.mxu0 %v1263
    %3836 = vmatpush1.bf16.msra.mxu0 %v1262
    %3837 = vmatprep.subr.bf16.mxu0 %v1267
    %3838 = vmatpush1.bf16.msra.mxu0 %v1266
    %3839 = vmatprep.subr.bf16.mxu0 %v1271
    %3840 = vmatpush1.bf16.msra.mxu0 %v1270
    %3841 = vmatprep.subr.bf16.mxu0 %v1275
    %3842 = vmatpush1.bf16.msra.mxu0 %v1274
    %3843 = vmatprep.subr.bf16.mxu0 %v1279
    %3844 = vmatpush1.bf16.msra.mxu0 %v1278
    %3845 = vmatprep.subr.bf16.mxu0 %v1283
    %3846 = vmatpush1.bf16.msra.mxu0 %v1282
    %3847 = vmatprep.subr.bf16.mxu0 %v1287
    %3848 = vmatpush1.bf16.msra.mxu0 %v1286
    %3849 = vmatprep.subr.bf16.mxu0 %v1291
    %3850 = vmatpush1.bf16.msra.mxu0 %v1290
    %3851 = vmatprep.subr.bf16.mxu0 %v1295
    %3852 = vmatpush1.bf16.msra.mxu0 %v1294
    %3853 = vmatprep.subr.bf16.mxu0 %v1299
    %3854 = vmatpush1.bf16.msra.mxu0 %v1298
    %3855 = vmatprep.subr.bf16.mxu0 %v1303
    %3856 = vmatpush1.bf16.msra.mxu0 %v1302
    %3857 = vmatprep.subr.bf16.mxu0 %v1307
    %3858 = vmatpush1.bf16.msra.mxu0 %v1306
    %3859 = vmatprep.subr.bf16.mxu0 %v1311
    %3860 = vmatpush1.bf16.msra.mxu0 %v1310
    %3861 = vmatprep.subr.bf16.mxu0 %v1315
    %3862 = vmatpush1.bf16.msra.mxu0 %v1314
    %3863 = vmatprep.subr.bf16.mxu0 %v1319
    %3864 = vmatpush1.bf16.msra.mxu0 %v1318
    %3865 = vmatprep.mubr.bf16.mxu0 %v3725
    %3866 = vmatmul.mubr.bf16.gmra.mrb[0].mxu0 %v3832
    %v3867 = vpop.f32.mrb[0].mxu0
    %v3868 = vadd.f32 %v1049, %v3867
    %v3869 = vpop.f32.mrb[0].mxu0
    %v3870 = vadd.f32 %v1053, %v3869
    %v3871 = vpop.f32.mrb[0].mxu0
    %v3872 = vpop.f32.mrb[0].mxu0
    %3873 = vdwg.mxu0
    %3874 = vmatprep.subr.bf16.mxu0 %v1261
    %3875 = vmatpush1.bf16.msra.mxu0 %v1260
    %3876 = vmatprep.subr.bf16.mxu0 %v1265
    %3877 = vmatpush1.bf16.msra.mxu0 %v1264
    %3878 = vmatprep.subr.bf16.mxu0 %v1269
    %3879 = vmatpush1.bf16.msra.mxu0 %v1268
    %3880 = vmatprep.subr.bf16.mxu0 %v1273
    %3881 = vmatpush1.bf16.msra.mxu0 %v1272
    %3882 = vmatprep.subr.bf16.mxu0 %v1277
    %3883 = vmatpush1.bf16.msra.mxu0 %v1276
    %3884 = vmatprep.subr.bf16.mxu0 %v1281
    %3885 = vmatpush1.bf16.msra.mxu0 %v1280
    %3886 = vmatprep.subr.bf16.mxu0 %v1285
    %3887 = vmatpush1.bf16.msra.mxu0 %v1284
    %3888 = vmatprep.subr.bf16.mxu0 %v1289
    %3889 = vmatpush1.bf16.msra.mxu0 %v1288
    %3890 = vmatprep.subr.bf16.mxu0 %v1293
    %3891 = vmatpush1.bf16.msra.mxu0 %v1292
    %3892 = vmatprep.subr.bf16.mxu0 %v1297
    %3893 = vmatpush1.bf16.msra.mxu0 %v1296
    %3894 = vmatprep.subr.bf16.mxu0 %v1301
    %3895 = vmatpush1.bf16.msra.mxu0 %v1300
    %3896 = vmatprep.subr.bf16.mxu0 %v1305
    %3897 = vmatpush1.bf16.msra.mxu0 %v1304
    %3898 = vmatprep.subr.bf16.mxu0 %v1309
    %3899 = vmatpush1.bf16.msra.mxu0 %v1308
    %3900 = vmatprep.subr.bf16.mxu0 %v1313
    %3901 = vmatpush1.bf16.msra.mxu0 %v1312
    %3902 = vmatprep.subr.bf16.mxu0 %v1317
    %3903 = vmatpush1.bf16.msra.mxu0 %v1316
    %3904 = vmatprep.subr.bf16.mxu0 %v1321
    %3905 = vmatpush1.bf16.msra.mxu0 %v1320
    %3906 = vmatprep.mubr.bf16.mxu0 %v3725
    %3907 = vmatmul.mubr.bf16.gmra.mrb[0].mxu0 %v3832
    %v3908 = vpop.f32.mrb[0].mxu0
    %v3909 = vadd.f32 %v1057, %v3908
    %v3910 = vpop.f32.mrb[0].mxu0
    %v3911 = vadd.f32 %v1061, %v3910
    %v3912 = vpop.f32.mrb[0].mxu0
    %v3913 = vpop.f32.mrb[0].mxu0
    %3914 = vdwg.mxu0
    %v3915 = vxor.u32 %v3868, 2147483648
    %v3916 = vmul.f32 %v3915, 1.442695
    %v3917 = vpow.pop %v3916
    %v3918 = vadd.f32 %v3917, 1.0
    %v3919 = vrcp.pop %v3918
    %v3920 = vmul.f32 1.0, %v3919
    %v3921 = vxor.u32 %v3870, 2147483648
    %v3922 = vmul.f32 %v3921, 1.442695
    %v3923 = vpow.pop %v3922
    %v3924 = vadd.f32 %v3923, 1.0
    %v3925 = vrcp.pop %v3924
    %v3926 = vmul.f32 1.0, %v3925
    %v3927 = vtanh.pop %v3909
    %v3928 = vxor.u32 %v3911, 2147483648
    %v3929 = vmul.f32 %v3928, 1.442695
    %v3930 = vpow.pop %v3929
    %v3931 = vadd.f32 %v3930, 1.0
    %v3932 = vrcp.pop %v3931
    %v3933 = vmul.f32 1.0, %v3932
    %v3934 = vmul.f32 %v3926, %v3500
    %v3935 = vmul.f32 %v3920, %v3927
    %v3936 = vadd.f32 %v3934, %v3935
    %v3937 = vtanh.pop %v3936
    %v3938 = vmul.f32 %v3933, %v3937
    %v3939 = vld [vmem:[#allocation2 + $0xa0] sm:$0xff]
    %v3940 = vld [vmem:[#allocation2 + $0xa8] sm:$0xff]
    %v3941 = vld [vmem:[#allocation2 + $0xb0] sm:$0xff]
    %v3942 = vld [vmem:[#allocation2 + $0xb8] sm:$0xff]
    %3943 = vmatprep.subr.bf16.mxu0 %v805
    %3944 = vmatpush1.bf16.msra.mxu0 %v804
    %3945 = vmatprep.subr.bf16.mxu0 %v809
    %3946 = vmatpush1.bf16.msra.mxu0 %v808
    %3947 = vmatprep.subr.bf16.mxu0 %v813
    %3948 = vmatpush1.bf16.msra.mxu0 %v812
    %3949 = vmatprep.subr.bf16.mxu0 %v817
    %3950 = vmatpush1.bf16.msra.mxu0 %v816
    %3951 = vmatprep.subr.bf16.mxu0 %v821
    %3952 = vmatpush1.bf16.msra.mxu0 %v820
    %3953 = vmatprep.subr.bf16.mxu0 %v825
    %3954 = vmatpush1.bf16.msra.mxu0 %v824
    %3955 = vmatprep.subr.bf16.mxu0 %v829
    %3956 = vmatpush1.bf16.msra.mxu0 %v828
    %3957 = vmatprep.subr.bf16.mxu0 %v833
    %3958 = vmatpush1.bf16.msra.mxu0 %v832
    %3959 = vmatprep.subr.bf16.mxu0 0
    %3960 = vmatpush1.bf16.msra.mxu0 0
    %3961 = vmatprep.subr.bf16.mxu0 0
    %3962 = vmatpush1.bf16.msra.mxu0 0
    %3963 = vmatprep.subr.bf16.mxu0 0
    %3964 = vmatpush1.bf16.msra.mxu0 0
    %3965 = vmatprep.subr.bf16.mxu0 0
    %3966 = vmatpush1.bf16.msra.mxu0 0
    %3967 = vmatprep.subr.bf16.mxu0 0
    %3968 = vmatpush1.bf16.msra.mxu0 0
    %3969 = vmatprep.subr.bf16.mxu0 0
    %3970 = vmatpush1.bf16.msra.mxu0 0
    %3971 = vmatprep.subr.bf16.mxu0 0
    %3972 = vmatpush1.bf16.msra.mxu0 0
    %3973 = vmatprep.subr.bf16.mxu0 0
    %3974 = vmatpush1.bf16.msra.mxu0 0
    %3975 = vmatprep.mubr.bf16.mxu0 0
    %3976 = vmatmul.mubr.bf16.gmra.mrb[0].mxu0 %v3832
    %v3977 = vpop.f32.mrb[0].mxu0
    %v3978 = vadd.f32 0.0, %v3977
    %v3979 = vpop.f32.mrb[0].mxu0
    %v3980 = vadd.f32 0.0, %v3979
    %v3981 = vpop.f32.mrb[0].mxu0
    %v3982 = vpop.f32.mrb[0].mxu0
    %3983 = vdwg.mxu0
    %3984 = vmatprep.subr.bf16.mxu0 %v807
    %3985 = vmatpush1.bf16.msra.mxu0 %v806
    %3986 = vmatprep.subr.bf16.mxu0 %v811
    %3987 = vmatpush1.bf16.msra.mxu0 %v810
    %3988 = vmatprep.subr.bf16.mxu0 %v815
    %3989 = vmatpush1.bf16.msra.mxu0 %v814
    %3990 = vmatprep.subr.bf16.mxu0 %v819
    %3991 = vmatpush1.bf16.msra.mxu0 %v818
    %3992 = vmatprep.subr.bf16.mxu0 %v823
    %3993 = vmatpush1.bf16.msra.mxu0 %v822
    %3994 = vmatprep.subr.bf16.mxu0 %v827
    %3995 = vmatpush1.bf16.msra.mxu0 %v826
    %3996 = vmatprep.subr.bf16.mxu0 %v831
    %3997 = vmatpush1.bf16.msra.mxu0 %v830
    %3998 = vmatprep.subr.bf16.mxu0 %v835
    %3999 = vmatpush1.bf16.msra.mxu0 %v834
    %4000 = vmatprep.subr.bf16.mxu0 0
    %4001 = vmatpush1.bf16.msra.mxu0 0
    %4002 = vmatprep.subr.bf16.mxu0 0
    %4003 = vmatpush1.bf16.msra.mxu0 0
    %4004 = vmatprep.subr.bf16.mxu0 0
    %4005 = vmatpush1.bf16.msra.mxu0 0
    %4006 = vmatprep.subr.bf16.mxu0 0
    %4007 = vmatpush1.bf16.msra.mxu0 0
    %4008 = vmatprep.subr.bf16.mxu0 0
    %4009 = vmatpush1.bf16.msra.mxu0 0
    %4010 = vmatprep.subr.bf16.mxu0 0
    %4011 = vmatpush1.bf16.msra.mxu0 0
    %4012 = vmatprep.subr.bf16.mxu0 0
    %4013 = vmatpush1.bf16.msra.mxu0 0
    %4014 = vmatprep.subr.bf16.mxu0 0
    %4015 = vmatpush1.bf16.msra.mxu0 0
    %4016 = vmatprep.mubr.bf16.mxu0 0
    %4017 = vmatmul.mubr.bf16.gmra.mrb[0].mxu0 %v3832
    %v4018 = vpop.f32.mrb[0].mxu0
    %v4019 = vadd.f32 0.0, %v4018
    %v4020 = vpop.f32.mrb[0].mxu0
    %v4021 = vadd.f32 0.0, %v4020
    %v4022 = vpop.f32.mrb[0].mxu0
    %v4023 = vpop.f32.mrb[0].mxu0
    %4024 = vdwg.mxu0
    %v4025 = vadd.f32 %v3939, %v3978
    %v4026 = vadd.f32 %v3940, %v3980
    %v4027 = vadd.f32 %v3941, %v4019
    %v4028 = vadd.f32 %v3942, %v4021
    %v4029 = vxor.u32 %v4025, 2147483648
    %v4030 = vmul.f32 %v4029, 1.442695
    %v4031 = vpow.pop %v4030
    %v4032 = vadd.f32 %v4031, 1.0
    %v4033 = vrcp.pop %v4032
    %v4034 = vmul.f32 1.0, %v4033
    %v4035 = vxor.u32 %v4026, 2147483648
    %v4036 = vmul.f32 %v4035, 1.442695
    %v4037 = vpow.pop %v4036
    %v4038 = vadd.f32 %v4037, 1.0
    %v4039 = vrcp.pop %v4038
    %v4040 = vmul.f32 1.0, %v4039
    %v4041 = vtanh.pop %v4027
    %v4042 = vxor.u32 %v4028, 2147483648
    %v4043 = vmul.f32 %v4042, 1.442695
    %v4044 = vpow.pop %v4043
    %v4045 = vadd.f32 %v4044, 1.0
    %v4046 = vrcp.pop %v4045
    %v4047 = vmul.f32 1.0, %v4046
    %v4048 = vmul.f32 %v4040, %v3614
    %v4049 = vmul.f32 %v4034, %v4041
    %v4050 = vadd.f32 %v4048, %v4049
    %v4051 = vtanh.pop %v4050
    %v4052 = vmul.f32 %v4047, %v4051
    %v4053 = vpack.c.bf16 %v3831, %v3831
    %v4054 = vpack.c.bf16 %v3724, %v3724
    %4055 = vmatprep.subr.bf16.mxu0 %v2620
    %4056 = vmatpush1.bf16.msra.mxu0 %v2619
    %4057 = vmatprep.subr.bf16.mxu0 %v2624
    %4058 = vmatpush1.bf16.msra.mxu0 %v2623
    %4059 = vmatprep.subr.bf16.mxu0 %v2628
    %4060 = vmatpush1.bf16.msra.mxu0 %v2627
    %4061 = vmatprep.subr.bf16.mxu0 %v2632
    %4062 = vmatpush1.bf16.msra.mxu0 %v2631
    %4063 = vmatprep.subr.bf16.mxu0 %v2636
    %4064 = vmatpush1.bf16.msra.mxu0 %v2635
    %4065 = vmatprep.subr.bf16.mxu0 %v2640
    %4066 = vmatpush1.bf16.msra.mxu0 %v2639
    %4067 = vmatprep.subr.bf16.mxu0 %v2644
    %4068 = vmatpush1.bf16.msra.mxu0 %v2643
    %4069 = vmatprep.subr.bf16.mxu0 %v2648
    %4070 = vmatpush1.bf16.msra.mxu0 %v2647
    %4071 = vmatprep.subr.bf16.mxu0 %v2652
    %4072 = vmatpush1.bf16.msra.mxu0 %v2651
    %4073 = vmatprep.subr.bf16.mxu0 %v2656
    %4074 = vmatpush1.bf16.msra.mxu0 %v2655
    %4075 = vmatprep.subr.bf16.mxu0 %v2660
    %4076 = vmatpush1.bf16.msra.mxu0 %v2659
    %4077 = vmatprep.subr.bf16.mxu0 %v2664
    %4078 = vmatpush1.bf16.msra.mxu0 %v2663
    %4079 = vmatprep.subr.bf16.mxu0 %v2668
    %4080 = vmatpush1.bf16.msra.mxu0 %v2667
    %4081 = vmatprep.subr.bf16.mxu0 %v2672
    %4082 = vmatpush1.bf16.msra.mxu0 %v2671
    %4083 = vmatprep.subr.bf16.mxu0 %v2676
    %4084 = vmatpush1.bf16.msra.mxu0 %v2675
    %4085 = vmatprep.subr.bf16.mxu0 %v2680
    %4086 = vmatpush1.bf16.msra.mxu0 %v2679
    %4087 = vmatprep.mubr.bf16.mxu0 %v4054
    %4088 = vmatmul.mubr.bf16.gmra.mrb[0].mxu0 %v4053
    %v4089 = vpop.f32.mrb[0].mxu0
    %v4090 = vadd.f32 %v2410, %v4089
    %v4091 = vpop.f32.mrb[0].mxu0
    %v4092 = vadd.f32 %v2414, %v4091
    %v4093 = vpop.f32.mrb[0].mxu0
    %v4094 = vpop.f32.mrb[0].mxu0
    %4095 = vdwg.mxu0
    %4096 = vmatprep.subr.bf16.mxu0 %v2622
    %4097 = vmatpush1.bf16.msra.mxu0 %v2621
    %4098 = vmatprep.subr.bf16.mxu0 %v2626
    %4099 = vmatpush1.bf16.msra.mxu0 %v2625
    %4100 = vmatprep.subr.bf16.mxu0 %v2630
    %4101 = vmatpush1.bf16.msra.mxu0 %v2629
    %4102 = vmatprep.subr.bf16.mxu0 %v2634
    %4103 = vmatpush1.bf16.msra.mxu0 %v2633
    %4104 = vmatprep.subr.bf16.mxu0 %v2638
    %4105 = vmatpush1.bf16.msra.mxu0 %v2637
    %4106 = vmatprep.subr.bf16.mxu0 %v2642
    %4107 = vmatpush1.bf16.msra.mxu0 %v2641
    %4108 = vmatprep.subr.bf16.mxu0 %v2646
    %4109 = vmatpush1.bf16.msra.mxu0 %v2645
    %4110 = vmatprep.subr.bf16.mxu0 %v2650
    %4111 = vmatpush1.bf16.msra.mxu0 %v2649
    %4112 = vmatprep.subr.bf16.mxu0 %v2654
    %4113 = vmatpush1.bf16.msra.mxu0 %v2653
    %4114 = vmatprep.subr.bf16.mxu0 %v2658
    %4115 = vmatpush1.bf16.msra.mxu0 %v2657
    %4116 = vmatprep.subr.bf16.mxu0 %v2662
    %4117 = vmatpush1.bf16.msra.mxu0 %v2661
    %4118 = vmatprep.subr.bf16.mxu0 %v2666
    %4119 = vmatpush1.bf16.msra.mxu0 %v2665
    %4120 = vmatprep.subr.bf16.mxu0 %v2670
    %4121 = vmatpush1.bf16.msra.mxu0 %v2669
    %4122 = vmatprep.subr.bf16.mxu0 %v2674
    %4123 = vmatpush1.bf16.msra.mxu0 %v2673
    %4124 = vmatprep.subr.bf16.mxu0 %v2678
    %4125 = vmatpush1.bf16.msra.mxu0 %v2677
    %4126 = vmatprep.subr.bf16.mxu0 %v2682
    %4127 = vmatpush1.bf16.msra.mxu0 %v2681
    %4128 = vmatprep.mubr.bf16.mxu0 %v4054
    %4129 = vmatmul.mubr.bf16.gmra.mrb[0].mxu0 %v4053
    %v4130 = vpop.f32.mrb[0].mxu0
    %v4131 = vadd.f32 %v2418, %v4130
    %v4132 = vpop.f32.mrb[0].mxu0
    %v4133 = vadd.f32 %v2422, %v4132
    %v4134 = vpop.f32.mrb[0].mxu0
    %v4135 = vpop.f32.mrb[0].mxu0
    %4136 = vdwg.mxu0
    %v4137 = vxor.u32 %v4090, 2147483648
    %v4138 = vmul.f32 %v4137, 1.442695
    %v4139 = vpow.pop %v4138
    %v4140 = vadd.f32 %v4139, 1.0
    %v4141 = vrcp.pop %v4140
    %v4142 = vmul.f32 1.0, %v4141
    %v4143 = vxor.u32 %v4092, 2147483648
    %v4144 = vmul.f32 %v4143, 1.442695
    %v4145 = vpow.pop %v4144
    %v4146 = vadd.f32 %v4145, 1.0
    %v4147 = vrcp.pop %v4146
    %v4148 = vmul.f32 1.0, %v4147
    %v4149 = vtanh.pop %v4131
    %v4150 = vxor.u32 %v4133, 2147483648
    %v4151 = vmul.f32 %v4150, 1.442695
    %v4152 = vpow.pop %v4151
    %v4153 = vadd.f32 %v4152, 1.0
    %v4154 = vrcp.pop %v4153
    %v4155 = vmul.f32 1.0, %v4154
    %v4156 = vmul.f32 %v4148, %v3722
    %v4157 = vmul.f32 %v4142, %v4149
    %v4158 = vadd.f32 %v4156, %v4157
    %v4159 = vtanh.pop %v4158
    %v4160 = vmul.f32 %v4155, %v4159
    %v4161 = vpack.c.bf16 %v3938, %v3938
    %4162 = vmatprep.subr.bf16.mxu0 %v1886
    %4163 = vmatpush1.bf16.msra.mxu0 %v1885
    %4164 = vmatprep.subr.bf16.mxu0 %v1890
    %4165 = vmatpush1.bf16.msra.mxu0 %v1889
    %4166 = vmatprep.subr.bf16.mxu0 %v1894
    %4167 = vmatpush1.bf16.msra.mxu0 %v1893
    %4168 = vmatprep.subr.bf16.mxu0 %v1898
    %4169 = vmatpush1.bf16.msra.mxu0 %v1897
    %4170 = vmatprep.subr.bf16.mxu0 %v1902
    %4171 = vmatpush1.bf16.msra.mxu0 %v1901
    %4172 = vmatprep.subr.bf16.mxu0 %v1906
    %4173 = vmatpush1.bf16.msra.mxu0 %v1905
    %4174 = vmatprep.subr.bf16.mxu0 %v1910
    %4175 = vmatpush1.bf16.msra.mxu0 %v1909
    %4176 = vmatprep.subr.bf16.mxu0 %v1914
    %4177 = vmatpush1.bf16.msra.mxu0 %v1913
    %4178 = vmatprep.subr.bf16.mxu0 %v1918
    %4179 = vmatpush1.bf16.msra.mxu0 %v1917
    %4180 = vmatprep.subr.bf16.mxu0 %v1922
    %4181 = vmatpush1.bf16.msra.mxu0 %v1921
    %4182 = vmatprep.subr.bf16.mxu0 %v1926
    %4183 = vmatpush1.bf16.msra.mxu0 %v1925
    %4184 = vmatprep.subr.bf16.mxu0 %v1930
    %4185 = vmatpush1.bf16.msra.mxu0 %v1929
    %4186 = vmatprep.subr.bf16.mxu0 %v1934
    %4187 = vmatpush1.bf16.msra.mxu0 %v1933
    %4188 = vmatprep.subr.bf16.mxu0 %v1938
    %4189 = vmatpush1.bf16.msra.mxu0 %v1937
    %4190 = vmatprep.subr.bf16.mxu0 %v1942
    %4191 = vmatpush1.bf16.msra.mxu0 %v1941
    %4192 = vmatprep.subr.bf16.mxu0 %v1946
    %4193 = vmatpush1.bf16.msra.mxu0 %v1945
    %4194 = vmatprep.mubr.bf16.mxu0 %v4053
    %4195 = vmatmul.mubr.bf16.gmra.mrb[0].mxu0 %v4161
    %v4196 = vpop.f32.mrb[0].mxu0
    %v4197 = vadd.f32 %v1676, %v4196
    %v4198 = vpop.f32.mrb[0].mxu0
    %v4199 = vadd.f32 %v1680, %v4198
    %v4200 = vpop.f32.mrb[0].mxu0
    %v4201 = vpop.f32.mrb[0].mxu0
    %4202 = vdwg.mxu0
    %4203 = vmatprep.subr.bf16.mxu0 %v1888
    %4204 = vmatpush1.bf16.msra.mxu0 %v1887
    %4205 = vmatprep.subr.bf16.mxu0 %v1892
    %4206 = vmatpush1.bf16.msra.mxu0 %v1891
    %4207 = vmatprep.subr.bf16.mxu0 %v1896
    %4208 = vmatpush1.bf16.msra.mxu0 %v1895
    %4209 = vmatprep.subr.bf16.mxu0 %v1900
    %4210 = vmatpush1.bf16.msra.mxu0 %v1899
    %4211 = vmatprep.subr.bf16.mxu0 %v1904
    %4212 = vmatpush1.bf16.msra.mxu0 %v1903
    %4213 = vmatprep.subr.bf16.mxu0 %v1908
    %4214 = vmatpush1.bf16.msra.mxu0 %v1907
    %4215 = vmatprep.subr.bf16.mxu0 %v1912
    %4216 = vmatpush1.bf16.msra.mxu0 %v1911
    %4217 = vmatprep.subr.bf16.mxu0 %v1916
    %4218 = vmatpush1.bf16.msra.mxu0 %v1915
    %4219 = vmatprep.subr.bf16.mxu0 %v1920
    %4220 = vmatpush1.bf16.msra.mxu0 %v1919
    %4221 = vmatprep.subr.bf16.mxu0 %v1924
    %4222 = vmatpush1.bf16.msra.mxu0 %v1923
    %4223 = vmatprep.subr.bf16.mxu0 %v1928
    %4224 = vmatpush1.bf16.msra.mxu0 %v1927
    %4225 = vmatprep.subr.bf16.mxu0 %v1932
    %4226 = vmatpush1.bf16.msra.mxu0 %v1931
    %4227 = vmatprep.subr.bf16.mxu0 %v1936
    %4228 = vmatpush1.bf16.msra.mxu0 %v1935
    %4229 = vmatprep.subr.bf16.mxu0 %v1940
    %4230 = vmatpush1.bf16.msra.mxu0 %v1939
    %4231 = vmatprep.subr.bf16.mxu0 %v1944
    %4232 = vmatpush1.bf16.msra.mxu0 %v1943
    %4233 = vmatprep.subr.bf16.mxu0 %v1948
    %4234 = vmatpush1.bf16.msra.mxu0 %v1947
    %4235 = vmatprep.mubr.bf16.mxu0 %v4053
    %4236 = vmatmul.mubr.bf16.gmra.mrb[0].mxu0 %v4161
    %v4237 = vpop.f32.mrb[0].mxu0
    %v4238 = vadd.f32 %v1684, %v4237
    %v4239 = vpop.f32.mrb[0].mxu0
    %v4240 = vadd.f32 %v1688, %v4239
    %v4241 = vpop.f32.mrb[0].mxu0
    %v4242 = vpop.f32.mrb[0].mxu0
    %4243 = vdwg.mxu0
    %v4244 = vxor.u32 %v4197, 2147483648
    %v4245 = vmul.f32 %v4244, 1.442695
    %v4246 = vpow.pop %v4245
    %v4247 = vadd.f32 %v4246, 1.0
    %v4248 = vrcp.pop %v4247
    %v4249 = vmul.f32 1.0, %v4248
    %v4250 = vxor.u32 %v4199, 2147483648
    %v4251 = vmul.f32 %v4250, 1.442695
    %v4252 = vpow.pop %v4251
    %v4253 = vadd.f32 %v4252, 1.0
    %v4254 = vrcp.pop %v4253
    %v4255 = vmul.f32 1.0, %v4254
    %v4256 = vtanh.pop %v4238
    %v4257 = vxor.u32 %v4240, 2147483648
    %v4258 = vmul.f32 %v4257, 1.442695
    %v4259 = vpow.pop %v4258
    %v4260 = vadd.f32 %v4259, 1.0
    %v4261 = vrcp.pop %v4260
    %v4262 = vmul.f32 1.0, %v4261
    %v4263 = vmul.f32 %v4255, %v3829
    %v4264 = vmul.f32 %v4249, %v4256
    %v4265 = vadd.f32 %v4263, %v4264
    %v4266 = vtanh.pop %v4265
    %v4267 = vmul.f32 %v4262, %v4266
    %v4268 = vpack.c.bf16 %v4052, %v4052
    %4269 = vmatprep.subr.bf16.mxu0 %v1259
    %4270 = vmatpush1.bf16.msra.mxu0 %v1258
    %4271 = vmatprep.subr.bf16.mxu0 %v1263
    %4272 = vmatpush1.bf16.msra.mxu0 %v1262
    %4273 = vmatprep.subr.bf16.mxu0 %v1267
    %4274 = vmatpush1.bf16.msra.mxu0 %v1266
    %4275 = vmatprep.subr.bf16.mxu0 %v1271
    %4276 = vmatpush1.bf16.msra.mxu0 %v1270
    %4277 = vmatprep.subr.bf16.mxu0 %v1275
    %4278 = vmatpush1.bf16.msra.mxu0 %v1274
    %4279 = vmatprep.subr.bf16.mxu0 %v1279
    %4280 = vmatpush1.bf16.msra.mxu0 %v1278
    %4281 = vmatprep.subr.bf16.mxu0 %v1283
    %4282 = vmatpush1.bf16.msra.mxu0 %v1282
    %4283 = vmatprep.subr.bf16.mxu0 %v1287
    %4284 = vmatpush1.bf16.msra.mxu0 %v1286
    %4285 = vmatprep.subr.bf16.mxu0 %v1291
    %4286 = vmatpush1.bf16.msra.mxu0 %v1290
    %4287 = vmatprep.subr.bf16.mxu0 %v1295
    %4288 = vmatpush1.bf16.msra.mxu0 %v1294
    %4289 = vmatprep.subr.bf16.mxu0 %v1299
    %4290 = vmatpush1.bf16.msra.mxu0 %v1298
    %4291 = vmatprep.subr.bf16.mxu0 %v1303
    %4292 = vmatpush1.bf16.msra.mxu0 %v1302
    %4293 = vmatprep.subr.bf16.mxu0 %v1307
    %4294 = vmatpush1.bf16.msra.mxu0 %v1306
    %4295 = vmatprep.subr.bf16.mxu0 %v1311
    %4296 = vmatpush1.bf16.msra.mxu0 %v1310
    %4297 = vmatprep.subr.bf16.mxu0 %v1315
    %4298 = vmatpush1.bf16.msra.mxu0 %v1314
    %4299 = vmatprep.subr.bf16.mxu0 %v1319
    %4300 = vmatpush1.bf16.msra.mxu0 %v1318
    %4301 = vmatprep.mubr.bf16.mxu0 %v4161
    %4302 = vmatmul.mubr.bf16.gmra.mrb[0].mxu0 %v4268
    %v4303 = vpop.f32.mrb[0].mxu0
    %v4304 = vadd.f32 %v1049, %v4303
    %v4305 = vpop.f32.mrb[0].mxu0
    %v4306 = vadd.f32 %v1053, %v4305
    %v4307 = vpop.f32.mrb[0].mxu0
    %v4308 = vpop.f32.mrb[0].mxu0
    %4309 = vdwg.mxu0
    %4310 = vmatprep.subr.bf16.mxu0 %v1261
    %4311 = vmatpush1.bf16.msra.mxu0 %v1260
    %4312 = vmatprep.subr.bf16.mxu0 %v1265
    %4313 = vmatpush1.bf16.msra.mxu0 %v1264
    %4314 = vmatprep.subr.bf16.mxu0 %v1269
    %4315 = vmatpush1.bf16.msra.mxu0 %v1268
    %4316 = vmatprep.subr.bf16.mxu0 %v1273
    %4317 = vmatpush1.bf16.msra.mxu0 %v1272
    %4318 = vmatprep.subr.bf16.mxu0 %v1277
    %4319 = vmatpush1.bf16.msra.mxu0 %v1276
    %4320 = vmatprep.subr.bf16.mxu0 %v1281
    %4321 = vmatpush1.bf16.msra.mxu0 %v1280
    %4322 = vmatprep.subr.bf16.mxu0 %v1285
    %4323 = vmatpush1.bf16.msra.mxu0 %v1284
    %4324 = vmatprep.subr.bf16.mxu0 %v1289
    %4325 = vmatpush1.bf16.msra.mxu0 %v1288
    %4326 = vmatprep.subr.bf16.mxu0 %v1293
    %4327 = vmatpush1.bf16.msra.mxu0 %v1292
    %4328 = vmatprep.subr.bf16.mxu0 %v1297
    %4329 = vmatpush1.bf16.msra.mxu0 %v1296
    %4330 = vmatprep.subr.bf16.mxu0 %v1301
    %4331 = vmatpush1.bf16.msra.mxu0 %v1300
    %4332 = vmatprep.subr.bf16.mxu0 %v1305
    %4333 = vmatpush1.bf16.msra.mxu0 %v1304
    %4334 = vmatprep.subr.bf16.mxu0 %v1309
    %4335 = vmatpush1.bf16.msra.mxu0 %v1308
    %4336 = vmatprep.subr.bf16.mxu0 %v1313
    %4337 = vmatpush1.bf16.msra.mxu0 %v1312
    %4338 = vmatprep.subr.bf16.mxu0 %v1317
    %4339 = vmatpush1.bf16.msra.mxu0 %v1316
    %4340 = vmatprep.subr.bf16.mxu0 %v1321
    %4341 = vmatpush1.bf16.msra.mxu0 %v1320
    %4342 = vmatprep.mubr.bf16.mxu0 %v4161
    %4343 = vmatmul.mubr.bf16.gmra.mrb[0].mxu0 %v4268
    %v4344 = vpop.f32.mrb[0].mxu0
    %v4345 = vadd.f32 %v1057, %v4344
    %v4346 = vpop.f32.mrb[0].mxu0
    %v4347 = vadd.f32 %v1061, %v4346
    %v4348 = vpop.f32.mrb[0].mxu0
    %v4349 = vpop.f32.mrb[0].mxu0
    %4350 = vdwg.mxu0
    %v4351 = vxor.u32 %v4304, 2147483648
    %v4352 = vmul.f32 %v4351, 1.442695
    %v4353 = vpow.pop %v4352
    %v4354 = vadd.f32 %v4353, 1.0
    %v4355 = vrcp.pop %v4354
    %v4356 = vmul.f32 1.0, %v4355
    %v4357 = vxor.u32 %v4306, 2147483648
    %v4358 = vmul.f32 %v4357, 1.442695
    %v4359 = vpow.pop %v4358
    %v4360 = vadd.f32 %v4359, 1.0
    %v4361 = vrcp.pop %v4360
    %v4362 = vmul.f32 1.0, %v4361
    %v4363 = vtanh.pop %v4345
    %v4364 = vxor.u32 %v4347, 2147483648
    %v4365 = vmul.f32 %v4364, 1.442695
    %v4366 = vpow.pop %v4365
    %v4367 = vadd.f32 %v4366, 1.0
    %v4368 = vrcp.pop %v4367
    %v4369 = vmul.f32 1.0, %v4368
    %v4370 = vmul.f32 %v4362, %v3936
    %v4371 = vmul.f32 %v4356, %v4363
    %v4372 = vadd.f32 %v4370, %v4371
    %v4373 = vtanh.pop %v4372
    %v4374 = vmul.f32 %v4369, %v4373
    %v4375 = vld [vmem:[#allocation2 + $0xc0] sm:$0xff]
    %v4376 = vld [vmem:[#allocation2 + $0xc8] sm:$0xff]
    %v4377 = vld [vmem:[#allocation2 + $0xd0] sm:$0xff]
    %v4378 = vld [vmem:[#allocation2 + $0xd8] sm:$0xff]
    %4379 = vmatprep.subr.bf16.mxu0 %v805
    %4380 = vmatpush1.bf16.msra.mxu0 %v804
    %4381 = vmatprep.subr.bf16.mxu0 %v809
    %4382 = vmatpush1.bf16.msra.mxu0 %v808
    %4383 = vmatprep.subr.bf16.mxu0 %v813
    %4384 = vmatpush1.bf16.msra.mxu0 %v812
    %4385 = vmatprep.subr.bf16.mxu0 %v817
    %4386 = vmatpush1.bf16.msra.mxu0 %v816
    %4387 = vmatprep.subr.bf16.mxu0 %v821
    %4388 = vmatpush1.bf16.msra.mxu0 %v820
    %4389 = vmatprep.subr.bf16.mxu0 %v825
    %4390 = vmatpush1.bf16.msra.mxu0 %v824
    %4391 = vmatprep.subr.bf16.mxu0 %v829
    %4392 = vmatpush1.bf16.msra.mxu0 %v828
    %4393 = vmatprep.subr.bf16.mxu0 %v833
    %4394 = vmatpush1.bf16.msra.mxu0 %v832
    %4395 = vmatprep.subr.bf16.mxu0 0
    %4396 = vmatpush1.bf16.msra.mxu0 0
    %4397 = vmatprep.subr.bf16.mxu0 0
    %4398 = vmatpush1.bf16.msra.mxu0 0
    %4399 = vmatprep.subr.bf16.mxu0 0
    %4400 = vmatpush1.bf16.msra.mxu0 0
    %4401 = vmatprep.subr.bf16.mxu0 0
    %4402 = vmatpush1.bf16.msra.mxu0 0
    %4403 = vmatprep.subr.bf16.mxu0 0
    %4404 = vmatpush1.bf16.msra.mxu0 0
    %4405 = vmatprep.subr.bf16.mxu0 0
    %4406 = vmatpush1.bf16.msra.mxu0 0
    %4407 = vmatprep.subr.bf16.mxu0 0
    %4408 = vmatpush1.bf16.msra.mxu0 0
    %4409 = vmatprep.subr.bf16.mxu0 0
    %4410 = vmatpush1.bf16.msra.mxu0 0
    %4411 = vmatprep.mubr.bf16.mxu0 0
    %4412 = vmatmul.mubr.bf16.gmra.mrb[0].mxu0 %v4268
    %v4413 = vpop.f32.mrb[0].mxu0
    %v4414 = vadd.f32 0.0, %v4413
    %v4415 = vpop.f32.mrb[0].mxu0
    %v4416 = vadd.f32 0.0, %v4415
    %v4417 = vpop.f32.mrb[0].mxu0
    %v4418 = vpop.f32.mrb[0].mxu0
    %4419 = vdwg.mxu0
    %4420 = vmatprep.subr.bf16.mxu0 %v807
    %4421 = vmatpush1.bf16.msra.mxu0 %v806
    %4422 = vmatprep.subr.bf16.mxu0 %v811
    %4423 = vmatpush1.bf16.msra.mxu0 %v810
    %4424 = vmatprep.subr.bf16.mxu0 %v815
    %4425 = vmatpush1.bf16.msra.mxu0 %v814
    %4426 = vmatprep.subr.bf16.mxu0 %v819
    %4427 = vmatpush1.bf16.msra.mxu0 %v818
    %4428 = vmatprep.subr.bf16.mxu0 %v823
    %4429 = vmatpush1.bf16.msra.mxu0 %v822
    %4430 = vmatprep.subr.bf16.mxu0 %v827
    %4431 = vmatpush1.bf16.msra.mxu0 %v826
    %4432 = vmatprep.subr.bf16.mxu0 %v831
    %4433 = vmatpush1.bf16.msra.mxu0 %v830
    %4434 = vmatprep.subr.bf16.mxu0 %v835
    %4435 = vmatpush1.bf16.msra.mxu0 %v834
    %4436 = vmatprep.subr.bf16.mxu0 0
    %4437 = vmatpush1.bf16.msra.mxu0 0
    %4438 = vmatprep.subr.bf16.mxu0 0
    %4439 = vmatpush1.bf16.msra.mxu0 0
    %4440 = vmatprep.subr.bf16.mxu0 0
    %4441 = vmatpush1.bf16.msra.mxu0 0
    %4442 = vmatprep.subr.bf16.mxu0 0
    %4443 = vmatpush1.bf16.msra.mxu0 0
    %4444 = vmatprep.subr.bf16.mxu0 0
    %4445 = vmatpush1.bf16.msra.mxu0 0
    %4446 = vmatprep.subr.bf16.mxu0 0
    %4447 = vmatpush1.bf16.msra.mxu0 0
    %4448 = vmatprep.subr.bf16.mxu0 0
    %4449 = vmatpush1.bf16.msra.mxu0 0
    %4450 = vmatprep.subr.bf16.mxu0 0
    %4451 = vmatpush1.bf16.msra.mxu0 0
    %4452 = vmatprep.mubr.bf16.mxu0 0
    %4453 = vmatmul.mubr.bf16.gmra.mrb[0].mxu0 %v4268
    %v4454 = vpop.f32.mrb[0].mxu0
    %v4455 = vadd.f32 0.0, %v4454
    %v4456 = vpop.f32.mrb[0].mxu0
    %v4457 = vadd.f32 0.0, %v4456
    %v4458 = vpop.f32.mrb[0].mxu0
    %v4459 = vpop.f32.mrb[0].mxu0
    %4460 = vdwg.mxu0
    %v4461 = vadd.f32 %v4375, %v4414
    %v4462 = vadd.f32 %v4376, %v4416
    %v4463 = vadd.f32 %v4377, %v4455
    %v4464 = vadd.f32 %v4378, %v4457
    %v4465 = vxor.u32 %v4461, 2147483648
    %v4466 = vmul.f32 %v4465, 1.442695
    %v4467 = vpow.pop %v4466
    %v4468 = vadd.f32 %v4467, 1.0
    %v4469 = vrcp.pop %v4468
    %v4470 = vmul.f32 1.0, %v4469
    %v4471 = vxor.u32 %v4462, 2147483648
    %v4472 = vmul.f32 %v4471, 1.442695
    %v4473 = vpow.pop %v4472
    %v4474 = vadd.f32 %v4473, 1.0
    %v4475 = vrcp.pop %v4474
    %v4476 = vmul.f32 1.0, %v4475
    %v4477 = vtanh.pop %v4463
    %v4478 = vxor.u32 %v4464, 2147483648
    %v4479 = vmul.f32 %v4478, 1.442695
    %v4480 = vpow.pop %v4479
    %v4481 = vadd.f32 %v4480, 1.0
    %v4482 = vrcp.pop %v4481
    %v4483 = vmul.f32 1.0, %v4482
    %v4484 = vmul.f32 %v4476, %v4050
    %v4485 = vmul.f32 %v4470, %v4477
    %v4486 = vadd.f32 %v4484, %v4485
    %v4487 = vtanh.pop %v4486
    %v4488 = vmul.f32 %v4483, %v4487
    %v4489 = vpack.c.bf16 %v4267, %v4267
    %v4490 = vpack.c.bf16 %v4160, %v4160
    %4491 = vmatprep.subr.bf16.mxu0 %v2620
    %4492 = vmatpush1.bf16.msra.mxu0 %v2619
    %4493 = vmatprep.subr.bf16.mxu0 %v2624
    %4494 = vmatpush1.bf16.msra.mxu0 %v2623
    %4495 = vmatprep.subr.bf16.mxu0 %v2628
    %4496 = vmatpush1.bf16.msra.mxu0 %v2627
    %4497 = vmatprep.subr.bf16.mxu0 %v2632
    %4498 = vmatpush1.bf16.msra.mxu0 %v2631
    %4499 = vmatprep.subr.bf16.mxu0 %v2636
    %4500 = vmatpush1.bf16.msra.mxu0 %v2635
    %4501 = vmatprep.subr.bf16.mxu0 %v2640
    %4502 = vmatpush1.bf16.msra.mxu0 %v2639
    %4503 = vmatprep.subr.bf16.mxu0 %v2644
    %4504 = vmatpush1.bf16.msra.mxu0 %v2643
    %4505 = vmatprep.subr.bf16.mxu0 %v2648
    %4506 = vmatpush1.bf16.msra.mxu0 %v2647
    %4507 = vmatprep.subr.bf16.mxu0 %v2652
    %4508 = vmatpush1.bf16.msra.mxu0 %v2651
    %4509 = vmatprep.subr.bf16.mxu0 %v2656
    %4510 = vmatpush1.bf16.msra.mxu0 %v2655
    %4511 = vmatprep.subr.bf16.mxu0 %v2660
    %4512 = vmatpush1.bf16.msra.mxu0 %v2659
    %4513 = vmatprep.subr.bf16.mxu0 %v2664
    %4514 = vmatpush1.bf16.msra.mxu0 %v2663
    %4515 = vmatprep.subr.bf16.mxu0 %v2668
    %4516 = vmatpush1.bf16.msra.mxu0 %v2667
    %4517 = vmatprep.subr.bf16.mxu0 %v2672
    %4518 = vmatpush1.bf16.msra.mxu0 %v2671
    %4519 = vmatprep.subr.bf16.mxu0 %v2676
    %4520 = vmatpush1.bf16.msra.mxu0 %v2675
    %4521 = vmatprep.subr.bf16.mxu0 %v2680
    %4522 = vmatpush1.bf16.msra.mxu0 %v2679
    %4523 = vmatprep.mubr.bf16.mxu0 %v4490
    %4524 = vmatmul.mubr.bf16.gmra.mrb[0].mxu0 %v4489
    %v4525 = vpop.f32.mrb[0].mxu0
    %v4526 = vadd.f32 %v2410, %v4525
    %v4527 = vpop.f32.mrb[0].mxu0
    %v4528 = vadd.f32 %v2414, %v4527
    %v4529 = vpop.f32.mrb[0].mxu0
    %v4530 = vpop.f32.mrb[0].mxu0
    %4531 = vdwg.mxu0
    %4532 = vmatprep.subr.bf16.mxu0 %v2622
    %4533 = vmatpush1.bf16.msra.mxu0 %v2621
    %4534 = vmatprep.subr.bf16.mxu0 %v2626
    %4535 = vmatpush1.bf16.msra.mxu0 %v2625
    %4536 = vmatprep.subr.bf16.mxu0 %v2630
    %4537 = vmatpush1.bf16.msra.mxu0 %v2629
    %4538 = vmatprep.subr.bf16.mxu0 %v2634
    %4539 = vmatpush1.bf16.msra.mxu0 %v2633
    %4540 = vmatprep.subr.bf16.mxu0 %v2638
    %4541 = vmatpush1.bf16.msra.mxu0 %v2637
    %4542 = vmatprep.subr.bf16.mxu0 %v2642
    %4543 = vmatpush1.bf16.msra.mxu0 %v2641
    %4544 = vmatprep.subr.bf16.mxu0 %v2646
    %4545 = vmatpush1.bf16.msra.mxu0 %v2645
    %4546 = vmatprep.subr.bf16.mxu0 %v2650
    %4547 = vmatpush1.bf16.msra.mxu0 %v2649
    %4548 = vmatprep.subr.bf16.mxu0 %v2654
    %4549 = vmatpush1.bf16.msra.mxu0 %v2653
    %4550 = vmatprep.subr.bf16.mxu0 %v2658
    %4551 = vmatpush1.bf16.msra.mxu0 %v2657
    %4552 = vmatprep.subr.bf16.mxu0 %v2662
    %4553 = vmatpush1.bf16.msra.mxu0 %v2661
    %4554 = vmatprep.subr.bf16.mxu0 %v2666
    %4555 = vmatpush1.bf16.msra.mxu0 %v2665
    %4556 = vmatprep.subr.bf16.mxu0 %v2670
    %4557 = vmatpush1.bf16.msra.mxu0 %v2669
    %4558 = vmatprep.subr.bf16.mxu0 %v2674
    %4559 = vmatpush1.bf16.msra.mxu0 %v2673
    %4560 = vmatprep.subr.bf16.mxu0 %v2678
    %4561 = vmatpush1.bf16.msra.mxu0 %v2677
    %4562 = vmatprep.subr.bf16.mxu0 %v2682
    %4563 = vmatpush1.bf16.msra.mxu0 %v2681
    %4564 = vmatprep.mubr.bf16.mxu0 %v4490
    %4565 = vmatmul.mubr.bf16.gmra.mrb[0].mxu0 %v4489
    %v4566 = vpop.f32.mrb[0].mxu0
    %v4567 = vadd.f32 %v2418, %v4566
    %v4568 = vpop.f32.mrb[0].mxu0
    %v4569 = vadd.f32 %v2422, %v4568
    %v4570 = vpop.f32.mrb[0].mxu0
    %v4571 = vpop.f32.mrb[0].mxu0
    %4572 = vdwg.mxu0
    %v4573 = vxor.u32 %v4526, 2147483648
    %v4574 = vmul.f32 %v4573, 1.442695
    %v4575 = vpow.pop %v4574
    %v4576 = vadd.f32 %v4575, 1.0
    %v4577 = vrcp.pop %v4576
    %v4578 = vmul.f32 1.0, %v4577
    %v4579 = vxor.u32 %v4528, 2147483648
    %v4580 = vmul.f32 %v4579, 1.442695
    %v4581 = vpow.pop %v4580
    %v4582 = vadd.f32 %v4581, 1.0
    %v4583 = vrcp.pop %v4582
    %v4584 = vmul.f32 1.0, %v4583
    %v4585 = vtanh.pop %v4567
    %v4586 = vxor.u32 %v4569, 2147483648
    %v4587 = vmul.f32 %v4586, 1.442695
    %v4588 = vpow.pop %v4587
    %v4589 = vadd.f32 %v4588, 1.0
    %v4590 = vrcp.pop %v4589
    %v4591 = vmul.f32 1.0, %v4590
    %v4592 = vmul.f32 %v4584, %v4158
    %v4593 = vmul.f32 %v4578, %v4585
    %v4594 = vadd.f32 %v4592, %v4593
    %v4595 = vtanh.pop %v4594
    %v4596 = vmul.f32 %v4591, %v4595
    %v4597 = vpack.c.bf16 %v4374, %v4374
    %4598 = vmatprep.subr.bf16.mxu0 %v1886
    %4599 = vmatpush1.bf16.msra.mxu0 %v1885
    %4600 = vmatprep.subr.bf16.mxu0 %v1890
    %4601 = vmatpush1.bf16.msra.mxu0 %v1889
    %4602 = vmatprep.subr.bf16.mxu0 %v1894
    %4603 = vmatpush1.bf16.msra.mxu0 %v1893
    %4604 = vmatprep.subr.bf16.mxu0 %v1898
    %4605 = vmatpush1.bf16.msra.mxu0 %v1897
    %4606 = vmatprep.subr.bf16.mxu0 %v1902
    %4607 = vmatpush1.bf16.msra.mxu0 %v1901
    %4608 = vmatprep.subr.bf16.mxu0 %v1906
    %4609 = vmatpush1.bf16.msra.mxu0 %v1905
    %4610 = vmatprep.subr.bf16.mxu0 %v1910
    %4611 = vmatpush1.bf16.msra.mxu0 %v1909
    %4612 = vmatprep.subr.bf16.mxu0 %v1914
    %4613 = vmatpush1.bf16.msra.mxu0 %v1913
    %4614 = vmatprep.subr.bf16.mxu0 %v1918
    %4615 = vmatpush1.bf16.msra.mxu0 %v1917
    %4616 = vmatprep.subr.bf16.mxu0 %v1922
    %4617 = vmatpush1.bf16.msra.mxu0 %v1921
    %4618 = vmatprep.subr.bf16.mxu0 %v1926
    %4619 = vmatpush1.bf16.msra.mxu0 %v1925
    %4620 = vmatprep.subr.bf16.mxu0 %v1930
    %4621 = vmatpush1.bf16.msra.mxu0 %v1929
    %4622 = vmatprep.subr.bf16.mxu0 %v1934
    %4623 = vmatpush1.bf16.msra.mxu0 %v1933
    %4624 = vmatprep.subr.bf16.mxu0 %v1938
    %4625 = vmatpush1.bf16.msra.mxu0 %v1937
    %4626 = vmatprep.subr.bf16.mxu0 %v1942
    %4627 = vmatpush1.bf16.msra.mxu0 %v1941
    %4628 = vmatprep.subr.bf16.mxu0 %v1946
    %4629 = vmatpush1.bf16.msra.mxu0 %v1945
    %4630 = vmatprep.mubr.bf16.mxu0 %v4489
    %4631 = vmatmul.mubr.bf16.gmra.mrb[0].mxu0 %v4597
    %v4632 = vpop.f32.mrb[0].mxu0
    %v4633 = vadd.f32 %v1676, %v4632
    %v4634 = vpop.f32.mrb[0].mxu0
    %v4635 = vadd.f32 %v1680, %v4634
    %v4636 = vpop.f32.mrb[0].mxu0
    %v4637 = vpop.f32.mrb[0].mxu0
    %4638 = vdwg.mxu0
    %4639 = vmatprep.subr.bf16.mxu0 %v1888
    %4640 = vmatpush1.bf16.msra.mxu0 %v1887
    %4641 = vmatprep.subr.bf16.mxu0 %v1892
    %4642 = vmatpush1.bf16.msra.mxu0 %v1891
    %4643 = vmatprep.subr.bf16.mxu0 %v1896
    %4644 = vmatpush1.bf16.msra.mxu0 %v1895
    %4645 = vmatprep.subr.bf16.mxu0 %v1900
    %4646 = vmatpush1.bf16.msra.mxu0 %v1899
    %4647 = vmatprep.subr.bf16.mxu0 %v1904
    %4648 = vmatpush1.bf16.msra.mxu0 %v1903
    %4649 = vmatprep.subr.bf16.mxu0 %v1908
    %4650 = vmatpush1.bf16.msra.mxu0 %v1907
    %4651 = vmatprep.subr.bf16.mxu0 %v1912
    %4652 = vmatpush1.bf16.msra.mxu0 %v1911
    %4653 = vmatprep.subr.bf16.mxu0 %v1916
    %4654 = vmatpush1.bf16.msra.mxu0 %v1915
    %4655 = vmatprep.subr.bf16.mxu0 %v1920
    %4656 = vmatpush1.bf16.msra.mxu0 %v1919
    %4657 = vmatprep.subr.bf16.mxu0 %v1924
    %4658 = vmatpush1.bf16.msra.mxu0 %v1923
    %4659 = vmatprep.subr.bf16.mxu0 %v1928
    %4660 = vmatpush1.bf16.msra.mxu0 %v1927
    %4661 = vmatprep.subr.bf16.mxu0 %v1932
    %4662 = vmatpush1.bf16.msra.mxu0 %v1931
    %4663 = vmatprep.subr.bf16.mxu0 %v1936
    %4664 = vmatpush1.bf16.msra.mxu0 %v1935
    %4665 = vmatprep.subr.bf16.mxu0 %v1940
    %4666 = vmatpush1.bf16.msra.mxu0 %v1939
    %4667 = vmatprep.subr.bf16.mxu0 %v1944
    %4668 = vmatpush1.bf16.msra.mxu0 %v1943
    %4669 = vmatprep.subr.bf16.mxu0 %v1948
    %4670 = vmatpush1.bf16.msra.mxu0 %v1947
    %4671 = vmatprep.mubr.bf16.mxu0 %v4489
    %4672 = vmatmul.mubr.bf16.gmra.mrb[0].mxu0 %v4597
    %v4673 = vpop.f32.mrb[0].mxu0
    %v4674 = vadd.f32 %v1684, %v4673
    %v4675 = vpop.f32.mrb[0].mxu0
    %v4676 = vadd.f32 %v1688, %v4675
    %v4677 = vpop.f32.mrb[0].mxu0
    %v4678 = vpop.f32.mrb[0].mxu0
    %4679 = vdwg.mxu0
    %v4680 = vxor.u32 %v4633, 2147483648
    %v4681 = vmul.f32 %v4680, 1.442695
    %v4682 = vpow.pop %v4681
    %v4683 = vadd.f32 %v4682, 1.0
    %v4684 = vrcp.pop %v4683
    %v4685 = vmul.f32 1.0, %v4684
    %v4686 = vxor.u32 %v4635, 2147483648
    %v4687 = vmul.f32 %v4686, 1.442695
    %v4688 = vpow.pop %v4687
    %v4689 = vadd.f32 %v4688, 1.0
    %v4690 = vrcp.pop %v4689
    %v4691 = vmul.f32 1.0, %v4690
    %v4692 = vtanh.pop %v4674
    %v4693 = vxor.u32 %v4676, 2147483648
    %v4694 = vmul.f32 %v4693, 1.442695
    %v4695 = vpow.pop %v4694
    %v4696 = vadd.f32 %v4695, 1.0
    %v4697 = vrcp.pop %v4696
    %v4698 = vmul.f32 1.0, %v4697
    %v4699 = vmul.f32 %v4691, %v4265
    %v4700 = vmul.f32 %v4685, %v4692
    %v4701 = vadd.f32 %v4699, %v4700
    %v4702 = vtanh.pop %v4701
    %v4703 = vmul.f32 %v4698, %v4702
    %v4704 = vpack.c.bf16 %v4488, %v4488
    %4705 = vmatprep.subr.bf16.mxu0 %v1259
    %4706 = vmatpush1.bf16.msra.mxu0 %v1258
    %4707 = vmatprep.subr.bf16.mxu0 %v1263
    %4708 = vmatpush1.bf16.msra.mxu0 %v1262
    %4709 = vmatprep.subr.bf16.mxu0 %v1267
    %4710 = vmatpush1.bf16.msra.mxu0 %v1266
    %4711 = vmatprep.subr.bf16.mxu0 %v1271
    %4712 = vmatpush1.bf16.msra.mxu0 %v1270
    %4713 = vmatprep.subr.bf16.mxu0 %v1275
    %4714 = vmatpush1.bf16.msra.mxu0 %v1274
    %4715 = vmatprep.subr.bf16.mxu0 %v1279
    %4716 = vmatpush1.bf16.msra.mxu0 %v1278
    %4717 = vmatprep.subr.bf16.mxu0 %v1283
    %4718 = vmatpush1.bf16.msra.mxu0 %v1282
    %4719 = vmatprep.subr.bf16.mxu0 %v1287
    %4720 = vmatpush1.bf16.msra.mxu0 %v1286
    %4721 = vmatprep.subr.bf16.mxu0 %v1291
    %4722 = vmatpush1.bf16.msra.mxu0 %v1290
    %4723 = vmatprep.subr.bf16.mxu0 %v1295
    %4724 = vmatpush1.bf16.msra.mxu0 %v1294
    %4725 = vmatprep.subr.bf16.mxu0 %v1299
    %4726 = vmatpush1.bf16.msra.mxu0 %v1298
    %4727 = vmatprep.subr.bf16.mxu0 %v1303
    %4728 = vmatpush1.bf16.msra.mxu0 %v1302
    %4729 = vmatprep.subr.bf16.mxu0 %v1307
    %4730 = vmatpush1.bf16.msra.mxu0 %v1306
    %4731 = vmatprep.subr.bf16.mxu0 %v1311
    %4732 = vmatpush1.bf16.msra.mxu0 %v1310
    %4733 = vmatprep.subr.bf16.mxu0 %v1315
    %4734 = vmatpush1.bf16.msra.mxu0 %v1314
    %4735 = vmatprep.subr.bf16.mxu0 %v1319
    %4736 = vmatpush1.bf16.msra.mxu0 %v1318
    %4737 = vmatprep.mubr.bf16.mxu0 %v4597
    %4738 = vmatmul.mubr.bf16.gmra.mrb[0].mxu0 %v4704
    %v4739 = vpop.f32.mrb[0].mxu0
    %v4740 = vadd.f32 %v1049, %v4739
    %v4741 = vpop.f32.mrb[0].mxu0
    %v4742 = vadd.f32 %v1053, %v4741
    %v4743 = vpop.f32.mrb[0].mxu0
    %v4744 = vpop.f32.mrb[0].mxu0
    %4745 = vdwg.mxu0
    %4746 = vmatprep.subr.bf16.mxu0 %v1261
    %4747 = vmatpush1.bf16.msra.mxu0 %v1260
    %4748 = vmatprep.subr.bf16.mxu0 %v1265
    %4749 = vmatpush1.bf16.msra.mxu0 %v1264
    %4750 = vmatprep.subr.bf16.mxu0 %v1269
    %4751 = vmatpush1.bf16.msra.mxu0 %v1268
    %4752 = vmatprep.subr.bf16.mxu0 %v1273
    %4753 = vmatpush1.bf16.msra.mxu0 %v1272
    %4754 = vmatprep.subr.bf16.mxu0 %v1277
    %4755 = vmatpush1.bf16.msra.mxu0 %v1276
    %4756 = vmatprep.subr.bf16.mxu0 %v1281
    %4757 = vmatpush1.bf16.msra.mxu0 %v1280
    %4758 = vmatprep.subr.bf16.mxu0 %v1285
    %4759 = vmatpush1.bf16.msra.mxu0 %v1284
    %4760 = vmatprep.subr.bf16.mxu0 %v1289
    %4761 = vmatpush1.bf16.msra.mxu0 %v1288
    %4762 = vmatprep.subr.bf16.mxu0 %v1293
    %4763 = vmatpush1.bf16.msra.mxu0 %v1292
    %4764 = vmatprep.subr.bf16.mxu0 %v1297
    %4765 = vmatpush1.bf16.msra.mxu0 %v1296
    %4766 = vmatprep.subr.bf16.mxu0 %v1301
    %4767 = vmatpush1.bf16.msra.mxu0 %v1300
    %4768 = vmatprep.subr.bf16.mxu0 %v1305
    %4769 = vmatpush1.bf16.msra.mxu0 %v1304
    %4770 = vmatprep.subr.bf16.mxu0 %v1309
    %4771 = vmatpush1.bf16.msra.mxu0 %v1308
    %4772 = vmatprep.subr.bf16.mxu0 %v1313
    %4773 = vmatpush1.bf16.msra.mxu0 %v1312
    %4774 = vmatprep.subr.bf16.mxu0 %v1317
    %4775 = vmatpush1.bf16.msra.mxu0 %v1316
    %4776 = vmatprep.subr.bf16.mxu0 %v1321
    %4777 = vmatpush1.bf16.msra.mxu0 %v1320
    %4778 = vmatprep.mubr.bf16.mxu0 %v4597
    %4779 = vmatmul.mubr.bf16.gmra.mrb[0].mxu0 %v4704
    %v4780 = vpop.f32.mrb[0].mxu0
    %v4781 = vadd.f32 %v1057, %v4780
    %v4782 = vpop.f32.mrb[0].mxu0
    %v4783 = vadd.f32 %v1061, %v4782
    %v4784 = vpop.f32.mrb[0].mxu0
    %v4785 = vpop.f32.mrb[0].mxu0
    %4786 = vdwg.mxu0
    %v4787 = vxor.u32 %v4740, 2147483648
    %v4788 = vmul.f32 %v4787, 1.442695
    %v4789 = vpow.pop %v4788
    %v4790 = vadd.f32 %v4789, 1.0
    %v4791 = vrcp.pop %v4790
    %v4792 = vmul.f32 1.0, %v4791
    %v4793 = vxor.u32 %v4742, 2147483648
    %v4794 = vmul.f32 %v4793, 1.442695
    %v4795 = vpow.pop %v4794
    %v4796 = vadd.f32 %v4795, 1.0
    %v4797 = vrcp.pop %v4796
    %v4798 = vmul.f32 1.0, %v4797
    %v4799 = vtanh.pop %v4781
    %v4800 = vxor.u32 %v4783, 2147483648
    %v4801 = vmul.f32 %v4800, 1.442695
    %v4802 = vpow.pop %v4801
    %v4803 = vadd.f32 %v4802, 1.0
    %v4804 = vrcp.pop %v4803
    %v4805 = vmul.f32 1.0, %v4804
    %v4806 = vmul.f32 %v4798, %v4372
    %v4807 = vmul.f32 %v4792, %v4799
    %v4808 = vadd.f32 %v4806, %v4807
    %v4809 = vtanh.pop %v4808
    %v4810 = vmul.f32 %v4805, %v4809
    %v4811 = vld [vmem:[#allocation2 + $0xe0] sm:$0xff]
    %v4812 = vld [vmem:[#allocation2 + $0xe8] sm:$0xff]
    %v4813 = vld [vmem:[#allocation2 + $0xf0] sm:$0xff]
    %v4814 = vld [vmem:[#allocation2 + $0xf8] sm:$0xff]
    %4815 = vmatprep.subr.bf16.mxu0 %v805
    %4816 = vmatpush1.bf16.msra.mxu0 %v804
    %4817 = vmatprep.subr.bf16.mxu0 %v809
    %4818 = vmatpush1.bf16.msra.mxu0 %v808
    %4819 = vmatprep.subr.bf16.mxu0 %v813
    %4820 = vmatpush1.bf16.msra.mxu0 %v812
    %4821 = vmatprep.subr.bf16.mxu0 %v817
    %4822 = vmatpush1.bf16.msra.mxu0 %v816
    %4823 = vmatprep.subr.bf16.mxu0 %v821
    %4824 = vmatpush1.bf16.msra.mxu0 %v820
    %4825 = vmatprep.subr.bf16.mxu0 %v825
    %4826 = vmatpush1.bf16.msra.mxu0 %v824
    %4827 = vmatprep.subr.bf16.mxu0 %v829
    %4828 = vmatpush1.bf16.msra.mxu0 %v828
    %4829 = vmatprep.subr.bf16.mxu0 %v833
    %4830 = vmatpush1.bf16.msra.mxu0 %v832
    %4831 = vmatprep.subr.bf16.mxu0 0
    %4832 = vmatpush1.bf16.msra.mxu0 0
    %4833 = vmatprep.subr.bf16.mxu0 0
    %4834 = vmatpush1.bf16.msra.mxu0 0
    %4835 = vmatprep.subr.bf16.mxu0 0
    %4836 = vmatpush1.bf16.msra.mxu0 0
    %4837 = vmatprep.subr.bf16.mxu0 0
    %4838 = vmatpush1.bf16.msra.mxu0 0
    %4839 = vmatprep.subr.bf16.mxu0 0
    %4840 = vmatpush1.bf16.msra.mxu0 0
    %4841 = vmatprep.subr.bf16.mxu0 0
    %4842 = vmatpush1.bf16.msra.mxu0 0
    %4843 = vmatprep.subr.bf16.mxu0 0
    %4844 = vmatpush1.bf16.msra.mxu0 0
    %4845 = vmatprep.subr.bf16.mxu0 0
    %4846 = vmatpush1.bf16.msra.mxu0 0
    %4847 = vmatprep.mubr.bf16.mxu0 0
    %4848 = vmatmul.mubr.bf16.gmra.mrb[0].mxu0 %v4704
    %v4849 = vpop.f32.mrb[0].mxu0
    %v4850 = vadd.f32 0.0, %v4849
    %v4851 = vpop.f32.mrb[0].mxu0
    %v4852 = vadd.f32 0.0, %v4851
    %v4853 = vpop.f32.mrb[0].mxu0
    %v4854 = vpop.f32.mrb[0].mxu0
    %4855 = vdwg.mxu0
    %4856 = vmatprep.subr.bf16.mxu0 %v807
    %4857 = vmatpush1.bf16.msra.mxu0 %v806
    %4858 = vmatprep.subr.bf16.mxu0 %v811
    %4859 = vmatpush1.bf16.msra.mxu0 %v810
    %4860 = vmatprep.subr.bf16.mxu0 %v815
    %4861 = vmatpush1.bf16.msra.mxu0 %v814
    %4862 = vmatprep.subr.bf16.mxu0 %v819
    %4863 = vmatpush1.bf16.msra.mxu0 %v818
    %4864 = vmatprep.subr.bf16.mxu0 %v823
    %4865 = vmatpush1.bf16.msra.mxu0 %v822
    %4866 = vmatprep.subr.bf16.mxu0 %v827
    %4867 = vmatpush1.bf16.msra.mxu0 %v826
    %4868 = vmatprep.subr.bf16.mxu0 %v831
    %4869 = vmatpush1.bf16.msra.mxu0 %v830
    %4870 = vmatprep.subr.bf16.mxu0 %v835
    %4871 = vmatpush1.bf16.msra.mxu0 %v834
    %4872 = vmatprep.subr.bf16.mxu0 0
    %4873 = vmatpush1.bf16.msra.mxu0 0
    %4874 = vmatprep.subr.bf16.mxu0 0
    %4875 = vmatpush1.bf16.msra.mxu0 0
    %4876 = vmatprep.subr.bf16.mxu0 0
    %4877 = vmatpush1.bf16.msra.mxu0 0
    %4878 = vmatprep.subr.bf16.mxu0 0
    %4879 = vmatpush1.bf16.msra.mxu0 0
    %4880 = vmatprep.subr.bf16.mxu0 0
    %4881 = vmatpush1.bf16.msra.mxu0 0
    %4882 = vmatprep.subr.bf16.mxu0 0
    %4883 = vmatpush1.bf16.msra.mxu0 0
    %4884 = vmatprep.subr.bf16.mxu0 0
    %4885 = vmatpush1.bf16.msra.mxu0 0
    %4886 = vmatprep.subr.bf16.mxu0 0
    %4887 = vmatpush1.bf16.msra.mxu0 0
    %4888 = vmatprep.mubr.bf16.mxu0 0
    %4889 = vmatmul.mubr.bf16.gmra.mrb[0].mxu0 %v4704
    %v4890 = vpop.f32.mrb[0].mxu0
    %v4891 = vadd.f32 0.0, %v4890
    %v4892 = vpop.f32.mrb[0].mxu0
    %v4893 = vadd.f32 0.0, %v4892
    %v4894 = vpop.f32.mrb[0].mxu0
    %v4895 = vpop.f32.mrb[0].mxu0
    %4896 = vdwg.mxu0
    %v4897 = vadd.f32 %v4811, %v4850
    %v4898 = vadd.f32 %v4812, %v4852
    %v4899 = vadd.f32 %v4813, %v4891
    %v4900 = vadd.f32 %v4814, %v4893
    %v4901 = vxor.u32 %v4897, 2147483648
    %v4902 = vmul.f32 %v4901, 1.442695
    %v4903 = vpow.pop %v4902
    %v4904 = vadd.f32 %v4903, 1.0
    %v4905 = vrcp.pop %v4904
    %v4906 = vmul.f32 1.0, %v4905
    %v4907 = vxor.u32 %v4898, 2147483648
    %v4908 = vmul.f32 %v4907, 1.442695
    %v4909 = vpow.pop %v4908
    %v4910 = vadd.f32 %v4909, 1.0
    %v4911 = vrcp.pop %v4910
    %v4912 = vmul.f32 1.0, %v4911
    %v4913 = vtanh.pop %v4899
    %v4914 = vxor.u32 %v4900, 2147483648
    %v4915 = vmul.f32 %v4914, 1.442695
    %v4916 = vpow.pop %v4915
    %v4917 = vadd.f32 %v4916, 1.0
    %v4918 = vrcp.pop %v4917
    %v4919 = vmul.f32 1.0, %v4918
    %v4920 = vmul.f32 %v4912, %v4486
    %v4921 = vmul.f32 %v4906, %v4913
    %v4922 = vadd.f32 %v4920, %v4921
    %v4923 = vtanh.pop %v4922
    %v4924 = vmul.f32 %v4919, %v4923
    %v4925 = vpack.c.bf16 %v4703, %v4703
    %v4926 = vpack.c.bf16 %v4596, %v4596
    %4927 = vmatprep.subr.bf16.mxu0 %v2620
    %4928 = vmatpush1.bf16.msra.mxu0 %v2619
    %4929 = vmatprep.subr.bf16.mxu0 %v2624
    %4930 = vmatpush1.bf16.msra.mxu0 %v2623
    %4931 = vmatprep.subr.bf16.mxu0 %v2628
    %4932 = vmatpush1.bf16.msra.mxu0 %v2627
    %4933 = vmatprep.subr.bf16.mxu0 %v2632
    %4934 = vmatpush1.bf16.msra.mxu0 %v2631
    %4935 = vmatprep.subr.bf16.mxu0 %v2636
    %4936 = vmatpush1.bf16.msra.mxu0 %v2635
    %4937 = vmatprep.subr.bf16.mxu0 %v2640
    %4938 = vmatpush1.bf16.msra.mxu0 %v2639
    %4939 = vmatprep.subr.bf16.mxu0 %v2644
    %4940 = vmatpush1.bf16.msra.mxu0 %v2643
    %4941 = vmatprep.subr.bf16.mxu0 %v2648
    %4942 = vmatpush1.bf16.msra.mxu0 %v2647
    %4943 = vmatprep.subr.bf16.mxu0 %v2652
    %4944 = vmatpush1.bf16.msra.mxu0 %v2651
    %4945 = vmatprep.subr.bf16.mxu0 %v2656
    %4946 = vmatpush1.bf16.msra.mxu0 %v2655
    %4947 = vmatprep.subr.bf16.mxu0 %v2660
    %4948 = vmatpush1.bf16.msra.mxu0 %v2659
    %4949 = vmatprep.subr.bf16.mxu0 %v2664
    %4950 = vmatpush1.bf16.msra.mxu0 %v2663
    %4951 = vmatprep.subr.bf16.mxu0 %v2668
    %4952 = vmatpush1.bf16.msra.mxu0 %v2667
    %4953 = vmatprep.subr.bf16.mxu0 %v2672
    %4954 = vmatpush1.bf16.msra.mxu0 %v2671
    %4955 = vmatprep.subr.bf16.mxu0 %v2676
    %4956 = vmatpush1.bf16.msra.mxu0 %v2675
    %4957 = vmatprep.subr.bf16.mxu0 %v2680
    %4958 = vmatpush1.bf16.msra.mxu0 %v2679
    %4959 = vmatprep.mubr.bf16.mxu0 %v4926
    %4960 = vmatmul.mubr.bf16.gmra.mrb[0].mxu0 %v4925
    %v4961 = vpop.f32.mrb[0].mxu0
    %v4962 = vadd.f32 %v2410, %v4961
    %v4963 = vpop.f32.mrb[0].mxu0
    %v4964 = vadd.f32 %v2414, %v4963
    %v4965 = vpop.f32.mrb[0].mxu0
    %v4966 = vpop.f32.mrb[0].mxu0
    %4967 = vdwg.mxu0
    %4968 = vmatprep.subr.bf16.mxu0 %v2622
    %4969 = vmatpush1.bf16.msra.mxu0 %v2621
    %4970 = vmatprep.subr.bf16.mxu0 %v2626
    %4971 = vmatpush1.bf16.msra.mxu0 %v2625
    %4972 = vmatprep.subr.bf16.mxu0 %v2630
    %4973 = vmatpush1.bf16.msra.mxu0 %v2629
    %4974 = vmatprep.subr.bf16.mxu0 %v2634
    %4975 = vmatpush1.bf16.msra.mxu0 %v2633
    %4976 = vmatprep.subr.bf16.mxu0 %v2638
    %4977 = vmatpush1.bf16.msra.mxu0 %v2637
    %4978 = vmatprep.subr.bf16.mxu0 %v2642
    %4979 = vmatpush1.bf16.msra.mxu0 %v2641
    %4980 = vmatprep.subr.bf16.mxu0 %v2646
    %4981 = vmatpush1.bf16.msra.mxu0 %v2645
    %4982 = vmatprep.subr.bf16.mxu0 %v2650
    %4983 = vmatpush1.bf16.msra.mxu0 %v2649
    %4984 = vmatprep.subr.bf16.mxu0 %v2654
    %4985 = vmatpush1.bf16.msra.mxu0 %v2653
    %4986 = vmatprep.subr.bf16.mxu0 %v2658
    %4987 = vmatpush1.bf16.msra.mxu0 %v2657
    %4988 = vmatprep.subr.bf16.mxu0 %v2662
    %4989 = vmatpush1.bf16.msra.mxu0 %v2661
    %4990 = vmatprep.subr.bf16.mxu0 %v2666
    %4991 = vmatpush1.bf16.msra.mxu0 %v2665
    %4992 = vmatprep.subr.bf16.mxu0 %v2670
    %4993 = vmatpush1.bf16.msra.mxu0 %v2669
    %4994 = vmatprep.subr.bf16.mxu0 %v2674
    %4995 = vmatpush1.bf16.msra.mxu0 %v2673
    %4996 = vmatprep.subr.bf16.mxu0 %v2678
    %4997 = vmatpush1.bf16.msra.mxu0 %v2677
    %4998 = vmatprep.subr.bf16.mxu0 %v2682
    %4999 = vmatpush1.bf16.msra.mxu0 %v2681
    %5000 = vmatprep.mubr.bf16.mxu0 %v4926
    %5001 = vmatmul.mubr.bf16.gmra.mrb[0].mxu0 %v4925
    %v5002 = vpop.f32.mrb[0].mxu0
    %v5003 = vadd.f32 %v2418, %v5002
    %v5004 = vpop.f32.mrb[0].mxu0
    %v5005 = vadd.f32 %v2422, %v5004
    %v5006 = vpop.f32.mrb[0].mxu0
    %v5007 = vpop.f32.mrb[0].mxu0
    %5008 = vdwg.mxu0
    %v5009 = vxor.u32 %v4962, 2147483648
    %v5010 = vmul.f32 %v5009, 1.442695
    %v5011 = vpow.pop %v5010
    %v5012 = vadd.f32 %v5011, 1.0
    %v5013 = vrcp.pop %v5012
    %v5014 = vmul.f32 1.0, %v5013
    %v5015 = vxor.u32 %v4964, 2147483648
    %v5016 = vmul.f32 %v5015, 1.442695
    %v5017 = vpow.pop %v5016
    %v5018 = vadd.f32 %v5017, 1.0
    %v5019 = vrcp.pop %v5018
    %v5020 = vmul.f32 1.0, %v5019
    %v5021 = vtanh.pop %v5003
    %v5022 = vxor.u32 %v5005, 2147483648
    %v5023 = vmul.f32 %v5022, 1.442695
    %v5024 = vpow.pop %v5023
    %v5025 = vadd.f32 %v5024, 1.0
    %v5026 = vrcp.pop %v5025
    %v5027 = vmul.f32 1.0, %v5026
    %v5028 = vmul.f32 %v5020, %v4594
    %v5029 = vmul.f32 %v5014, %v5021
    %v5030 = vadd.f32 %v5028, %v5029
    %v5031 = vtanh.pop %v5030
    %v5032 = vmul.f32 %v5027, %v5031
    %v5033 = vpack.c.bf16 %v4810, %v4810
    %5034 = vmatprep.subr.bf16.mxu0 %v1886
    %5035 = vmatpush1.bf16.msra.mxu0 %v1885
    %5036 = vmatprep.subr.bf16.mxu0 %v1890
    %5037 = vmatpush1.bf16.msra.mxu0 %v1889
    %5038 = vmatprep.subr.bf16.mxu0 %v1894
    %5039 = vmatpush1.bf16.msra.mxu0 %v1893
    %5040 = vmatprep.subr.bf16.mxu0 %v1898
    %5041 = vmatpush1.bf16.msra.mxu0 %v1897
    %5042 = vmatprep.subr.bf16.mxu0 %v1902
    %5043 = vmatpush1.bf16.msra.mxu0 %v1901
    %5044 = vmatprep.subr.bf16.mxu0 %v1906
    %5045 = vmatpush1.bf16.msra.mxu0 %v1905
    %5046 = vmatprep.subr.bf16.mxu0 %v1910
    %5047 = vmatpush1.bf16.msra.mxu0 %v1909
    %5048 = vmatprep.subr.bf16.mxu0 %v1914
    %5049 = vmatpush1.bf16.msra.mxu0 %v1913
    %5050 = vmatprep.subr.bf16.mxu0 %v1918
    %5051 = vmatpush1.bf16.msra.mxu0 %v1917
    %5052 = vmatprep.subr.bf16.mxu0 %v1922
    %5053 = vmatpush1.bf16.msra.mxu0 %v1921
    %5054 = vmatprep.subr.bf16.mxu0 %v1926
    %5055 = vmatpush1.bf16.msra.mxu0 %v1925
    %5056 = vmatprep.subr.bf16.mxu0 %v1930
    %5057 = vmatpush1.bf16.msra.mxu0 %v1929
    %5058 = vmatprep.subr.bf16.mxu0 %v1934
    %5059 = vmatpush1.bf16.msra.mxu0 %v1933
    %5060 = vmatprep.subr.bf16.mxu0 %v1938
    %5061 = vmatpush1.bf16.msra.mxu0 %v1937
    %5062 = vmatprep.subr.bf16.mxu0 %v1942
    %5063 = vmatpush1.bf16.msra.mxu0 %v1941
    %5064 = vmatprep.subr.bf16.mxu0 %v1946
    %5065 = vmatpush1.bf16.msra.mxu0 %v1945
    %5066 = vmatprep.mubr.bf16.mxu0 %v4925
    %5067 = vmatmul.mubr.bf16.gmra.mrb[0].mxu0 %v5033
    %v5068 = vpop.f32.mrb[0].mxu0
    %v5069 = vadd.f32 %v1676, %v5068
    %v5070 = vpop.f32.mrb[0].mxu0
    %v5071 = vadd.f32 %v1680, %v5070
    %v5072 = vpop.f32.mrb[0].mxu0
    %v5073 = vpop.f32.mrb[0].mxu0
    %5074 = vdwg.mxu0
    %5075 = vmatprep.subr.bf16.mxu0 %v1888
    %5076 = vmatpush1.bf16.msra.mxu0 %v1887
    %5077 = vmatprep.subr.bf16.mxu0 %v1892
    %5078 = vmatpush1.bf16.msra.mxu0 %v1891
    %5079 = vmatprep.subr.bf16.mxu0 %v1896
    %5080 = vmatpush1.bf16.msra.mxu0 %v1895
    %5081 = vmatprep.subr.bf16.mxu0 %v1900
    %5082 = vmatpush1.bf16.msra.mxu0 %v1899
    %5083 = vmatprep.subr.bf16.mxu0 %v1904
    %5084 = vmatpush1.bf16.msra.mxu0 %v1903
    %5085 = vmatprep.subr.bf16.mxu0 %v1908
    %5086 = vmatpush1.bf16.msra.mxu0 %v1907
    %5087 = vmatprep.subr.bf16.mxu0 %v1912
    %5088 = vmatpush1.bf16.msra.mxu0 %v1911
    %5089 = vmatprep.subr.bf16.mxu0 %v1916
    %5090 = vmatpush1.bf16.msra.mxu0 %v1915
    %5091 = vmatprep.subr.bf16.mxu0 %v1920
    %5092 = vmatpush1.bf16.msra.mxu0 %v1919
    %5093 = vmatprep.subr.bf16.mxu0 %v1924
    %5094 = vmatpush1.bf16.msra.mxu0 %v1923
    %5095 = vmatprep.subr.bf16.mxu0 %v1928
    %5096 = vmatpush1.bf16.msra.mxu0 %v1927
    %5097 = vmatprep.subr.bf16.mxu0 %v1932
    %5098 = vmatpush1.bf16.msra.mxu0 %v1931
    %5099 = vmatprep.subr.bf16.mxu0 %v1936
    %5100 = vmatpush1.bf16.msra.mxu0 %v1935
    %5101 = vmatprep.subr.bf16.mxu0 %v1940
    %5102 = vmatpush1.bf16.msra.mxu0 %v1939
    %5103 = vmatprep.subr.bf16.mxu0 %v1944
    %5104 = vmatpush1.bf16.msra.mxu0 %v1943
    %5105 = vmatprep.subr.bf16.mxu0 %v1948
    %5106 = vmatpush1.bf16.msra.mxu0 %v1947
    %5107 = vmatprep.mubr.bf16.mxu0 %v4925
    %5108 = vmatmul.mubr.bf16.gmra.mrb[0].mxu0 %v5033
    %v5109 = vpop.f32.mrb[0].mxu0
    %v5110 = vadd.f32 %v1684, %v5109
    %v5111 = vpop.f32.mrb[0].mxu0
    %v5112 = vadd.f32 %v1688, %v5111
    %v5113 = vpop.f32.mrb[0].mxu0
    %v5114 = vpop.f32.mrb[0].mxu0
    %5115 = vdwg.mxu0
    %v5116 = vxor.u32 %v5069, 2147483648
    %v5117 = vmul.f32 %v5116, 1.442695
    %v5118 = vpow.pop %v5117
    %v5119 = vadd.f32 %v5118, 1.0
    %v5120 = vrcp.pop %v5119
    %v5121 = vmul.f32 1.0, %v5120
    %v5122 = vxor.u32 %v5071, 2147483648
    %v5123 = vmul.f32 %v5122, 1.442695
    %v5124 = vpow.pop %v5123
    %v5125 = vadd.f32 %v5124, 1.0
    %v5126 = vrcp.pop %v5125
    %v5127 = vmul.f32 1.0, %v5126
    %v5128 = vtanh.pop %v5110
    %v5129 = vxor.u32 %v5112, 2147483648
    %v5130 = vmul.f32 %v5129, 1.442695
    %v5131 = vpow.pop %v5130
    %v5132 = vadd.f32 %v5131, 1.0
    %v5133 = vrcp.pop %v5132
    %v5134 = vmul.f32 1.0, %v5133
    %v5135 = vmul.f32 %v5127, %v4701
    %v5136 = vmul.f32 %v5121, %v5128
    %v5137 = vadd.f32 %v5135, %v5136
    %v5138 = vtanh.pop %v5137
    %v5139 = vmul.f32 %v5134, %v5138
    %v5140 = vpack.c.bf16 %v4924, %v4924
    %5141 = vmatprep.subr.bf16.mxu0 %v1259
    %5142 = vmatpush1.bf16.msra.mxu0 %v1258
    %5143 = vmatprep.subr.bf16.mxu0 %v1263
    %5144 = vmatpush1.bf16.msra.mxu0 %v1262
    %5145 = vmatprep.subr.bf16.mxu0 %v1267
    %5146 = vmatpush1.bf16.msra.mxu0 %v1266
    %5147 = vmatprep.subr.bf16.mxu0 %v1271
    %5148 = vmatpush1.bf16.msra.mxu0 %v1270
    %5149 = vmatprep.subr.bf16.mxu0 %v1275
    %5150 = vmatpush1.bf16.msra.mxu0 %v1274
    %5151 = vmatprep.subr.bf16.mxu0 %v1279
    %5152 = vmatpush1.bf16.msra.mxu0 %v1278
    %5153 = vmatprep.subr.bf16.mxu0 %v1283
    %5154 = vmatpush1.bf16.msra.mxu0 %v1282
    %5155 = vmatprep.subr.bf16.mxu0 %v1287
    %5156 = vmatpush1.bf16.msra.mxu0 %v1286
    %5157 = vmatprep.subr.bf16.mxu0 %v1291
    %5158 = vmatpush1.bf16.msra.mxu0 %v1290
    %5159 = vmatprep.subr.bf16.mxu0 %v1295
    %5160 = vmatpush1.bf16.msra.mxu0 %v1294
    %5161 = vmatprep.subr.bf16.mxu0 %v1299
    %5162 = vmatpush1.bf16.msra.mxu0 %v1298
    %5163 = vmatprep.subr.bf16.mxu0 %v1303
    %5164 = vmatpush1.bf16.msra.mxu0 %v1302
    %5165 = vmatprep.subr.bf16.mxu0 %v1307
    %5166 = vmatpush1.bf16.msra.mxu0 %v1306
    %5167 = vmatprep.subr.bf16.mxu0 %v1311
    %5168 = vmatpush1.bf16.msra.mxu0 %v1310
    %5169 = vmatprep.subr.bf16.mxu0 %v1315
    %5170 = vmatpush1.bf16.msra.mxu0 %v1314
    %5171 = vmatprep.subr.bf16.mxu0 %v1319
    %5172 = vmatpush1.bf16.msra.mxu0 %v1318
    %5173 = vmatprep.mubr.bf16.mxu0 %v5033
    %5174 = vmatmul.mubr.bf16.gmra.mrb[0].mxu0 %v5140
    %v5175 = vpop.f32.mrb[0].mxu0
    %v5176 = vadd.f32 %v1049, %v5175
    %v5177 = vpop.f32.mrb[0].mxu0
    %v5178 = vadd.f32 %v1053, %v5177
    %v5179 = vpop.f32.mrb[0].mxu0
    %v5180 = vpop.f32.mrb[0].mxu0
    %5181 = vdwg.mxu0
    %5182 = vmatprep.subr.bf16.mxu0 %v1261
    %5183 = vmatpush1.bf16.msra.mxu0 %v1260
    %5184 = vmatprep.subr.bf16.mxu0 %v1265
    %5185 = vmatpush1.bf16.msra.mxu0 %v1264
    %5186 = vmatprep.subr.bf16.mxu0 %v1269
    %5187 = vmatpush1.bf16.msra.mxu0 %v1268
    %5188 = vmatprep.subr.bf16.mxu0 %v1273
    %5189 = vmatpush1.bf16.msra.mxu0 %v1272
    %5190 = vmatprep.subr.bf16.mxu0 %v1277
    %5191 = vmatpush1.bf16.msra.mxu0 %v1276
    %5192 = vmatprep.subr.bf16.mxu0 %v1281
    %5193 = vmatpush1.bf16.msra.mxu0 %v1280
    %5194 = vmatprep.subr.bf16.mxu0 %v1285
    %5195 = vmatpush1.bf16.msra.mxu0 %v1284
    %5196 = vmatprep.subr.bf16.mxu0 %v1289
    %5197 = vmatpush1.bf16.msra.mxu0 %v1288
    %5198 = vmatprep.subr.bf16.mxu0 %v1293
    %5199 = vmatpush1.bf16.msra.mxu0 %v1292
    %5200 = vmatprep.subr.bf16.mxu0 %v1297
    %5201 = vmatpush1.bf16.msra.mxu0 %v1296
    %5202 = vmatprep.subr.bf16.mxu0 %v1301
    %5203 = vmatpush1.bf16.msra.mxu0 %v1300
    %5204 = vmatprep.subr.bf16.mxu0 %v1305
    %5205 = vmatpush1.bf16.msra.mxu0 %v1304
    %5206 = vmatprep.subr.bf16.mxu0 %v1309
    %5207 = vmatpush1.bf16.msra.mxu0 %v1308
    %5208 = vmatprep.subr.bf16.mxu0 %v1313
    %5209 = vmatpush1.bf16.msra.mxu0 %v1312
    %5210 = vmatprep.subr.bf16.mxu0 %v1317
    %5211 = vmatpush1.bf16.msra.mxu0 %v1316
    %5212 = vmatprep.subr.bf16.mxu0 %v1321
    %5213 = vmatpush1.bf16.msra.mxu0 %v1320
    %5214 = vmatprep.mubr.bf16.mxu0 %v5033
    %5215 = vmatmul.mubr.bf16.gmra.mrb[0].mxu0 %v5140
    %v5216 = vpop.f32.mrb[0].mxu0
    %v5217 = vadd.f32 %v1057, %v5216
    %v5218 = vpop.f32.mrb[0].mxu0
    %v5219 = vadd.f32 %v1061, %v5218
    %v5220 = vpop.f32.mrb[0].mxu0
    %v5221 = vpop.f32.mrb[0].mxu0
    %5222 = vdwg.mxu0
    %v5223 = vxor.u32 %v5176, 2147483648
    %v5224 = vmul.f32 %v5223, 1.442695
    %v5225 = vpow.pop %v5224
    %v5226 = vadd.f32 %v5225, 1.0
    %v5227 = vrcp.pop %v5226
    %v5228 = vmul.f32 1.0, %v5227
    %v5229 = vxor.u32 %v5178, 2147483648
    %v5230 = vmul.f32 %v5229, 1.442695
    %v5231 = vpow.pop %v5230
    %v5232 = vadd.f32 %v5231, 1.0
    %v5233 = vrcp.pop %v5232
    %v5234 = vmul.f32 1.0, %v5233
    %v5235 = vtanh.pop %v5217
    %v5236 = vxor.u32 %v5219, 2147483648
    %v5237 = vmul.f32 %v5236, 1.442695
    %v5238 = vpow.pop %v5237
    %v5239 = vadd.f32 %v5238, 1.0
    %v5240 = vrcp.pop %v5239
    %v5241 = vmul.f32 1.0, %v5240
    %v5242 = vmul.f32 %v5234, %v4808
    %v5243 = vmul.f32 %v5228, %v5235
    %v5244 = vadd.f32 %v5242, %v5243
    %v5245 = vtanh.pop %v5244
    %v5246 = vmul.f32 %v5241, %v5245
    %v5247 = vpack.c.bf16 %v5139, %v5139
    %v5248 = vpack.c.bf16 %v5032, %v5032
    %5249 = vmatprep.subr.bf16.mxu0 %v2620
    %5250 = vmatpush1.bf16.msra.mxu0 %v2619
    %5251 = vmatprep.subr.bf16.mxu0 %v2624
    %5252 = vmatpush1.bf16.msra.mxu0 %v2623
    %5253 = vmatprep.subr.bf16.mxu0 %v2628
    %5254 = vmatpush1.bf16.msra.mxu0 %v2627
    %5255 = vmatprep.subr.bf16.mxu0 %v2632
    %5256 = vmatpush1.bf16.msra.mxu0 %v2631
    %5257 = vmatprep.subr.bf16.mxu0 %v2636
    %5258 = vmatpush1.bf16.msra.mxu0 %v2635
    %5259 = vmatprep.subr.bf16.mxu0 %v2640
    %5260 = vmatpush1.bf16.msra.mxu0 %v2639
    %5261 = vmatprep.subr.bf16.mxu0 %v2644
    %5262 = vmatpush1.bf16.msra.mxu0 %v2643
    %5263 = vmatprep.subr.bf16.mxu0 %v2648
    %5264 = vmatpush1.bf16.msra.mxu0 %v2647
    %5265 = vmatprep.subr.bf16.mxu0 %v2652
    %5266 = vmatpush1.bf16.msra.mxu0 %v2651
    %5267 = vmatprep.subr.bf16.mxu0 %v2656
    %5268 = vmatpush1.bf16.msra.mxu0 %v2655
    %5269 = vmatprep.subr.bf16.mxu0 %v2660
    %5270 = vmatpush1.bf16.msra.mxu0 %v2659
    %5271 = vmatprep.subr.bf16.mxu0 %v2664
    %5272 = vmatpush1.bf16.msra.mxu0 %v2663
    %5273 = vmatprep.subr.bf16.mxu0 %v2668
    %5274 = vmatpush1.bf16.msra.mxu0 %v2667
    %5275 = vmatprep.subr.bf16.mxu0 %v2672
    %5276 = vmatpush1.bf16.msra.mxu0 %v2671
    %5277 = vmatprep.subr.bf16.mxu0 %v2676
    %5278 = vmatpush1.bf16.msra.mxu0 %v2675
    %5279 = vmatprep.subr.bf16.mxu0 %v2680
    %5280 = vmatpush1.bf16.msra.mxu0 %v2679
    %5281 = vmatprep.mubr.bf16.mxu0 %v5248
    %5282 = vmatmul.mubr.bf16.gmra.mrb[0].mxu0 %v5247
    %v5283 = vpop.f32.mrb[0].mxu0
    %v5284 = vadd.f32 %v2410, %v5283
    %v5285 = vpop.f32.mrb[0].mxu0
    %v5286 = vadd.f32 %v2414, %v5285
    %v5287 = vpop.f32.mrb[0].mxu0
    %v5288 = vpop.f32.mrb[0].mxu0
    %5289 = vdwg.mxu0
    %5290 = vmatprep.subr.bf16.mxu0 %v2622
    %5291 = vmatpush1.bf16.msra.mxu0 %v2621
    %5292 = vmatprep.subr.bf16.mxu0 %v2626
    %5293 = vmatpush1.bf16.msra.mxu0 %v2625
    %5294 = vmatprep.subr.bf16.mxu0 %v2630
    %5295 = vmatpush1.bf16.msra.mxu0 %v2629
    %5296 = vmatprep.subr.bf16.mxu0 %v2634
    %5297 = vmatpush1.bf16.msra.mxu0 %v2633
    %5298 = vmatprep.subr.bf16.mxu0 %v2638
    %5299 = vmatpush1.bf16.msra.mxu0 %v2637
    %5300 = vmatprep.subr.bf16.mxu0 %v2642
    %5301 = vmatpush1.bf16.msra.mxu0 %v2641
    %5302 = vmatprep.subr.bf16.mxu0 %v2646
    %5303 = vmatpush1.bf16.msra.mxu0 %v2645
    %5304 = vmatprep.subr.bf16.mxu0 %v2650
    %5305 = vmatpush1.bf16.msra.mxu0 %v2649
    %5306 = vmatprep.subr.bf16.mxu0 %v2654
    %5307 = vmatpush1.bf16.msra.mxu0 %v2653
    %5308 = vmatprep.subr.bf16.mxu0 %v2658
    %5309 = vmatpush1.bf16.msra.mxu0 %v2657
    %5310 = vmatprep.subr.bf16.mxu0 %v2662
    %5311 = vmatpush1.bf16.msra.mxu0 %v2661
    %5312 = vmatprep.subr.bf16.mxu0 %v2666
    %5313 = vmatpush1.bf16.msra.mxu0 %v2665
    %5314 = vmatprep.subr.bf16.mxu0 %v2670
    %5315 = vmatpush1.bf16.msra.mxu0 %v2669
    %5316 = vmatprep.subr.bf16.mxu0 %v2674
    %5317 = vmatpush1.bf16.msra.mxu0 %v2673
    %5318 = vmatprep.subr.bf16.mxu0 %v2678
    %5319 = vmatpush1.bf16.msra.mxu0 %v2677
    %5320 = vmatprep.subr.bf16.mxu0 %v2682
    %5321 = vmatpush1.bf16.msra.mxu0 %v2681
    %5322 = vmatprep.mubr.bf16.mxu0 %v5248
    %5323 = vmatmul.mubr.bf16.gmra.mrb[0].mxu0 %v5247
    %v5324 = vpop.f32.mrb[0].mxu0
    %v5325 = vadd.f32 %v2418, %v5324
    %v5326 = vpop.f32.mrb[0].mxu0
    %v5327 = vadd.f32 %v2422, %v5326
    %v5328 = vpop.f32.mrb[0].mxu0
    %v5329 = vpop.f32.mrb[0].mxu0
    %5330 = vdwg.mxu0
    %v5331 = vxor.u32 %v5284, 2147483648
    %v5332 = vmul.f32 %v5331, 1.442695
    %v5333 = vpow.pop %v5332
    %v5334 = vadd.f32 %v5333, 1.0
    %v5335 = vrcp.pop %v5334
    %v5336 = vmul.f32 1.0, %v5335
    %v5337 = vxor.u32 %v5286, 2147483648
    %v5338 = vmul.f32 %v5337, 1.442695
    %v5339 = vpow.pop %v5338
    %v5340 = vadd.f32 %v5339, 1.0
    %v5341 = vrcp.pop %v5340
    %v5342 = vmul.f32 1.0, %v5341
    %v5343 = vtanh.pop %v5325
    %v5344 = vxor.u32 %v5327, 2147483648
    %v5345 = vmul.f32 %v5344, 1.442695
    %v5346 = vpow.pop %v5345
    %v5347 = vadd.f32 %v5346, 1.0
    %v5348 = vrcp.pop %v5347
    %v5349 = vmul.f32 1.0, %v5348
    %v5350 = vmul.f32 %v5342, %v5030
    %v5351 = vmul.f32 %v5336, %v5343
    %v5352 = vadd.f32 %v5350, %v5351
    %v5353 = vtanh.pop %v5352
    %v5354 = vmul.f32 %v5349, %v5353
    %v5355 = vpack.c.bf16 %v5246, %v5246
    %5356 = vmatprep.subr.bf16.mxu0 %v1886
    %5357 = vmatpush1.bf16.msra.mxu0 %v1885
    %5358 = vmatprep.subr.bf16.mxu0 %v1890
    %5359 = vmatpush1.bf16.msra.mxu0 %v1889
    %5360 = vmatprep.subr.bf16.mxu0 %v1894
    %5361 = vmatpush1.bf16.msra.mxu0 %v1893
    %5362 = vmatprep.subr.bf16.mxu0 %v1898
    %5363 = vmatpush1.bf16.msra.mxu0 %v1897
    %5364 = vmatprep.subr.bf16.mxu0 %v1902
    %5365 = vmatpush1.bf16.msra.mxu0 %v1901
    %5366 = vmatprep.subr.bf16.mxu0 %v1906
    %5367 = vmatpush1.bf16.msra.mxu0 %v1905
    %5368 = vmatprep.subr.bf16.mxu0 %v1910
    %5369 = vmatpush1.bf16.msra.mxu0 %v1909
    %5370 = vmatprep.subr.bf16.mxu0 %v1914
    %5371 = vmatpush1.bf16.msra.mxu0 %v1913
    %5372 = vmatprep.subr.bf16.mxu0 %v1918
    %5373 = vmatpush1.bf16.msra.mxu0 %v1917
    %5374 = vmatprep.subr.bf16.mxu0 %v1922
    %5375 = vmatpush1.bf16.msra.mxu0 %v1921
    %5376 = vmatprep.subr.bf16.mxu0 %v1926
    %5377 = vmatpush1.bf16.msra.mxu0 %v1925
    %5378 = vmatprep.subr.bf16.mxu0 %v1930
    %5379 = vmatpush1.bf16.msra.mxu0 %v1929
    %5380 = vmatprep.subr.bf16.mxu0 %v1934
    %5381 = vmatpush1.bf16.msra.mxu0 %v1933
    %5382 = vmatprep.subr.bf16.mxu0 %v1938
    %5383 = vmatpush1.bf16.msra.mxu0 %v1937
    %5384 = vmatprep.subr.bf16.mxu0 %v1942
    %5385 = vmatpush1.bf16.msra.mxu0 %v1941
    %5386 = vmatprep.subr.bf16.mxu0 %v1946
    %5387 = vmatpush1.bf16.msra.mxu0 %v1945
    %5388 = vmatprep.mubr.bf16.mxu0 %v5247
    %5389 = vmatmul.mubr.bf16.gmra.mrb[0].mxu0 %v5355
    %v5390 = vpop.f32.mrb[0].mxu0
    %v5391 = vadd.f32 %v1676, %v5390
    %v5392 = vpop.f32.mrb[0].mxu0
    %v5393 = vadd.f32 %v1680, %v5392
    %v5394 = vpop.f32.mrb[0].mxu0
    %v5395 = vpop.f32.mrb[0].mxu0
    %5396 = vdwg.mxu0
    %5397 = vmatprep.subr.bf16.mxu0 %v1888
    %5398 = vmatpush1.bf16.msra.mxu0 %v1887
    %5399 = vmatprep.subr.bf16.mxu0 %v1892
    %5400 = vmatpush1.bf16.msra.mxu0 %v1891
    %5401 = vmatprep.subr.bf16.mxu0 %v1896
    %5402 = vmatpush1.bf16.msra.mxu0 %v1895
    %5403 = vmatprep.subr.bf16.mxu0 %v1900
    %5404 = vmatpush1.bf16.msra.mxu0 %v1899
    %5405 = vmatprep.subr.bf16.mxu0 %v1904
    %5406 = vmatpush1.bf16.msra.mxu0 %v1903
    %5407 = vmatprep.subr.bf16.mxu0 %v1908
    %5408 = vmatpush1.bf16.msra.mxu0 %v1907
    %5409 = vmatprep.subr.bf16.mxu0 %v1912
    %5410 = vmatpush1.bf16.msra.mxu0 %v1911
    %5411 = vmatprep.subr.bf16.mxu0 %v1916
    %5412 = vmatpush1.bf16.msra.mxu0 %v1915
    %5413 = vmatprep.subr.bf16.mxu0 %v1920
    %5414 = vmatpush1.bf16.msra.mxu0 %v1919
    %5415 = vmatprep.subr.bf16.mxu0 %v1924
    %5416 = vmatpush1.bf16.msra.mxu0 %v1923
    %5417 = vmatprep.subr.bf16.mxu0 %v1928
    %5418 = vmatpush1.bf16.msra.mxu0 %v1927
    %5419 = vmatprep.subr.bf16.mxu0 %v1932
    %5420 = vmatpush1.bf16.msra.mxu0 %v1931
    %5421 = vmatprep.subr.bf16.mxu0 %v1936
    %5422 = vmatpush1.bf16.msra.mxu0 %v1935
    %5423 = vmatprep.subr.bf16.mxu0 %v1940
    %5424 = vmatpush1.bf16.msra.mxu0 %v1939
    %5425 = vmatprep.subr.bf16.mxu0 %v1944
    %5426 = vmatpush1.bf16.msra.mxu0 %v1943
    %5427 = vmatprep.subr.bf16.mxu0 %v1948
    %5428 = vmatpush1.bf16.msra.mxu0 %v1947
    %5429 = vmatprep.mubr.bf16.mxu0 %v5247
    %5430 = vmatmul.mubr.bf16.gmra.mrb[0].mxu0 %v5355
    %v5431 = vpop.f32.mrb[0].mxu0
    %v5432 = vadd.f32 %v1684, %v5431
    %v5433 = vpop.f32.mrb[0].mxu0
    %v5434 = vadd.f32 %v1688, %v5433
    %v5435 = vpop.f32.mrb[0].mxu0
    %v5436 = vpop.f32.mrb[0].mxu0
    %5437 = vdwg.mxu0
    %v5438 = vxor.u32 %v5391, 2147483648
    %v5439 = vmul.f32 %v5438, 1.442695
    %v5440 = vpow.pop %v5439
    %v5441 = vadd.f32 %v5440, 1.0
    %v5442 = vrcp.pop %v5441
    %v5443 = vmul.f32 1.0, %v5442
    %v5444 = vxor.u32 %v5393, 2147483648
    %v5445 = vmul.f32 %v5444, 1.442695
    %v5446 = vpow.pop %v5445
    %v5447 = vadd.f32 %v5446, 1.0
    %v5448 = vrcp.pop %v5447
    %v5449 = vmul.f32 1.0, %v5448
    %v5450 = vtanh.pop %v5432
    %v5451 = vxor.u32 %v5434, 2147483648
    %v5452 = vmul.f32 %v5451, 1.442695
    %v5453 = vpow.pop %v5452
    %v5454 = vadd.f32 %v5453, 1.0
    %v5455 = vrcp.pop %v5454
    %v5456 = vmul.f32 1.0, %v5455
    %v5457 = vmul.f32 %v5449, %v5137
    %v5458 = vmul.f32 %v5443, %v5450
    %v5459 = vadd.f32 %v5457, %v5458
    %v5460 = vtanh.pop %v5459
    %v5461 = vmul.f32 %v5456, %v5460
    %v5462 = vpack.c.bf16 %v5461, %v5461
    %v5463 = vpack.c.bf16 %v5354, %v5354
    %5464 = vmatprep.subr.bf16.mxu0 %v2620
    %5465 = vmatpush1.bf16.msra.mxu0 %v2619
    %5466 = vmatprep.subr.bf16.mxu0 %v2624
    %5467 = vmatpush1.bf16.msra.mxu0 %v2623
    %5468 = vmatprep.subr.bf16.mxu0 %v2628
    %5469 = vmatpush1.bf16.msra.mxu0 %v2627
    %5470 = vmatprep.subr.bf16.mxu0 %v2632
    %5471 = vmatpush1.bf16.msra.mxu0 %v2631
    %5472 = vmatprep.subr.bf16.mxu0 %v2636
    %5473 = vmatpush1.bf16.msra.mxu0 %v2635
    %5474 = vmatprep.subr.bf16.mxu0 %v2640
    %5475 = vmatpush1.bf16.msra.mxu0 %v2639
    %5476 = vmatprep.subr.bf16.mxu0 %v2644
    %5477 = vmatpush1.bf16.msra.mxu0 %v2643
    %5478 = vmatprep.subr.bf16.mxu0 %v2648
    %5479 = vmatpush1.bf16.msra.mxu0 %v2647
    %5480 = vmatprep.subr.bf16.mxu0 %v2652
    %5481 = vmatpush1.bf16.msra.mxu0 %v2651
    %5482 = vmatprep.subr.bf16.mxu0 %v2656
    %5483 = vmatpush1.bf16.msra.mxu0 %v2655
    %5484 = vmatprep.subr.bf16.mxu0 %v2660
    %5485 = vmatpush1.bf16.msra.mxu0 %v2659
    %5486 = vmatprep.subr.bf16.mxu0 %v2664
    %5487 = vmatpush1.bf16.msra.mxu0 %v2663
    %5488 = vmatprep.subr.bf16.mxu0 %v2668
    %5489 = vmatpush1.bf16.msra.mxu0 %v2667
    %5490 = vmatprep.subr.bf16.mxu0 %v2672
    %5491 = vmatpush1.bf16.msra.mxu0 %v2671
    %5492 = vmatprep.subr.bf16.mxu0 %v2676
    %5493 = vmatpush1.bf16.msra.mxu0 %v2675
    %5494 = vmatprep.subr.bf16.mxu0 %v2680
    %5495 = vmatpush1.bf16.msra.mxu0 %v2679
    %5496 = vmatprep.mubr.bf16.mxu0 %v5463
    %5497 = vmatmul.mubr.bf16.gmra.mrb[0].mxu0 %v5462
    %v5498 = vpop.f32.mrb[0].mxu0
    %v5499 = vadd.f32 %v2410, %v5498
    %v5500 = vpop.f32.mrb[0].mxu0
    %v5501 = vadd.f32 %v2414, %v5500
    %v5502 = vpop.f32.mrb[0].mxu0
    %v5503 = vpop.f32.mrb[0].mxu0
    %5504 = vdwg.mxu0
    %5505 = vmatprep.subr.bf16.mxu0 %v2622
    %5506 = vmatpush1.bf16.msra.mxu0 %v2621
    %5507 = vmatprep.subr.bf16.mxu0 %v2626
    %5508 = vmatpush1.bf16.msra.mxu0 %v2625
    %5509 = vmatprep.subr.bf16.mxu0 %v2630
    %5510 = vmatpush1.bf16.msra.mxu0 %v2629
    %5511 = vmatprep.subr.bf16.mxu0 %v2634
    %5512 = vmatpush1.bf16.msra.mxu0 %v2633
    %5513 = vmatprep.subr.bf16.mxu0 %v2638
    %5514 = vmatpush1.bf16.msra.mxu0 %v2637
    %5515 = vmatprep.subr.bf16.mxu0 %v2642
    %5516 = vmatpush1.bf16.msra.mxu0 %v2641
    %5517 = vmatprep.subr.bf16.mxu0 %v2646
    %5518 = vmatpush1.bf16.msra.mxu0 %v2645
    %5519 = vmatprep.subr.bf16.mxu0 %v2650
    %5520 = vmatpush1.bf16.msra.mxu0 %v2649
    %5521 = vmatprep.subr.bf16.mxu0 %v2654
    %5522 = vmatpush1.bf16.msra.mxu0 %v2653
    %5523 = vmatprep.subr.bf16.mxu0 %v2658
    %5524 = vmatpush1.bf16.msra.mxu0 %v2657
    %5525 = vmatprep.subr.bf16.mxu0 %v2662
    %5526 = vmatpush1.bf16.msra.mxu0 %v2661
    %5527 = vmatprep.subr.bf16.mxu0 %v2666
    %5528 = vmatpush1.bf16.msra.mxu0 %v2665
    %5529 = vmatprep.subr.bf16.mxu0 %v2670
    %5530 = vmatpush1.bf16.msra.mxu0 %v2669
    %5531 = vmatprep.subr.bf16.mxu0 %v2674
    %5532 = vmatpush1.bf16.msra.mxu0 %v2673
    %5533 = vmatprep.subr.bf16.mxu0 %v2678
    %5534 = vmatpush1.bf16.msra.mxu0 %v2677
    %5535 = vmatprep.subr.bf16.mxu0 %v2682
    %5536 = vmatpush1.bf16.msra.mxu0 %v2681
    %5537 = vmatprep.mubr.bf16.mxu0 %v5463
    %5538 = vmatmul.mubr.bf16.gmra.mrb[0].mxu0 %v5462
    %v5539 = vpop.f32.mrb[0].mxu0
    %v5540 = vadd.f32 %v2418, %v5539
    %v5541 = vpop.f32.mrb[0].mxu0
    %v5542 = vadd.f32 %v2422, %v5541
    %v5543 = vpop.f32.mrb[0].mxu0
    %v5544 = vpop.f32.mrb[0].mxu0
    %5545 = vdwg.mxu0
    %v5546 = vxor.u32 %v5499, 2147483648
    %v5547 = vmul.f32 %v5546, 1.442695
    %v5548 = vpow.pop %v5547
    %v5549 = vadd.f32 %v5548, 1.0
    %v5550 = vrcp.pop %v5549
    %v5551 = vmul.f32 1.0, %v5550
    %v5552 = vxor.u32 %v5501, 2147483648
    %v5553 = vmul.f32 %v5552, 1.442695
    %v5554 = vpow.pop %v5553
    %v5555 = vadd.f32 %v5554, 1.0
    %v5556 = vrcp.pop %v5555
    %v5557 = vmul.f32 1.0, %v5556
    %v5558 = vtanh.pop %v5540
    %v5559 = vxor.u32 %v5542, 2147483648
    %v5560 = vmul.f32 %v5559, 1.442695
    %v5561 = vpow.pop %v5560
    %v5562 = vadd.f32 %v5561, 1.0
    %v5563 = vrcp.pop %v5562
    %v5564 = vmul.f32 1.0, %v5563
    %v5565 = vmul.f32 %v5557, %v5352
    %v5566 = vmul.f32 %v5551, %v5558
    %v5567 = vadd.f32 %v5565, %v5566
    %v5568 = vtanh.pop %v5567
    %v5569 = vmul.f32 %v5564, %v5568
    %v5570 = vld [vmem:[%s3] sm:$0xff]
    %v5571 = vld [vmem:[%s3 + $0x8] sm:$0xff]
    %v5572 = vld [vmem:[%s3 + $0x10] sm:$0xff]
    %v5573 = vld [vmem:[%s3 + $0x18] sm:$0xff]
    %v5574 = vld [vmem:[%s3 + $0x20] sm:$0xff]
    %v5575 = vld [vmem:[%s3 + $0x28] sm:$0xff]
    %v5576 = vld [vmem:[%s3 + $0x30] sm:$0xff]
    %v5577 = vld [vmem:[%s3 + $0x38] sm:$0xff]
    %v5578 = vld [vmem:[%s3 + $0x40] sm:$0xff]
    %v5579 = vld [vmem:[%s3 + $0x48] sm:$0xff]
    %v5580 = vld [vmem:[%s3 + $0x50] sm:$0xff]
    %v5581 = vld [vmem:[%s3 + $0x58] sm:$0xff]
    %v5582 = vld [vmem:[%s3 + $0x60] sm:$0xff]
    %v5583 = vld [vmem:[%s3 + $0x68] sm:$0xff]
    %v5584 = vld [vmem:[%s3 + $0x70] sm:$0xff]
    %v5585 = vld [vmem:[%s3 + $0x78] sm:$0xff]
    %v5586 = vld [vmem:[%s5] sm:$0xf]
    %v5587 = vpack.c.bf16 %v5246, %v4924
    %v5588 = vpack.c.bf16 %v5569, %v5461
    %v5589 = vld [vmem:[%s29] sm:$0xff]
    %v5590 = vld [vmem:[%s29 + $0x8] sm:$0xf]
    %v5591 = vld [vmem:[%s29 + $0xc] sm:$0xff]
    %v5592 = vld [vmem:[%s29 + $0x14] sm:$0xf]
    %v5593 = vld [vmem:[%s29 + $0x18] sm:$0xff]
    %v5594 = vld [vmem:[%s29 + $0x20] sm:$0xf]
    %v5595 = vld [vmem:[%s29 + $0x24] sm:$0xff]
    %v5596 = vld [vmem:[%s29 + $0x2c] sm:$0xf]
    %v5597 = vld [vmem:[%s29 + $0x30] sm:$0xff]
    %v5598 = vld [vmem:[%s29 + $0x38] sm:$0xf]
    %v5599 = vld [vmem:[%s29 + $0x3c] sm:$0xff]
    %v5600 = vld [vmem:[%s29 + $0x44] sm:$0xf]
    %v5601 = vld [vmem:[%s29 + $0x48] sm:$0xff]
    %v5602 = vld [vmem:[%s29 + $0x50] sm:$0xf]
    %v5603 = vld [vmem:[%s29 + $0x54] sm:$0xff]
    %v5604 = vld [vmem:[%s29 + $0x5c] sm:$0xf]
    %v5605 = vld [vmem:[%s29 + $0x60] sm:$0xff]
    %v5606 = vld [vmem:[%s29 + $0x68] sm:$0xf]
    %v5607 = vld [vmem:[%s29 + $0x6c] sm:$0xff]
    %v5608 = vld [vmem:[%s29 + $0x74] sm:$0xf]
    %v5609 = vld [vmem:[%s29 + $0x78] sm:$0xff]
    %v5610 = vld [vmem:[%s29 + $0x80] sm:$0xf]
    %v5611 = vld [vmem:[%s29 + $0x84] sm:$0xff]
    %v5612 = vld [vmem:[%s29 + $0x8c] sm:$0xf]
    %v5613 = vld [vmem:[%s29 + $0x90] sm:$0xff]
    %v5614 = vld [vmem:[%s29 + $0x98] sm:$0xf]
    %v5615 = vld [vmem:[%s29 + $0x9c] sm:$0xff]
    %v5616 = vld [vmem:[%s29 + $0xa4] sm:$0xf]
    %v5617 = vld [vmem:[%s29 + $0xa8] sm:$0xff]
    %v5618 = vld [vmem:[%s29 + $0xb0] sm:$0xf]
    %v5619 = vld [vmem:[%s29 + $0xb4] sm:$0xff]
    %v5620 = vld [vmem:[%s29 + $0xbc] sm:$0xf]
    %v5621 = vld [vmem:[%s31] sm:$0x7]
    %v5623 = vlaneseq
    %v5624 = vshrl.u32 %v5623, 7
    %v5625 = vsub.s32 0, %v5624
    %v5626 = vrot.slane %v5621, %v5625
    %v5627 = vlaneseq
    %v5628 = vshrl.u32 %v5627, 7
    %v5629 = vsub.s32 1, %v5628
    %v5630 = vrot.slane %v5621, %v5629
    %v5631 = vlaneseq
    %v5632 = vshrl.u32 %v5631, 7
    %v5633 = vsub.s32 2, %v5632
    %v5634 = vrot.slane %v5621, %v5633
    %v5670 = vunpack.c.l.b16 %v5589
    %v5671 = vunpack.c.h.b16 %v5589
    %v5672 = vunpack.c.l.b16 %v5590
    %v5673 = vunpack.c.l.b16 %v5591
    %v5674 = vunpack.c.h.b16 %v5591
    %v5675 = vunpack.c.l.b16 %v5592
    %v5676 = vunpack.c.l.b16 %v5593
    %v5677 = vunpack.c.h.b16 %v5593
    %v5678 = vunpack.c.l.b16 %v5594
    %v5679 = vunpack.c.l.b16 %v5595
    %v5680 = vunpack.c.h.b16 %v5595
    %v5681 = vunpack.c.l.b16 %v5596
    %v5682 = vunpack.c.l.b16 %v5597
    %v5683 = vunpack.c.h.b16 %v5597
    %v5684 = vunpack.c.l.b16 %v5598
    %v5685 = vunpack.c.l.b16 %v5599
    %v5686 = vunpack.c.h.b16 %v5599
    %v5687 = vunpack.c.l.b16 %v5600
    %v5688 = vunpack.c.l.b16 %v5601
    %v5689 = vunpack.c.h.b16 %v5601
    %v5690 = vunpack.c.l.b16 %v5602
    %v5691 = vunpack.c.l.b16 %v5603
    %v5692 = vunpack.c.h.b16 %v5603
    %v5693 = vunpack.c.l.b16 %v5604
    %v5694 = vunpack.c.l.b16 %v5605
    %v5695 = vunpack.c.h.b16 %v5605
    %v5696 = vunpack.c.l.b16 %v5606
    %v5697 = vunpack.c.l.b16 %v5607
    %v5698 = vunpack.c.h.b16 %v5607
    %v5699 = vunpack.c.l.b16 %v5608
    %v5700 = vunpack.c.l.b16 %v5609
    %v5701 = vunpack.c.h.b16 %v5609
    %v5702 = vunpack.c.l.b16 %v5610
    %v5703 = vunpack.c.l.b16 %v5611
    %v5704 = vunpack.c.h.b16 %v5611
    %v5705 = vunpack.c.l.b16 %v5612
    %v5706 = vunpack.c.l.b16 %v5613
    %v5707 = vunpack.c.h.b16 %v5613
    %v5708 = vunpack.c.l.b16 %v5614
    %v5709 = vunpack.c.l.b16 %v5615
    %v5710 = vunpack.c.h.b16 %v5615
    %v5711 = vunpack.c.l.b16 %v5616
    %v5712 = vunpack.c.l.b16 %v5617
    %v5713 = vunpack.c.h.b16 %v5617
    %v5714 = vunpack.c.l.b16 %v5618
    %v5715 = vunpack.c.l.b16 %v5619
    %v5716 = vunpack.c.h.b16 %v5619
    %v5717 = vunpack.c.l.b16 %v5620
    %v5718 = vpack.c.b16 %v5673, %v5670
    %v5719 = vpack.c.b16 %v5674, %v5671
    %v5720 = vpack.c.b16 %v5675, %v5672
    %v5721 = vpack.c.b16 %v5679, %v5676
    %v5722 = vpack.c.b16 %v5680, %v5677
    %v5723 = vpack.c.b16 %v5681, %v5678
    %v5724 = vpack.c.b16 %v5685, %v5682
    %v5725 = vpack.c.b16 %v5686, %v5683
    %v5726 = vpack.c.b16 %v5687, %v5684
    %v5727 = vpack.c.b16 %v5691, %v5688
    %v5728 = vpack.c.b16 %v5692, %v5689
    %v5729 = vpack.c.b16 %v5693, %v5690
    %v5730 = vpack.c.b16 %v5697, %v5694
    %v5731 = vpack.c.b16 %v5698, %v5695
    %v5732 = vpack.c.b16 %v5699, %v5696
    %v5733 = vpack.c.b16 %v5703, %v5700
    %v5734 = vpack.c.b16 %v5704, %v5701
    %v5735 = vpack.c.b16 %v5705, %v5702
    %v5736 = vpack.c.b16 %v5709, %v5706
    %v5737 = vpack.c.b16 %v5710, %v5707
    %v5738 = vpack.c.b16 %v5711, %v5708
    %v5739 = vpack.c.b16 %v5715, %v5712
    %v5740 = vpack.c.b16 %v5716, %v5713
    %v5741 = vpack.c.b16 %v5717, %v5714
    %5766 = vmatprep.subr.bf16.mxu0 %v5719
    %5767 = vmatpush1.bf16.msra.mxu0 %v5718
    %5768 = vmatprep.subr.bf16.mxu0 %v5722
    %5769 = vmatpush1.bf16.msra.mxu0 %v5721
    %5770 = vmatprep.subr.bf16.mxu0 %v5725
    %5771 = vmatpush1.bf16.msra.mxu0 %v5724
    %5772 = vmatprep.subr.bf16.mxu0 %v5728
    %5773 = vmatpush1.bf16.msra.mxu0 %v5727
    %5774 = vmatprep.subr.bf16.mxu0 %v5731
    %5775 = vmatpush1.bf16.msra.mxu0 %v5730
    %5776 = vmatprep.subr.bf16.mxu0 %v5734
    %5777 = vmatpush1.bf16.msra.mxu0 %v5733
    %5778 = vmatprep.subr.bf16.mxu0 %v5737
    %5779 = vmatpush1.bf16.msra.mxu0 %v5736
    %5780 = vmatprep.subr.bf16.mxu0 %v5740
    %5781 = vmatpush1.bf16.msra.mxu0 %v5739
    %5782 = vmatprep.subr.bf16.mxu0 0
    %5783 = vmatpush1.bf16.msra.mxu0 0
    %5784 = vmatprep.subr.bf16.mxu0 0
    %5785 = vmatpush1.bf16.msra.mxu0 0
    %5786 = vmatprep.subr.bf16.mxu0 0
    %5787 = vmatpush1.bf16.msra.mxu0 0
    %5788 = vmatprep.subr.bf16.mxu0 0
    %5789 = vmatpush1.bf16.msra.mxu0 0
    %5790 = vmatprep.subr.bf16.mxu0 0
    %5791 = vmatpush1.bf16.msra.mxu0 0
    %5792 = vmatprep.subr.bf16.mxu0 0
    %5793 = vmatpush1.bf16.msra.mxu0 0
    %5794 = vmatprep.subr.bf16.mxu0 0
    %5795 = vmatpush1.bf16.msra.mxu0 0
    %5796 = vmatprep.subr.bf16.mxu0 0
    %5797 = vmatpush1.bf16.msra.mxu0 0
    %5798 = vmatprep.mubr.bf16.mxu0 0
    %5799 = vmatmul.mubr.bf16.gmra.mrb[0].mxu0 %v5587
    %v5800 = vpop.f32.mrb[0].mxu0
    %v5801 = vadd.f32 %v5626, %v5800
    %v5802 = vpop.f32.mrb[0].mxu0
    %v5803 = vadd.f32 %v5630, %v5802
    %v5804 = vpop.f32.mrb[0].mxu0
    %v5805 = vadd.f32 %v5626, %v5804
    %v5806 = vpop.f32.mrb[0].mxu0
    %v5807 = vadd.f32 %v5630, %v5806
    %5808 = vmatprep.mubr.bf16.mxu0 0
    %5809 = vmatmul.mubr.bf16.gmra.mrb[0].mxu0 %v5588
    %v5810 = vpop.f32.mrb[0].mxu0
    %v5811 = vadd.f32 %v5626, %v5810
    %v5812 = vpop.f32.mrb[0].mxu0
    %v5813 = vadd.f32 %v5630, %v5812
    %v5814 = vpop.f32.mrb[0].mxu0
    %v5815 = vadd.f32 %v5626, %v5814
    %v5816 = vpop.f32.mrb[0].mxu0
    %v5817 = vadd.f32 %v5630, %v5816
    %5818 = vdwg.mxu0
    %5819 = vmatprep.subr.bf16.mxu0 0
    %5820 = vmatpush1.bf16.msra.mxu0 %v5720
    %5821 = vmatprep.subr.bf16.mxu0 0
    %5822 = vmatpush1.bf16.msra.mxu0 %v5723
    %5823 = vmatprep.subr.bf16.mxu0 0
    %5824 = vmatpush1.bf16.msra.mxu0 %v5726
    %5825 = vmatprep.subr.bf16.mxu0 0
    %5826 = vmatpush1.bf16.msra.mxu0 %v5729
    %5827 = vmatprep.subr.bf16.mxu0 0
    %5828 = vmatpush1.bf16.msra.mxu0 %v5732
    %5829 = vmatprep.subr.bf16.mxu0 0
    %5830 = vmatpush1.bf16.msra.mxu0 %v5735
    %5831 = vmatprep.subr.bf16.mxu0 0
    %5832 = vmatpush1.bf16.msra.mxu0 %v5738
    %5833 = vmatprep.subr.bf16.mxu0 0
    %5834 = vmatpush1.bf16.msra.mxu0 %v5741
    %5835 = vmatprep.subr.bf16.mxu0 0
    %5836 = vmatpush1.bf16.msra.mxu0 0
    %5837 = vmatprep.subr.bf16.mxu0 0
    %5838 = vmatpush1.bf16.msra.mxu0 0
    %5839 = vmatprep.subr.bf16.mxu0 0
    %5840 = vmatpush1.bf16.msra.mxu0 0
    %5841 = vmatprep.subr.bf16.mxu0 0
    %5842 = vmatpush1.bf16.msra.mxu0 0
    %5843 = vmatprep.subr.bf16.mxu0 0
    %5844 = vmatpush1.bf16.msra.mxu0 0
    %5845 = vmatprep.subr.bf16.mxu0 0
    %5846 = vmatpush1.bf16.msra.mxu0 0
    %5847 = vmatprep.subr.bf16.mxu0 0
    %5848 = vmatpush1.bf16.msra.mxu0 0
    %5849 = vmatprep.subr.bf16.mxu0 0
    %5850 = vmatpush1.bf16.msra.mxu0 0
    %5851 = vmatprep.mubr.bf16.mxu0 0
    %5852 = vmatmul.mubr.bf16.gmra.mrb[0].mxu0 %v5587
    %v5853 = vpop.f32.mrb[0].mxu0
    %v5854 = vadd.f32 %v5634, %v5853
    %v5855 = vpop.f32.mrb[0].mxu0
    %v5856 = vpop.f32.mrb[0].mxu0
    %v5857 = vadd.f32 %v5634, %v5856
    %v5858 = vpop.f32.mrb[0].mxu0
    %5859 = vmatprep.mubr.bf16.mxu0 0
    %5860 = vmatmul.mubr.bf16.gmra.mrb[0].mxu0 %v5588
    %v5861 = vpop.f32.mrb[0].mxu0
    %v5862 = vadd.f32 %v5634, %v5861
    %v5863 = vpop.f32.mrb[0].mxu0
    %v5864 = vpop.f32.mrb[0].mxu0
    %v5865 = vadd.f32 %v5634, %v5864
    %v5866 = vpop.f32.mrb[0].mxu0
    %5867 = vdwg.mxu0
    %v5868 = vmul.f32 %v5801, 0.17677669
    %v5869 = vmul.f32 %v5805, 0.17677669
    %v5870 = vmul.f32 %v5811, 0.17677669
    %v5871 = vmul.f32 %v5815, 0.17677669
    %v5872 = vpack.c.bf16 %v5807, %v5803
    %v5873 = vpack.c.bf16 %v5817, %v5813
    %v5874 = vlaneseq
    %v5875 = vshrl.u32 %v5874, 7
    %v5876 = vsub.s32 0, %v5875
    %v5877 = vrot.slane %v5586, %v5876
    %v5878 = vmul.f32 %v5868, %v5877
    %v5879 = vmul.f32 %v5869, %v5877
    %v5880 = vmul.f32 %v5870, %v5877
    %v5881 = vmul.f32 %v5871, %v5877
    %v5882 = vlaneseq
    %v5883 = vshrl.u32 %v5882, 7
    %v5884 = vsub.s32 1, %v5883
    %v5885 = vrot.slane %v5586, %v5884
    %v5886 = vmul.f32 %v5868, %v5885
    %v5887 = vmul.f32 %v5869, %v5885
    %v5888 = vmul.f32 %v5870, %v5885
    %v5889 = vmul.f32 %v5871, %v5885
    %v5890 = vlaneseq
    %v5891 = vshrl.u32 %v5890, 7
    %v5892 = vsub.s32 2, %v5891
    %v5893 = vrot.slane %v5586, %v5892
    %v5894 = vmul.f32 %v5868, %v5893
    %v5895 = vmul.f32 %v5869, %v5893
    %v5896 = vmul.f32 %v5870, %v5893
    %v5897 = vmul.f32 %v5871, %v5893
    %v5898 = vlaneseq
    %v5899 = vshrl.u32 %v5898, 7
    %v5900 = vsub.s32 3, %v5899
    %v5901 = vrot.slane %v5586, %v5900
    %v5902 = vmul.f32 %v5868, %v5901
    %v5903 = vmul.f32 %v5869, %v5901
    %v5904 = vmul.f32 %v5870, %v5901
    %v5905 = vmul.f32 %v5871, %v5901
    %v5906 = vpack.c.bf16 %v5879, %v5878
    %v5907 = vpack.c.bf16 %v5881, %v5880
    %v5908 = vpack.c.bf16 %v5887, %v5886
    %v5909 = vpack.c.bf16 %v5889, %v5888
    %v5910 = vpack.c.bf16 %v5895, %v5894
    %v5911 = vpack.c.bf16 %v5897, %v5896
    %v5912 = vpack.c.bf16 %v5903, %v5902
    %v5913 = vpack.c.bf16 %v5905, %v5904
    %5914 = vmatprep.subr.bf16.mxu0 0
    %5915 = vmatpush1.bf16.xpose.msra.mxu0 %v5872
    %5916 = vmatprep.subr.bf16.mxu0 0
    %5917 = vmatpush1.bf16.xpose.msra.mxu0 %v5873
    %5918 = vmatprep.subr.bf16.mxu0 0
    %5919 = vmatpush1.bf16.xpose.msra.mxu0 0
    %5920 = vmatprep.subr.bf16.mxu0 0
    %5921 = vmatpush1.bf16.xpose.msra.mxu0 0
    %5922 = vmatprep.subr.bf16.mxu0 0
    %5923 = vmatpush1.bf16.xpose.msra.mxu0 0
    %5924 = vmatprep.subr.bf16.mxu0 0
    %5925 = vmatpush1.bf16.xpose.msra.mxu0 0
    %5926 = vmatprep.subr.bf16.mxu0 0
    %5927 = vmatpush1.bf16.xpose.msra.mxu0 0
    %5928 = vmatprep.subr.bf16.mxu0 0
    %5929 = vmatpush1.bf16.xpose.msra.mxu0 0
    %5930 = vmatprep.subr.bf16.mxu0 0
    %5931 = vmatpush1.bf16.xpose.msra.mxu0 0
    %5932 = vmatprep.subr.bf16.mxu0 0
    %5933 = vmatpush1.bf16.xpose.msra.mxu0 0
    %5934 = vmatprep.subr.bf16.mxu0 0
    %5935 = vmatpush1.bf16.xpose.msra.mxu0 0
    %5936 = vmatprep.subr.bf16.mxu0 0
    %5937 = vmatpush1.bf16.xpose.msra.mxu0 0
    %5938 = vmatprep.subr.bf16.mxu0 0
    %5939 = vmatpush1.bf16.xpose.msra.mxu0 0
    %5940 = vmatprep.subr.bf16.mxu0 0
    %5941 = vmatpush1.bf16.xpose.msra.mxu0 0
    %5942 = vmatprep.subr.bf16.mxu0 0
    %5943 = vmatpush1.bf16.xpose.msra.mxu0 0
    %5944 = vmatprep.subr.bf16.mxu0 0
    %5945 = vmatpush1.bf16.xpose.msra.mxu0 0
    %5946 = vmatprep.mubr.bf16.mxu0 0
    %5947 = vmatmul.mubr.bf16.gmra.mrb[0].mxu0 %v5906
    %v5948 = vpop.f32.mrb[0].mxu0
    %v5949 = vadd.f32 %v5570, %v5948
    %v5950 = vpop.f32.mrb[0].mxu0
    %v5951 = vpop.f32.mrb[0].mxu0
    %v5952 = vadd.f32 %v5571, %v5951
    %v5953 = vpop.f32.mrb[0].mxu0
    %5954 = vmatprep.mubr.bf16.mxu0 0
    %5955 = vmatmul.mubr.bf16.gmra.mrb[0].mxu0 %v5907
    %v5956 = vpop.f32.mrb[0].mxu0
    %v5957 = vadd.f32 %v5572, %v5956
    %v5958 = vpop.f32.mrb[0].mxu0
    %v5959 = vpop.f32.mrb[0].mxu0
    %v5960 = vadd.f32 %v5573, %v5959
    %v5961 = vpop.f32.mrb[0].mxu0
    %5962 = vmatprep.mubr.bf16.mxu0 0
    %5963 = vmatmul.mubr.bf16.gmra.mrb[0].mxu0 %v5908
    %v5964 = vpop.f32.mrb[0].mxu0
    %v5965 = vadd.f32 %v5574, %v5964
    %v5966 = vpop.f32.mrb[0].mxu0
    %v5967 = vpop.f32.mrb[0].mxu0
    %v5968 = vadd.f32 %v5575, %v5967
    %v5969 = vpop.f32.mrb[0].mxu0
    %5970 = vmatprep.mubr.bf16.mxu0 0
    %5971 = vmatmul.mubr.bf16.gmra.mrb[0].mxu0 %v5909
    %v5972 = vpop.f32.mrb[0].mxu0
    %v5973 = vadd.f32 %v5576, %v5972
    %v5974 = vpop.f32.mrb[0].mxu0
    %v5975 = vpop.f32.mrb[0].mxu0
    %v5976 = vadd.f32 %v5577, %v5975
    %v5977 = vpop.f32.mrb[0].mxu0
    %5978 = vmatprep.mubr.bf16.mxu0 0
    %5979 = vmatmul.mubr.bf16.gmra.mrb[0].mxu0 %v5910
    %v5980 = vpop.f32.mrb[0].mxu0
    %v5981 = vadd.f32 %v5578, %v5980
    %v5982 = vpop.f32.mrb[0].mxu0
    %v5983 = vpop.f32.mrb[0].mxu0
    %v5984 = vadd.f32 %v5579, %v5983
    %v5985 = vpop.f32.mrb[0].mxu0
    %5986 = vmatprep.mubr.bf16.mxu0 0
    %5987 = vmatmul.mubr.bf16.gmra.mrb[0].mxu0 %v5911
    %v5988 = vpop.f32.mrb[0].mxu0
    %v5989 = vadd.f32 %v5580, %v5988
    %v5990 = vpop.f32.mrb[0].mxu0
    %v5991 = vpop.f32.mrb[0].mxu0
    %v5992 = vadd.f32 %v5581, %v5991
    %v5993 = vpop.f32.mrb[0].mxu0
    %5994 = vmatprep.mubr.bf16.mxu0 0
    %5995 = vmatmul.mubr.bf16.gmra.mrb[0].mxu0 %v5912
    %v5996 = vpop.f32.mrb[0].mxu0
    %v5997 = vadd.f32 %v5582, %v5996
    %v5998 = vpop.f32.mrb[0].mxu0
    %v5999 = vpop.f32.mrb[0].mxu0
    %v6000 = vadd.f32 %v5583, %v5999
    %v6001 = vpop.f32.mrb[0].mxu0
    %6002 = vmatprep.mubr.bf16.mxu0 0
    %6003 = vmatmul.mubr.bf16.gmra.mrb[0].mxu0 %v5913
    %v6004 = vpop.f32.mrb[0].mxu0
    %v6005 = vadd.f32 %v5584, %v6004
    %v6006 = vpop.f32.mrb[0].mxu0
    %v6007 = vpop.f32.mrb[0].mxu0
    %v6008 = vadd.f32 %v5585, %v6007
    %v6009 = vpop.f32.mrb[0].mxu0
    %6010 = vdwg.mxu0
    %vm6011 = vcmask 261120
    %v6012 = vsel %vm6011, %v5949, -inf
    %6013 = vmax.xlane.f32.xlu0 %v6012
    %v6014 = vpop.xlane.xlu0 %6013
    %v6015 = vsel %vm6011, %v5952, -inf
    %6016 = vmax.xlane.f32.xlu0 %v6015
    %v6017 = vpop.xlane.xlu0 %6016
    %v6018 = vsel %vm6011, %v5957, -inf
    %6019 = vmax.xlane.f32.xlu0 %v6018
    %v6020 = vpop.xlane.xlu0 %6019
    %v6021 = vsel %vm6011, %v5960, -inf
    %6022 = vmax.xlane.f32.xlu0 %v6021
    %v6023 = vpop.xlane.xlu0 %6022
    %v6024 = vsel %vm6011, %v5965, -inf
    %6025 = vmax.xlane.f32.xlu0 %v6024
    %v6026 = vpop.xlane.xlu0 %6025
    %v6027 = vsel %vm6011, %v5968, -inf
    %6028 = vmax.xlane.f32.xlu0 %v6027
    %v6029 = vpop.xlane.xlu0 %6028
    %v6030 = vsel %vm6011, %v5973, -inf
    %6031 = vmax.xlane.f32.xlu0 %v6030
    %v6032 = vpop.xlane.xlu0 %6031
    %v6033 = vsel %vm6011, %v5976, -inf
    %6034 = vmax.xlane.f32.xlu0 %v6033
    %v6035 = vpop.xlane.xlu0 %6034
    %v6036 = vsel %vm6011, %v5981, -inf
    %6037 = vmax.xlane.f32.xlu0 %v6036
    %v6038 = vpop.xlane.xlu0 %6037
    %v6039 = vsel %vm6011, %v5984, -inf
    %6040 = vmax.xlane.f32.xlu0 %v6039
    %v6041 = vpop.xlane.xlu0 %6040
    %v6042 = vsel %vm6011, %v5989, -inf
    %6043 = vmax.xlane.f32.xlu0 %v6042
    %v6044 = vpop.xlane.xlu0 %6043
    %v6045 = vsel %vm6011, %v5992, -inf
    %6046 = vmax.xlane.f32.xlu0 %v6045
    %v6047 = vpop.xlane.xlu0 %6046
    %v6048 = vsel %vm6011, %v5997, -inf
    %6049 = vmax.xlane.f32.xlu0 %v6048
    %v6050 = vpop.xlane.xlu0 %6049
    %v6051 = vsel %vm6011, %v6000, -inf
    %6052 = vmax.xlane.f32.xlu0 %v6051
    %v6053 = vpop.xlane.xlu0 %6052
    %v6054 = vsel %vm6011, %v6005, -inf
    %6055 = vmax.xlane.f32.xlu0 %v6054
    %v6056 = vpop.xlane.xlu0 %6055
    %v6057 = vsel %vm6011, %v6008, -inf
    %6058 = vmax.xlane.f32.xlu0 %v6057
    %v6059 = vpop.xlane.xlu0 %6058
    %v6060 = vsub.f32 %v5949, %v6014
    %v6061 = vsub.f32 %v5952, %v6017
    %v6062 = vsub.f32 %v5957, %v6020
    %v6063 = vsub.f32 %v5960, %v6023
    %v6064 = vsub.f32 %v5965, %v6026
    %v6065 = vsub.f32 %v5968, %v6029
    %v6066 = vsub.f32 %v5973, %v6032
    %v6067 = vsub.f32 %v5976, %v6035
    %v6068 = vsub.f32 %v5981, %v6038
    %v6069 = vsub.f32 %v5984, %v6041
    %v6070 = vsub.f32 %v5989, %v6044
    %v6071 = vsub.f32 %v5992, %v6047
    %v6072 = vsub.f32 %v5997, %v6050
    %v6073 = vsub.f32 %v6000, %v6053
    %v6074 = vsub.f32 %v6005, %v6056
    %v6075 = vsub.f32 %v6008, %v6059
    %v6076 = vmul.f32 %v6060, 1.442695
    %v6077 = vpow.pop %v6076
    %v6078 = vmul.f32 %v6061, 1.442695
    %v6079 = vpow.pop %v6078
    %v6080 = vmul.f32 %v6062, 1.442695
    %v6081 = vpow.pop %v6080
    %v6082 = vmul.f32 %v6063, 1.442695
    %v6083 = vpow.pop %v6082
    %v6084 = vmul.f32 %v6064, 1.442695
    %v6085 = vpow.pop %v6084
    %v6086 = vmul.f32 %v6065, 1.442695
    %v6087 = vpow.pop %v6086
    %v6088 = vmul.f32 %v6066, 1.442695
    %v6089 = vpow.pop %v6088
    %v6090 = vmul.f32 %v6067, 1.442695
    %v6091 = vpow.pop %v6090
    %v6092 = vmul.f32 %v6068, 1.442695
    %v6093 = vpow.pop %v6092
    %v6094 = vmul.f32 %v6069, 1.442695
    %v6095 = vpow.pop %v6094
    %v6096 = vmul.f32 %v6070, 1.442695
    %v6097 = vpow.pop %v6096
    %v6098 = vmul.f32 %v6071, 1.442695
    %v6099 = vpow.pop %v6098
    %v6100 = vmul.f32 %v6072, 1.442695
    %v6101 = vpow.pop %v6100
    %v6102 = vmul.f32 %v6073, 1.442695
    %v6103 = vpow.pop %v6102
    %v6104 = vmul.f32 %v6074, 1.442695
    %v6105 = vpow.pop %v6104
    %v6106 = vmul.f32 %v6075, 1.442695
    %v6107 = vpow.pop %v6106
    %v6108 = vsel %vm6011, %v6077, 0.0
    %6109 = vadd.xlane.f32.xlu0 %v6108
    %v6110 = vpop.xlane.xlu0 %6109
    %v6111 = vsel %vm6011, %v6079, 0.0
    %6112 = vadd.xlane.f32.xlu0 %v6111
    %v6113 = vpop.xlane.xlu0 %6112
    %v6114 = vsel %vm6011, %v6081, 0.0
    %6115 = vadd.xlane.f32.xlu0 %v6114
    %v6116 = vpop.xlane.xlu0 %6115
    %v6117 = vsel %vm6011, %v6083, 0.0
    %6118 = vadd.xlane.f32.xlu0 %v6117
    %v6119 = vpop.xlane.xlu0 %6118
    %v6120 = vsel %vm6011, %v6085, 0.0
    %6121 = vadd.xlane.f32.xlu0 %v6120
    %v6122 = vpop.xlane.xlu0 %6121
    %v6123 = vsel %vm6011, %v6087, 0.0
    %6124 = vadd.xlane.f32.xlu0 %v6123
    %v6125 = vpop.xlane.xlu0 %6124
    %v6126 = vsel %vm6011, %v6089, 0.0
    %6127 = vadd.xlane.f32.xlu0 %v6126
    %v6128 = vpop.xlane.xlu0 %6127
    %v6129 = vsel %vm6011, %v6091, 0.0
    %6130 = vadd.xlane.f32.xlu0 %v6129
    %v6131 = vpop.xlane.xlu0 %6130
    %v6132 = vsel %vm6011, %v6093, 0.0
    %6133 = vadd.xlane.f32.xlu0 %v6132
    %v6134 = vpop.xlane.xlu0 %6133
    %v6135 = vsel %vm6011, %v6095, 0.0
    %6136 = vadd.xlane.f32.xlu0 %v6135
    %v6137 = vpop.xlane.xlu0 %6136
    %v6138 = vsel %vm6011, %v6097, 0.0
    %6139 = vadd.xlane.f32.xlu0 %v6138
    %v6140 = vpop.xlane.xlu0 %6139
    %v6141 = vsel %vm6011, %v6099, 0.0
    %6142 = vadd.xlane.f32.xlu0 %v6141
    %v6143 = vpop.xlane.xlu0 %6142
    %v6144 = vsel %vm6011, %v6101, 0.0
    %6145 = vadd.xlane.f32.xlu0 %v6144
    %v6146 = vpop.xlane.xlu0 %6145
    %v6147 = vsel %vm6011, %v6103, 0.0
    %6148 = vadd.xlane.f32.xlu0 %v6147
    %v6149 = vpop.xlane.xlu0 %6148
    %v6150 = vsel %vm6011, %v6105, 0.0
    %6151 = vadd.xlane.f32.xlu0 %v6150
    %v6152 = vpop.xlane.xlu0 %6151
    %v6153 = vsel %vm6011, %v6107, 0.0
    %6154 = vadd.xlane.f32.xlu0 %v6153
    %v6155 = vpop.xlane.xlu0 %6154
    %v6156 = vrcp.pop %v6110
    %v6157 = vrcp.pop %v6113
    %v6158 = vrcp.pop %v6116
    %v6159 = vrcp.pop %v6119
    %v6160 = vrcp.pop %v6122
    %v6161 = vrcp.pop %v6125
    %v6162 = vrcp.pop %v6128
    %v6163 = vrcp.pop %v6131
    %v6164 = vrcp.pop %v6134
    %v6165 = vrcp.pop %v6137
    %v6166 = vrcp.pop %v6140
    %v6167 = vrcp.pop %v6143
    %v6168 = vrcp.pop %v6146
    %v6169 = vrcp.pop %v6149
    %v6170 = vrcp.pop %v6152
    %v6171 = vrcp.pop %v6155
    %v6172 = vmul.f32 %v6077, %v6156
    %v6173 = vmul.f32 %v6079, %v6157
    %v6174 = vmul.f32 %v6081, %v6158
    %v6175 = vmul.f32 %v6083, %v6159
    %v6176 = vmul.f32 %v6085, %v6160
    %v6177 = vmul.f32 %v6087, %v6161
    %v6178 = vmul.f32 %v6089, %v6162
    %v6179 = vmul.f32 %v6091, %v6163
    %v6180 = vmul.f32 %v6093, %v6164
    %v6181 = vmul.f32 %v6095, %v6165
    %v6182 = vmul.f32 %v6097, %v6166
    %v6183 = vmul.f32 %v6099, %v6167
    %v6184 = vmul.f32 %v6101, %v6168
    %v6185 = vmul.f32 %v6103, %v6169
    %v6186 = vmul.f32 %v6105, %v6170
    %v6187 = vmul.f32 %v6107, %v6171
    %v6188 = vpack.c.bf16 %v6173, %v6172
    %v6189 = vpack.c.bf16 %v6175, %v6174
    %v6190 = vpack.c.bf16 %v6177, %v6176
    %v6191 = vpack.c.bf16 %v6179, %v6178
    %v6192 = vpack.c.bf16 %v6181, %v6180
    %v6193 = vpack.c.bf16 %v6183, %v6182
    %v6194 = vpack.c.bf16 %v6185, %v6184
    %v6195 = vpack.c.bf16 %v6187, %v6186
    %v6196 = vmul.f32 %v5854, %v5877
    %v6197 = vmul.f32 %v5857, %v5877
    %v6198 = vmul.f32 %v5862, %v5877
    %v6199 = vmul.f32 %v5865, %v5877
    %v6200 = vpack.c.bf16 %v6197, %v6196
    %v6201 = vpack.c.bf16 %v6199, %v6198
    %v6202 = vmul.f32 %v5854, %v5885
    %v6203 = vmul.f32 %v5857, %v5885
    %v6204 = vmul.f32 %v5862, %v5885
    %v6205 = vmul.f32 %v5865, %v5885
    %v6206 = vpack.c.bf16 %v6203, %v6202
    %v6207 = vpack.c.bf16 %v6205, %v6204
    %v6209 = vsel %vm6011, %v6190, 0
    %v6212 = vsel %vm6011, %v6191, 0
    %6214 = vmatprep.subr.bf16.mxu0 0
    %6215 = vmatpush1.bf16.msra.mxu0 %v6206
    %6216 = vmatprep.subr.bf16.mxu0 0
    %6217 = vmatpush1.bf16.msra.mxu0 %v6207
    %6218 = vmatprep.subr.bf16.mxu0 0
    %6219 = vmatpush1.bf16.msra.mxu0 0
    %6220 = vmatprep.subr.bf16.mxu0 0
    %6221 = vmatpush1.bf16.msra.mxu0 0
    %6222 = vmatprep.subr.bf16.mxu0 0
    %6223 = vmatpush1.bf16.msra.mxu0 0
    %6224 = vmatprep.subr.bf16.mxu0 0
    %6225 = vmatpush1.bf16.msra.mxu0 0
    %6226 = vmatprep.subr.bf16.mxu0 0
    %6227 = vmatpush1.bf16.msra.mxu0 0
    %6228 = vmatprep.subr.bf16.mxu0 0
    %6229 = vmatpush1.bf16.msra.mxu0 0
    %6230 = vmatprep.subr.bf16.mxu0 0
    %6231 = vmatpush1.bf16.msra.mxu0 0
    %6232 = vmatprep.subr.bf16.mxu0 0
    %6233 = vmatpush1.bf16.msra.mxu0 0
    %6234 = vmatprep.subr.bf16.mxu0 0
    %6235 = vmatpush1.bf16.msra.mxu0 0
    %6236 = vmatprep.subr.bf16.mxu0 0
    %6237 = vmatpush1.bf16.msra.mxu0 0
    %6238 = vmatprep.subr.bf16.mxu0 0
    %6239 = vmatpush1.bf16.msra.mxu0 0
    %6240 = vmatprep.subr.bf16.mxu0 0
    %6241 = vmatpush1.bf16.msra.mxu0 0
    %6242 = vmatprep.subr.bf16.mxu0 0
    %6243 = vmatpush1.bf16.msra.mxu0 0
    %6244 = vmatprep.subr.bf16.mxu0 0
    %6245 = vmatpush1.bf16.msra.mxu0 0
    %6246 = vmatprep.mubr.bf16.mxu0 0
    %6247 = vmatmul.mubr.bf16.gmra.mrb[0].mxu0 %v6209
    %v6248 = vpop.f32.mrb[0].mxu0
    %v6249 = vadd.f32 0.0, %v6248
    %v6250 = vpop.f32.mrb[0].mxu0
    %v6251 = vpop.f32.mrb[0].mxu0
    %v6252 = vadd.f32 0.0, %v6251
    %v6253 = vpop.f32.mrb[0].mxu0
    %6254 = vmatprep.mubr.bf16.mxu0 0
    %6255 = vmatmul.mubr.bf16.gmra.mrb[0].mxu0 %v6212
    %v6256 = vpop.f32.mrb[0].mxu0
    %v6257 = vadd.f32 0.0, %v6256
    %v6258 = vpop.f32.mrb[0].mxu0
    %v6259 = vpop.f32.mrb[0].mxu0
    %v6260 = vadd.f32 0.0, %v6259
    %v6261 = vpop.f32.mrb[0].mxu0
    %6262 = vdwg.mxu0
    %v6264 = vsel %vm6011, %v6188, 0
    %v6267 = vsel %vm6011, %v6189, 0
    %6269 = vmatprep.subr.bf16.mxu0 0
    %6270 = vmatpush1.bf16.msra.mxu0 %v6200
    %6271 = vmatprep.subr.bf16.mxu0 0
    %6272 = vmatpush1.bf16.msra.mxu0 %v6201
    %6273 = vmatprep.subr.bf16.mxu0 0
    %6274 = vmatpush1.bf16.msra.mxu0 0
    %6275 = vmatprep.subr.bf16.mxu0 0
    %6276 = vmatpush1.bf16.msra.mxu0 0
    %6277 = vmatprep.subr.bf16.mxu0 0
    %6278 = vmatpush1.bf16.msra.mxu0 0
    %6279 = vmatprep.subr.bf16.mxu0 0
    %6280 = vmatpush1.bf16.msra.mxu0 0
    %6281 = vmatprep.subr.bf16.mxu0 0
    %6282 = vmatpush1.bf16.msra.mxu0 0
    %6283 = vmatprep.subr.bf16.mxu0 0
    %6284 = vmatpush1.bf16.msra.mxu0 0
    %6285 = vmatprep.subr.bf16.mxu0 0
    %6286 = vmatpush1.bf16.msra.mxu0 0
    %6287 = vmatprep.subr.bf16.mxu0 0
    %6288 = vmatpush1.bf16.msra.mxu0 0
    %6289 = vmatprep.subr.bf16.mxu0 0
    %6290 = vmatpush1.bf16.msra.mxu0 0
    %6291 = vmatprep.subr.bf16.mxu0 0
    %6292 = vmatpush1.bf16.msra.mxu0 0
    %6293 = vmatprep.subr.bf16.mxu0 0
    %6294 = vmatpush1.bf16.msra.mxu0 0
    %6295 = vmatprep.subr.bf16.mxu0 0
    %6296 = vmatpush1.bf16.msra.mxu0 0
    %6297 = vmatprep.subr.bf16.mxu0 0
    %6298 = vmatpush1.bf16.msra.mxu0 0
    %6299 = vmatprep.subr.bf16.mxu0 0
    %6300 = vmatpush1.bf16.msra.mxu0 0
    %6301 = vmatprep.mubr.bf16.mxu0 0
    %6302 = vmatmul.mubr.bf16.gmra.mrb[0].mxu0 %v6264
    %v6303 = vpop.f32.mrb[0].mxu0
    %v6304 = vadd.f32 %v6249, %v6303
    %v6305 = vpop.f32.mrb[0].mxu0
    %v6306 = vpop.f32.mrb[0].mxu0
    %v6307 = vadd.f32 %v6252, %v6306
    %v6308 = vpop.f32.mrb[0].mxu0
    %6309 = vmatprep.mubr.bf16.mxu0 0
    %6310 = vmatmul.mubr.bf16.gmra.mrb[0].mxu0 %v6267
    %v6311 = vpop.f32.mrb[0].mxu0
    %v6312 = vadd.f32 %v6257, %v6311
    %v6313 = vpop.f32.mrb[0].mxu0
    %v6314 = vpop.f32.mrb[0].mxu0
    %v6315 = vadd.f32 %v6260, %v6314
    %v6316 = vpop.f32.mrb[0].mxu0
    %6317 = vdwg.mxu0
    %v6318 = vmul.f32 %v5854, %v5893
    %v6319 = vmul.f32 %v5857, %v5893
    %v6320 = vmul.f32 %v5862, %v5893
    %v6321 = vmul.f32 %v5865, %v5893
    %v6322 = vpack.c.bf16 %v6319, %v6318
    %v6323 = vpack.c.bf16 %v6321, %v6320
    %v6325 = vsel %vm6011, %v6192, 0
    %v6328 = vsel %vm6011, %v6193, 0
    %6330 = vmatprep.subr.bf16.mxu0 0
    %6331 = vmatpush1.bf16.msra.mxu0 %v6322
    %6332 = vmatprep.subr.bf16.mxu0 0
    %6333 = vmatpush1.bf16.msra.mxu0 %v6323
    %6334 = vmatprep.subr.bf16.mxu0 0
    %6335 = vmatpush1.bf16.msra.mxu0 0
    %6336 = vmatprep.subr.bf16.mxu0 0
    %6337 = vmatpush1.bf16.msra.mxu0 0
    %6338 = vmatprep.subr.bf16.mxu0 0
    %6339 = vmatpush1.bf16.msra.mxu0 0
    %6340 = vmatprep.subr.bf16.mxu0 0
    %6341 = vmatpush1.bf16.msra.mxu0 0
    %6342 = vmatprep.subr.bf16.mxu0 0
    %6343 = vmatpush1.bf16.msra.mxu0 0
    %6344 = vmatprep.subr.bf16.mxu0 0
    %6345 = vmatpush1.bf16.msra.mxu0 0
    %6346 = vmatprep.subr.bf16.mxu0 0
    %6347 = vmatpush1.bf16.msra.mxu0 0
    %6348 = vmatprep.subr.bf16.mxu0 0
    %6349 = vmatpush1.bf16.msra.mxu0 0
    %6350 = vmatprep.subr.bf16.mxu0 0
    %6351 = vmatpush1.bf16.msra.mxu0 0
    %6352 = vmatprep.subr.bf16.mxu0 0
    %6353 = vmatpush1.bf16.msra.mxu0 0
    %6354 = vmatprep.subr.bf16.mxu0 0
    %6355 = vmatpush1.bf16.msra.mxu0 0
    %6356 = vmatprep.subr.bf16.mxu0 0
    %6357 = vmatpush1.bf16.msra.mxu0 0
    %6358 = vmatprep.subr.bf16.mxu0 0
    %6359 = vmatpush1.bf16.msra.mxu0 0
    %6360 = vmatprep.subr.bf16.mxu0 0
    %6361 = vmatpush1.bf16.msra.mxu0 0
    %6362 = vmatprep.mubr.bf16.mxu0 0
    %6363 = vmatmul.mubr.bf16.gmra.mrb[0].mxu0 %v6325
    %v6364 = vpop.f32.mrb[0].mxu0
    %v6365 = vadd.f32 0.0, %v6364
    %v6366 = vpop.f32.mrb[0].mxu0
    %v6367 = vpop.f32.mrb[0].mxu0
    %v6368 = vadd.f32 0.0, %v6367
    %v6369 = vpop.f32.mrb[0].mxu0
    %6370 = vmatprep.mubr.bf16.mxu0 0
    %6371 = vmatmul.mubr.bf16.gmra.mrb[0].mxu0 %v6328
    %v6372 = vpop.f32.mrb[0].mxu0
    %v6373 = vadd.f32 0.0, %v6372
    %v6374 = vpop.f32.mrb[0].mxu0
    %v6375 = vpop.f32.mrb[0].mxu0
    %v6376 = vadd.f32 0.0, %v6375
    %v6377 = vpop.f32.mrb[0].mxu0
    %6378 = vdwg.mxu0
    %v6379 = vadd.f32 %v6304, %v6365
    %v6380 = vadd.f32 %v6307, %v6368
    %v6381 = vadd.f32 %v6312, %v6373
    %v6382 = vadd.f32 %v6315, %v6376
    %v6383 = vmul.f32 %v5854, %v5901
    %v6384 = vmul.f32 %v5857, %v5901
    %v6385 = vmul.f32 %v5862, %v5901
    %v6386 = vmul.f32 %v5865, %v5901
    %v6387 = vpack.c.bf16 %v6384, %v6383
    %v6388 = vpack.c.bf16 %v6386, %v6385
    %v6390 = vsel %vm6011, %v6194, 0
    %v6393 = vsel %vm6011, %v6195, 0
    %6395 = vmatprep.subr.bf16.mxu0 0
    %6396 = vmatpush1.bf16.msra.mxu0 %v6387
    %6397 = vmatprep.subr.bf16.mxu0 0
    %6398 = vmatpush1.bf16.msra.mxu0 %v6388
    %6399 = vmatprep.subr.bf16.mxu0 0
    %6400 = vmatpush1.bf16.msra.mxu0 0
    %6401 = vmatprep.subr.bf16.mxu0 0
    %6402 = vmatpush1.bf16.msra.mxu0 0
    %6403 = vmatprep.subr.bf16.mxu0 0
    %6404 = vmatpush1.bf16.msra.mxu0 0
    %6405 = vmatprep.subr.bf16.mxu0 0
    %6406 = vmatpush1.bf16.msra.mxu0 0
    %6407 = vmatprep.subr.bf16.mxu0 0
    %6408 = vmatpush1.bf16.msra.mxu0 0
    %6409 = vmatprep.subr.bf16.mxu0 0
    %6410 = vmatpush1.bf16.msra.mxu0 0
    %6411 = vmatprep.subr.bf16.mxu0 0
    %6412 = vmatpush1.bf16.msra.mxu0 0
    %6413 = vmatprep.subr.bf16.mxu0 0
    %6414 = vmatpush1.bf16.msra.mxu0 0
    %6415 = vmatprep.subr.bf16.mxu0 0
    %6416 = vmatpush1.bf16.msra.mxu0 0
    %6417 = vmatprep.subr.bf16.mxu0 0
    %6418 = vmatpush1.bf16.msra.mxu0 0
    %6419 = vmatprep.subr.bf16.mxu0 0
    %6420 = vmatpush1.bf16.msra.mxu0 0
    %6421 = vmatprep.subr.bf16.mxu0 0
    %6422 = vmatpush1.bf16.msra.mxu0 0
    %6423 = vmatprep.subr.bf16.mxu0 0
    %6424 = vmatpush1.bf16.msra.mxu0 0
    %6425 = vmatprep.subr.bf16.mxu0 0
    %6426 = vmatpush1.bf16.msra.mxu0 0
    %6427 = vmatprep.mubr.bf16.mxu0 0
    %6428 = vmatmul.mubr.bf16.gmra.mrb[0].mxu0 %v6390
    %v6429 = vpop.f32.mrb[0].mxu0
    %v6430 = vadd.f32 0.0, %v6429
    %v6431 = vpop.f32.mrb[0].mxu0
    %v6432 = vpop.f32.mrb[0].mxu0
    %v6433 = vadd.f32 0.0, %v6432
    %v6434 = vpop.f32.mrb[0].mxu0
    %6435 = vmatprep.mubr.bf16.mxu0 0
    %6436 = vmatmul.mubr.bf16.gmra.mrb[0].mxu0 %v6393
    %v6437 = vpop.f32.mrb[0].mxu0
    %v6438 = vadd.f32 0.0, %v6437
    %v6439 = vpop.f32.mrb[0].mxu0
    %v6440 = vpop.f32.mrb[0].mxu0
    %v6441 = vadd.f32 0.0, %v6440
    %v6442 = vpop.f32.mrb[0].mxu0
    %6443 = vdwg.mxu0
    %v6444 = vadd.f32 %v6379, %v6430
    %v6445 = vadd.f32 %v6380, %v6433
    %v6446 = vadd.f32 %v6381, %v6438
    %v6447 = vadd.f32 %v6382, %v6441
    %v6448 = vpack.c.bf16 %v6445, %v6444
    %v6449 = vpack.c.bf16 %v6447, %v6446
    %v6450 = vld [vmem:[%s33] sm:$0xf]
    %v6451 = vld [vmem:[%s33 + $0x4] sm:$0xf]
    %v6452 = vld [vmem:[%s33 + $0x8] sm:$0xf]
    %v6453 = vld [vmem:[%s33 + $0xc] sm:$0xf]
    %v6454 = vld [vmem:[%s33 + $0x10] sm:$0xf]
    %v6455 = vld [vmem:[%s33 + $0x14] sm:$0xf]
    %v6456 = vld [vmem:[%s33 + $0x18] sm:$0xf]
    %v6457 = vld [vmem:[%s33 + $0x1c] sm:$0xf]
    %v6458 = vld [vmem:[%s33 + $0x20] sm:$0xf]
    %v6459 = vld [vmem:[%s33 + $0x24] sm:$0xf]
    %v6460 = vld [vmem:[%s33 + $0x28] sm:$0xf]
    %v6461 = vld [vmem:[%s33 + $0x2c] sm:$0xf]
    %v6462 = vld [vmem:[%s33 + $0x30] sm:$0xf]
    %v6463 = vld [vmem:[%s33 + $0x34] sm:$0xf]
    %v6464 = vld [vmem:[%s33 + $0x38] sm:$0xf]
    %v6465 = vld [vmem:[%s33 + $0x3c] sm:$0xf]
    %v6466 = vld [vmem:[%s35] sm:$0x1]
    %v6468 = vlaneseq
    %v6469 = vshrl.u32 %v6468, 7
    %v6470 = vsub.s32 0, %v6469
    %v6471 = vrot.slane %v6466, %v6470
    %v6489 = vunpack.c.l.b16 %v6450
    %v6490 = vunpack.c.l.b16 %v6451
    %v6491 = vunpack.c.l.b16 %v6452
    %v6492 = vunpack.c.l.b16 %v6453
    %v6493 = vunpack.c.l.b16 %v6454
    %v6494 = vunpack.c.l.b16 %v6455
    %v6495 = vunpack.c.l.b16 %v6456
    %v6496 = vunpack.c.l.b16 %v6457
    %v6497 = vunpack.c.l.b16 %v6458
    %v6498 = vunpack.c.l.b16 %v6459
    %v6499 = vunpack.c.l.b16 %v6460
    %v6500 = vunpack.c.l.b16 %v6461
    %v6501 = vunpack.c.l.b16 %v6462
    %v6502 = vunpack.c.l.b16 %v6463
    %v6503 = vunpack.c.l.b16 %v6464
    %v6504 = vunpack.c.l.b16 %v6465
    %v6505 = vpack.c.b16 %v6490, %v6489
    %v6506 = vpack.c.b16 %v6492, %v6491
    %v6507 = vpack.c.b16 %v6494, %v6493
    %v6508 = vpack.c.b16 %v6496, %v6495
    %v6509 = vpack.c.b16 %v6498, %v6497
    %v6510 = vpack.c.b16 %v6500, %v6499
    %v6511 = vpack.c.b16 %v6502, %v6501
    %v6512 = vpack.c.b16 %v6504, %v6503
    %6521 = vmatprep.subr.bf16.mxu0 0
    %6522 = vmatpush1.bf16.msra.mxu0 %v6505
    %6523 = vmatprep.subr.bf16.mxu0 0
    %6524 = vmatpush1.bf16.msra.mxu0 %v6506
    %6525 = vmatprep.subr.bf16.mxu0 0
    %6526 = vmatpush1.bf16.msra.mxu0 %v6507
    %6527 = vmatprep.subr.bf16.mxu0 0
    %6528 = vmatpush1.bf16.msra.mxu0 %v6508
    %6529 = vmatprep.subr.bf16.mxu0 0
    %6530 = vmatpush1.bf16.msra.mxu0 %v6509
    %6531 = vmatprep.subr.bf16.mxu0 0
    %6532 = vmatpush1.bf16.msra.mxu0 %v6510
    %6533 = vmatprep.subr.bf16.mxu0 0
    %6534 = vmatpush1.bf16.msra.mxu0 %v6511
    %6535 = vmatprep.subr.bf16.mxu0 0
    %6536 = vmatpush1.bf16.msra.mxu0 %v6512
    %6537 = vmatprep.subr.bf16.mxu0 0
    %6538 = vmatpush1.bf16.msra.mxu0 0
    %6539 = vmatprep.subr.bf16.mxu0 0
    %6540 = vmatpush1.bf16.msra.mxu0 0
    %6541 = vmatprep.subr.bf16.mxu0 0
    %6542 = vmatpush1.bf16.msra.mxu0 0
    %6543 = vmatprep.subr.bf16.mxu0 0
    %6544 = vmatpush1.bf16.msra.mxu0 0
    %6545 = vmatprep.subr.bf16.mxu0 0
    %6546 = vmatpush1.bf16.msra.mxu0 0
    %6547 = vmatprep.subr.bf16.mxu0 0
    %6548 = vmatpush1.bf16.msra.mxu0 0
    %6549 = vmatprep.subr.bf16.mxu0 0
    %6550 = vmatpush1.bf16.msra.mxu0 0
    %6551 = vmatprep.subr.bf16.mxu0 0
    %6552 = vmatpush1.bf16.msra.mxu0 0
    %6553 = vmatprep.mubr.bf16.mxu0 0
    %6554 = vmatmul.mubr.bf16.gmra.mrb[0].mxu0 %v6448
    %v6555 = vpop.f32.mrb[0].mxu0
    %v6556 = vadd.f32 %v6471, %v6555
    %v6557 = vpop.f32.mrb[0].mxu0
    %v6558 = vpop.f32.mrb[0].mxu0
    %v6559 = vadd.f32 %v6471, %v6558
    %v6560 = vpop.f32.mrb[0].mxu0
    %6561 = vmatprep.mubr.bf16.mxu0 0
    %6562 = vmatmul.mubr.bf16.gmra.mrb[0].mxu0 %v6449
    %v6563 = vpop.f32.mrb[0].mxu0
    %v6564 = vadd.f32 %v6471, %v6563
    %v6565 = vpop.f32.mrb[0].mxu0
    %v6566 = vpop.f32.mrb[0].mxu0
    %v6567 = vadd.f32 %v6471, %v6566
    %v6568 = vpop.f32.mrb[0].mxu0
    %6569 = vdwg.mxu0
    %v6570 = vadd.f32 %v4924, %v6556
    %v6571 = vadd.f32 %v5246, %v6559
    %v6572 = vadd.f32 %v5461, %v6564
    %v6573 = vadd.f32 %v5569, %v6567
    %v6574 = vld [vmem:[%s37] sm:$0x1]
    %v6575 = vld [vmem:[%s39] sm:$0x1]
    %6576 = vadd.xlane.f32.xlu0 %v6570
    %v6577 = vpop.xlane.xlu0 %6576
    %6578 = vadd.xlane.f32.xlu0 %v6571
    %v6579 = vpop.xlane.xlu0 %6578
    %6580 = vadd.xlane.f32.xlu0 %v6572
    %v6581 = vpop.xlane.xlu0 %6580
    %6582 = vadd.xlane.f32.xlu0 %v6573
    %v6583 = vpop.xlane.xlu0 %6582
    %v6584 = vrcp.pop 128.0
    %v6585 = vmul.f32 %v6577, %v6584
    %v6586 = vmul.f32 %v6579, %v6584
    %v6587 = vmul.f32 %v6581, %v6584
    %v6588 = vmul.f32 %v6583, %v6584
    %v6589 = vsub.f32 %v6570, %v6585
    %v6590 = vsub.f32 %v6571, %v6586
    %v6591 = vsub.f32 %v6572, %v6587
    %v6592 = vsub.f32 %v6573, %v6588
    %v6593 = vmul.f32 %v6589, %v6589
    %v6594 = vmul.f32 %v6590, %v6590
    %v6595 = vmul.f32 %v6591, %v6591
    %v6596 = vmul.f32 %v6592, %v6592
    %6597 = vadd.xlane.f32.xlu0 %v6593
    %v6598 = vpop.xlane.xlu0 %6597
    %6599 = vadd.xlane.f32.xlu0 %v6594
    %v6600 = vpop.xlane.xlu0 %6599
    %6601 = vadd.xlane.f32.xlu0 %v6595
    %v6602 = vpop.xlane.xlu0 %6601
    %6603 = vadd.xlane.f32.xlu0 %v6596
    %v6604 = vpop.xlane.xlu0 %6603
    %v6605 = vmul.f32 %v6598, %v6584
    %v6606 = vmul.f32 %v6600, %v6584
    %v6607 = vmul.f32 %v6602, %v6584
    %v6608 = vmul.f32 %v6604, %v6584
    %v6609 = vadd.f32 %v6605, 1e-05
    %v6610 = vadd.f32 %v6606, 1e-05
    %v6611 = vadd.f32 %v6607, 1e-05
    %v6612 = vadd.f32 %v6608, 1e-05
    %v6613 = vrsqrt.pop %v6609
    %v6614 = vrsqrt.pop %v6610
    %v6615 = vrsqrt.pop %v6611
    %v6616 = vrsqrt.pop %v6612
    %v6617 = vmul.f32 %v6589, %v6613
    %v6618 = vmul.f32 %v6590, %v6614
    %v6619 = vmul.f32 %v6591, %v6615
    %v6620 = vmul.f32 %v6592, %v6616
    %v6622 = vlaneseq
    %v6623 = vshrl.u32 %v6622, 7
    %v6624 = vsub.s32 0, %v6623
    %v6625 = vrot.slane %v6574, %v6624
    %v6627 = vmul.f32 %v6617, %v6625
    %v6628 = vmul.f32 %v6618, %v6625
    %v6629 = vmul.f32 %v6619, %v6625
    %v6630 = vmul.f32 %v6620, %v6625
    %v6632 = vlaneseq
    %v6633 = vshrl.u32 %v6632, 7
    %v6634 = vsub.s32 0, %v6633
    %v6635 = vrot.slane %v6575, %v6634
    %v6637 = vadd.f32 %v6627, %v6635
    %v6638 = vadd.f32 %v6628, %v6635
    %v6639 = vadd.f32 %v6629, %v6635
    %v6640 = vadd.f32 %v6630, %v6635
    %v6641 = vpack.c.bf16 %v6638, %v6637
    %v6642 = vpack.c.bf16 %v6640, %v6639
    %v6643 = vld [vmem:[%s41] sm:$0xff]
    %v6644 = vld [vmem:[%s41 + $0x8] sm:$0xff]
    %v6645 = vld [vmem:[%s41 + $0x10] sm:$0xff]
    %v6646 = vld [vmem:[%s41 + $0x18] sm:$0xff]
    %v6647 = vld [vmem:[%s41 + $0x20] sm:$0xff]
    %v6648 = vld [vmem:[%s41 + $0x28] sm:$0xff]
    %v6649 = vld [vmem:[%s41 + $0x30] sm:$0xff]
    %v6650 = vld [vmem:[%s41 + $0x38] sm:$0xff]
    %v6651 = vld [vmem:[%s41 + $0x40] sm:$0xff]
    %v6652 = vld [vmem:[%s41 + $0x48] sm:$0xff]
    %v6653 = vld [vmem:[%s41 + $0x50] sm:$0xff]
    %v6654 = vld [vmem:[%s41 + $0x58] sm:$0xff]
    %v6655 = vld [vmem:[%s41 + $0x60] sm:$0xff]
    %v6656 = vld [vmem:[%s41 + $0x68] sm:$0xff]
    %v6657 = vld [vmem:[%s41 + $0x70] sm:$0xff]
    %v6658 = vld [vmem:[%s41 + $0x78] sm:$0xff]
    %v6659 = vld [vmem:[%s43] sm:$0x3]
    %v6661 = vlaneseq
    %v6662 = vshrl.u32 %v6661, 7
    %v6663 = vsub.s32 0, %v6662
    %v6664 = vrot.slane %v6659, %v6663
    %v6665 = vlaneseq
    %v6666 = vshrl.u32 %v6665, 7
    %v6667 = vsub.s32 1, %v6666
    %v6668 = vrot.slane %v6659, %v6667
    %v6687 = vunpack.c.l.b16 %v6643
    %v6688 = vunpack.c.h.b16 %v6643
    %v6689 = vunpack.c.l.b16 %v6644
    %v6690 = vunpack.c.h.b16 %v6644
    %v6691 = vunpack.c.l.b16 %v6645
    %v6692 = vunpack.c.h.b16 %v6645
    %v6693 = vunpack.c.l.b16 %v6646
    %v6694 = vunpack.c.h.b16 %v6646
    %v6695 = vunpack.c.l.b16 %v6647
    %v6696 = vunpack.c.h.b16 %v6647
    %v6697 = vunpack.c.l.b16 %v6648
    %v6698 = vunpack.c.h.b16 %v6648
    %v6699 = vunpack.c.l.b16 %v6649
    %v6700 = vunpack.c.h.b16 %v6649
    %v6701 = vunpack.c.l.b16 %v6650
    %v6702 = vunpack.c.h.b16 %v6650
    %v6703 = vunpack.c.l.b16 %v6651
    %v6704 = vunpack.c.h.b16 %v6651
    %v6705 = vunpack.c.l.b16 %v6652
    %v6706 = vunpack.c.h.b16 %v6652
    %v6707 = vunpack.c.l.b16 %v6653
    %v6708 = vunpack.c.h.b16 %v6653
    %v6709 = vunpack.c.l.b16 %v6654
    %v6710 = vunpack.c.h.b16 %v6654
    %v6711 = vunpack.c.l.b16 %v6655
    %v6712 = vunpack.c.h.b16 %v6655
    %v6713 = vunpack.c.l.b16 %v6656
    %v6714 = vunpack.c.h.b16 %v6656
    %v6715 = vunpack.c.l.b16 %v6657
    %v6716 = vunpack.c.h.b16 %v6657
    %v6717 = vunpack.c.l.b16 %v6658
    %v6718 = vunpack.c.h.b16 %v6658
    %v6719 = vpack.c.b16 %v6689, %v6687
    %v6720 = vpack.c.b16 %v6690, %v6688
    %v6721 = vpack.c.b16 %v6693, %v6691
    %v6722 = vpack.c.b16 %v6694, %v6692
    %v6723 = vpack.c.b16 %v6697, %v6695
    %v6724 = vpack.c.b16 %v6698, %v6696
    %v6725 = vpack.c.b16 %v6701, %v6699
    %v6726 = vpack.c.b16 %v6702, %v6700
    %v6727 = vpack.c.b16 %v6705, %v6703
    %v6728 = vpack.c.b16 %v6706, %v6704
    %v6729 = vpack.c.b16 %v6709, %v6707
    %v6730 = vpack.c.b16 %v6710, %v6708
    %v6731 = vpack.c.b16 %v6713, %v6711
    %v6732 = vpack.c.b16 %v6714, %v6712
    %v6733 = vpack.c.b16 %v6717, %v6715
    %v6734 = vpack.c.b16 %v6718, %v6716
    %6751 = vmatprep.subr.bf16.mxu0 %v6720
    %6752 = vmatpush1.bf16.msra.mxu0 %v6719
    %6753 = vmatprep.subr.bf16.mxu0 %v6722
    %6754 = vmatpush1.bf16.msra.mxu0 %v6721
    %6755 = vmatprep.subr.bf16.mxu0 %v6724
    %6756 = vmatpush1.bf16.msra.mxu0 %v6723
    %6757 = vmatprep.subr.bf16.mxu0 %v6726
    %6758 = vmatpush1.bf16.msra.mxu0 %v6725
    %6759 = vmatprep.subr.bf16.mxu0 %v6728
    %6760 = vmatpush1.bf16.msra.mxu0 %v6727
    %6761 = vmatprep.subr.bf16.mxu0 %v6730
    %6762 = vmatpush1.bf16.msra.mxu0 %v6729
    %6763 = vmatprep.subr.bf16.mxu0 %v6732
    %6764 = vmatpush1.bf16.msra.mxu0 %v6731
    %6765 = vmatprep.subr.bf16.mxu0 %v6734
    %6766 = vmatpush1.bf16.msra.mxu0 %v6733
    %6767 = vmatprep.subr.bf16.mxu0 0
    %6768 = vmatpush1.bf16.msra.mxu0 0
    %6769 = vmatprep.subr.bf16.mxu0 0
    %6770 = vmatpush1.bf16.msra.mxu0 0
    %6771 = vmatprep.subr.bf16.mxu0 0
    %6772 = vmatpush1.bf16.msra.mxu0 0
    %6773 = vmatprep.subr.bf16.mxu0 0
    %6774 = vmatpush1.bf16.msra.mxu0 0
    %6775 = vmatprep.subr.bf16.mxu0 0
    %6776 = vmatpush1.bf16.msra.mxu0 0
    %6777 = vmatprep.subr.bf16.mxu0 0
    %6778 = vmatpush1.bf16.msra.mxu0 0
    %6779 = vmatprep.subr.bf16.mxu0 0
    %6780 = vmatpush1.bf16.msra.mxu0 0
    %6781 = vmatprep.subr.bf16.mxu0 0
    %6782 = vmatpush1.bf16.msra.mxu0 0
    %6783 = vmatprep.mubr.bf16.mxu0 0
    %6784 = vmatmul.mubr.bf16.gmra.mrb[0].mxu0 %v6641
    %v6785 = vpop.f32.mrb[0].mxu0
    %v6786 = vadd.f32 %v6664, %v6785
    %v6787 = vpop.f32.mrb[0].mxu0
    %v6788 = vadd.f32 %v6668, %v6787
    %v6789 = vpop.f32.mrb[0].mxu0
    %v6790 = vadd.f32 %v6664, %v6789
    %v6791 = vpop.f32.mrb[0].mxu0
    %v6792 = vadd.f32 %v6668, %v6791
    %6793 = vmatprep.mubr.bf16.mxu0 0
    %6794 = vmatmul.mubr.bf16.gmra.mrb[0].mxu0 %v6642
    %v6795 = vpop.f32.mrb[0].mxu0
    %v6796 = vadd.f32 %v6664, %v6795
    %v6797 = vpop.f32.mrb[0].mxu0
    %v6798 = vadd.f32 %v6668, %v6797
    %v6799 = vpop.f32.mrb[0].mxu0
    %v6800 = vadd.f32 %v6664, %v6799
    %v6801 = vpop.f32.mrb[0].mxu0
    %v6802 = vadd.f32 %v6668, %v6801
    %6803 = vdwg.mxu0
    %v6804 = vmax.f32 %v6786, 0.0
    %v6805 = vmax.f32 %v6788, 0.0
    %v6806 = vmax.f32 %v6790, 0.0
    %v6807 = vmax.f32 %v6792, 0.0
    %v6808 = vmax.f32 %v6796, 0.0
    %v6809 = vmax.f32 %v6798, 0.0
    %v6810 = vmax.f32 %v6800, 0.0
    %v6811 = vmax.f32 %v6802, 0.0
    %v6812 = vpack.c.bf16 %v6806, %v6804
    %v6813 = vpack.c.bf16 %v6807, %v6805
    %v6814 = vpack.c.bf16 %v6810, %v6808
    %v6815 = vpack.c.bf16 %v6811, %v6809
    %v6816 = vld [vmem:[%s45] sm:$0xf]
    %v6817 = vld [vmem:[%s45 + $0x4] sm:$0xf]
    %v6818 = vld [vmem:[%s45 + $0x8] sm:$0xf]
    %v6819 = vld [vmem:[%s45 + $0xc] sm:$0xf]
    %v6820 = vld [vmem:[%s45 + $0x10] sm:$0xf]
    %v6821 = vld [vmem:[%s45 + $0x14] sm:$0xf]
    %v6822 = vld [vmem:[%s45 + $0x18] sm:$0xf]
    %v6823 = vld [vmem:[%s45 + $0x1c] sm:$0xf]
    %v6824 = vld [vmem:[%s45 + $0x20] sm:$0xf]
    %v6825 = vld [vmem:[%s45 + $0x24] sm:$0xf]
    %v6826 = vld [vmem:[%s45 + $0x28] sm:$0xf]
    %v6827 = vld [vmem:[%s45 + $0x2c] sm:$0xf]
    %v6828 = vld [vmem:[%s45 + $0x30] sm:$0xf]
    %v6829 = vld [vmem:[%s45 + $0x34] sm:$0xf]
    %v6830 = vld [vmem:[%s45 + $0x38] sm:$0xf]
    %v6831 = vld [vmem:[%s45 + $0x3c] sm:$0xf]
    %v6832 = vld [vmem:[%s45 + $0x40] sm:$0xf]
    %v6833 = vld [vmem:[%s45 + $0x44] sm:$0xf]
    %v6834 = vld [vmem:[%s45 + $0x48] sm:$0xf]
    %v6835 = vld [vmem:[%s45 + $0x4c] sm:$0xf]
    %v6836 = vld [vmem:[%s45 + $0x50] sm:$0xf]
    %v6837 = vld [vmem:[%s45 + $0x54] sm:$0xf]
    %v6838 = vld [vmem:[%s45 + $0x58] sm:$0xf]
    %v6839 = vld [vmem:[%s45 + $0x5c] sm:$0xf]
    %v6840 = vld [vmem:[%s45 + $0x60] sm:$0xf]
    %v6841 = vld [vmem:[%s45 + $0x64] sm:$0xf]
    %v6842 = vld [vmem:[%s45 + $0x68] sm:$0xf]
    %v6843 = vld [vmem:[%s45 + $0x6c] sm:$0xf]
    %v6844 = vld [vmem:[%s45 + $0x70] sm:$0xf]
    %v6845 = vld [vmem:[%s45 + $0x74] sm:$0xf]
    %v6846 = vld [vmem:[%s45 + $0x78] sm:$0xf]
    %v6847 = vld [vmem:[%s45 + $0x7c] sm:$0xf]
    %v6848 = vld [vmem:[%s47] sm:$0x1]
    %v6850 = vlaneseq
    %v6851 = vshrl.u32 %v6850, 7
    %v6852 = vsub.s32 0, %v6851
    %v6853 = vrot.slane %v6848, %v6852
    %v6887 = vunpack.c.l.b16 %v6816
    %v6888 = vunpack.c.l.b16 %v6817
    %v6889 = vunpack.c.l.b16 %v6818
    %v6890 = vunpack.c.l.b16 %v6819
    %v6891 = vunpack.c.l.b16 %v6820
    %v6892 = vunpack.c.l.b16 %v6821
    %v6893 = vunpack.c.l.b16 %v6822
    %v6894 = vunpack.c.l.b16 %v6823
    %v6895 = vunpack.c.l.b16 %v6824
    %v6896 = vunpack.c.l.b16 %v6825
    %v6897 = vunpack.c.l.b16 %v6826
    %v6898 = vunpack.c.l.b16 %v6827
    %v6899 = vunpack.c.l.b16 %v6828
    %v6900 = vunpack.c.l.b16 %v6829
    %v6901 = vunpack.c.l.b16 %v6830
    %v6902 = vunpack.c.l.b16 %v6831
    %v6903 = vunpack.c.l.b16 %v6832
    %v6904 = vunpack.c.l.b16 %v6833
    %v6905 = vunpack.c.l.b16 %v6834
    %v6906 = vunpack.c.l.b16 %v6835
    %v6907 = vunpack.c.l.b16 %v6836
    %v6908 = vunpack.c.l.b16 %v6837
    %v6909 = vunpack.c.l.b16 %v6838
    %v6910 = vunpack.c.l.b16 %v6839
    %v6911 = vunpack.c.l.b16 %v6840
    %v6912 = vunpack.c.l.b16 %v6841
    %v6913 = vunpack.c.l.b16 %v6842
    %v6914 = vunpack.c.l.b16 %v6843
    %v6915 = vunpack.c.l.b16 %v6844
    %v6916 = vunpack.c.l.b16 %v6845
    %v6917 = vunpack.c.l.b16 %v6846
    %v6918 = vunpack.c.l.b16 %v6847
    %v6919 = vpack.c.b16 %v6888, %v6887
    %v6920 = vpack.c.b16 %v6890, %v6889
    %v6921 = vpack.c.b16 %v6892, %v6891
    %v6922 = vpack.c.b16 %v6894, %v6893
    %v6923 = vpack.c.b16 %v6896, %v6895
    %v6924 = vpack.c.b16 %v6898, %v6897
    %v6925 = vpack.c.b16 %v6900, %v6899
    %v6926 = vpack.c.b16 %v6902, %v6901
    %v6927 = vpack.c.b16 %v6904, %v6903
    %v6928 = vpack.c.b16 %v6906, %v6905
    %v6929 = vpack.c.b16 %v6908, %v6907
    %v6930 = vpack.c.b16 %v6910, %v6909
    %v6931 = vpack.c.b16 %v6912, %v6911
    %v6932 = vpack.c.b16 %v6914, %v6913
    %v6933 = vpack.c.b16 %v6916, %v6915
    %v6934 = vpack.c.b16 %v6918, %v6917
    %6951 = vmatprep.subr.bf16.mxu0 0
    %6952 = vmatpush1.bf16.msra.mxu0 %v6919
    %6953 = vmatprep.subr.bf16.mxu0 0
    %6954 = vmatpush1.bf16.msra.mxu0 %v6920
    %6955 = vmatprep.subr.bf16.mxu0 0
    %6956 = vmatpush1.bf16.msra.mxu0 %v6921
    %6957 = vmatprep.subr.bf16.mxu0 0
    %6958 = vmatpush1.bf16.msra.mxu0 %v6922
    %6959 = vmatprep.subr.bf16.mxu0 0
    %6960 = vmatpush1.bf16.msra.mxu0 %v6923
    %6961 = vmatprep.subr.bf16.mxu0 0
    %6962 = vmatpush1.bf16.msra.mxu0 %v6924
    %6963 = vmatprep.subr.bf16.mxu0 0
    %6964 = vmatpush1.bf16.msra.mxu0 %v6925
    %6965 = vmatprep.subr.bf16.mxu0 0
    %6966 = vmatpush1.bf16.msra.mxu0 %v6926
    %6967 = vmatprep.subr.bf16.mxu0 0
    %6968 = vmatpush1.bf16.msra.mxu0 %v6927
    %6969 = vmatprep.subr.bf16.mxu0 0
    %6970 = vmatpush1.bf16.msra.mxu0 %v6928
    %6971 = vmatprep.subr.bf16.mxu0 0
    %6972 = vmatpush1.bf16.msra.mxu0 %v6929
    %6973 = vmatprep.subr.bf16.mxu0 0
    %6974 = vmatpush1.bf16.msra.mxu0 %v6930
    %6975 = vmatprep.subr.bf16.mxu0 0
    %6976 = vmatpush1.bf16.msra.mxu0 %v6931
    %6977 = vmatprep.subr.bf16.mxu0 0
    %6978 = vmatpush1.bf16.msra.mxu0 %v6932
    %6979 = vmatprep.subr.bf16.mxu0 0
    %6980 = vmatpush1.bf16.msra.mxu0 %v6933
    %6981 = vmatprep.subr.bf16.mxu0 0
    %6982 = vmatpush1.bf16.msra.mxu0 %v6934
    %6983 = vmatprep.mubr.bf16.mxu0 %v6813
    %6984 = vmatmul.mubr.bf16.gmra.mrb[0].mxu0 %v6812
    %v6985 = vpop.f32.mrb[0].mxu0
    %v6986 = vadd.f32 %v6853, %v6985
    %v6987 = vpop.f32.mrb[0].mxu0
    %v6988 = vpop.f32.mrb[0].mxu0
    %v6989 = vadd.f32 %v6853, %v6988
    %v6990 = vpop.f32.mrb[0].mxu0
    %6991 = vmatprep.mubr.bf16.mxu0 %v6815
    %6992 = vmatmul.mubr.bf16.gmra.mrb[0].mxu0 %v6814
    %v6993 = vpop.f32.mrb[0].mxu0
    %v6994 = vadd.f32 %v6853, %v6993
    %v6995 = vpop.f32.mrb[0].mxu0
    %v6996 = vpop.f32.mrb[0].mxu0
    %v6997 = vadd.f32 %v6853, %v6996
    %v6998 = vpop.f32.mrb[0].mxu0
    %6999 = vdwg.mxu0
    %v7000 = vadd.f32 %v6637, %v6986
    %v7001 = vadd.f32 %v6638, %v6989
    %v7002 = vadd.f32 %v6639, %v6994
    %v7003 = vadd.f32 %v6640, %v6997
    %v7004 = vld [vmem:[%s49] sm:$0x1]
    %v7005 = vld [vmem:[%s51] sm:$0x1]
    %7006 = vadd.xlane.f32.xlu0 %v7000
    %v7007 = vpop.xlane.xlu0 %7006
    %7008 = vadd.xlane.f32.xlu0 %v7001
    %v7009 = vpop.xlane.xlu0 %7008
    %7010 = vadd.xlane.f32.xlu0 %v7002
    %v7011 = vpop.xlane.xlu0 %7010
    %7012 = vadd.xlane.f32.xlu0 %v7003
    %v7013 = vpop.xlane.xlu0 %7012
    %v7014 = vmul.f32 %v7007, %v6584
    %v7015 = vmul.f32 %v7009, %v6584
    %v7016 = vmul.f32 %v7011, %v6584
    %v7017 = vmul.f32 %v7013, %v6584
    %v7018 = vsub.f32 %v7000, %v7014
    %v7019 = vsub.f32 %v7001, %v7015
    %v7020 = vsub.f32 %v7002, %v7016
    %v7021 = vsub.f32 %v7003, %v7017
    %v7022 = vmul.f32 %v7018, %v7018
    %v7023 = vmul.f32 %v7019, %v7019
    %v7024 = vmul.f32 %v7020, %v7020
    %v7025 = vmul.f32 %v7021, %v7021
    %7026 = vadd.xlane.f32.xlu0 %v7022
    %v7027 = vpop.xlane.xlu0 %7026
    %7028 = vadd.xlane.f32.xlu0 %v7023
    %v7029 = vpop.xlane.xlu0 %7028
    %7030 = vadd.xlane.f32.xlu0 %v7024
    %v7031 = vpop.xlane.xlu0 %7030
    %7032 = vadd.xlane.f32.xlu0 %v7025
    %v7033 = vpop.xlane.xlu0 %7032
    %v7034 = vmul.f32 %v7027, %v6584
    %v7035 = vmul.f32 %v7029, %v6584
    %v7036 = vmul.f32 %v7031, %v6584
    %v7037 = vmul.f32 %v7033, %v6584
    %v7038 = vadd.f32 %v7034, 1e-05
    %v7039 = vadd.f32 %v7035, 1e-05
    %v7040 = vadd.f32 %v7036, 1e-05
    %v7041 = vadd.f32 %v7037, 1e-05
    %v7042 = vrsqrt.pop %v7038
    %v7043 = vrsqrt.pop %v7039
    %v7044 = vrsqrt.pop %v7040
    %v7045 = vrsqrt.pop %v7041
    %v7046 = vmul.f32 %v7018, %v7042
    %v7047 = vmul.f32 %v7019, %v7043
    %v7048 = vmul.f32 %v7020, %v7044
    %v7049 = vmul.f32 %v7021, %v7045
    %v7051 = vlaneseq
    %v7052 = vshrl.u32 %v7051, 7
    %v7053 = vsub.s32 0, %v7052
    %v7054 = vrot.slane %v7004, %v7053
    %v7056 = vmul.f32 %v7046, %v7054
    %v7057 = vmul.f32 %v7047, %v7054
    %v7058 = vmul.f32 %v7048, %v7054
    %v7059 = vmul.f32 %v7049, %v7054
    %v7061 = vlaneseq
    %v7062 = vshrl.u32 %v7061, 7
    %v7063 = vsub.s32 0, %v7062
    %v7064 = vrot.slane %v7005, %v7063
    %v7066 = vadd.f32 %v7056, %v7064
    %v7067 = vadd.f32 %v7057, %v7064
    %v7068 = vadd.f32 %v7058, %v7064
    %v7069 = vadd.f32 %v7059, %v7064
    %v7070 = vpack.c.bf16 %v7067, %v7066
    %v7071 = vpack.c.bf16 %v7069, %v7068
    %v7072 = vld [vmem:[%s53] sm:$0xff]
    %v7073 = vld [vmem:[%s53 + $0x8] sm:$0xf]
    %v7074 = vld [vmem:[%s53 + $0xc] sm:$0xff]
    %v7075 = vld [vmem:[%s53 + $0x14] sm:$0xf]
    %v7076 = vld [vmem:[%s53 + $0x18] sm:$0xff]
    %v7077 = vld [vmem:[%s53 + $0x20] sm:$0xf]
    %v7078 = vld [vmem:[%s53 + $0x24] sm:$0xff]
    %v7079 = vld [vmem:[%s53 + $0x2c] sm:$0xf]
    %v7080 = vld [vmem:[%s53 + $0x30] sm:$0xff]
    %v7081 = vld [vmem:[%s53 + $0x38] sm:$0xf]
    %v7082 = vld [vmem:[%s53 + $0x3c] sm:$0xff]
    %v7083 = vld [vmem:[%s53 + $0x44] sm:$0xf]
    %v7084 = vld [vmem:[%s53 + $0x48] sm:$0xff]
    %v7085 = vld [vmem:[%s53 + $0x50] sm:$0xf]
    %v7086 = vld [vmem:[%s53 + $0x54] sm:$0xff]
    %v7087 = vld [vmem:[%s53 + $0x5c] sm:$0xf]
    %v7088 = vld [vmem:[%s53 + $0x60] sm:$0xff]
    %v7089 = vld [vmem:[%s53 + $0x68] sm:$0xf]
    %v7090 = vld [vmem:[%s53 + $0x6c] sm:$0xff]
    %v7091 = vld [vmem:[%s53 + $0x74] sm:$0xf]
    %v7092 = vld [vmem:[%s53 + $0x78] sm:$0xff]
    %v7093 = vld [vmem:[%s53 + $0x80] sm:$0xf]
    %v7094 = vld [vmem:[%s53 + $0x84] sm:$0xff]
    %v7095 = vld [vmem:[%s53 + $0x8c] sm:$0xf]
    %v7096 = vld [vmem:[%s53 + $0x90] sm:$0xff]
    %v7097 = vld [vmem:[%s53 + $0x98] sm:$0xf]
    %v7098 = vld [vmem:[%s53 + $0x9c] sm:$0xff]
    %v7099 = vld [vmem:[%s53 + $0xa4] sm:$0xf]
    %v7100 = vld [vmem:[%s53 + $0xa8] sm:$0xff]
    %v7101 = vld [vmem:[%s53 + $0xb0] sm:$0xf]
    %v7102 = vld [vmem:[%s53 + $0xb4] sm:$0xff]
    %v7103 = vld [vmem:[%s53 + $0xbc] sm:$0xf]
    %v7104 = vld [vmem:[%s55] sm:$0x7]
    %v7106 = vlaneseq
    %v7107 = vshrl.u32 %v7106, 7
    %v7108 = vsub.s32 0, %v7107
    %v7109 = vrot.slane %v7104, %v7108
    %v7110 = vlaneseq
    %v7111 = vshrl.u32 %v7110, 7
    %v7112 = vsub.s32 1, %v7111
    %v7113 = vrot.slane %v7104, %v7112
    %v7114 = vlaneseq
    %v7115 = vshrl.u32 %v7114, 7
    %v7116 = vsub.s32 2, %v7115
    %v7117 = vrot.slane %v7104, %v7116
    %v7153 = vunpack.c.l.b16 %v7072
    %v7154 = vunpack.c.h.b16 %v7072
    %v7155 = vunpack.c.l.b16 %v7073
    %v7156 = vunpack.c.l.b16 %v7074
    %v7157 = vunpack.c.h.b16 %v7074
    %v7158 = vunpack.c.l.b16 %v7075
    %v7159 = vunpack.c.l.b16 %v7076
    %v7160 = vunpack.c.h.b16 %v7076
    %v7161 = vunpack.c.l.b16 %v7077
    %v7162 = vunpack.c.l.b16 %v7078
    %v7163 = vunpack.c.h.b16 %v7078
    %v7164 = vunpack.c.l.b16 %v7079
    %v7165 = vunpack.c.l.b16 %v7080
    %v7166 = vunpack.c.h.b16 %v7080
    %v7167 = vunpack.c.l.b16 %v7081
    %v7168 = vunpack.c.l.b16 %v7082
    %v7169 = vunpack.c.h.b16 %v7082
    %v7170 = vunpack.c.l.b16 %v7083
    %v7171 = vunpack.c.l.b16 %v7084
    %v7172 = vunpack.c.h.b16 %v7084
    %v7173 = vunpack.c.l.b16 %v7085
    %v7174 = vunpack.c.l.b16 %v7086
    %v7175 = vunpack.c.h.b16 %v7086
    %v7176 = vunpack.c.l.b16 %v7087
    %v7177 = vunpack.c.l.b16 %v7088
    %v7178 = vunpack.c.h.b16 %v7088
    %v7179 = vunpack.c.l.b16 %v7089
    %v7180 = vunpack.c.l.b16 %v7090
    %v7181 = vunpack.c.h.b16 %v7090
    %v7182 = vunpack.c.l.b16 %v7091
    %v7183 = vunpack.c.l.b16 %v7092
    %v7184 = vunpack.c.h.b16 %v7092
    %v7185 = vunpack.c.l.b16 %v7093
    %v7186 = vunpack.c.l.b16 %v7094
    %v7187 = vunpack.c.h.b16 %v7094
    %v7188 = vunpack.c.l.b16 %v7095
    %v7189 = vunpack.c.l.b16 %v7096
    %v7190 = vunpack.c.h.b16 %v7096
    %v7191 = vunpack.c.l.b16 %v7097
    %v7192 = vunpack.c.l.b16 %v7098
    %v7193 = vunpack.c.h.b16 %v7098
    %v7194 = vunpack.c.l.b16 %v7099
    %v7195 = vunpack.c.l.b16 %v7100
    %v7196 = vunpack.c.h.b16 %v7100
    %v7197 = vunpack.c.l.b16 %v7101
    %v7198 = vunpack.c.l.b16 %v7102
    %v7199 = vunpack.c.h.b16 %v7102
    %v7200 = vunpack.c.l.b16 %v7103
    %v7201 = vpack.c.b16 %v7156, %v7153
    %v7202 = vpack.c.b16 %v7157, %v7154
    %v7203 = vpack.c.b16 %v7158, %v7155
    %v7204 = vpack.c.b16 %v7162, %v7159
    %v7205 = vpack.c.b16 %v7163, %v7160
    %v7206 = vpack.c.b16 %v7164, %v7161
    %v7207 = vpack.c.b16 %v7168, %v7165
    %v7208 = vpack.c.b16 %v7169, %v7166
    %v7209 = vpack.c.b16 %v7170, %v7167
    %v7210 = vpack.c.b16 %v7174, %v7171
    %v7211 = vpack.c.b16 %v7175, %v7172
    %v7212 = vpack.c.b16 %v7176, %v7173
    %v7213 = vpack.c.b16 %v7180, %v7177
    %v7214 = vpack.c.b16 %v7181, %v7178
    %v7215 = vpack.c.b16 %v7182, %v7179
    %v7216 = vpack.c.b16 %v7186, %v7183
    %v7217 = vpack.c.b16 %v7187, %v7184
    %v7218 = vpack.c.b16 %v7188, %v7185
    %v7219 = vpack.c.b16 %v7192, %v7189
    %v7220 = vpack.c.b16 %v7193, %v7190
    %v7221 = vpack.c.b16 %v7194, %v7191
    %v7222 = vpack.c.b16 %v7198, %v7195
    %v7223 = vpack.c.b16 %v7199, %v7196
    %v7224 = vpack.c.b16 %v7200, %v7197
    %7249 = vmatprep.subr.bf16.mxu0 %v7202
    %7250 = vmatpush1.bf16.msra.mxu0 %v7201
    %7251 = vmatprep.subr.bf16.mxu0 %v7205
    %7252 = vmatpush1.bf16.msra.mxu0 %v7204
    %7253 = vmatprep.subr.bf16.mxu0 %v7208
    %7254 = vmatpush1.bf16.msra.mxu0 %v7207
    %7255 = vmatprep.subr.bf16.mxu0 %v7211
    %7256 = vmatpush1.bf16.msra.mxu0 %v7210
    %7257 = vmatprep.subr.bf16.mxu0 %v7214
    %7258 = vmatpush1.bf16.msra.mxu0 %v7213
    %7259 = vmatprep.subr.bf16.mxu0 %v7217
    %7260 = vmatpush1.bf16.msra.mxu0 %v7216
    %7261 = vmatprep.subr.bf16.mxu0 %v7220
    %7262 = vmatpush1.bf16.msra.mxu0 %v7219
    %7263 = vmatprep.subr.bf16.mxu0 %v7223
    %7264 = vmatpush1.bf16.msra.mxu0 %v7222
    %7265 = vmatprep.subr.bf16.mxu0 0
    %7266 = vmatpush1.bf16.msra.mxu0 0
    %7267 = vmatprep.subr.bf16.mxu0 0
    %7268 = vmatpush1.bf16.msra.mxu0 0
    %7269 = vmatprep.subr.bf16.mxu0 0
    %7270 = vmatpush1.bf16.msra.mxu0 0
    %7271 = vmatprep.subr.bf16.mxu0 0
    %7272 = vmatpush1.bf16.msra.mxu0 0
    %7273 = vmatprep.subr.bf16.mxu0 0
    %7274 = vmatpush1.bf16.msra.mxu0 0
    %7275 = vmatprep.subr.bf16.mxu0 0
    %7276 = vmatpush1.bf16.msra.mxu0 0
    %7277 = vmatprep.subr.bf16.mxu0 0
    %7278 = vmatpush1.bf16.msra.mxu0 0
    %7279 = vmatprep.subr.bf16.mxu0 0
    %7280 = vmatpush1.bf16.msra.mxu0 0
    %7281 = vmatprep.mubr.bf16.mxu0 0
    %7282 = vmatmul.mubr.bf16.gmra.mrb[0].mxu0 %v7070
    %v7283 = vpop.f32.mrb[0].mxu0
    %v7284 = vadd.f32 %v7109, %v7283
    %v7285 = vpop.f32.mrb[0].mxu0
    %v7286 = vadd.f32 %v7113, %v7285
    %v7287 = vpop.f32.mrb[0].mxu0
    %v7288 = vadd.f32 %v7109, %v7287
    %v7289 = vpop.f32.mrb[0].mxu0
    %v7290 = vadd.f32 %v7113, %v7289
    %7291 = vmatprep.mubr.bf16.mxu0 0
    %7292 = vmatmul.mubr.bf16.gmra.mrb[0].mxu0 %v7071
    %v7293 = vpop.f32.mrb[0].mxu0
    %v7294 = vadd.f32 %v7109, %v7293
    %v7295 = vpop.f32.mrb[0].mxu0
    %v7296 = vadd.f32 %v7113, %v7295
    %v7297 = vpop.f32.mrb[0].mxu0
    %v7298 = vadd.f32 %v7109, %v7297
    %v7299 = vpop.f32.mrb[0].mxu0
    %v7300 = vadd.f32 %v7113, %v7299
    %7301 = vdwg.mxu0
    %7302 = vmatprep.subr.bf16.mxu0 0
    %7303 = vmatpush1.bf16.msra.mxu0 %v7203
    %7304 = vmatprep.subr.bf16.mxu0 0
    %7305 = vmatpush1.bf16.msra.mxu0 %v7206
    %7306 = vmatprep.subr.bf16.mxu0 0
    %7307 = vmatpush1.bf16.msra.mxu0 %v7209
    %7308 = vmatprep.subr.bf16.mxu0 0
    %7309 = vmatpush1.bf16.msra.mxu0 %v7212
    %7310 = vmatprep.subr.bf16.mxu0 0
    %7311 = vmatpush1.bf16.msra.mxu0 %v7215
    %7312 = vmatprep.subr.bf16.mxu0 0
    %7313 = vmatpush1.bf16.msra.mxu0 %v7218
    %7314 = vmatprep.subr.bf16.mxu0 0
    %7315 = vmatpush1.bf16.msra.mxu0 %v7221
    %7316 = vmatprep.subr.bf16.mxu0 0
    %7317 = vmatpush1.bf16.msra.mxu0 %v7224
    %7318 = vmatprep.subr.bf16.mxu0 0
    %7319 = vmatpush1.bf16.msra.mxu0 0
    %7320 = vmatprep.subr.bf16.mxu0 0
    %7321 = vmatpush1.bf16.msra.mxu0 0
    %7322 = vmatprep.subr.bf16.mxu0 0
    %7323 = vmatpush1.bf16.msra.mxu0 0
    %7324 = vmatprep.subr.bf16.mxu0 0
    %7325 = vmatpush1.bf16.msra.mxu0 0
    %7326 = vmatprep.subr.bf16.mxu0 0
    %7327 = vmatpush1.bf16.msra.mxu0 0
    %7328 = vmatprep.subr.bf16.mxu0 0
    %7329 = vmatpush1.bf16.msra.mxu0 0
    %7330 = vmatprep.subr.bf16.mxu0 0
    %7331 = vmatpush1.bf16.msra.mxu0 0
    %7332 = vmatprep.subr.bf16.mxu0 0
    %7333 = vmatpush1.bf16.msra.mxu0 0
    %7334 = vmatprep.mubr.bf16.mxu0 0
    %7335 = vmatmul.mubr.bf16.gmra.mrb[0].mxu0 %v7070
    %v7336 = vpop.f32.mrb[0].mxu0
    %v7337 = vadd.f32 %v7117, %v7336
    %v7338 = vpop.f32.mrb[0].mxu0
    %v7339 = vpop.f32.mrb[0].mxu0
    %v7340 = vadd.f32 %v7117, %v7339
    %v7341 = vpop.f32.mrb[0].mxu0
    %7342 = vmatprep.mubr.bf16.mxu0 0
    %7343 = vmatmul.mubr.bf16.gmra.mrb[0].mxu0 %v7071
    %v7344 = vpop.f32.mrb[0].mxu0
    %v7345 = vadd.f32 %v7117, %v7344
    %v7346 = vpop.f32.mrb[0].mxu0
    %v7347 = vpop.f32.mrb[0].mxu0
    %v7348 = vadd.f32 %v7117, %v7347
    %v7349 = vpop.f32.mrb[0].mxu0
    %7350 = vdwg.mxu0
    %v7351 = vmul.f32 %v7284, 0.17677669
    %v7352 = vmul.f32 %v7288, 0.17677669
    %v7353 = vmul.f32 %v7294, 0.17677669
    %v7354 = vmul.f32 %v7298, 0.17677669
    %v7355 = vpack.c.bf16 %v7290, %v7286
    %v7356 = vpack.c.bf16 %v7300, %v7296
    %v7357 = vmul.f32 %v7351, %v5877
    %v7358 = vmul.f32 %v7352, %v5877
    %v7359 = vmul.f32 %v7353, %v5877
    %v7360 = vmul.f32 %v7354, %v5877
    %v7361 = vmul.f32 %v7351, %v5885
    %v7362 = vmul.f32 %v7352, %v5885
    %v7363 = vmul.f32 %v7353, %v5885
    %v7364 = vmul.f32 %v7354, %v5885
    %v7365 = vmul.f32 %v7351, %v5893
    %v7366 = vmul.f32 %v7352, %v5893
    %v7367 = vmul.f32 %v7353, %v5893
    %v7368 = vmul.f32 %v7354, %v5893
    %v7369 = vmul.f32 %v7351, %v5901
    %v7370 = vmul.f32 %v7352, %v5901
    %v7371 = vmul.f32 %v7353, %v5901
    %v7372 = vmul.f32 %v7354, %v5901
    %v7373 = vpack.c.bf16 %v7358, %v7357
    %v7374 = vpack.c.bf16 %v7360, %v7359
    %v7375 = vpack.c.bf16 %v7362, %v7361
    %v7376 = vpack.c.bf16 %v7364, %v7363
    %v7377 = vpack.c.bf16 %v7366, %v7365
    %v7378 = vpack.c.bf16 %v7368, %v7367
    %v7379 = vpack.c.bf16 %v7370, %v7369
    %v7380 = vpack.c.bf16 %v7372, %v7371
    %7381 = vmatprep.subr.bf16.mxu0 0
    %7382 = vmatpush1.bf16.xpose.msra.mxu0 %v7355
    %7383 = vmatprep.subr.bf16.mxu0 0
    %7384 = vmatpush1.bf16.xpose.msra.mxu0 %v7356
    %7385 = vmatprep.subr.bf16.mxu0 0
    %7386 = vmatpush1.bf16.xpose.msra.mxu0 0
    %7387 = vmatprep.subr.bf16.mxu0 0
    %7388 = vmatpush1.bf16.xpose.msra.mxu0 0
    %7389 = vmatprep.subr.bf16.mxu0 0
    %7390 = vmatpush1.bf16.xpose.msra.mxu0 0
    %7391 = vmatprep.subr.bf16.mxu0 0
    %7392 = vmatpush1.bf16.xpose.msra.mxu0 0
    %7393 = vmatprep.subr.bf16.mxu0 0
    %7394 = vmatpush1.bf16.xpose.msra.mxu0 0
    %7395 = vmatprep.subr.bf16.mxu0 0
    %7396 = vmatpush1.bf16.xpose.msra.mxu0 0
    %7397 = vmatprep.subr.bf16.mxu0 0
    %7398 = vmatpush1.bf16.xpose.msra.mxu0 0
    %7399 = vmatprep.subr.bf16.mxu0 0
    %7400 = vmatpush1.bf16.xpose.msra.mxu0 0
    %7401 = vmatprep.subr.bf16.mxu0 0
    %7402 = vmatpush1.bf16.xpose.msra.mxu0 0
    %7403 = vmatprep.subr.bf16.mxu0 0
    %7404 = vmatpush1.bf16.xpose.msra.mxu0 0
    %7405 = vmatprep.subr.bf16.mxu0 0
    %7406 = vmatpush1.bf16.xpose.msra.mxu0 0
    %7407 = vmatprep.subr.bf16.mxu0 0
    %7408 = vmatpush1.bf16.xpose.msra.mxu0 0
    %7409 = vmatprep.subr.bf16.mxu0 0
    %7410 = vmatpush1.bf16.xpose.msra.mxu0 0
    %7411 = vmatprep.subr.bf16.mxu0 0
    %7412 = vmatpush1.bf16.xpose.msra.mxu0 0
    %7413 = vmatprep.mubr.bf16.mxu0 0
    %7414 = vmatmul.mubr.bf16.gmra.mrb[0].mxu0 %v7373
    %v7415 = vpop.f32.mrb[0].mxu0
    %v7416 = vadd.f32 %v5570, %v7415
    %v7417 = vpop.f32.mrb[0].mxu0
    %v7418 = vpop.f32.mrb[0].mxu0
    %v7419 = vadd.f32 %v5571, %v7418
    %v7420 = vpop.f32.mrb[0].mxu0
    %7421 = vmatprep.mubr.bf16.mxu0 0
    %7422 = vmatmul.mubr.bf16.gmra.mrb[0].mxu0 %v7374
    %v7423 = vpop.f32.mrb[0].mxu0
    %v7424 = vadd.f32 %v5572, %v7423
    %v7425 = vpop.f32.mrb[0].mxu0
    %v7426 = vpop.f32.mrb[0].mxu0
    %v7427 = vadd.f32 %v5573, %v7426
    %v7428 = vpop.f32.mrb[0].mxu0
    %7429 = vmatprep.mubr.bf16.mxu0 0
    %7430 = vmatmul.mubr.bf16.gmra.mrb[0].mxu0 %v7375
    %v7431 = vpop.f32.mrb[0].mxu0
    %v7432 = vadd.f32 %v5574, %v7431
    %v7433 = vpop.f32.mrb[0].mxu0
    %v7434 = vpop.f32.mrb[0].mxu0
    %v7435 = vadd.f32 %v5575, %v7434
    %v7436 = vpop.f32.mrb[0].mxu0
    %7437 = vmatprep.mubr.bf16.mxu0 0
    %7438 = vmatmul.mubr.bf16.gmra.mrb[0].mxu0 %v7376
    %v7439 = vpop.f32.mrb[0].mxu0
    %v7440 = vadd.f32 %v5576, %v7439
    %v7441 = vpop.f32.mrb[0].mxu0
    %v7442 = vpop.f32.mrb[0].mxu0
    %v7443 = vadd.f32 %v5577, %v7442
    %v7444 = vpop.f32.mrb[0].mxu0
    %7445 = vmatprep.mubr.bf16.mxu0 0
    %7446 = vmatmul.mubr.bf16.gmra.mrb[0].mxu0 %v7377
    %v7447 = vpop.f32.mrb[0].mxu0
    %v7448 = vadd.f32 %v5578, %v7447
    %v7449 = vpop.f32.mrb[0].mxu0
    %v7450 = vpop.f32.mrb[0].mxu0
    %v7451 = vadd.f32 %v5579, %v7450
    %v7452 = vpop.f32.mrb[0].mxu0
    %7453 = vmatprep.mubr.bf16.mxu0 0
    %7454 = vmatmul.mubr.bf16.gmra.mrb[0].mxu0 %v7378
    %v7455 = vpop.f32.mrb[0].mxu0
    %v7456 = vadd.f32 %v5580, %v7455
    %v7457 = vpop.f32.mrb[0].mxu0
    %v7458 = vpop.f32.mrb[0].mxu0
    %v7459 = vadd.f32 %v5581, %v7458
    %v7460 = vpop.f32.mrb[0].mxu0
    %7461 = vmatprep.mubr.bf16.mxu0 0
    %7462 = vmatmul.mubr.bf16.gmra.mrb[0].mxu0 %v7379
    %v7463 = vpop.f32.mrb[0].mxu0
    %v7464 = vadd.f32 %v5582, %v7463
    %v7465 = vpop.f32.mrb[0].mxu0
    %v7466 = vpop.f32.mrb[0].mxu0
    %v7467 = vadd.f32 %v5583, %v7466
    %v7468 = vpop.f32.mrb[0].mxu0
    %7469 = vmatprep.mubr.bf16.mxu0 0
    %7470 = vmatmul.mubr.bf16.gmra.mrb[0].mxu0 %v7380
    %v7471 = vpop.f32.mrb[0].mxu0
    %v7472 = vadd.f32 %v5584, %v7471
    %v7473 = vpop.f32.mrb[0].mxu0
    %v7474 = vpop.f32.mrb[0].mxu0
    %v7475 = vadd.f32 %v5585, %v7474
    %v7476 = vpop.f32.mrb[0].mxu0
    %7477 = vdwg.mxu0
    %v7478 = vsel %vm6011, %v7416, -inf
    %7479 = vmax.xlane.f32.xlu0 %v7478
    %v7480 = vpop.xlane.xlu0 %7479
    %v7481 = vsel %vm6011, %v7419, -inf
    %7482 = vmax.xlane.f32.xlu0 %v7481
    %v7483 = vpop.xlane.xlu0 %7482
    %v7484 = vsel %vm6011, %v7424, -inf
    %7485 = vmax.xlane.f32.xlu0 %v7484
    %v7486 = vpop.xlane.xlu0 %7485
    %v7487 = vsel %vm6011, %v7427, -inf
    %7488 = vmax.xlane.f32.xlu0 %v7487
    %v7489 = vpop.xlane.xlu0 %7488
    %v7490 = vsel %vm6011, %v7432, -inf
    %7491 = vmax.xlane.f32.xlu0 %v7490
    %v7492 = vpop.xlane.xlu0 %7491
    %v7493 = vsel %vm6011, %v7435, -inf
    %7494 = vmax.xlane.f32.xlu0 %v7493
    %v7495 = vpop.xlane.xlu0 %7494
    %v7496 = vsel %vm6011, %v7440, -inf
    %7497 = vmax.xlane.f32.xlu0 %v7496
    %v7498 = vpop.xlane.xlu0 %7497
    %v7499 = vsel %vm6011, %v7443, -inf
    %7500 = vmax.xlane.f32.xlu0 %v7499
    %v7501 = vpop.xlane.xlu0 %7500
    %v7502 = vsel %vm6011, %v7448, -inf
    %7503 = vmax.xlane.f32.xlu0 %v7502
    %v7504 = vpop.xlane.xlu0 %7503
    %v7505 = vsel %vm6011, %v7451, -inf
    %7506 = vmax.xlane.f32.xlu0 %v7505
    %v7507 = vpop.xlane.xlu0 %7506
    %v7508 = vsel %vm6011, %v7456, -inf
    %7509 = vmax.xlane.f32.xlu0 %v7508
    %v7510 = vpop.xlane.xlu0 %7509
    %v7511 = vsel %vm6011, %v7459, -inf
    %7512 = vmax.xlane.f32.xlu0 %v7511
    %v7513 = vpop.xlane.xlu0 %7512
    %v7514 = vsel %vm6011, %v7464, -inf
    %7515 = vmax.xlane.f32.xlu0 %v7514
    %v7516 = vpop.xlane.xlu0 %7515
    %v7517 = vsel %vm6011, %v7467, -inf
    %7518 = vmax.xlane.f32.xlu0 %v7517
    %v7519 = vpop.xlane.xlu0 %7518
    %v7520 = vsel %vm6011, %v7472, -inf
    %7521 = vmax.xlane.f32.xlu0 %v7520
    %v7522 = vpop.xlane.xlu0 %7521
    %v7523 = vsel %vm6011, %v7475, -inf
    %7524 = vmax.xlane.f32.xlu0 %v7523
    %v7525 = vpop.xlane.xlu0 %7524
    %v7526 = vsub.f32 %v7416, %v7480
    %v7527 = vsub.f32 %v7419, %v7483
    %v7528 = vsub.f32 %v7424, %v7486
    %v7529 = vsub.f32 %v7427, %v7489
    %v7530 = vsub.f32 %v7432, %v7492
    %v7531 = vsub.f32 %v7435, %v7495
    %v7532 = vsub.f32 %v7440, %v7498
    %v7533 = vsub.f32 %v7443, %v7501
    %v7534 = vsub.f32 %v7448, %v7504
    %v7535 = vsub.f32 %v7451, %v7507
    %v7536 = vsub.f32 %v7456, %v7510
    %v7537 = vsub.f32 %v7459, %v7513
    %v7538 = vsub.f32 %v7464, %v7516
    %v7539 = vsub.f32 %v7467, %v7519
    %v7540 = vsub.f32 %v7472, %v7522
    %v7541 = vsub.f32 %v7475, %v7525
    %v7542 = vmul.f32 %v7526, 1.442695
    %v7543 = vpow.pop %v7542
    %v7544 = vmul.f32 %v7527, 1.442695
    %v7545 = vpow.pop %v7544
    %v7546 = vmul.f32 %v7528, 1.442695
    %v7547 = vpow.pop %v7546
    %v7548 = vmul.f32 %v7529, 1.442695
    %v7549 = vpow.pop %v7548
    %v7550 = vmul.f32 %v7530, 1.442695
    %v7551 = vpow.pop %v7550
    %v7552 = vmul.f32 %v7531, 1.442695
    %v7553 = vpow.pop %v7552
    %v7554 = vmul.f32 %v7532, 1.442695
    %v7555 = vpow.pop %v7554
    %v7556 = vmul.f32 %v7533, 1.442695
    %v7557 = vpow.pop %v7556
    %v7558 = vmul.f32 %v7534, 1.442695
    %v7559 = vpow.pop %v7558
    %v7560 = vmul.f32 %v7535, 1.442695
    %v7561 = vpow.pop %v7560
    %v7562 = vmul.f32 %v7536, 1.442695
    %v7563 = vpow.pop %v7562
    %v7564 = vmul.f32 %v7537, 1.442695
    %v7565 = vpow.pop %v7564
    %v7566 = vmul.f32 %v7538, 1.442695
    %v7567 = vpow.pop %v7566
    %v7568 = vmul.f32 %v7539, 1.442695
    %v7569 = vpow.pop %v7568
    %v7570 = vmul.f32 %v7540, 1.442695
    %v7571 = vpow.pop %v7570
    %v7572 = vmul.f32 %v7541, 1.442695
    %v7573 = vpow.pop %v7572
    %v7574 = vsel %vm6011, %v7543, 0.0
    %7575 = vadd.xlane.f32.xlu0 %v7574
    %v7576 = vpop.xlane.xlu0 %7575
    %v7577 = vsel %vm6011, %v7545, 0.0
    %7578 = vadd.xlane.f32.xlu0 %v7577
    %v7579 = vpop.xlane.xlu0 %7578
    %v7580 = vsel %vm6011, %v7547, 0.0
    %7581 = vadd.xlane.f32.xlu0 %v7580
    %v7582 = vpop.xlane.xlu0 %7581
    %v7583 = vsel %vm6011, %v7549, 0.0
    %7584 = vadd.xlane.f32.xlu0 %v7583
    %v7585 = vpop.xlane.xlu0 %7584
    %v7586 = vsel %vm6011, %v7551, 0.0
    %7587 = vadd.xlane.f32.xlu0 %v7586
    %v7588 = vpop.xlane.xlu0 %7587
    %v7589 = vsel %vm6011, %v7553, 0.0
    %7590 = vadd.xlane.f32.xlu0 %v7589
    %v7591 = vpop.xlane.xlu0 %7590
    %v7592 = vsel %vm6011, %v7555, 0.0
    %7593 = vadd.xlane.f32.xlu0 %v7592
    %v7594 = vpop.xlane.xlu0 %7593
    %v7595 = vsel %vm6011, %v7557, 0.0
    %7596 = vadd.xlane.f32.xlu0 %v7595
    %v7597 = vpop.xlane.xlu0 %7596
    %v7598 = vsel %vm6011, %v7559, 0.0
    %7599 = vadd.xlane.f32.xlu0 %v7598
    %v7600 = vpop.xlane.xlu0 %7599
    %v7601 = vsel %vm6011, %v7561, 0.0
    %7602 = vadd.xlane.f32.xlu0 %v7601
    %v7603 = vpop.xlane.xlu0 %7602
    %v7604 = vsel %vm6011, %v7563, 0.0
    %7605 = vadd.xlane.f32.xlu0 %v7604
    %v7606 = vpop.xlane.xlu0 %7605
    %v7607 = vsel %vm6011, %v7565, 0.0
    %7608 = vadd.xlane.f32.xlu0 %v7607
    %v7609 = vpop.xlane.xlu0 %7608
    %v7610 = vsel %vm6011, %v7567, 0.0
    %7611 = vadd.xlane.f32.xlu0 %v7610
    %v7612 = vpop.xlane.xlu0 %7611
    %v7613 = vsel %vm6011, %v7569, 0.0
    %7614 = vadd.xlane.f32.xlu0 %v7613
    %v7615 = vpop.xlane.xlu0 %7614
    %v7616 = vsel %vm6011, %v7571, 0.0
    %7617 = vadd.xlane.f32.xlu0 %v7616
    %v7618 = vpop.xlane.xlu0 %7617
    %v7619 = vsel %vm6011, %v7573, 0.0
    %7620 = vadd.xlane.f32.xlu0 %v7619
    %v7621 = vpop.xlane.xlu0 %7620
    %v7622 = vrcp.pop %v7576
    %v7623 = vrcp.pop %v7579
    %v7624 = vrcp.pop %v7582
    %v7625 = vrcp.pop %v7585
    %v7626 = vrcp.pop %v7588
    %v7627 = vrcp.pop %v7591
    %v7628 = vrcp.pop %v7594
    %v7629 = vrcp.pop %v7597
    %v7630 = vrcp.pop %v7600
    %v7631 = vrcp.pop %v7603
    %v7632 = vrcp.pop %v7606
    %v7633 = vrcp.pop %v7609
    %v7634 = vrcp.pop %v7612
    %v7635 = vrcp.pop %v7615
    %v7636 = vrcp.pop %v7618
    %v7637 = vrcp.pop %v7621
    %v7638 = vmul.f32 %v7543, %v7622
    %v7639 = vmul.f32 %v7545, %v7623
    %v7640 = vmul.f32 %v7547, %v7624
    %v7641 = vmul.f32 %v7549, %v7625
    %v7642 = vmul.f32 %v7551, %v7626
    %v7643 = vmul.f32 %v7553, %v7627
    %v7644 = vmul.f32 %v7555, %v7628
    %v7645 = vmul.f32 %v7557, %v7629
    %v7646 = vmul.f32 %v7559, %v7630
    %v7647 = vmul.f32 %v7561, %v7631
    %v7648 = vmul.f32 %v7563, %v7632
    %v7649 = vmul.f32 %v7565, %v7633
    %v7650 = vmul.f32 %v7567, %v7634
    %v7651 = vmul.f32 %v7569, %v7635
    %v7652 = vmul.f32 %v7571, %v7636
    %v7653 = vmul.f32 %v7573, %v7637
    %v7654 = vpack.c.bf16 %v7639, %v7638
    %v7655 = vpack.c.bf16 %v7641, %v7640
    %v7656 = vpack.c.bf16 %v7643, %v7642
    %v7657 = vpack.c.bf16 %v7645, %v7644
    %v7658 = vpack.c.bf16 %v7647, %v7646
    %v7659 = vpack.c.bf16 %v7649, %v7648
    %v7660 = vpack.c.bf16 %v7651, %v7650
    %v7661 = vpack.c.bf16 %v7653, %v7652
    %v7662 = vmul.f32 %v7337, %v5877
    %v7663 = vmul.f32 %v7340, %v5877
    %v7664 = vmul.f32 %v7345, %v5877
    %v7665 = vmul.f32 %v7348, %v5877
    %v7666 = vpack.c.bf16 %v7663, %v7662
    %v7667 = vpack.c.bf16 %v7665, %v7664
    %v7668 = vmul.f32 %v7337, %v5885
    %v7669 = vmul.f32 %v7340, %v5885
    %v7670 = vmul.f32 %v7345, %v5885
    %v7671 = vmul.f32 %v7348, %v5885
    %v7672 = vpack.c.bf16 %v7669, %v7668
    %v7673 = vpack.c.bf16 %v7671, %v7670
    %v7675 = vsel %vm6011, %v7656, 0
    %v7678 = vsel %vm6011, %v7657, 0
    %7680 = vmatprep.subr.bf16.mxu0 0
    %7681 = vmatpush1.bf16.msra.mxu0 %v7672
    %7682 = vmatprep.subr.bf16.mxu0 0
    %7683 = vmatpush1.bf16.msra.mxu0 %v7673
    %7684 = vmatprep.subr.bf16.mxu0 0
    %7685 = vmatpush1.bf16.msra.mxu0 0
    %7686 = vmatprep.subr.bf16.mxu0 0
    %7687 = vmatpush1.bf16.msra.mxu0 0
    %7688 = vmatprep.subr.bf16.mxu0 0
    %7689 = vmatpush1.bf16.msra.mxu0 0
    %7690 = vmatprep.subr.bf16.mxu0 0
    %7691 = vmatpush1.bf16.msra.mxu0 0
    %7692 = vmatprep.subr.bf16.mxu0 0
    %7693 = vmatpush1.bf16.msra.mxu0 0
    %7694 = vmatprep.subr.bf16.mxu0 0
    %7695 = vmatpush1.bf16.msra.mxu0 0
    %7696 = vmatprep.subr.bf16.mxu0 0
    %7697 = vmatpush1.bf16.msra.mxu0 0
    %7698 = vmatprep.subr.bf16.mxu0 0
    %7699 = vmatpush1.bf16.msra.mxu0 0
    %7700 = vmatprep.subr.bf16.mxu0 0
    %7701 = vmatpush1.bf16.msra.mxu0 0
    %7702 = vmatprep.subr.bf16.mxu0 0
    %7703 = vmatpush1.bf16.msra.mxu0 0
    %7704 = vmatprep.subr.bf16.mxu0 0
    %7705 = vmatpush1.bf16.msra.mxu0 0
    %7706 = vmatprep.subr.bf16.mxu0 0
    %7707 = vmatpush1.bf16.msra.mxu0 0
    %7708 = vmatprep.subr.bf16.mxu0 0
    %7709 = vmatpush1.bf16.msra.mxu0 0
    %7710 = vmatprep.subr.bf16.mxu0 0
    %7711 = vmatpush1.bf16.msra.mxu0 0
    %7712 = vmatprep.mubr.bf16.mxu0 0
    %7713 = vmatmul.mubr.bf16.gmra.mrb[0].mxu0 %v7675
    %v7714 = vpop.f32.mrb[0].mxu0
    %v7715 = vadd.f32 0.0, %v7714
    %v7716 = vpop.f32.mrb[0].mxu0
    %v7717 = vpop.f32.mrb[0].mxu0
    %v7718 = vadd.f32 0.0, %v7717
    %v7719 = vpop.f32.mrb[0].mxu0
    %7720 = vmatprep.mubr.bf16.mxu0 0
    %7721 = vmatmul.mubr.bf16.gmra.mrb[0].mxu0 %v7678
    %v7722 = vpop.f32.mrb[0].mxu0
    %v7723 = vadd.f32 0.0, %v7722
    %v7724 = vpop.f32.mrb[0].mxu0
    %v7725 = vpop.f32.mrb[0].mxu0
    %v7726 = vadd.f32 0.0, %v7725
    %v7727 = vpop.f32.mrb[0].mxu0
    %7728 = vdwg.mxu0
    %v7730 = vsel %vm6011, %v7654, 0
    %v7733 = vsel %vm6011, %v7655, 0
    %7735 = vmatprep.subr.bf16.mxu0 0
    %7736 = vmatpush1.bf16.msra.mxu0 %v7666
    %7737 = vmatprep.subr.bf16.mxu0 0
    %7738 = vmatpush1.bf16.msra.mxu0 %v7667
    %7739 = vmatprep.subr.bf16.mxu0 0
    %7740 = vmatpush1.bf16.msra.mxu0 0
    %7741 = vmatprep.subr.bf16.mxu0 0
    %7742 = vmatpush1.bf16.msra.mxu0 0
    %7743 = vmatprep.subr.bf16.mxu0 0
    %7744 = vmatpush1.bf16.msra.mxu0 0
    %7745 = vmatprep.subr.bf16.mxu0 0
    %7746 = vmatpush1.bf16.msra.mxu0 0
    %7747 = vmatprep.subr.bf16.mxu0 0
    %7748 = vmatpush1.bf16.msra.mxu0 0
    %7749 = vmatprep.subr.bf16.mxu0 0
    %7750 = vmatpush1.bf16.msra.mxu0 0
    %7751 = vmatprep.subr.bf16.mxu0 0
    %7752 = vmatpush1.bf16.msra.mxu0 0
    %7753 = vmatprep.subr.bf16.mxu0 0
    %7754 = vmatpush1.bf16.msra.mxu0 0
    %7755 = vmatprep.subr.bf16.mxu0 0
    %7756 = vmatpush1.bf16.msra.mxu0 0
    %7757 = vmatprep.subr.bf16.mxu0 0
    %7758 = vmatpush1.bf16.msra.mxu0 0
    %7759 = vmatprep.subr.bf16.mxu0 0
    %7760 = vmatpush1.bf16.msra.mxu0 0
    %7761 = vmatprep.subr.bf16.mxu0 0
    %7762 = vmatpush1.bf16.msra.mxu0 0
    %7763 = vmatprep.subr.bf16.mxu0 0
    %7764 = vmatpush1.bf16.msra.mxu0 0
    %7765 = vmatprep.subr.bf16.mxu0 0
    %7766 = vmatpush1.bf16.msra.mxu0 0
    %7767 = vmatprep.mubr.bf16.mxu0 0
    %7768 = vmatmul.mubr.bf16.gmra.mrb[0].mxu0 %v7730
    %v7769 = vpop.f32.mrb[0].mxu0
    %v7770 = vadd.f32 %v7715, %v7769
    %v7771 = vpop.f32.mrb[0].mxu0
    %v7772 = vpop.f32.mrb[0].mxu0
    %v7773 = vadd.f32 %v7718, %v7772
    %v7774 = vpop.f32.mrb[0].mxu0
    %7775 = vmatprep.mubr.bf16.mxu0 0
    %7776 = vmatmul.mubr.bf16.gmra.mrb[0].mxu0 %v7733
    %v7777 = vpop.f32.mrb[0].mxu0
    %v7778 = vadd.f32 %v7723, %v7777
    %v7779 = vpop.f32.mrb[0].mxu0
    %v7780 = vpop.f32.mrb[0].mxu0
    %v7781 = vadd.f32 %v7726, %v7780
    %v7782 = vpop.f32.mrb[0].mxu0
    %7783 = vdwg.mxu0
    %v7784 = vmul.f32 %v7337, %v5893
    %v7785 = vmul.f32 %v7340, %v5893
    %v7786 = vmul.f32 %v7345, %v5893
    %v7787 = vmul.f32 %v7348, %v5893
    %v7788 = vpack.c.bf16 %v7785, %v7784
    %v7789 = vpack.c.bf16 %v7787, %v7786
    %v7791 = vsel %vm6011, %v7658, 0
    %v7794 = vsel %vm6011, %v7659, 0
    %7796 = vmatprep.subr.bf16.mxu0 0
    %7797 = vmatpush1.bf16.msra.mxu0 %v7788
    %7798 = vmatprep.subr.bf16.mxu0 0
    %7799 = vmatpush1.bf16.msra.mxu0 %v7789
    %7800 = vmatprep.subr.bf16.mxu0 0
    %7801 = vmatpush1.bf16.msra.mxu0 0
    %7802 = vmatprep.subr.bf16.mxu0 0
    %7803 = vmatpush1.bf16.msra.mxu0 0
    %7804 = vmatprep.subr.bf16.mxu0 0
    %7805 = vmatpush1.bf16.msra.mxu0 0
    %7806 = vmatprep.subr.bf16.mxu0 0
    %7807 = vmatpush1.bf16.msra.mxu0 0
    %7808 = vmatprep.subr.bf16.mxu0 0
    %7809 = vmatpush1.bf16.msra.mxu0 0
    %7810 = vmatprep.subr.bf16.mxu0 0
    %7811 = vmatpush1.bf16.msra.mxu0 0
    %7812 = vmatprep.subr.bf16.mxu0 0
    %7813 = vmatpush1.bf16.msra.mxu0 0
    %7814 = vmatprep.subr.bf16.mxu0 0
    %7815 = vmatpush1.bf16.msra.mxu0 0
    %7816 = vmatprep.subr.bf16.mxu0 0
    %7817 = vmatpush1.bf16.msra.mxu0 0
    %7818 = vmatprep.subr.bf16.mxu0 0
    %7819 = vmatpush1.bf16.msra.mxu0 0
    %7820 = vmatprep.subr.bf16.mxu0 0
    %7821 = vmatpush1.bf16.msra.mxu0 0
    %7822 = vmatprep.subr.bf16.mxu0 0
    %7823 = vmatpush1.bf16.msra.mxu0 0
    %7824 = vmatprep.subr.bf16.mxu0 0
    %7825 = vmatpush1.bf16.msra.mxu0 0
    %7826 = vmatprep.subr.bf16.mxu0 0
    %7827 = vmatpush1.bf16.msra.mxu0 0
    %7828 = vmatprep.mubr.bf16.mxu0 0
    %7829 = vmatmul.mubr.bf16.gmra.mrb[0].mxu0 %v7791
    %v7830 = vpop.f32.mrb[0].mxu0
    %v7831 = vadd.f32 0.0, %v7830
    %v7832 = vpop.f32.mrb[0].mxu0
    %v7833 = vpop.f32.mrb[0].mxu0
    %v7834 = vadd.f32 0.0, %v7833
    %v7835 = vpop.f32.mrb[0].mxu0
    %7836 = vmatprep.mubr.bf16.mxu0 0
    %7837 = vmatmul.mubr.bf16.gmra.mrb[0].mxu0 %v7794
    %v7838 = vpop.f32.mrb[0].mxu0
    %v7839 = vadd.f32 0.0, %v7838
    %v7840 = vpop.f32.mrb[0].mxu0
    %v7841 = vpop.f32.mrb[0].mxu0
    %v7842 = vadd.f32 0.0, %v7841
    %v7843 = vpop.f32.mrb[0].mxu0
    %7844 = vdwg.mxu0
    %v7845 = vadd.f32 %v7770, %v7831
    %v7846 = vadd.f32 %v7773, %v7834
    %v7847 = vadd.f32 %v7778, %v7839
    %v7848 = vadd.f32 %v7781, %v7842
    %v7849 = vmul.f32 %v7337, %v5901
    %v7850 = vmul.f32 %v7340, %v5901
    %v7851 = vmul.f32 %v7345, %v5901
    %v7852 = vmul.f32 %v7348, %v5901
    %v7853 = vpack.c.bf16 %v7850, %v7849
    %v7854 = vpack.c.bf16 %v7852, %v7851
    %v7856 = vsel %vm6011, %v7660, 0
    %v7859 = vsel %vm6011, %v7661, 0
    %7861 = vmatprep.subr.bf16.mxu0 0
    %7862 = vmatpush1.bf16.msra.mxu0 %v7853
    %7863 = vmatprep.subr.bf16.mxu0 0
    %7864 = vmatpush1.bf16.msra.mxu0 %v7854
    %7865 = vmatprep.subr.bf16.mxu0 0
    %7866 = vmatpush1.bf16.msra.mxu0 0
    %7867 = vmatprep.subr.bf16.mxu0 0
    %7868 = vmatpush1.bf16.msra.mxu0 0
    %7869 = vmatprep.subr.bf16.mxu0 0
    %7870 = vmatpush1.bf16.msra.mxu0 0
    %7871 = vmatprep.subr.bf16.mxu0 0
    %7872 = vmatpush1.bf16.msra.mxu0 0
    %7873 = vmatprep.subr.bf16.mxu0 0
    %7874 = vmatpush1.bf16.msra.mxu0 0
    %7875 = vmatprep.subr.bf16.mxu0 0
    %7876 = vmatpush1.bf16.msra.mxu0 0
    %7877 = vmatprep.subr.bf16.mxu0 0
    %7878 = vmatpush1.bf16.msra.mxu0 0
    %7879 = vmatprep.subr.bf16.mxu0 0
    %7880 = vmatpush1.bf16.msra.mxu0 0
    %7881 = vmatprep.subr.bf16.mxu0 0
    %7882 = vmatpush1.bf16.msra.mxu0 0
    %7883 = vmatprep.subr.bf16.mxu0 0
    %7884 = vmatpush1.bf16.msra.mxu0 0
    %7885 = vmatprep.subr.bf16.mxu0 0
    %7886 = vmatpush1.bf16.msra.mxu0 0
    %7887 = vmatprep.subr.bf16.mxu0 0
    %7888 = vmatpush1.bf16.msra.mxu0 0
    %7889 = vmatprep.subr.bf16.mxu0 0
    %7890 = vmatpush1.bf16.msra.mxu0 0
    %7891 = vmatprep.subr.bf16.mxu0 0
    %7892 = vmatpush1.bf16.msra.mxu0 0
    %7893 = vmatprep.mubr.bf16.mxu0 0
    %7894 = vmatmul.mubr.bf16.gmra.mrb[0].mxu0 %v7856
    %v7895 = vpop.f32.mrb[0].mxu0
    %v7896 = vadd.f32 0.0, %v7895
    %v7897 = vpop.f32.mrb[0].mxu0
    %v7898 = vpop.f32.mrb[0].mxu0
    %v7899 = vadd.f32 0.0, %v7898
    %v7900 = vpop.f32.mrb[0].mxu0
    %7901 = vmatprep.mubr.bf16.mxu0 0
    %7902 = vmatmul.mubr.bf16.gmra.mrb[0].mxu0 %v7859
    %v7903 = vpop.f32.mrb[0].mxu0
    %v7904 = vadd.f32 0.0, %v7903
    %v7905 = vpop.f32.mrb[0].mxu0
    %v7906 = vpop.f32.mrb[0].mxu0
    %v7907 = vadd.f32 0.0, %v7906
    %v7908 = vpop.f32.mrb[0].mxu0
    %7909 = vdwg.mxu0
    %v7910 = vadd.f32 %v7845, %v7896
    %v7911 = vadd.f32 %v7846, %v7899
    %v7912 = vadd.f32 %v7847, %v7904
    %v7913 = vadd.f32 %v7848, %v7907
    %v7914 = vpack.c.bf16 %v7911, %v7910
    %v7915 = vpack.c.bf16 %v7913, %v7912
    %v7916 = vld [vmem:[%s57] sm:$0xf]
    %v7917 = vld [vmem:[%s57 + $0x4] sm:$0xf]
    %v7918 = vld [vmem:[%s57 + $0x8] sm:$0xf]
    %v7919 = vld [vmem:[%s57 + $0xc] sm:$0xf]
    %v7920 = vld [vmem:[%s57 + $0x10] sm:$0xf]
    %v7921 = vld [vmem:[%s57 + $0x14] sm:$0xf]
    %v7922 = vld [vmem:[%s57 + $0x18] sm:$0xf]
    %v7923 = vld [vmem:[%s57 + $0x1c] sm:$0xf]
    %v7924 = vld [vmem:[%s57 + $0x20] sm:$0xf]
    %v7925 = vld [vmem:[%s57 + $0x24] sm:$0xf]
    %v7926 = vld [vmem:[%s57 + $0x28] sm:$0xf]
    %v7927 = vld [vmem:[%s57 + $0x2c] sm:$0xf]
    %v7928 = vld [vmem:[%s57 + $0x30] sm:$0xf]
    %v7929 = vld [vmem:[%s57 + $0x34] sm:$0xf]
    %v7930 = vld [vmem:[%s57 + $0x38] sm:$0xf]
    %v7931 = vld [vmem:[%s57 + $0x3c] sm:$0xf]
    %v7932 = vld [vmem:[%s59] sm:$0x1]
    %v7934 = vlaneseq
    %v7935 = vshrl.u32 %v7934, 7
    %v7936 = vsub.s32 0, %v7935
    %v7937 = vrot.slane %v7932, %v7936
    %v7955 = vunpack.c.l.b16 %v7916
    %v7956 = vunpack.c.l.b16 %v7917
    %v7957 = vunpack.c.l.b16 %v7918
    %v7958 = vunpack.c.l.b16 %v7919
    %v7959 = vunpack.c.l.b16 %v7920
    %v7960 = vunpack.c.l.b16 %v7921
    %v7961 = vunpack.c.l.b16 %v7922
    %v7962 = vunpack.c.l.b16 %v7923
    %v7963 = vunpack.c.l.b16 %v7924
    %v7964 = vunpack.c.l.b16 %v7925
    %v7965 = vunpack.c.l.b16 %v7926
    %v7966 = vunpack.c.l.b16 %v7927
    %v7967 = vunpack.c.l.b16 %v7928
    %v7968 = vunpack.c.l.b16 %v7929
    %v7969 = vunpack.c.l.b16 %v7930
    %v7970 = vunpack.c.l.b16 %v7931
    %v7971 = vpack.c.b16 %v7956, %v7955
    %v7972 = vpack.c.b16 %v7958, %v7957
    %v7973 = vpack.c.b16 %v7960, %v7959
    %v7974 = vpack.c.b16 %v7962, %v7961
    %v7975 = vpack.c.b16 %v7964, %v7963
    %v7976 = vpack.c.b16 %v7966, %v7965
    %v7977 = vpack.c.b16 %v7968, %v7967
    %v7978 = vpack.c.b16 %v7970, %v7969
    %7987 = vmatprep.subr.bf16.mxu0 0
    %7988 = vmatpush1.bf16.msra.mxu0 %v7971
    %7989 = vmatprep.subr.bf16.mxu0 0
    %7990 = vmatpush1.bf16.msra.mxu0 %v7972
    %7991 = vmatprep.subr.bf16.mxu0 0
    %7992 = vmatpush1.bf16.msra.mxu0 %v7973
    %7993 = vmatprep.subr.bf16.mxu0 0
    %7994 = vmatpush1.bf16.msra.mxu0 %v7974
    %7995 = vmatprep.subr.bf16.mxu0 0
    %7996 = vmatpush1.bf16.msra.mxu0 %v7975
    %7997 = vmatprep.subr.bf16.mxu0 0
    %7998 = vmatpush1.bf16.msra.mxu0 %v7976
    %7999 = vmatprep.subr.bf16.mxu0 0
    %8000 = vmatpush1.bf16.msra.mxu0 %v7977
    %8001 = vmatprep.subr.bf16.mxu0 0
    %8002 = vmatpush1.bf16.msra.mxu0 %v7978
    %8003 = vmatprep.subr.bf16.mxu0 0
    %8004 = vmatpush1.bf16.msra.mxu0 0
    %8005 = vmatprep.subr.bf16.mxu0 0
    %8006 = vmatpush1.bf16.msra.mxu0 0
    %8007 = vmatprep.subr.bf16.mxu0 0
    %8008 = vmatpush1.bf16.msra.mxu0 0
    %8009 = vmatprep.subr.bf16.mxu0 0
    %8010 = vmatpush1.bf16.msra.mxu0 0
    %8011 = vmatprep.subr.bf16.mxu0 0
    %8012 = vmatpush1.bf16.msra.mxu0 0
    %8013 = vmatprep.subr.bf16.mxu0 0
    %8014 = vmatpush1.bf16.msra.mxu0 0
    %8015 = vmatprep.subr.bf16.mxu0 0
    %8016 = vmatpush1.bf16.msra.mxu0 0
    %8017 = vmatprep.subr.bf16.mxu0 0
    %8018 = vmatpush1.bf16.msra.mxu0 0
    %8019 = vmatprep.mubr.bf16.mxu0 0
    %8020 = vmatmul.mubr.bf16.gmra.mrb[0].mxu0 %v7914
    %v8021 = vpop.f32.mrb[0].mxu0
    %v8022 = vadd.f32 %v7937, %v8021
    %v8023 = vpop.f32.mrb[0].mxu0
    %v8024 = vpop.f32.mrb[0].mxu0
    %v8025 = vadd.f32 %v7937, %v8024
    %v8026 = vpop.f32.mrb[0].mxu0
    %8027 = vmatprep.mubr.bf16.mxu0 0
    %8028 = vmatmul.mubr.bf16.gmra.mrb[0].mxu0 %v7915
    %v8029 = vpop.f32.mrb[0].mxu0
    %v8030 = vadd.f32 %v7937, %v8029
    %v8031 = vpop.f32.mrb[0].mxu0
    %v8032 = vpop.f32.mrb[0].mxu0
    %v8033 = vadd.f32 %v7937, %v8032
    %v8034 = vpop.f32.mrb[0].mxu0
    %8035 = vdwg.mxu0
    %v8036 = vadd.f32 %v7066, %v8022
    %v8037 = vadd.f32 %v7067, %v8025
    %v8038 = vadd.f32 %v7068, %v8030
    %v8039 = vadd.f32 %v7069, %v8033
    %v8040 = vld [vmem:[%s61] sm:$0x1]
    %v8041 = vld [vmem:[%s63] sm:$0x1]
    %8042 = vadd.xlane.f32.xlu0 %v8036
    %v8043 = vpop.xlane.xlu0 %8042
    %8044 = vadd.xlane.f32.xlu0 %v8037
    %v8045 = vpop.xlane.xlu0 %8044
    %8046 = vadd.xlane.f32.xlu0 %v8038
    %v8047 = vpop.xlane.xlu0 %8046
    %8048 = vadd.xlane.f32.xlu0 %v8039
    %v8049 = vpop.xlane.xlu0 %8048
    %v8050 = vmul.f32 %v8043, %v6584
    %v8051 = vmul.f32 %v8045, %v6584
    %v8052 = vmul.f32 %v8047, %v6584
    %v8053 = vmul.f32 %v8049, %v6584
    %v8054 = vsub.f32 %v8036, %v8050
    %v8055 = vsub.f32 %v8037, %v8051
    %v8056 = vsub.f32 %v8038, %v8052
    %v8057 = vsub.f32 %v8039, %v8053
    %v8058 = vmul.f32 %v8054, %v8054
    %v8059 = vmul.f32 %v8055, %v8055
    %v8060 = vmul.f32 %v8056, %v8056
    %v8061 = vmul.f32 %v8057, %v8057
    %8062 = vadd.xlane.f32.xlu0 %v8058
    %v8063 = vpop.xlane.xlu0 %8062
    %8064 = vadd.xlane.f32.xlu0 %v8059
    %v8065 = vpop.xlane.xlu0 %8064
    %8066 = vadd.xlane.f32.xlu0 %v8060
    %v8067 = vpop.xlane.xlu0 %8066
    %8068 = vadd.xlane.f32.xlu0 %v8061
    %v8069 = vpop.xlane.xlu0 %8068
    %v8070 = vmul.f32 %v8063, %v6584
    %v8071 = vmul.f32 %v8065, %v6584
    %v8072 = vmul.f32 %v8067, %v6584
    %v8073 = vmul.f32 %v8069, %v6584
    %v8074 = vadd.f32 %v8070, 1e-05
    %v8075 = vadd.f32 %v8071, 1e-05
    %v8076 = vadd.f32 %v8072, 1e-05
    %v8077 = vadd.f32 %v8073, 1e-05
    %v8078 = vrsqrt.pop %v8074
    %v8079 = vrsqrt.pop %v8075
    %v8080 = vrsqrt.pop %v8076
    %v8081 = vrsqrt.pop %v8077
    %v8082 = vmul.f32 %v8054, %v8078
    %v8083 = vmul.f32 %v8055, %v8079
    %v8084 = vmul.f32 %v8056, %v8080
    %v8085 = vmul.f32 %v8057, %v8081
    %v8087 = vlaneseq
    %v8088 = vshrl.u32 %v8087, 7
    %v8089 = vsub.s32 0, %v8088
    %v8090 = vrot.slane %v8040, %v8089
    %v8092 = vmul.f32 %v8082, %v8090
    %v8093 = vmul.f32 %v8083, %v8090
    %v8094 = vmul.f32 %v8084, %v8090
    %v8095 = vmul.f32 %v8085, %v8090
    %v8097 = vlaneseq
    %v8098 = vshrl.u32 %v8097, 7
    %v8099 = vsub.s32 0, %v8098
    %v8100 = vrot.slane %v8041, %v8099
    %v8102 = vadd.f32 %v8092, %v8100
    %v8103 = vadd.f32 %v8093, %v8100
    %v8104 = vadd.f32 %v8094, %v8100
    %v8105 = vadd.f32 %v8095, %v8100
    %v8106 = vpack.c.bf16 %v8103, %v8102
    %v8107 = vpack.c.bf16 %v8105, %v8104
    %v8108 = vld [vmem:[%s65] sm:$0xff]
    %v8109 = vld [vmem:[%s65 + $0x8] sm:$0xff]
    %v8110 = vld [vmem:[%s65 + $0x10] sm:$0xff]
    %v8111 = vld [vmem:[%s65 + $0x18] sm:$0xff]
    %v8112 = vld [vmem:[%s65 + $0x20] sm:$0xff]
    %v8113 = vld [vmem:[%s65 + $0x28] sm:$0xff]
    %v8114 = vld [vmem:[%s65 + $0x30] sm:$0xff]
    %v8115 = vld [vmem:[%s65 + $0x38] sm:$0xff]
    %v8116 = vld [vmem:[%s65 + $0x40] sm:$0xff]
    %v8117 = vld [vmem:[%s65 + $0x48] sm:$0xff]
    %v8118 = vld [vmem:[%s65 + $0x50] sm:$0xff]
    %v8119 = vld [vmem:[%s65 + $0x58] sm:$0xff]
    %v8120 = vld [vmem:[%s65 + $0x60] sm:$0xff]
    %v8121 = vld [vmem:[%s65 + $0x68] sm:$0xff]
    %v8122 = vld [vmem:[%s65 + $0x70] sm:$0xff]
    %v8123 = vld [vmem:[%s65 + $0x78] sm:$0xff]
    %v8124 = vld [vmem:[%s67] sm:$0x3]
    %v8126 = vlaneseq
    %v8127 = vshrl.u32 %v8126, 7
    %v8128 = vsub.s32 0, %v8127
    %v8129 = vrot.slane %v8124, %v8128
    %v8130 = vlaneseq
    %v8131 = vshrl.u32 %v8130, 7
    %v8132 = vsub.s32 1, %v8131
    %v8133 = vrot.slane %v8124, %v8132
    %v8152 = vunpack.c.l.b16 %v8108
    %v8153 = vunpack.c.h.b16 %v8108
    %v8154 = vunpack.c.l.b16 %v8109
    %v8155 = vunpack.c.h.b16 %v8109
    %v8156 = vunpack.c.l.b16 %v8110
    %v8157 = vunpack.c.h.b16 %v8110
    %v8158 = vunpack.c.l.b16 %v8111
    %v8159 = vunpack.c.h.b16 %v8111
    %v8160 = vunpack.c.l.b16 %v8112
    %v8161 = vunpack.c.h.b16 %v8112
    %v8162 = vunpack.c.l.b16 %v8113
    %v8163 = vunpack.c.h.b16 %v8113
    %v8164 = vunpack.c.l.b16 %v8114
    %v8165 = vunpack.c.h.b16 %v8114
    %v8166 = vunpack.c.l.b16 %v8115
    %v8167 = vunpack.c.h.b16 %v8115
    %v8168 = vunpack.c.l.b16 %v8116
    %v8169 = vunpack.c.h.b16 %v8116
    %v8170 = vunpack.c.l.b16 %v8117
    %v8171 = vunpack.c.h.b16 %v8117
    %v8172 = vunpack.c.l.b16 %v8118
    %v8173 = vunpack.c.h.b16 %v8118
    %v8174 = vunpack.c.l.b16 %v8119
    %v8175 = vunpack.c.h.b16 %v8119
    %v8176 = vunpack.c.l.b16 %v8120
    %v8177 = vunpack.c.h.b16 %v8120
    %v8178 = vunpack.c.l.b16 %v8121
    %v8179 = vunpack.c.h.b16 %v8121
    %v8180 = vunpack.c.l.b16 %v8122
    %v8181 = vunpack.c.h.b16 %v8122
    %v8182 = vunpack.c.l.b16 %v8123
    %v8183 = vunpack.c.h.b16 %v8123
    %v8184 = vpack.c.b16 %v8154, %v8152
    %v8185 = vpack.c.b16 %v8155, %v8153
    %v8186 = vpack.c.b16 %v8158, %v8156
    %v8187 = vpack.c.b16 %v8159, %v8157
    %v8188 = vpack.c.b16 %v8162, %v8160
    %v8189 = vpack.c.b16 %v8163, %v8161
    %v8190 = vpack.c.b16 %v8166, %v8164
    %v8191 = vpack.c.b16 %v8167, %v8165
    %v8192 = vpack.c.b16 %v8170, %v8168
    %v8193 = vpack.c.b16 %v8171, %v8169
    %v8194 = vpack.c.b16 %v8174, %v8172
    %v8195 = vpack.c.b16 %v8175, %v8173
    %v8196 = vpack.c.b16 %v8178, %v8176
    %v8197 = vpack.c.b16 %v8179, %v8177
    %v8198 = vpack.c.b16 %v8182, %v8180
    %v8199 = vpack.c.b16 %v8183, %v8181
    %8216 = vmatprep.subr.bf16.mxu0 %v8185
    %8217 = vmatpush1.bf16.msra.mxu0 %v8184
    %8218 = vmatprep.subr.bf16.mxu0 %v8187
    %8219 = vmatpush1.bf16.msra.mxu0 %v8186
    %8220 = vmatprep.subr.bf16.mxu0 %v8189
    %8221 = vmatpush1.bf16.msra.mxu0 %v8188
    %8222 = vmatprep.subr.bf16.mxu0 %v8191
    %8223 = vmatpush1.bf16.msra.mxu0 %v8190
    %8224 = vmatprep.subr.bf16.mxu0 %v8193
    %8225 = vmatpush1.bf16.msra.mxu0 %v8192
    %8226 = vmatprep.subr.bf16.mxu0 %v8195
    %8227 = vmatpush1.bf16.msra.mxu0 %v8194
    %8228 = vmatprep.subr.bf16.mxu0 %v8197
    %8229 = vmatpush1.bf16.msra.mxu0 %v8196
    %8230 = vmatprep.subr.bf16.mxu0 %v8199
    %8231 = vmatpush1.bf16.msra.mxu0 %v8198
    %8232 = vmatprep.subr.bf16.mxu0 0
    %8233 = vmatpush1.bf16.msra.mxu0 0
    %8234 = vmatprep.subr.bf16.mxu0 0
    %8235 = vmatpush1.bf16.msra.mxu0 0
    %8236 = vmatprep.subr.bf16.mxu0 0
    %8237 = vmatpush1.bf16.msra.mxu0 0
    %8238 = vmatprep.subr.bf16.mxu0 0
    %8239 = vmatpush1.bf16.msra.mxu0 0
    %8240 = vmatprep.subr.bf16.mxu0 0
    %8241 = vmatpush1.bf16.msra.mxu0 0
    %8242 = vmatprep.subr.bf16.mxu0 0
    %8243 = vmatpush1.bf16.msra.mxu0 0
    %8244 = vmatprep.subr.bf16.mxu0 0
    %8245 = vmatpush1.bf16.msra.mxu0 0
    %8246 = vmatprep.subr.bf16.mxu0 0
    %8247 = vmatpush1.bf16.msra.mxu0 0
    %8248 = vmatprep.mubr.bf16.mxu0 0
    %8249 = vmatmul.mubr.bf16.gmra.mrb[0].mxu0 %v8106
    %v8250 = vpop.f32.mrb[0].mxu0
    %v8251 = vadd.f32 %v8129, %v8250
    %v8252 = vpop.f32.mrb[0].mxu0
    %v8253 = vadd.f32 %v8133, %v8252
    %v8254 = vpop.f32.mrb[0].mxu0
    %v8255 = vadd.f32 %v8129, %v8254
    %v8256 = vpop.f32.mrb[0].mxu0
    %v8257 = vadd.f32 %v8133, %v8256
    %8258 = vmatprep.mubr.bf16.mxu0 0
    %8259 = vmatmul.mubr.bf16.gmra.mrb[0].mxu0 %v8107
    %v8260 = vpop.f32.mrb[0].mxu0
    %v8261 = vadd.f32 %v8129, %v8260
    %v8262 = vpop.f32.mrb[0].mxu0
    %v8263 = vadd.f32 %v8133, %v8262
    %v8264 = vpop.f32.mrb[0].mxu0
    %v8265 = vadd.f32 %v8129, %v8264
    %v8266 = vpop.f32.mrb[0].mxu0
    %v8267 = vadd.f32 %v8133, %v8266
    %8268 = vdwg.mxu0
    %v8269 = vmax.f32 %v8251, 0.0
    %v8270 = vmax.f32 %v8253, 0.0
    %v8271 = vmax.f32 %v8255, 0.0
    %v8272 = vmax.f32 %v8257, 0.0
    %v8273 = vmax.f32 %v8261, 0.0
    %v8274 = vmax.f32 %v8263, 0.0
    %v8275 = vmax.f32 %v8265, 0.0
    %v8276 = vmax.f32 %v8267, 0.0
    %v8277 = vpack.c.bf16 %v8271, %v8269
    %v8278 = vpack.c.bf16 %v8272, %v8270
    %v8279 = vpack.c.bf16 %v8275, %v8273
    %v8280 = vpack.c.bf16 %v8276, %v8274
    %v8281 = vld [vmem:[%s69] sm:$0xf]
    %v8282 = vld [vmem:[%s69 + $0x4] sm:$0xf]
    %v8283 = vld [vmem:[%s69 + $0x8] sm:$0xf]
    %v8284 = vld [vmem:[%s69 + $0xc] sm:$0xf]
    %v8285 = vld [vmem:[%s69 + $0x10] sm:$0xf]
    %v8286 = vld [vmem:[%s69 + $0x14] sm:$0xf]
    %v8287 = vld [vmem:[%s69 + $0x18] sm:$0xf]
    %v8288 = vld [vmem:[%s69 + $0x1c] sm:$0xf]
    %v8289 = vld [vmem:[%s69 + $0x20] sm:$0xf]
    %v8290 = vld [vmem:[%s69 + $0x24] sm:$0xf]
    %v8291 = vld [vmem:[%s69 + $0x28] sm:$0xf]
    %v8292 = vld [vmem:[%s69 + $0x2c] sm:$0xf]
    %v8293 = vld [vmem:[%s69 + $0x30] sm:$0xf]
    %v8294 = vld [vmem:[%s69 + $0x34] sm:$0xf]
    %v8295 = vld [vmem:[%s69 + $0x38] sm:$0xf]
    %v8296 = vld [vmem:[%s69 + $0x3c] sm:$0xf]
    %v8297 = vld [vmem:[%s69 + $0x40] sm:$0xf]
    %v8298 = vld [vmem:[%s69 + $0x44] sm:$0xf]
    %v8299 = vld [vmem:[%s69 + $0x48] sm:$0xf]
    %v8300 = vld [vmem:[%s69 + $0x4c] sm:$0xf]
    %v8301 = vld [vmem:[%s69 + $0x50] sm:$0xf]
    %v8302 = vld [vmem:[%s69 + $0x54] sm:$0xf]
    %v8303 = vld [vmem:[%s69 + $0x58] sm:$0xf]
    %v8304 = vld [vmem:[%s69 + $0x5c] sm:$0xf]
    %v8305 = vld [vmem:[%s69 + $0x60] sm:$0xf]
    %v8306 = vld [vmem:[%s69 + $0x64] sm:$0xf]
    %v8307 = vld [vmem:[%s69 + $0x68] sm:$0xf]
    %v8308 = vld [vmem:[%s69 + $0x6c] sm:$0xf]
    %v8309 = vld [vmem:[%s69 + $0x70] sm:$0xf]
    %v8310 = vld [vmem:[%s69 + $0x74] sm:$0xf]
    %v8311 = vld [vmem:[%s69 + $0x78] sm:$0xf]
    %v8312 = vld [vmem:[%s69 + $0x7c] sm:$0xf]
    %v8313 = vld [vmem:[%s71] sm:$0x1]
    %v8315 = vlaneseq
    %v8316 = vshrl.u32 %v8315, 7
    %v8317 = vsub.s32 0, %v8316
    %v8318 = vrot.slane %v8313, %v8317
    %v8352 = vunpack.c.l.b16 %v8281
    %v8353 = vunpack.c.l.b16 %v8282
    %v8354 = vunpack.c.l.b16 %v8283
    %v8355 = vunpack.c.l.b16 %v8284
    %v8356 = vunpack.c.l.b16 %v8285
    %v8357 = vunpack.c.l.b16 %v8286
    %v8358 = vunpack.c.l.b16 %v8287
    %v8359 = vunpack.c.l.b16 %v8288
    %v8360 = vunpack.c.l.b16 %v8289
    %v8361 = vunpack.c.l.b16 %v8290
    %v8362 = vunpack.c.l.b16 %v8291
    %v8363 = vunpack.c.l.b16 %v8292
    %v8364 = vunpack.c.l.b16 %v8293
    %v8365 = vunpack.c.l.b16 %v8294
    %v8366 = vunpack.c.l.b16 %v8295
    %v8367 = vunpack.c.l.b16 %v8296
    %v8368 = vunpack.c.l.b16 %v8297
    %v8369 = vunpack.c.l.b16 %v8298
    %v8370 = vunpack.c.l.b16 %v8299
    %v8371 = vunpack.c.l.b16 %v8300
    %v8372 = vunpack.c.l.b16 %v8301
    %v8373 = vunpack.c.l.b16 %v8302
    %v8374 = vunpack.c.l.b16 %v8303
    %v8375 = vunpack.c.l.b16 %v8304
    %v8376 = vunpack.c.l.b16 %v8305
    %v8377 = vunpack.c.l.b16 %v8306
    %v8378 = vunpack.c.l.b16 %v8307
    %v8379 = vunpack.c.l.b16 %v8308
    %v8380 = vunpack.c.l.b16 %v8309
    %v8381 = vunpack.c.l.b16 %v8310
    %v8382 = vunpack.c.l.b16 %v8311
    %v8383 = vunpack.c.l.b16 %v8312
    %v8384 = vpack.c.b16 %v8353, %v8352
    %v8385 = vpack.c.b16 %v8355, %v8354
    %v8386 = vpack.c.b16 %v8357, %v8356
    %v8387 = vpack.c.b16 %v8359, %v8358
    %v8388 = vpack.c.b16 %v8361, %v8360
    %v8389 = vpack.c.b16 %v8363, %v8362
    %v8390 = vpack.c.b16 %v8365, %v8364
    %v8391 = vpack.c.b16 %v8367, %v8366
    %v8392 = vpack.c.b16 %v8369, %v8368
    %v8393 = vpack.c.b16 %v8371, %v8370
    %v8394 = vpack.c.b16 %v8373, %v8372
    %v8395 = vpack.c.b16 %v8375, %v8374
    %v8396 = vpack.c.b16 %v8377, %v8376
    %v8397 = vpack.c.b16 %v8379, %v8378
    %v8398 = vpack.c.b16 %v8381, %v8380
    %v8399 = vpack.c.b16 %v8383, %v8382
    %8416 = vmatprep.subr.bf16.mxu0 0
    %8417 = vmatpush1.bf16.msra.mxu0 %v8384
    %8418 = vmatprep.subr.bf16.mxu0 0
    %8419 = vmatpush1.bf16.msra.mxu0 %v8385
    %8420 = vmatprep.subr.bf16.mxu0 0
    %8421 = vmatpush1.bf16.msra.mxu0 %v8386
    %8422 = vmatprep.subr.bf16.mxu0 0
    %8423 = vmatpush1.bf16.msra.mxu0 %v8387
    %8424 = vmatprep.subr.bf16.mxu0 0
    %8425 = vmatpush1.bf16.msra.mxu0 %v8388
    %8426 = vmatprep.subr.bf16.mxu0 0
    %8427 = vmatpush1.bf16.msra.mxu0 %v8389
    %8428 = vmatprep.subr.bf16.mxu0 0
    %8429 = vmatpush1.bf16.msra.mxu0 %v8390
    %8430 = vmatprep.subr.bf16.mxu0 0
    %8431 = vmatpush1.bf16.msra.mxu0 %v8391
    %8432 = vmatprep.subr.bf16.mxu0 0
    %8433 = vmatpush1.bf16.msra.mxu0 %v8392
    %8434 = vmatprep.subr.bf16.mxu0 0
    %8435 = vmatpush1.bf16.msra.mxu0 %v8393
    %8436 = vmatprep.subr.bf16.mxu0 0
    %8437 = vmatpush1.bf16.msra.mxu0 %v8394
    %8438 = vmatprep.subr.bf16.mxu0 0
    %8439 = vmatpush1.bf16.msra.mxu0 %v8395
    %8440 = vmatprep.subr.bf16.mxu0 0
    %8441 = vmatpush1.bf16.msra.mxu0 %v8396
    %8442 = vmatprep.subr.bf16.mxu0 0
    %8443 = vmatpush1.bf16.msra.mxu0 %v8397
    %8444 = vmatprep.subr.bf16.mxu0 0
    %8445 = vmatpush1.bf16.msra.mxu0 %v8398
    %8446 = vmatprep.subr.bf16.mxu0 0
    %8447 = vmatpush1.bf16.msra.mxu0 %v8399
    %8448 = vmatprep.mubr.bf16.mxu0 %v8278
    %8449 = vmatmul.mubr.bf16.gmra.mrb[0].mxu0 %v8277
    %v8450 = vpop.f32.mrb[0].mxu0
    %v8451 = vadd.f32 %v8318, %v8450
    %v8452 = vpop.f32.mrb[0].mxu0
    %v8453 = vpop.f32.mrb[0].mxu0
    %v8454 = vadd.f32 %v8318, %v8453
    %v8455 = vpop.f32.mrb[0].mxu0
    %8456 = vmatprep.mubr.bf16.mxu0 %v8280
    %8457 = vmatmul.mubr.bf16.gmra.mrb[0].mxu0 %v8279
    %v8458 = vpop.f32.mrb[0].mxu0
    %v8459 = vadd.f32 %v8318, %v8458
    %v8460 = vpop.f32.mrb[0].mxu0
    %v8461 = vpop.f32.mrb[0].mxu0
    %v8462 = vadd.f32 %v8318, %v8461
    %v8463 = vpop.f32.mrb[0].mxu0
    %8464 = vdwg.mxu0
    %v8465 = vadd.f32 %v8102, %v8451
    %v8466 = vadd.f32 %v8103, %v8454
    %v8467 = vadd.f32 %v8104, %v8459
    %v8468 = vadd.f32 %v8105, %v8462
    %v8469 = vld [vmem:[%s73] sm:$0x1]
    %v8470 = vld [vmem:[%s75] sm:$0x1]
    %8471 = vadd.xlane.f32.xlu0 %v8465
    %v8472 = vpop.xlane.xlu0 %8471
    %8473 = vadd.xlane.f32.xlu0 %v8466
    %v8474 = vpop.xlane.xlu0 %8473
    %8475 = vadd.xlane.f32.xlu0 %v8467
    %v8476 = vpop.xlane.xlu0 %8475
    %8477 = vadd.xlane.f32.xlu0 %v8468
    %v8478 = vpop.xlane.xlu0 %8477
    %v8479 = vmul.f32 %v8472, %v6584
    %v8480 = vmul.f32 %v8474, %v6584
    %v8481 = vmul.f32 %v8476, %v6584
    %v8482 = vmul.f32 %v8478, %v6584
    %v8483 = vsub.f32 %v8465, %v8479
    %v8484 = vsub.f32 %v8466, %v8480
    %v8485 = vsub.f32 %v8467, %v8481
    %v8486 = vsub.f32 %v8468, %v8482
    %v8487 = vmul.f32 %v8483, %v8483
    %v8488 = vmul.f32 %v8484, %v8484
    %v8489 = vmul.f32 %v8485, %v8485
    %v8490 = vmul.f32 %v8486, %v8486
    %8491 = vadd.xlane.f32.xlu0 %v8487
    %v8492 = vpop.xlane.xlu0 %8491
    %8493 = vadd.xlane.f32.xlu0 %v8488
    %v8494 = vpop.xlane.xlu0 %8493
    %8495 = vadd.xlane.f32.xlu0 %v8489
    %v8496 = vpop.xlane.xlu0 %8495
    %8497 = vadd.xlane.f32.xlu0 %v8490
    %v8498 = vpop.xlane.xlu0 %8497
    %v8499 = vmul.f32 %v8492, %v6584
    %v8500 = vmul.f32 %v8494, %v6584
    %v8501 = vmul.f32 %v8496, %v6584
    %v8502 = vmul.f32 %v8498, %v6584
    %v8503 = vadd.f32 %v8499, 1e-05
    %v8504 = vadd.f32 %v8500, 1e-05
    %v8505 = vadd.f32 %v8501, 1e-05
    %v8506 = vadd.f32 %v8502, 1e-05
    %v8507 = vrsqrt.pop %v8503
    %v8508 = vrsqrt.pop %v8504
    %v8509 = vrsqrt.pop %v8505
    %v8510 = vrsqrt.pop %v8506
    %v8511 = vmul.f32 %v8483, %v8507
    %v8512 = vmul.f32 %v8484, %v8508
    %v8513 = vmul.f32 %v8485, %v8509
    %v8514 = vmul.f32 %v8486, %v8510
    %v8516 = vlaneseq
    %v8517 = vshrl.u32 %v8516, 7
    %v8518 = vsub.s32 0, %v8517
    %v8519 = vrot.slane %v8469, %v8518
    %v8521 = vmul.f32 %v8511, %v8519
    %v8522 = vmul.f32 %v8512, %v8519
    %v8523 = vmul.f32 %v8513, %v8519
    %v8524 = vmul.f32 %v8514, %v8519
    %v8526 = vlaneseq
    %v8527 = vshrl.u32 %v8526, 7
    %v8528 = vsub.s32 0, %v8527
    %v8529 = vrot.slane %v8470, %v8528
    %v8531 = vadd.f32 %v8521, %v8529
    %v8532 = vadd.f32 %v8522, %v8529
    %v8533 = vadd.f32 %v8523, %v8529
    %v8534 = vadd.f32 %v8524, %v8529
    %v8535 = vpack.c.bf16 %v8532, %v8531
    %v8536 = vpack.c.bf16 %v8534, %v8533
    %v8537 = vld [vmem:[%s77] sm:$0xf]
    %v8538 = vld [vmem:[%s77 + $0x4] sm:$0xf]
    %v8539 = vld [vmem:[%s77 + $0x8] sm:$0xf]
    %v8540 = vld [vmem:[%s77 + $0xc] sm:$0xf]
    %v8541 = vld [vmem:[%s77 + $0x10] sm:$0xf]
    %v8542 = vld [vmem:[%s77 + $0x14] sm:$0xf]
    %v8543 = vld [vmem:[%s77 + $0x18] sm:$0xf]
    %v8544 = vld [vmem:[%s77 + $0x1c] sm:$0xf]
    %v8545 = vld [vmem:[%s77 + $0x20] sm:$0xf]
    %v8546 = vld [vmem:[%s77 + $0x24] sm:$0xf]
    %v8547 = vld [vmem:[%s77 + $0x28] sm:$0xf]
    %v8548 = vld [vmem:[%s77 + $0x2c] sm:$0xf]
    %v8549 = vld [vmem:[%s77 + $0x30] sm:$0xf]
    %v8550 = vld [vmem:[%s77 + $0x34] sm:$0xf]
    %v8551 = vld [vmem:[%s77 + $0x38] sm:$0xf]
    %v8552 = vld [vmem:[%s77 + $0x3c] sm:$0xf]
    %v8553 = vld [vmem:[%s79] sm:$0x1]
    %v8555 = vlaneseq
    %v8556 = vshrl.u32 %v8555, 7
    %v8557 = vsub.s32 0, %v8556
    %v8558 = vrot.slane %v8553, %v8557
    %v8576 = vunpack.c.l.b16 %v8537
    %v8577 = vunpack.c.l.b16 %v8538
    %v8578 = vunpack.c.l.b16 %v8539
    %v8579 = vunpack.c.l.b16 %v8540
    %v8580 = vunpack.c.l.b16 %v8541
    %v8581 = vunpack.c.l.b16 %v8542
    %v8582 = vunpack.c.l.b16 %v8543
    %v8583 = vunpack.c.l.b16 %v8544
    %v8584 = vunpack.c.l.b16 %v8545
    %v8585 = vunpack.c.l.b16 %v8546
    %v8586 = vunpack.c.l.b16 %v8547
    %v8587 = vunpack.c.l.b16 %v8548
    %v8588 = vunpack.c.l.b16 %v8549
    %v8589 = vunpack.c.l.b16 %v8550
    %v8590 = vunpack.c.l.b16 %v8551
    %v8591 = vunpack.c.l.b16 %v8552
    %v8592 = vpack.c.b16 %v8577, %v8576
    %v8593 = vpack.c.b16 %v8579, %v8578
    %v8594 = vpack.c.b16 %v8581, %v8580
    %v8595 = vpack.c.b16 %v8583, %v8582
    %v8596 = vpack.c.b16 %v8585, %v8584
    %v8597 = vpack.c.b16 %v8587, %v8586
    %v8598 = vpack.c.b16 %v8589, %v8588
    %v8599 = vpack.c.b16 %v8591, %v8590
    %8608 = vmatprep.subr.bf16.mxu0 0
    %8609 = vmatpush1.bf16.msra.mxu0 %v8592
    %8610 = vmatprep.subr.bf16.mxu0 0
    %8611 = vmatpush1.bf16.msra.mxu0 %v8593
    %8612 = vmatprep.subr.bf16.mxu0 0
    %8613 = vmatpush1.bf16.msra.mxu0 %v8594
    %8614 = vmatprep.subr.bf16.mxu0 0
    %8615 = vmatpush1.bf16.msra.mxu0 %v8595
    %8616 = vmatprep.subr.bf16.mxu0 0
    %8617 = vmatpush1.bf16.msra.mxu0 %v8596
    %8618 = vmatprep.subr.bf16.mxu0 0
    %8619 = vmatpush1.bf16.msra.mxu0 %v8597
    %8620 = vmatprep.subr.bf16.mxu0 0
    %8621 = vmatpush1.bf16.msra.mxu0 %v8598
    %8622 = vmatprep.subr.bf16.mxu0 0
    %8623 = vmatpush1.bf16.msra.mxu0 %v8599
    %8624 = vmatprep.subr.bf16.mxu0 0
    %8625 = vmatpush1.bf16.msra.mxu0 0
    %8626 = vmatprep.subr.bf16.mxu0 0
    %8627 = vmatpush1.bf16.msra.mxu0 0
    %8628 = vmatprep.subr.bf16.mxu0 0
    %8629 = vmatpush1.bf16.msra.mxu0 0
    %8630 = vmatprep.subr.bf16.mxu0 0
    %8631 = vmatpush1.bf16.msra.mxu0 0
    %8632 = vmatprep.subr.bf16.mxu0 0
    %8633 = vmatpush1.bf16.msra.mxu0 0
    %8634 = vmatprep.subr.bf16.mxu0 0
    %8635 = vmatpush1.bf16.msra.mxu0 0
    %8636 = vmatprep.subr.bf16.mxu0 0
    %8637 = vmatpush1.bf16.msra.mxu0 0
    %8638 = vmatprep.subr.bf16.mxu0 0
    %8639 = vmatpush1.bf16.msra.mxu0 0
    %8640 = vmatprep.mubr.bf16.mxu0 0
    %8641 = vmatmul.mubr.bf16.gmra.mrb[0].mxu0 %v8535
    %v8642 = vpop.f32.mrb[0].mxu0
    %v8643 = vadd.f32 %v8558, %v8642
    %v8644 = vpop.f32.mrb[0].mxu0
    %v8645 = vpop.f32.mrb[0].mxu0
    %v8646 = vadd.f32 %v8558, %v8645
    %v8647 = vpop.f32.mrb[0].mxu0
    %8648 = vmatprep.mubr.bf16.mxu0 0
    %8649 = vmatmul.mubr.bf16.gmra.mrb[0].mxu0 %v8536
    %v8650 = vpop.f32.mrb[0].mxu0
    %v8651 = vadd.f32 %v8558, %v8650
    %v8652 = vpop.f32.mrb[0].mxu0
    %v8653 = vpop.f32.mrb[0].mxu0
    %v8654 = vadd.f32 %v8558, %v8653
    %v8655 = vpop.f32.mrb[0].mxu0
    %8656 = vdwg.mxu0
    %v8657 = vld [vmem:[%s81] sm:$0x1]
    %v8659 = vlaneseq
    %v8660 = vshrl.u32 %v8659, 7
    %v8661 = vsub.s32 0, %v8660
    %v8662 = vrot.slane %v8657, %v8661
    %v8664 = vmul.f32 %v8662, %v8643
    %v8665 = vmul.f32 %v8662, %v8646
    %v8666 = vmul.f32 %v8662, %v8651
    %v8667 = vmul.f32 %v8662, %v8654
    %v8668 = vmul.f32 %v8664, 0.5
    %v8669 = vmul.f32 %v8665, 0.5
    %v8670 = vmul.f32 %v8666, 0.5
    %v8671 = vmul.f32 %v8667, 0.5
    %v8672 = vadd.f32 %v8643, %v8668
    %v8673 = vadd.f32 %v8646, %v8669
    %v8674 = vadd.f32 %v8651, %v8670
    %v8675 = vadd.f32 %v8654, %v8671
    %v8676 = vmul.f32 %v8672, %v8672
    %v8677 = vmul.f32 %v8673, %v8673
    %v8678 = vmul.f32 %v8674, %v8674
    %v8679 = vmul.f32 %v8675, %v8675
    %v8680 = vmul.f32 %v8672, %v8676
    %v8681 = vmul.f32 %v8673, %v8677
    %v8682 = vmul.f32 %v8674, %v8678
    %v8683 = vmul.f32 %v8675, %v8679
    %v8684 = vmul.f32 %v8680, 0.044715
    %v8685 = vmul.f32 %v8681, 0.044715
    %v8686 = vmul.f32 %v8682, 0.044715
    %v8687 = vmul.f32 %v8683, 0.044715
    %v8688 = vadd.f32 %v8672, %v8684
    %v8689 = vadd.f32 %v8673, %v8685
    %v8690 = vadd.f32 %v8674, %v8686
    %v8691 = vadd.f32 %v8675, %v8687
    %v8692 = vmul.f32 %v8688, 0.7978846
    %v8693 = vmul.f32 %v8689, 0.7978846
    %v8694 = vmul.f32 %v8690, 0.7978846
    %v8695 = vmul.f32 %v8691, 0.7978846
    %v8696 = vtanh.pop %v8692
    %v8697 = vtanh.pop %v8693
    %v8698 = vtanh.pop %v8694
    %v8699 = vtanh.pop %v8695
    %v8700 = vadd.f32 %v8696, 1.0
    %v8701 = vadd.f32 %v8697, 1.0
    %v8702 = vadd.f32 %v8698, 1.0
    %v8703 = vadd.f32 %v8699, 1.0
    %v8704 = vmul.f32 %v8700, 0.5
    %v8705 = vmul.f32 %v8701, 0.5
    %v8706 = vmul.f32 %v8702, 0.5
    %v8707 = vmul.f32 %v8703, 0.5
    %v8708 = vmul.f32 %v8672, %v8704
    %v8709 = vmul.f32 %v8673, %v8705
    %v8710 = vmul.f32 %v8674, %v8706
    %v8711 = vmul.f32 %v8675, %v8707
    %v8712 = vld [vmem:[%s83] sm:$0x1]
    %v8713 = vld [vmem:[#allocation3] sm:$0x1]
    %8714 = vadd.xlane.f32.xlu0 %v8708
    %v8715 = vpop.xlane.xlu0 %8714
    %8716 = vadd.xlane.f32.xlu0 %v8709
    %v8717 = vpop.xlane.xlu0 %8716
    %8718 = vadd.xlane.f32.xlu0 %v8710
    %v8719 = vpop.xlane.xlu0 %8718
    %8720 = vadd.xlane.f32.xlu0 %v8711
    %v8721 = vpop.xlane.xlu0 %8720
    %v8722 = vmul.f32 %v8715, %v6584
    %v8723 = vmul.f32 %v8717, %v6584
    %v8724 = vmul.f32 %v8719, %v6584
    %v8725 = vmul.f32 %v8721, %v6584
    %v8726 = vsub.f32 %v8708, %v8722
    %v8727 = vsub.f32 %v8709, %v8723
    %v8728 = vsub.f32 %v8710, %v8724
    %v8729 = vsub.f32 %v8711, %v8725
    %v8730 = vmul.f32 %v8726, %v8726
    %v8731 = vmul.f32 %v8727, %v8727
    %v8732 = vmul.f32 %v8728, %v8728
    %v8733 = vmul.f32 %v8729, %v8729
    %8734 = vadd.xlane.f32.xlu0 %v8730
    %v8735 = vpop.xlane.xlu0 %8734
    %8736 = vadd.xlane.f32.xlu0 %v8731
    %v8737 = vpop.xlane.xlu0 %8736
    %8738 = vadd.xlane.f32.xlu0 %v8732
    %v8739 = vpop.xlane.xlu0 %8738
    %8740 = vadd.xlane.f32.xlu0 %v8733
    %v8741 = vpop.xlane.xlu0 %8740
    %v8742 = vmul.f32 %v8735, %v6584
    %v8743 = vmul.f32 %v8737, %v6584
    %v8744 = vmul.f32 %v8739, %v6584
    %v8745 = vmul.f32 %v8741, %v6584
    %v8746 = vadd.f32 %v8742, 1e-05
    %v8747 = vadd.f32 %v8743, 1e-05
    %v8748 = vadd.f32 %v8744, 1e-05
    %v8749 = vadd.f32 %v8745, 1e-05
    %v8750 = vrsqrt.pop %v8746
    %v8751 = vrsqrt.pop %v8747
    %v8752 = vrsqrt.pop %v8748
    %v8753 = vrsqrt.pop %v8749
    %v8754 = vmul.f32 %v8726, %v8750
    %v8755 = vmul.f32 %v8727, %v8751
    %v8756 = vmul.f32 %v8728, %v8752
    %v8757 = vmul.f32 %v8729, %v8753
    %v8759 = vlaneseq
    %v8760 = vshrl.u32 %v8759, 7
    %v8761 = vsub.s32 0, %v8760
    %v8762 = vrot.slane %v8712, %v8761
    %v8764 = vmul.f32 %v8754, %v8762
    %v8765 = vmul.f32 %v8755, %v8762
    %v8766 = vmul.f32 %v8756, %v8762
    %v8767 = vmul.f32 %v8757, %v8762
    %v8769 = vlaneseq
    %v8770 = vshrl.u32 %v8769, 7
    %v8771 = vsub.s32 0, %v8770
    %v8772 = vrot.slane %v8713, %v8771
    %v8774 = vadd.f32 %v8764, %v8772
    %v8775 = vadd.f32 %v8765, %v8772
    %v8776 = vadd.f32 %v8766, %v8772
    %v8777 = vadd.f32 %v8767, %v8772
    %v8778 = vpack.c.bf16 %v8775, %v8774
    %v8779 = vpack.c.bf16 %v8777, %v8776
    %v8780 = vld [vmem:[%s87] sm:$0xf]
    %v8781 = vld [vmem:[%s87 + $0x4] sm:$0xf]
    %v8782 = vld [vmem:[%s87 + $0x8] sm:$0xf]
    %v8783 = vld [vmem:[%s87 + $0xc] sm:$0xf]
    %v8784 = vld [vmem:[%s87 + $0x10] sm:$0xf]
    %v8785 = vld [vmem:[%s87 + $0x14] sm:$0xf]
    %v8786 = vld [vmem:[%s87 + $0x18] sm:$0xf]
    %v8787 = vld [vmem:[%s87 + $0x1c] sm:$0xf]
    %v8788 = vld [vmem:[%s87 + $0x20] sm:$0xf]
    %v8789 = vld [vmem:[%s87 + $0x24] sm:$0xf]
    %v8790 = vld [vmem:[%s87 + $0x28] sm:$0xf]
    %v8791 = vld [vmem:[%s87 + $0x2c] sm:$0xf]
    %v8792 = vld [vmem:[%s87 + $0x30] sm:$0xf]
    %v8793 = vld [vmem:[%s87 + $0x34] sm:$0xf]
    %v8794 = vld [vmem:[%s87 + $0x38] sm:$0xf]
    %v8795 = vld [vmem:[%s87 + $0x3c] sm:$0xf]
    %v8796 = vld [vmem:[#allocation5] sm:$0x1]
    %v8798 = vlaneseq
    %v8799 = vshrl.u32 %v8798, 7
    %v8800 = vsub.s32 0, %v8799
    %v8801 = vrot.slane %v8796, %v8800
    %v8819 = vunpack.c.l.b16 %v8780
    %v8820 = vunpack.c.l.b16 %v8781
    %v8821 = vunpack.c.l.b16 %v8782
    %v8822 = vunpack.c.l.b16 %v8783
    %v8823 = vunpack.c.l.b16 %v8784
    %v8824 = vunpack.c.l.b16 %v8785
    %v8825 = vunpack.c.l.b16 %v8786
    %v8826 = vunpack.c.l.b16 %v8787
    %v8827 = vunpack.c.l.b16 %v8788
    %v8828 = vunpack.c.l.b16 %v8789
    %v8829 = vunpack.c.l.b16 %v8790
    %v8830 = vunpack.c.l.b16 %v8791
    %v8831 = vunpack.c.l.b16 %v8792
    %v8832 = vunpack.c.l.b16 %v8793
    %v8833 = vunpack.c.l.b16 %v8794
    %v8834 = vunpack.c.l.b16 %v8795
    %v8835 = vpack.c.b16 %v8820, %v8819
    %v8836 = vpack.c.b16 %v8822, %v8821
    %v8837 = vpack.c.b16 %v8824, %v8823
    %v8838 = vpack.c.b16 %v8826, %v8825
    %v8839 = vpack.c.b16 %v8828, %v8827
    %v8840 = vpack.c.b16 %v8830, %v8829
    %v8841 = vpack.c.b16 %v8832, %v8831
    %v8842 = vpack.c.b16 %v8834, %v8833
    %8851 = vmatprep.subr.bf16.mxu0 0
    %8852 = vmatpush1.bf16.msra.mxu0 %v8835
    %8853 = vmatprep.subr.bf16.mxu0 0
    %8854 = vmatpush1.bf16.msra.mxu0 %v8836
    %8855 = vmatprep.subr.bf16.mxu0 0
    %8856 = vmatpush1.bf16.msra.mxu0 %v8837
    %8857 = vmatprep.subr.bf16.mxu0 0
    %8858 = vmatpush1.bf16.msra.mxu0 %v8838
    %8859 = vmatprep.subr.bf16.mxu0 0
    %8860 = vmatpush1.bf16.msra.mxu0 %v8839
    %8861 = vmatprep.subr.bf16.mxu0 0
    %8862 = vmatpush1.bf16.msra.mxu0 %v8840
    %8863 = vmatprep.subr.bf16.mxu0 0
    %8864 = vmatpush1.bf16.msra.mxu0 %v8841
    %8865 = vmatprep.subr.bf16.mxu0 0
    %8866 = vmatpush1.bf16.msra.mxu0 %v8842
    %8867 = vmatprep.subr.bf16.mxu0 0
    %8868 = vmatpush1.bf16.msra.mxu0 0
    %8869 = vmatprep.subr.bf16.mxu0 0
    %8870 = vmatpush1.bf16.msra.mxu0 0
    %8871 = vmatprep.subr.bf16.mxu0 0
    %8872 = vmatpush1.bf16.msra.mxu0 0
    %8873 = vmatprep.subr.bf16.mxu0 0
    %8874 = vmatpush1.bf16.msra.mxu0 0
    %8875 = vmatprep.subr.bf16.mxu0 0
    %8876 = vmatpush1.bf16.msra.mxu0 0
    %8877 = vmatprep.subr.bf16.mxu0 0
    %8878 = vmatpush1.bf16.msra.mxu0 0
    %8879 = vmatprep.subr.bf16.mxu0 0
    %8880 = vmatpush1.bf16.msra.mxu0 0
    %8881 = vmatprep.subr.bf16.mxu0 0
    %8882 = vmatpush1.bf16.msra.mxu0 0
    %8883 = vmatprep.mubr.bf16.mxu0 0
    %8884 = vmatmul.mubr.bf16.gmra.mrb[0].mxu0 %v8778
    %v8885 = vpop.f32.mrb[0].mxu0
    %v8886 = vpop.f32.mrb[0].mxu0
    %v8887 = vpop.f32.mrb[0].mxu0
    %v8888 = vpop.f32.mrb[0].mxu0
    %8889 = vmatprep.mubr.bf16.mxu0 0
    %8890 = vmatmul.mubr.bf16.gmra.mrb[0].mxu0 %v8779
    %v8891 = vpop.f32.mrb[0].mxu0
    %v8892 = vpop.f32.mrb[0].mxu0
    %v8893 = vpop.f32.mrb[0].mxu0
    %v8894 = vadd.f32 %v8801, %v8893
    %v8895 = vpop.f32.mrb[0].mxu0
    %8896 = vdwg.mxu0
    %v8897 = vld [vmem:[%s91] sm:$0x1]
    %v8899 = vlaneseq
    %v8900 = vshrl.u32 %v8899, 7
    %v8901 = vsub.s32 0, %v8900
    %v8902 = vrot.slane %v8897, %v8901
    %v8904 = vmul.f32 %v8902, %v8894
    %v8905 = vmul.f32 %v8904, 0.5
    %v8906 = vadd.f32 %v8894, %v8905
    %v8907 = vmul.f32 %v8906, %v8906
    %v8908 = vmul.f32 %v8906, %v8907
    %v8909 = vmul.f32 %v8908, 0.044715
    %v8910 = vadd.f32 %v8906, %v8909
    %v8911 = vmul.f32 %v8910, 0.7978846
    %v8912 = vtanh.pop %v8911
    %v8913 = vadd.f32 %v8912, 1.0
    %v8914 = vmul.f32 %v8913, 0.5
    %v8915 = vmul.f32 %v8906, %v8914
    %v8916 = vld [vmem:[#allocation7] sm:$0x1]
    %v8917 = vld [vmem:[#allocation8] sm:$0x1]
    %8918 = vadd.xlane.f32.xlu0 %v8915
    %v8919 = vpop.xlane.xlu0 %8918
    %v8920 = vmul.f32 %v8919, %v6584
    %v8921 = vsub.f32 %v8915, %v8920
    %v8922 = vmul.f32 %v8921, %v8921
    %8923 = vadd.xlane.f32.xlu0 %v8922
    %v8924 = vpop.xlane.xlu0 %8923
    %v8925 = vmul.f32 %v8924, %v6584
    %v8926 = vadd.f32 %v8925, 1e-05
    %v8927 = vrsqrt.pop %v8926
    %v8928 = vmul.f32 %v8921, %v8927
    %v8930 = vlaneseq
    %v8931 = vshrl.u32 %v8930, 7
    %v8932 = vsub.s32 0, %v8931
    %v8933 = vrot.slane %v8916, %v8932
    %v8935 = vmul.f32 %v8928, %v8933
    %v8937 = vlaneseq
    %v8938 = vshrl.u32 %v8937, 7
    %v8939 = vsub.s32 0, %v8938
    %v8940 = vrot.slane %v8917, %v8939
    %v8942 = vadd.f32 %v8935, %v8940
    %v8943 = vpack.c.bf16 %v8942, %v8942
    %v8944 = vld [vmem:[%s97] sm:$0xf]
    %v8945 = vld [vmem:[%s97 + $0x4] sm:$0xf]
    %v8946 = vld [vmem:[%s97 + $0x8] sm:$0xf]
    %v8947 = vld [vmem:[%s97 + $0xc] sm:$0xf]
    %v8948 = vld [vmem:[%s97 + $0x10] sm:$0xf]
    %v8949 = vld [vmem:[%s97 + $0x14] sm:$0xf]
    %v8950 = vld [vmem:[%s97 + $0x18] sm:$0xf]
    %v8951 = vld [vmem:[%s97 + $0x1c] sm:$0xf]
    %v8952 = vld [vmem:[%s97 + $0x20] sm:$0xf]
    %v8953 = vld [vmem:[%s97 + $0x24] sm:$0xf]
    %v8954 = vld [vmem:[%s97 + $0x28] sm:$0xf]
    %v8955 = vld [vmem:[%s97 + $0x2c] sm:$0xf]
    %v8956 = vld [vmem:[%s97 + $0x30] sm:$0xf]
    %v8957 = vld [vmem:[%s97 + $0x34] sm:$0xf]
    %v8958 = vld [vmem:[%s97 + $0x38] sm:$0xf]
    %v8959 = vld [vmem:[%s97 + $0x3c] sm:$0xf]
    %v8960 = vld [vmem:[%s99] sm:$0x1]
    %v8962 = vlaneseq
    %v8963 = vshrl.u32 %v8962, 7
    %v8964 = vsub.s32 0, %v8963
    %v8965 = vrot.slane %v8960, %v8964
    %v8983 = vunpack.c.l.b16 %v8944
    %v8984 = vunpack.c.l.b16 %v8945
    %v8985 = vunpack.c.l.b16 %v8946
    %v8986 = vunpack.c.l.b16 %v8947
    %v8987 = vunpack.c.l.b16 %v8948
    %v8988 = vunpack.c.l.b16 %v8949
    %v8989 = vunpack.c.l.b16 %v8950
    %v8990 = vunpack.c.l.b16 %v8951
    %v8991 = vunpack.c.l.b16 %v8952
    %v8992 = vunpack.c.l.b16 %v8953
    %v8993 = vunpack.c.l.b16 %v8954
    %v8994 = vunpack.c.l.b16 %v8955
    %v8995 = vunpack.c.l.b16 %v8956
    %v8996 = vunpack.c.l.b16 %v8957
    %v8997 = vunpack.c.l.b16 %v8958
    %v8998 = vunpack.c.l.b16 %v8959
    %v8999 = vpack.c.b16 %v8984, %v8983
    %v9000 = vpack.c.b16 %v8986, %v8985
    %v9001 = vpack.c.b16 %v8988, %v8987
    %v9002 = vpack.c.b16 %v8990, %v8989
    %v9003 = vpack.c.b16 %v8992, %v8991
    %v9004 = vpack.c.b16 %v8994, %v8993
    %v9005 = vpack.c.b16 %v8996, %v8995
    %v9006 = vpack.c.b16 %v8998, %v8997
    %9015 = vmatprep.subr.bf16.mxu0 0
    %9016 = vmatpush1.bf16.msra.mxu0 %v8999
    %9017 = vmatprep.subr.bf16.mxu0 0
    %9018 = vmatpush1.bf16.msra.mxu0 %v9000
    %9019 = vmatprep.subr.bf16.mxu0 0
    %9020 = vmatpush1.bf16.msra.mxu0 %v9001
    %9021 = vmatprep.subr.bf16.mxu0 0
    %9022 = vmatpush1.bf16.msra.mxu0 %v9002
    %9023 = vmatprep.subr.bf16.mxu0 0
    %9024 = vmatpush1.bf16.msra.mxu0 %v9003
    %9025 = vmatprep.subr.bf16.mxu0 0
    %9026 = vmatpush1.bf16.msra.mxu0 %v9004
    %9027 = vmatprep.subr.bf16.mxu0 0
    %9028 = vmatpush1.bf16.msra.mxu0 %v9005
    %9029 = vmatprep.subr.bf16.mxu0 0
    %9030 = vmatpush1.bf16.msra.mxu0 %v9006
    %9031 = vmatprep.subr.bf16.mxu0 0
    %9032 = vmatpush1.bf16.msra.mxu0 0
    %9033 = vmatprep.subr.bf16.mxu0 0
    %9034 = vmatpush1.bf16.msra.mxu0 0
    %9035 = vmatprep.subr.bf16.mxu0 0
    %9036 = vmatpush1.bf16.msra.mxu0 0
    %9037 = vmatprep.subr.bf16.mxu0 0
    %9038 = vmatpush1.bf16.msra.mxu0 0
    %9039 = vmatprep.subr.bf16.mxu0 0
    %9040 = vmatpush1.bf16.msra.mxu0 0
    %9041 = vmatprep.subr.bf16.mxu0 0
    %9042 = vmatpush1.bf16.msra.mxu0 0
    %9043 = vmatprep.subr.bf16.mxu0 0
    %9044 = vmatpush1.bf16.msra.mxu0 0
    %9045 = vmatprep.subr.bf16.mxu0 0
    %9046 = vmatpush1.bf16.msra.mxu0 0
    %9047 = vmatprep.mubr.bf16.mxu0 0
    %9048 = vmatmul.mubr.bf16.gmra.mrb[0].mxu0 %v8943
    %v9049 = vpop.f32.mrb[0].mxu0
    %v9050 = vadd.f32 %v8965, %v9049
    %v9051 = vpop.f32.mrb[0].mxu0
    %v9052 = vpop.f32.mrb[0].mxu0
    %v9053 = vpop.f32.mrb[0].mxu0
    %9054 = vdwg.mxu0
    %v9055 = vxor.u32 %v9050, 2147483648
    %v9056 = vmul.f32 %v9055, 1.442695
    %v9057 = vpow.pop %v9056
    %v9058 = vadd.f32 %v9057, 1.0
    %v9059 = vrcp.pop %v9058
    %v9060 = vmul.f32 1.0, %v9059
    %9061 = vst [vmem:[%s101] sm:$0xff] %v9060
    // Predicated region
    $region218: #{political_predictor_forward.1} parent=1 // pred_check
      _
    $region219: #{political_predictor_forward.1} parent=1 // pred_check_branch
      %9063 = sbr.rel (0) target = $region221
    $region220: #{political_predictor_forward.1} parent=1 // pred_region
      _
    $region221: #{political_predictor_forward.1} parent=1 // pred_fallthru
      _
    // Predicated region
    $region222: #{political_predictor_forward.1} parent=1 // pred_check
      _
    $region223: #{political_predictor_forward.1} parent=1 // pred_check_branch
      %9065 = sbr.rel (0) target = $region225
    $region224: #{political_predictor_forward.1} parent=1 // pred_region
      _
    $region225: #{political_predictor_forward.1} parent=1 // pred_fallthru
      _
    %9066 = vsyncpa [#allocation4], 1
    %9067 = vsyncpa [#allocation6], 1
    %9068 = vsyncpa [#allocation9], 1

</llo_original>
